<compile_context>
chip_gen: v7x
topology: tpu7x:2x2x1
jax: 0.10.0
libtpu: 0.0.40
codegen_flags: <defaults>
</compile_context>

<pallas_src>
import functools

import jax
import jax.numpy as jnp
from jax import lax
from jax.experimental import pallas as pl
from jax.experimental.pallas import tpu as pltpu

EPS = 1e-5
LANE = 128
TOP = 4   # zero rows added above/below the image so every shifted tap window
          # (a contiguous row slice in the flat layout) stays in bounds.


def _round_up(x, m):
    return (x + m - 1) // m * m


# ----------------------------------------------------------------------------
# Pallas kernels
# ----------------------------------------------------------------------------
def _conv3x3_flat_kernel(*refs, row0, wt, out_rows, preact):
    """3x3 conv as 9 shifted-window GEMMs + per-image BN partial stats.

    Activations are flat (rows, Cin) with row width `wt`; the tap (kh, kw)
    reads the contiguous window starting at row0 + (kh-1)*wt + (kw-1).
    If `preact`, a per-channel affine + ReLU (the previous BatchNorm) plus an
    interior mask (the conv's zero padding) is applied ONCE to the whole input
    block and staged in a VMEM scratch; the tap windows read that scratch.
    """
    if preact:
        (x_ref, w_ref, sc_ref, sh_ref, inmask_ref, outmask_ref,
         y_ref, ssum_ref, ssq_ref, xact_ref) = refs
        # bn1 affine + ReLU, then re-zero the pad ring / row-wrap positions so
        # the conv's zero padding stays zero.  Done once per block, not per tap.
        xact_ref[...] = (jnp.maximum(x_ref[0] * sc_ref[...] + sh_ref[...], 0.0)
                         * inmask_ref[...])

        def window(start):
            return xact_ref[start:start + out_rows, :]
    else:
        x_ref, w_ref, outmask_ref, y_ref, ssum_ref, ssq_ref = refs

        def window(start):
            return x_ref[0, start:start + out_rows, :]

    cout = w_ref.shape[-1]
    acc = jnp.zeros((out_rows, cout), jnp.float32)
    for kh in range(3):
        for kw in range(3):
            start = row0 + (kh - 1) * wt + (kw - 1)
            win = window(start)                                 # (out_rows, Cin) f32
            acc = acc + jnp.dot(win.astype(jnp.bfloat16),       # bf16 MXU operands
                                w_ref[kh * 3 + kw],
                                preferred_element_type=jnp.float32)

    # Zero the pad-ring / row-wrap junk positions, then emit partial BN stats
    # (sum and sum-of-squares over this image) plus the raw conv output.
    acc = acc * outmask_ref[...]
    ssum_ref[0] = jnp.sum(acc, axis=0, keepdims=True)
    ssq_ref[0] = jnp.sum(acc * acc, axis=0, keepdims=True)
    y_ref[0] = acc.astype(y_ref.dtype)


def _bn_add_relu_kernel(y_ref, xres_ref, sc_ref, sh_ref, out_ref, *, res_row0):
    """out = relu(scale * conv2_raw + shift + residual), residual read from the
    conv1 input tensor (its interior rows) -- no separate residual array."""
    rows = y_ref.shape[1]
    y = y_ref[0]
    res = xres_ref[0, res_row0:res_row0 + rows, :]
    out_ref[0] = jnp.maximum(y * sc_ref[...] + sh_ref[...] + res, 0.0)


# ----------------------------------------------------------------------------
# pallas_call wrappers
# ----------------------------------------------------------------------------
def _conv_call(x_flat, w9, out_rows, row0, wt, out_mask, preact=None):
    B, rin, cin = x_flat.shape
    cout = w9.shape[-1]

    in_specs = [pl.BlockSpec((1, rin, cin), lambda b: (b, 0, 0)),
                pl.BlockSpec(w9.shape, lambda b: (0, 0, 0))]
    args = [x_flat, w9]
    scratch_shapes = []
    extra_bytes = 0
    if preact is not None:
        scale, shift, in_mask = preact
        in_specs += [pl.BlockSpec(scale.shape, lambda b: (0, 0)),
                     pl.BlockSpec(shift.shape, lambda b: (0, 0)),
                     pl.BlockSpec(in_mask.shape, lambda b: (0, 0))]
        args += [scale, shift, in_mask]
        scratch_shapes = [pltpu.VMEM((rin, cin), jnp.float32)]
        extra_bytes = in_mask.size * 4 + 2 * cin * 4 + rin * cin * 4
    in_specs.append(pl.BlockSpec(out_mask.shape, lambda b: (0, 0)))
    args.append(out_mask)

    out_shape = (jax.ShapeDtypeStruct((B, out_rows, cout), jnp.float32),
                 jax.ShapeDtypeStruct((B, 1, cout), jnp.float32),
                 jax.ShapeDtypeStruct((B, 1, cout), jnp.float32))
    out_specs = (pl.BlockSpec((1, out_rows, cout), lambda b: (b, 0, 0)),
                 pl.BlockSpec((1, 1, cout), lambda b: (b, 0, 0)),
                 pl.BlockSpec((1, 1, cout), lambda b: (b, 0, 0)))

    kernel = functools.partial(_conv3x3_flat_kernel, row0=row0, wt=wt,
                               out_rows=out_rows, preact=preact is not None)

    flops = 2 * B * out_rows * 9 * cin * cout
    bytes_accessed = int(x_flat.size * 4 + w9.size * 2 + out_mask.size * 4
                         + extra_bytes + B * out_rows * cout * 4
                         + 2 * B * cout * 4)
    block_bytes = int(rin * cin * 4 + w9.size * 2 + out_mask.size * 4
                      + extra_bytes + 2 * out_rows * cout * 4 + 4 * cout * 4)
    vmem_limit = int(min(48 << 20, max(16 << 20, 2 * block_bytes + (4 << 20))))

    return pl.pallas_call(
        kernel,
        out_shape=out_shape,
        grid=(B,),
        in_specs=in_specs,
        out_specs=out_specs,
        scratch_shapes=scratch_shapes,
        compiler_params=pltpu.CompilerParams(
            dimension_semantics=("parallel",),
            vmem_limit_bytes=vmem_limit),
        cost_estimate=pl.CostEstimate(flops=flops, transcendentals=0,
                                      bytes_accessed=bytes_accessed),
    )(*args)


def _bn_add_relu_call(y2, x_flat, scale, shift, res_row0):
    B, rows, cout = y2.shape
    rin = x_flat.shape[1]
    kernel = functools.partial(_bn_add_relu_kernel, res_row0=res_row0)
    block_bytes = int((2 * rows * cout + rin * cout + 2 * cout) * 4)
    vmem_limit = int(min(48 << 20, max(16 << 20, 2 * block_bytes + (4 << 20))))
    return pl.pallas_call(
        kernel,
        out_shape=jax.ShapeDtypeStruct((B, rows, cout), jnp.float32),
        grid=(B,),
        in_specs=[pl.BlockSpec((1, rows, cout), lambda b: (b, 0, 0)),
                  pl.BlockSpec((1, rin, cout), lambda b: (b, 0, 0)),
                  pl.BlockSpec(scale.shape, lambda b: (0, 0)),
                  pl.BlockSpec(shift.shape, lambda b: (0, 0))],
        out_specs=pl.BlockSpec((1, rows, cout), lambda b: (b, 0, 0)),
        compiler_params=pltpu.CompilerParams(
            dimension_semantics=("parallel",),
            vmem_limit_bytes=vmem_limit),
        cost_estimate=pl.CostEstimate(
            flops=3 * B * rows * cout, transcendentals=0,
            bytes_accessed=int((2 * y2.size + x_flat.size) * 4)),
    )(y2, x_flat, scale, shift)


# ----------------------------------------------------------------------------
# Layout / BN glue (pure data movement & tiny per-channel math)
# ----------------------------------------------------------------------------
def _prep_weight(w_oihw, cin_p, cout_p):
    # torch (Cout, Cin, kh, kw) -> (9, Cin_p, Cout_p) bf16, tap index = kh*3+kw
    cout, cin = w_oihw.shape[0], w_oihw.shape[1]
    w = jnp.transpose(w_oihw.astype(jnp.float32), (2, 3, 1, 0))
    w = jnp.pad(w, ((0, 0), (0, 0), (0, cin_p - cin), (0, cout_p - cout)))
    return w.reshape(9, cin_p, cout_p).astype(jnp.bfloat16)


def _pad_vec(v, cp):
    return jnp.pad(v.astype(jnp.float32), (0, cp - v.shape[0]))


def _interior_mask(n_rows, wt, row0, h, w, cp):
    # 1.0 on true image positions of an (n_rows, wt) spatial domain, 0.0 on the
    # zero-pad ring / row-wrap junk columns.  Flattened + lane-broadcast.
    i = jnp.arange(n_rows)[:, None]
    j = jnp.arange(wt)[None, :]
    keep = (i >= row0) & (i < row0 + h) & (j >= 1) & (j <= w)
    m = keep.astype(jnp.float32).reshape(n_rows * wt, 1)
    return jnp.broadcast_to(m, (n_rows * wt, cp))


def _bn_affine(ssum, ssq, gamma, beta, count):
    # Reduce per-image partial sums -> training-mode BN as a per-channel affine.
    s = jnp.sum(ssum[:, 0, :], axis=0, keepdims=True)
    q = jnp.sum(ssq[:, 0, :], axis=0, keepdims=True)
    mean = s / count
    var = jnp.maximum(q / count - mean * mean, 0.0)   # biased variance
    scale = gamma[None, :] * lax.rsqrt(var + EPS)
    shift = beta[None, :] - mean * scale
    return scale, shift


def basic_block_forward(x_nchw, params):
    """BasicBlock forward (stride=1, downsample=None). x_nchw: (B, C, H, W)."""
    w1, g1, b1, w2, g2, b2 = params
    B, C, H, W = x_nchw.shape
    assert w1.shape[0] == C and w1.shape[1] == C, "residual add needs planes == inplanes"
    cp = _round_up(C, LANE)
    wt = W + 2
    n_valid = float(B * H * W)

    # NCHW -> flat "(rows, channel-lane)" layout with zero padding.
    x = jnp.transpose(x_nchw, (0, 2, 3, 1)).astype(jnp.float32)
    x_flat = jnp.pad(x, ((0, 0), (TOP, TOP), (1, 1), (0, cp - C)))
    x_flat = x_flat.reshape(B, (H + 2 * TOP) * wt, cp)

    w1f = _prep_weight(w1, cp, cp)
    w2f = _prep_weight(w2, cp, cp)
    g1p, b1p = _pad_vec(g1, cp), _pad_vec(b1, cp)
    g2p, b2p = _pad_vec(g2, cp), _pad_vec(b2, cp)

    # y1 lives on a (H+4) x (W+2) halo domain (image rows sit at 2..H+1).
    rows_y1 = (H + 4) * wt
    rows_y2 = H * wt
    mask_y1 = _interior_mask(H + 4, wt, 2, H, W, cp)
    mask_y2 = _interior_mask(H, wt, 0, H, W, cp)

    # conv1 + bn1 partial stats (no residual / zeros tensor anywhere).
    y1, s1, q1 = _conv_call(x_flat, w1f, rows_y1, (TOP - 2) * wt, wt, mask_y1)
    scale1, shift1 = _bn_affine(s1, q1, g1p, b1p, n_valid)

    # bn1 + ReLU fused as pre-activation inside conv2, + bn2 partial stats.
    y2, s2, q2 = _conv_call(y1, w2f, rows_y2, 2 * wt, wt, mask_y2,
                            preact=(scale1, shift1, mask_y1))
    scale2, shift2 = _bn_affine(s2, q2, g2p, b2p, n_valid)

    # bn2 affine + residual (read from the conv1 input tensor) + ReLU.
    out_flat = _bn_add_relu_call(y2, x_flat, scale2, shift2, TOP * wt)

    out = out_flat.reshape(B, H, wt, cp)[:, :, 1:W + 1, :C]
    return jnp.transpose(out, (0, 3, 1, 2))


# ----------------------------------------------------------------------------
# Pure-JAX f32 reference (module semantics) for verification
# ----------------------------------------------------------------------------
def reference_forward(x_nchw, params):
    w1, g1, b1, w2, g2, b2 = params
    x = jnp.transpose(x_nchw, (0, 2, 3, 1)).astype(jnp.float32)

    def conv(x, w):
        return lax.conv_general_dilated(
            x, jnp.transpose(w, (2, 3, 1, 0)), window_strides=(1, 1),
            padding=((1, 1), (1, 1)), dimension_numbers=("NHWC", "HWIO", "NHWC"))

    def bn(y, g, b):
        m = jnp.mean(y, axis=(0, 1, 2), keepdims=True)
        v = jnp.mean((y - m) ** 2, axis=(0, 1, 2), keepdims=True)
        return (y - m) * lax.rsqrt(v + EPS) * g + b

    y = jax.nn.relu(bn(conv(x, w1), g1, b1))
    y = bn(conv(y, w2), g2, b2)
    y = jax.nn.relu(y + x)
    return jnp.transpose(y, (0, 3, 1, 2))


# ----------------------------------------------------------------------------
if __name__ == "__main__":
    B, C, H, W = 2, 4, 16, 16            # inplanes = planes = 4, stride = 1
    key = jax.random.PRNGKey(0)
    k = jax.random.split(key, 7)

    x = jax.random.normal(k[0], (B, C, H, W), jnp.float32)
    w1 = 0.2 * jax.random.normal(k[1], (C, C, 3, 3), jnp.float32)   # conv1 weight
    w2 = 0.2 * jax.random.normal(k[2], (C, C, 3, 3), jnp.float32)   # conv2 weight
    g1 = 1.0 + 0.1 * jax.random.normal(k[3], (C,), jnp.float32)     # bn1 gamma
    b1 = 0.1 * jax.random.normal(k[4], (C,), jnp.float32)           # bn1 beta
    g2 = 1.0 + 0.1 * jax.random.normal(k[5], (C,), jnp.float32)     # bn2 gamma
    b2 = 0.1 * jax.random.normal(k[6], (C,), jnp.float32)           # bn2 beta
    params = (w1, g1, b1, w2, g2, b2)

    out = jax.block_until_ready(jax.jit(basic_block_forward)(x, params))
    ref = jax.block_until_ready(reference_forward(x, params))

    assert out.shape == (B, C, H, W)
    # bf16 MXU operands vs an all-f32 reference: allow a few 1e-2 of absolute
    # error; genuine bugs would show up as O(0.1 - 1).
    err = float(jnp.max(jnp.abs(out - ref)))
    assert err < 5e-2, f"max abs err = {err}"

    print("KERNEL_OK")
</pallas_src>

<mosaic_0001>
module attributes {stable_mosaic.version = 11 : i64} {
  func.func @_conv3x3_flat_kernel(%arg0: i32, %arg1: memref<1x432x128xf32, #tpu.memory_space<vmem>>, %arg2: memref<9x128x128xbf16, #tpu.memory_space<vmem>>, %arg3: memref<360x128xf32, #tpu.memory_space<vmem>>, %arg4: memref<1x360x128xf32, #tpu.memory_space<vmem>>, %arg5: memref<1x1x128xf32, #tpu.memory_space<vmem>>, %arg6: memref<1x1x128xf32, #tpu.memory_space<vmem>>) attributes {dimension_semantics = [#tpu.dimension_semantics<parallel>], iteration_bounds = array<i64: 2>, scalar_prefetch = 0 : i64, scratch_operands = 0 : i64, tpu.core_type = #tpu.core_type<tc>, window_params = [{transform_indices = @transform_0, window_bounds = array<i64: 1, 432, 128>}, {pipeline_mode = #tpu.pipeline_mode<synchronous>, transform_indices = @transform_1, window_bounds = array<i64: 9, 128, 128>}, {pipeline_mode = #tpu.pipeline_mode<synchronous>, transform_indices = @transform_2, window_bounds = array<i64: 360, 128>}, {transform_indices = @transform_3, window_bounds = array<i64: 1, 360, 128>}, {transform_indices = @transform_4, window_bounds = array<i64: 1, 1, 128>}, {transform_indices = @transform_5, window_bounds = array<i64: 1, 1, 128>}]} {
    %cst = arith.constant 0.000000e+00 : f32
    %0 = vector.broadcast %cst : f32 to vector<360x128xf32>
    %c0 = arith.constant 0 : index
    %c17 = arith.constant 17 : index
    %c0_0 = arith.constant 0 : index
    %1 = vector.load %arg1[%c0, %c17, %c0_0] : memref<1x432x128xf32, #tpu.memory_space<vmem>>, vector<1x360x128xf32>
    %2 = vector.shape_cast %1 : vector<1x360x128xf32> to vector<360x128xf32>
    %3 = arith.truncf %2 : vector<360x128xf32> to vector<360x128xbf16>
    %c0_1 = arith.constant 0 : index
    %c0_2 = arith.constant 0 : index
    %c0_3 = arith.constant 0 : index
    %4 = vector.load %arg2[%c0_1, %c0_2, %c0_3] : memref<9x128x128xbf16, #tpu.memory_space<vmem>>, vector<1x128x128xbf16>
    %5 = vector.shape_cast %4 : vector<1x128x128xbf16> to vector<128x128xbf16>
    %cst_4 = arith.constant dense<0.000000e+00> : vector<360x128xf32>
    %6 = tpu.matmul %3, %5, %cst_4 {dimension_numbers = #tpu.dot_dimension_numbers<[1], [0], [0], [1], [0, 0, 1, 1], [], []>} : vector<360x128xbf16>, vector<128x128xbf16>, vector<360x128xf32> -> vector<360x128xf32>
    %7 = arith.addf %0, %6 : vector<360x128xf32>
    %c0_5 = arith.constant 0 : index
    %c18 = arith.constant 18 : index
    %c0_6 = arith.constant 0 : index
    %8 = vector.load %arg1[%c0_5, %c18, %c0_6] : memref<1x432x128xf32, #tpu.memory_space<vmem>>, vector<1x360x128xf32>
    %9 = vector.shape_cast %8 : vector<1x360x128xf32> to vector<360x128xf32>
    %10 = arith.truncf %9 : vector<360x128xf32> to vector<360x128xbf16>
    %c1 = arith.constant 1 : index
    %c0_7 = arith.constant 0 : index
    %c0_8 = arith.constant 0 : index
    %11 = vector.load %arg2[%c1, %c0_7, %c0_8] : memref<9x128x128xbf16, #tpu.memory_space<vmem>>, vector<1x128x128xbf16>
    %12 = vector.shape_cast %11 : vector<1x128x128xbf16> to vector<128x128xbf16>
    %cst_9 = arith.constant dense<0.000000e+00> : vector<360x128xf32>
    %13 = tpu.matmul %10, %12, %cst_9 {dimension_numbers = #tpu.dot_dimension_numbers<[1], [0], [0], [1], [0, 0, 1, 1], [], []>} : vector<360x128xbf16>, vector<128x128xbf16>, vector<360x128xf32> -> vector<360x128xf32>
    %14 = arith.addf %7, %13 : vector<360x128xf32>
    %c0_10 = arith.constant 0 : index
    %c19 = arith.constant 19 : index
    %c0_11 = arith.constant 0 : index
    %15 = vector.load %arg1[%c0_10, %c19, %c0_11] : memref<1x432x128xf32, #tpu.memory_space<vmem>>, vector<1x360x128xf32>
    %16 = vector.shape_cast %15 : vector<1x360x128xf32> to vector<360x128xf32>
    %17 = arith.truncf %16 : vector<360x128xf32> to vector<360x128xbf16>
    %c2 = arith.constant 2 : index
    %c0_12 = arith.constant 0 : index
    %c0_13 = arith.constant 0 : index
    %18 = vector.load %arg2[%c2, %c0_12, %c0_13] : memref<9x128x128xbf16, #tpu.memory_space<vmem>>, vector<1x128x128xbf16>
    %19 = vector.shape_cast %18 : vector<1x128x128xbf16> to vector<128x128xbf16>
    %cst_14 = arith.constant dense<0.000000e+00> : vector<360x128xf32>
    %20 = tpu.matmul %17, %19, %cst_14 {dimension_numbers = #tpu.dot_dimension_numbers<[1], [0], [0], [1], [0, 0, 1, 1], [], []>} : vector<360x128xbf16>, vector<128x128xbf16>, vector<360x128xf32> -> vector<360x128xf32>
    %21 = arith.addf %14, %20 : vector<360x128xf32>
    %c0_15 = arith.constant 0 : index
    %c35 = arith.constant 35 : index
    %c0_16 = arith.constant 0 : index
    %22 = vector.load %arg1[%c0_15, %c35, %c0_16] : memref<1x432x128xf32, #tpu.memory_space<vmem>>, vector<1x360x128xf32>
    %23 = vector.shape_cast %22 : vector<1x360x128xf32> to vector<360x128xf32>
    %24 = arith.truncf %23 : vector<360x128xf32> to vector<360x128xbf16>
    %c3 = arith.constant 3 : index
    %c0_17 = arith.constant 0 : index
    %c0_18 = arith.constant 0 : index
    %25 = vector.load %arg2[%c3, %c0_17, %c0_18] : memref<9x128x128xbf16, #tpu.memory_space<vmem>>, vector<1x128x128xbf16>
    %26 = vector.shape_cast %25 : vector<1x128x128xbf16> to vector<128x128xbf16>
    %cst_19 = arith.constant dense<0.000000e+00> : vector<360x128xf32>
    %27 = tpu.matmul %24, %26, %cst_19 {dimension_numbers = #tpu.dot_dimension_numbers<[1], [0], [0], [1], [0, 0, 1, 1], [], []>} : vector<360x128xbf16>, vector<128x128xbf16>, vector<360x128xf32> -> vector<360x128xf32>
    %28 = arith.addf %21, %27 : vector<360x128xf32>
    %c0_20 = arith.constant 0 : index
    %c36 = arith.constant 36 : index
    %c0_21 = arith.constant 0 : index
    %29 = vector.load %arg1[%c0_20, %c36, %c0_21] : memref<1x432x128xf32, #tpu.memory_space<vmem>>, vector<1x360x128xf32>
    %30 = vector.shape_cast %29 : vector<1x360x128xf32> to vector<360x128xf32>
    %31 = arith.truncf %30 : vector<360x128xf32> to vector<360x128xbf16>
    %c4 = arith.constant 4 : index
    %c0_22 = arith.constant 0 : index
    %c0_23 = arith.constant 0 : index
    %32 = vector.load %arg2[%c4, %c0_22, %c0_23] : memref<9x128x128xbf16, #tpu.memory_space<vmem>>, vector<1x128x128xbf16>
    %33 = vector.shape_cast %32 : vector<1x128x128xbf16> to vector<128x128xbf16>
    %cst_24 = arith.constant dense<0.000000e+00> : vector<360x128xf32>
    %34 = tpu.matmul %31, %33, %cst_24 {dimension_numbers = #tpu.dot_dimension_numbers<[1], [0], [0], [1], [0, 0, 1, 1], [], []>} : vector<360x128xbf16>, vector<128x128xbf16>, vector<360x128xf32> -> vector<360x128xf32>
    %35 = arith.addf %28, %34 : vector<360x128xf32>
    %c0_25 = arith.constant 0 : index
    %c37 = arith.constant 37 : index
    %c0_26 = arith.constant 0 : index
    %36 = vector.load %arg1[%c0_25, %c37, %c0_26] : memref<1x432x128xf32, #tpu.memory_space<vmem>>, vector<1x360x128xf32>
    %37 = vector.shape_cast %36 : vector<1x360x128xf32> to vector<360x128xf32>
    %38 = arith.truncf %37 : vector<360x128xf32> to vector<360x128xbf16>
    %c5 = arith.constant 5 : index
    %c0_27 = arith.constant 0 : index
    %c0_28 = arith.constant 0 : index
    %39 = vector.load %arg2[%c5, %c0_27, %c0_28] : memref<9x128x128xbf16, #tpu.memory_space<vmem>>, vector<1x128x128xbf16>
    %40 = vector.shape_cast %39 : vector<1x128x128xbf16> to vector<128x128xbf16>
    %cst_29 = arith.constant dense<0.000000e+00> : vector<360x128xf32>
    %41 = tpu.matmul %38, %40, %cst_29 {dimension_numbers = #tpu.dot_dimension_numbers<[1], [0], [0], [1], [0, 0, 1, 1], [], []>} : vector<360x128xbf16>, vector<128x128xbf16>, vector<360x128xf32> -> vector<360x128xf32>
    %42 = arith.addf %35, %41 : vector<360x128xf32>
    %c0_30 = arith.constant 0 : index
    %c53 = arith.constant 53 : index
    %c0_31 = arith.constant 0 : index
    %43 = vector.load %arg1[%c0_30, %c53, %c0_31] : memref<1x432x128xf32, #tpu.memory_space<vmem>>, vector<1x360x128xf32>
    %44 = vector.shape_cast %43 : vector<1x360x128xf32> to vector<360x128xf32>
    %45 = arith.truncf %44 : vector<360x128xf32> to vector<360x128xbf16>
    %c6 = arith.constant 6 : index
    %c0_32 = arith.constant 0 : index
    %c0_33 = arith.constant 0 : index
    %46 = vector.load %arg2[%c6, %c0_32, %c0_33] : memref<9x128x128xbf16, #tpu.memory_space<vmem>>, vector<1x128x128xbf16>
    %47 = vector.shape_cast %46 : vector<1x128x128xbf16> to vector<128x128xbf16>
    %cst_34 = arith.constant dense<0.000000e+00> : vector<360x128xf32>
    %48 = tpu.matmul %45, %47, %cst_34 {dimension_numbers = #tpu.dot_dimension_numbers<[1], [0], [0], [1], [0, 0, 1, 1], [], []>} : vector<360x128xbf16>, vector<128x128xbf16>, vector<360x128xf32> -> vector<360x128xf32>
    %49 = arith.addf %42, %48 : vector<360x128xf32>
    %c0_35 = arith.constant 0 : index
    %c54 = arith.constant 54 : index
    %c0_36 = arith.constant 0 : index
    %50 = vector.load %arg1[%c0_35, %c54, %c0_36] : memref<1x432x128xf32, #tpu.memory_space<vmem>>, vector<1x360x128xf32>
    %51 = vector.shape_cast %50 : vector<1x360x128xf32> to vector<360x128xf32>
    %52 = arith.truncf %51 : vector<360x128xf32> to vector<360x128xbf16>
    %c7 = arith.constant 7 : index
    %c0_37 = arith.constant 0 : index
    %c0_38 = arith.constant 0 : index
    %53 = vector.load %arg2[%c7, %c0_37, %c0_38] : memref<9x128x128xbf16, #tpu.memory_space<vmem>>, vector<1x128x128xbf16>
    %54 = vector.shape_cast %53 : vector<1x128x128xbf16> to vector<128x128xbf16>
    %cst_39 = arith.constant dense<0.000000e+00> : vector<360x128xf32>
    %55 = tpu.matmul %52, %54, %cst_39 {dimension_numbers = #tpu.dot_dimension_numbers<[1], [0], [0], [1], [0, 0, 1, 1], [], []>} : vector<360x128xbf16>, vector<128x128xbf16>, vector<360x128xf32> -> vector<360x128xf32>
    %56 = arith.addf %49, %55 : vector<360x128xf32>
    %c0_40 = arith.constant 0 : index
    %c55 = arith.constant 55 : index
    %c0_41 = arith.constant 0 : index
    %57 = vector.load %arg1[%c0_40, %c55, %c0_41] : memref<1x432x128xf32, #tpu.memory_space<vmem>>, vector<1x360x128xf32>
    %58 = vector.shape_cast %57 : vector<1x360x128xf32> to vector<360x128xf32>
    %59 = arith.truncf %58 : vector<360x128xf32> to vector<360x128xbf16>
    %c8 = arith.constant 8 : index
    %c0_42 = arith.constant 0 : index
    %c0_43 = arith.constant 0 : index
    %60 = vector.load %arg2[%c8, %c0_42, %c0_43] : memref<9x128x128xbf16, #tpu.memory_space<vmem>>, vector<1x128x128xbf16>
    %61 = vector.shape_cast %60 : vector<1x128x128xbf16> to vector<128x128xbf16>
    %cst_44 = arith.constant dense<0.000000e+00> : vector<360x128xf32>
    %62 = tpu.matmul %59, %61, %cst_44 {dimension_numbers = #tpu.dot_dimension_numbers<[1], [0], [0], [1], [0, 0, 1, 1], [], []>} : vector<360x128xbf16>, vector<128x128xbf16>, vector<360x128xf32> -> vector<360x128xf32>
    %63 = arith.addf %56, %62 : vector<360x128xf32>
    %c0_45 = arith.constant 0 : index
    %c0_46 = arith.constant 0 : index
    %64 = vector.load %arg3[%c0_45, %c0_46] : memref<360x128xf32, #tpu.memory_space<vmem>>, vector<360x128xf32>
    %65 = arith.mulf %63, %64 : vector<360x128xf32>
    %cst_47 = arith.constant dense<0.000000e+00> : vector<128xf32>
    %66 = vector.multi_reduction <add>, %65, %cst_47 [0] : vector<360x128xf32> to vector<128xf32>
    %67 = vector.shape_cast %66 : vector<128xf32> to vector<1x128xf32>
    %c0_48 = arith.constant 0 : index
    %c0_49 = arith.constant 0 : index
    %c0_50 = arith.constant 0 : index
    %68 = vector.load %arg5[%c0_48, %c0_49, %c0_50] : memref<1x1x128xf32, #tpu.memory_space<vmem>>, vector<1x1x128xf32>
    %69 = vector.shape_cast %68 : vector<1x1x128xf32> to vector<1x128xf32>
    %70 = vector.shape_cast %67 : vector<1x128xf32> to vector<1x1x128xf32>
    tpu.vector_store %arg5[%c0_48, %c0_49, %c0_50], %70 {strides = array<i32>} : memref<1x1x128xf32, #tpu.memory_space<vmem>>, vector<1x1x128xf32>,
    %71 = arith.mulf %65, %65 : vector<360x128xf32>
    %cst_51 = arith.constant dense<0.000000e+00> : vector<128xf32>
    %72 = vector.multi_reduction <add>, %71, %cst_51 [0] : vector<360x128xf32> to vector<128xf32>
    %73 = vector.shape_cast %72 : vector<128xf32> to vector<1x128xf32>
    %c0_52 = arith.constant 0 : index
    %c0_53 = arith.constant 0 : index
    %c0_54 = arith.constant 0 : index
    %74 = vector.load %arg6[%c0_52, %c0_53, %c0_54] : memref<1x1x128xf32, #tpu.memory_space<vmem>>, vector<1x1x128xf32>
    %75 = vector.shape_cast %74 : vector<1x1x128xf32> to vector<1x128xf32>
    %76 = vector.shape_cast %73 : vector<1x128xf32> to vector<1x1x128xf32>
    tpu.vector_store %arg6[%c0_52, %c0_53, %c0_54], %76 {strides = array<i32>} : memref<1x1x128xf32, #tpu.memory_space<vmem>>, vector<1x1x128xf32>,
    %c0_55 = arith.constant 0 : index
    %c0_56 = arith.constant 0 : index
    %c0_57 = arith.constant 0 : index
    %77 = vector.load %arg4[%c0_55, %c0_56, %c0_57] : memref<1x360x128xf32, #tpu.memory_space<vmem>>, vector<1x360x128xf32>
    %78 = vector.shape_cast %77 : vector<1x360x128xf32> to vector<360x128xf32>
    %79 = vector.shape_cast %65 : vector<360x128xf32> to vector<1x360x128xf32>
    tpu.vector_store %arg4[%c0_55, %c0_56, %c0_57], %79 {strides = array<i32>} : memref<1x360x128xf32, #tpu.memory_space<vmem>>, vector<1x360x128xf32>,
    return
  }
  func.func @transform_0(%arg0: i32) -> (i32, i32, i32) {
    %c0_i32 = arith.constant 0 : i32
    %c0_i32_0 = arith.constant 0 : i32
    %c0_i32_1 = arith.constant 0 : i32
    return %arg0, %c0_i32, %c0_i32_0 : i32, i32, i32
  }
  func.func @transform_1(%arg0: i32) -> (i32, i32, i32) {
    %c0_i32 = arith.constant 0 : i32
    %c0_i32_0 = arith.constant 0 : i32
    %c0_i32_1 = arith.constant 0 : i32
    %c0_i32_2 = arith.constant 0 : i32
    return %c0_i32, %c0_i32_0, %c0_i32_1 : i32, i32, i32
  }
  func.func @transform_2(%arg0: i32) -> (i32, i32) {
    %c0_i32 = arith.constant 0 : i32
    %c0_i32_0 = arith.constant 0 : i32
    %c0_i32_1 = arith.constant 0 : i32
    return %c0_i32, %c0_i32_0 : i32, i32
  }
  func.func @transform_3(%arg0: i32) -> (i32, i32, i32) {
    %c0_i32 = arith.constant 0 : i32
    %c0_i32_0 = arith.constant 0 : i32
    %c0_i32_1 = arith.constant 0 : i32
    return %arg0, %c0_i32, %c0_i32_0 : i32, i32, i32
  }
  func.func @transform_4(%arg0: i32) -> (i32, i32, i32) {
    %c0_i32 = arith.constant 0 : i32
    %c0_i32_0 = arith.constant 0 : i32
    %c0_i32_1 = arith.constant 0 : i32
    return %arg0, %c0_i32, %c0_i32_0 : i32, i32, i32
  }
  func.func @transform_5(%arg0: i32) -> (i32, i32, i32) {
    %c0_i32 = arith.constant 0 : i32
    %c0_i32_0 = arith.constant 0 : i32
    %c0_i32_1 = arith.constant 0 : i32
    return %arg0, %c0_i32, %c0_i32_0 : i32, i32, i32
  }
}

module attributes {stable_mosaic.version = 11 : i64} {
  func.func @_bn_add_relu_kernel(%arg0: i32, %arg1: memref<1x288x128xf32, #tpu.memory_space<vmem>>, %arg2: memref<1x432x128xf32, #tpu.memory_space<vmem>>, %arg3: memref<1x128xf32, #tpu.memory_space<vmem>>, %arg4: memref<1x128xf32, #tpu.memory_space<vmem>>, %arg5: memref<1x288x128xf32, #tpu.memory_space<vmem>>) attributes {dimension_semantics = [#tpu.dimension_semantics<parallel>], iteration_bounds = array<i64: 2>, scalar_prefetch = 0 : i64, scratch_operands = 0 : i64, tpu.core_type = #tpu.core_type<tc>, window_params = [{transform_indices = @transform_0, window_bounds = array<i64: 1, 288, 128>}, {transform_indices = @transform_1, window_bounds = array<i64: 1, 432, 128>}, {pipeline_mode = #tpu.pipeline_mode<synchronous>, transform_indices = @transform_2, window_bounds = array<i64: 1, 128>}, {pipeline_mode = #tpu.pipeline_mode<synchronous>, transform_indices = @transform_3, window_bounds = array<i64: 1, 128>}, {transform_indices = @transform_4, window_bounds = array<i64: 1, 288, 128>}]} {
    %c0 = arith.constant 0 : index
    %c0_0 = arith.constant 0 : index
    %c0_1 = arith.constant 0 : index
    %0 = vector.load %arg1[%c0, %c0_0, %c0_1] : memref<1x288x128xf32, #tpu.memory_space<vmem>>, vector<1x288x128xf32>
    %1 = vector.shape_cast %0 : vector<1x288x128xf32> to vector<288x128xf32>
    %c0_2 = arith.constant 0 : index
    %c72 = arith.constant 72 : index
    %c0_3 = arith.constant 0 : index
    %2 = vector.load %arg2[%c0_2, %c72, %c0_3] : memref<1x432x128xf32, #tpu.memory_space<vmem>>, vector<1x288x128xf32>
    %3 = vector.shape_cast %2 : vector<1x288x128xf32> to vector<288x128xf32>
    %c0_4 = arith.constant 0 : index
    %c0_5 = arith.constant 0 : index
    %4 = vector.load %arg3[%c0_4, %c0_5] : memref<1x128xf32, #tpu.memory_space<vmem>>, vector<1x128xf32>
    %5 = vector.broadcast %4 : vector<1x128xf32> to vector<288x128xf32>
    %6 = arith.mulf %1, %5 : vector<288x128xf32>
    %c0_6 = arith.constant 0 : index
    %c0_7 = arith.constant 0 : index
    %7 = vector.load %arg4[%c0_6, %c0_7] : memref<1x128xf32, #tpu.memory_space<vmem>>, vector<1x128xf32>
    %8 = vector.broadcast %7 : vector<1x128xf32> to vector<288x128xf32>
    %9 = arith.addf %6, %8 : vector<288x128xf32>
    %10 = arith.addf %9, %3 : vector<288x128xf32>
    %cst = arith.constant 0.000000e+00 : f32
    %11 = vector.broadcast %cst : f32 to vector<288x128xf32>
    %12 = arith.maximumf %10, %11 : vector<288x128xf32>
    %c0_8 = arith.constant 0 : index
    %c0_9 = arith.constant 0 : index
    %c0_10 = arith.constant 0 : index
    %13 = vector.load %arg5[%c0_8, %c0_9, %c0_10] : memref<1x288x128xf32, #tpu.memory_space<vmem>>, vector<1x288x128xf32>
    %14 = vector.shape_cast %13 : vector<1x288x128xf32> to vector<288x128xf32>
    %15 = vector.shape_cast %12 : vector<288x128xf32> to vector<1x288x128xf32>
    tpu.vector_store %arg5[%c0_8, %c0_9, %c0_10], %15 {strides = array<i32>} : memref<1x288x128xf32, #tpu.memory_space<vmem>>, vector<1x288x128xf32>,
    return
  }
  func.func @transform_0(%arg0: i32) -> (i32, i32, i32) {
    %c0_i32 = arith.constant 0 : i32
    %c0_i32_0 = arith.constant 0 : i32
    %c0_i32_1 = arith.constant 0 : i32
    return %arg0, %c0_i32, %c0_i32_0 : i32, i32, i32
  }
  func.func @transform_1(%arg0: i32) -> (i32, i32, i32) {
    %c0_i32 = arith.constant 0 : i32
    %c0_i32_0 = arith.constant 0 : i32
    %c0_i32_1 = arith.constant 0 : i32
    return %arg0, %c0_i32, %c0_i32_0 : i32, i32, i32
  }
  func.func @transform_2(%arg0: i32) -> (i32, i32) {
    %c0_i32 = arith.constant 0 : i32
    %c0_i32_0 = arith.constant 0 : i32
    %c0_i32_1 = arith.constant 0 : i32
    return %c0_i32, %c0_i32_0 : i32, i32
  }
  func.func @transform_3(%arg0: i32) -> (i32, i32) {
    %c0_i32 = arith.constant 0 : i32
    %c0_i32_0 = arith.constant 0 : i32
    %c0_i32_1 = arith.constant 0 : i32
    return %c0_i32, %c0_i32_0 : i32, i32
  }
  func.func @transform_4(%arg0: i32) -> (i32, i32, i32) {
    %c0_i32 = arith.constant 0 : i32
    %c0_i32_0 = arith.constant 0 : i32
    %c0_i32_1 = arith.constant 0 : i32
    return %arg0, %c0_i32, %c0_i32_0 : i32, i32, i32
  }
}

module attributes {stable_mosaic.version = 11 : i64} {
  func.func @_conv3x3_flat_kernel(%arg0: i32, %arg1: memref<1x360x128xf32, #tpu.memory_space<vmem>>, %arg2: memref<9x128x128xbf16, #tpu.memory_space<vmem>>, %arg3: memref<1x128xf32, #tpu.memory_space<vmem>>, %arg4: memref<1x128xf32, #tpu.memory_space<vmem>>, %arg5: memref<360x128xf32, #tpu.memory_space<vmem>>, %arg6: memref<288x128xf32, #tpu.memory_space<vmem>>, %arg7: memref<1x288x128xf32, #tpu.memory_space<vmem>>, %arg8: memref<1x1x128xf32, #tpu.memory_space<vmem>>, %arg9: memref<1x1x128xf32, #tpu.memory_space<vmem>>, %arg10: memref<360x128xf32, #tpu.memory_space<vmem>>) attributes {dimension_semantics = [#tpu.dimension_semantics<parallel>], iteration_bounds = array<i64: 2>, scalar_prefetch = 0 : i64, scratch_operands = 1 : i64, tpu.core_type = #tpu.core_type<tc>, window_params = [{transform_indices = @transform_0, window_bounds = array<i64: 1, 360, 128>}, {pipeline_mode = #tpu.pipeline_mode<synchronous>, transform_indices = @transform_1, window_bounds = array<i64: 9, 128, 128>}, {pipeline_mode = #tpu.pipeline_mode<synchronous>, transform_indices = @transform_2, window_bounds = array<i64: 1, 128>}, {pipeline_mode = #tpu.pipeline_mode<synchronous>, transform_indices = @transform_3, window_bounds = array<i64: 1, 128>}, {pipeline_mode = #tpu.pipeline_mode<synchronous>, transform_indices = @transform_4, window_bounds = array<i64: 360, 128>}, {pipeline_mode = #tpu.pipeline_mode<synchronous>, transform_indices = @transform_5, window_bounds = array<i64: 288, 128>}, {transform_indices = @transform_6, window_bounds = array<i64: 1, 288, 128>}, {transform_indices = @transform_7, window_bounds = array<i64: 1, 1, 128>}, {transform_indices = @transform_8, window_bounds = array<i64: 1, 1, 128>}]} {
    %c0 = arith.constant 0 : index
    %c0_0 = arith.constant 0 : index
    %c0_1 = arith.constant 0 : index
    %0 = vector.load %arg1[%c0, %c0_0, %c0_1] : memref<1x360x128xf32, #tpu.memory_space<vmem>>, vector<1x360x128xf32>
    %1 = vector.shape_cast %0 : vector<1x360x128xf32> to vector<360x128xf32>
    %c0_2 = arith.constant 0 : index
    %c0_3 = arith.constant 0 : index
    %2 = vector.load %arg3[%c0_2, %c0_3] : memref<1x128xf32, #tpu.memory_space<vmem>>, vector<1x128xf32>
    %3 = vector.broadcast %2 : vector<1x128xf32> to vector<360x128xf32>
    %4 = arith.mulf %1, %3 : vector<360x128xf32>
    %c0_4 = arith.constant 0 : index
    %c0_5 = arith.constant 0 : index
    %5 = vector.load %arg4[%c0_4, %c0_5] : memref<1x128xf32, #tpu.memory_space<vmem>>, vector<1x128xf32>
    %6 = vector.broadcast %5 : vector<1x128xf32> to vector<360x128xf32>
    %7 = arith.addf %4, %6 : vector<360x128xf32>
    %cst = arith.constant 0.000000e+00 : f32
    %8 = vector.broadcast %cst : f32 to vector<360x128xf32>
    %9 = arith.maximumf %7, %8 : vector<360x128xf32>
    %c0_6 = arith.constant 0 : index
    %c0_7 = arith.constant 0 : index
    %10 = vector.load %arg5[%c0_6, %c0_7] : memref<360x128xf32, #tpu.memory_space<vmem>>, vector<360x128xf32>
    %11 = arith.mulf %9, %10 : vector<360x128xf32>
    %c0_8 = arith.constant 0 : index
    %c0_9 = arith.constant 0 : index
    %12 = vector.load %arg10[%c0_8, %c0_9] : memref<360x128xf32, #tpu.memory_space<vmem>>, vector<360x128xf32>
    tpu.vector_store %arg10[%c0_8, %c0_9], %11 {strides = array<i32>} : memref<360x128xf32, #tpu.memory_space<vmem>>, vector<360x128xf32>,
    %cst_10 = arith.constant 0.000000e+00 : f32
    %13 = vector.broadcast %cst_10 : f32 to vector<288x128xf32>
    %c17 = arith.constant 17 : index
    %c0_11 = arith.constant 0 : index
    %14 = vector.load %arg10[%c17, %c0_11] : memref<360x128xf32, #tpu.memory_space<vmem>>, vector<288x128xf32>
    %15 = arith.truncf %14 : vector<288x128xf32> to vector<288x128xbf16>
    %c0_12 = arith.constant 0 : index
    %c0_13 = arith.constant 0 : index
    %c0_14 = arith.constant 0 : index
    %16 = vector.load %arg2[%c0_12, %c0_13, %c0_14] : memref<9x128x128xbf16, #tpu.memory_space<vmem>>, vector<1x128x128xbf16>
    %17 = vector.shape_cast %16 : vector<1x128x128xbf16> to vector<128x128xbf16>
    %cst_15 = arith.constant dense<0.000000e+00> : vector<288x128xf32>
    %18 = tpu.matmul %15, %17, %cst_15 {dimension_numbers = #tpu.dot_dimension_numbers<[1], [0], [0], [1], [0, 0, 1, 1], [], []>} : vector<288x128xbf16>, vector<128x128xbf16>, vector<288x128xf32> -> vector<288x128xf32>
    %19 = arith.addf %13, %18 : vector<288x128xf32>
    %c18 = arith.constant 18 : index
    %c0_16 = arith.constant 0 : index
    %20 = vector.load %arg10[%c18, %c0_16] : memref<360x128xf32, #tpu.memory_space<vmem>>, vector<288x128xf32>
    %21 = arith.truncf %20 : vector<288x128xf32> to vector<288x128xbf16>
    %c1 = arith.constant 1 : index
    %c0_17 = arith.constant 0 : index
    %c0_18 = arith.constant 0 : index
    %22 = vector.load %arg2[%c1, %c0_17, %c0_18] : memref<9x128x128xbf16, #tpu.memory_space<vmem>>, vector<1x128x128xbf16>
    %23 = vector.shape_cast %22 : vector<1x128x128xbf16> to vector<128x128xbf16>
    %cst_19 = arith.constant dense<0.000000e+00> : vector<288x128xf32>
    %24 = tpu.matmul %21, %23, %cst_19 {dimension_numbers = #tpu.dot_dimension_numbers<[1], [0], [0], [1], [0, 0, 1, 1], [], []>} : vector<288x128xbf16>, vector<128x128xbf16>, vector<288x128xf32> -> vector<288x128xf32>
    %25 = arith.addf %19, %24 : vector<288x128xf32>
    %c19 = arith.constant 19 : index
    %c0_20 = arith.constant 0 : index
    %26 = vector.load %arg10[%c19, %c0_20] : memref<360x128xf32, #tpu.memory_space<vmem>>, vector<288x128xf32>
    %27 = arith.truncf %26 : vector<288x128xf32> to vector<288x128xbf16>
    %c2 = arith.constant 2 : index
    %c0_21 = arith.constant 0 : index
    %c0_22 = arith.constant 0 : index
    %28 = vector.load %arg2[%c2, %c0_21, %c0_22] : memref<9x128x128xbf16, #tpu.memory_space<vmem>>, vector<1x128x128xbf16>
    %29 = vector.shape_cast %28 : vector<1x128x128xbf16> to vector<128x128xbf16>
    %cst_23 = arith.constant dense<0.000000e+00> : vector<288x128xf32>
    %30 = tpu.matmul %27, %29, %cst_23 {dimension_numbers = #tpu.dot_dimension_numbers<[1], [0], [0], [1], [0, 0, 1, 1], [], []>} : vector<288x128xbf16>, vector<128x128xbf16>, vector<288x128xf32> -> vector<288x128xf32>
    %31 = arith.addf %25, %30 : vector<288x128xf32>
    %c35 = arith.constant 35 : index
    %c0_24 = arith.constant 0 : index
    %32 = vector.load %arg10[%c35, %c0_24] : memref<360x128xf32, #tpu.memory_space<vmem>>, vector<288x128xf32>
    %33 = arith.truncf %32 : vector<288x128xf32> to vector<288x128xbf16>
    %c3 = arith.constant 3 : index
    %c0_25 = arith.constant 0 : index
    %c0_26 = arith.constant 0 : index
    %34 = vector.load %arg2[%c3, %c0_25, %c0_26] : memref<9x128x128xbf16, #tpu.memory_space<vmem>>, vector<1x128x128xbf16>
    %35 = vector.shape_cast %34 : vector<1x128x128xbf16> to vector<128x128xbf16>
    %cst_27 = arith.constant dense<0.000000e+00> : vector<288x128xf32>
    %36 = tpu.matmul %33, %35, %cst_27 {dimension_numbers = #tpu.dot_dimension_numbers<[1], [0], [0], [1], [0, 0, 1, 1], [], []>} : vector<288x128xbf16>, vector<128x128xbf16>, vector<288x128xf32> -> vector<288x128xf32>
    %37 = arith.addf %31, %36 : vector<288x128xf32>
    %c36 = arith.constant 36 : index
    %c0_28 = arith.constant 0 : index
    %38 = vector.load %arg10[%c36, %c0_28] : memref<360x128xf32, #tpu.memory_space<vmem>>, vector<288x128xf32>
    %39 = arith.truncf %38 : vector<288x128xf32> to vector<288x128xbf16>
    %c4 = arith.constant 4 : index
    %c0_29 = arith.constant 0 : index
    %c0_30 = arith.constant 0 : index
    %40 = vector.load %arg2[%c4, %c0_29, %c0_30] : memref<9x128x128xbf16, #tpu.memory_space<vmem>>, vector<1x128x128xbf16>
    %41 = vector.shape_cast %40 : vector<1x128x128xbf16> to vector<128x128xbf16>
    %cst_31 = arith.constant dense<0.000000e+00> : vector<288x128xf32>
    %42 = tpu.matmul %39, %41, %cst_31 {dimension_numbers = #tpu.dot_dimension_numbers<[1], [0], [0], [1], [0, 0, 1, 1], [], []>} : vector<288x128xbf16>, vector<128x128xbf16>, vector<288x128xf32> -> vector<288x128xf32>
    %43 = arith.addf %37, %42 : vector<288x128xf32>
    %c37 = arith.constant 37 : index
    %c0_32 = arith.constant 0 : index
    %44 = vector.load %arg10[%c37, %c0_32] : memref<360x128xf32, #tpu.memory_space<vmem>>, vector<288x128xf32>
    %45 = arith.truncf %44 : vector<288x128xf32> to vector<288x128xbf16>
    %c5 = arith.constant 5 : index
    %c0_33 = arith.constant 0 : index
    %c0_34 = arith.constant 0 : index
    %46 = vector.load %arg2[%c5, %c0_33, %c0_34] : memref<9x128x128xbf16, #tpu.memory_space<vmem>>, vector<1x128x128xbf16>
    %47 = vector.shape_cast %46 : vector<1x128x128xbf16> to vector<128x128xbf16>
    %cst_35 = arith.constant dense<0.000000e+00> : vector<288x128xf32>
    %48 = tpu.matmul %45, %47, %cst_35 {dimension_numbers = #tpu.dot_dimension_numbers<[1], [0], [0], [1], [0, 0, 1, 1], [], []>} : vector<288x128xbf16>, vector<128x128xbf16>, vector<288x128xf32> -> vector<288x128xf32>
    %49 = arith.addf %43, %48 : vector<288x128xf32>
    %c53 = arith.constant 53 : index
    %c0_36 = arith.constant 0 : index
    %50 = vector.load %arg10[%c53, %c0_36] : memref<360x128xf32, #tpu.memory_space<vmem>>, vector<288x128xf32>
    %51 = arith.truncf %50 : vector<288x128xf32> to vector<288x128xbf16>
    %c6 = arith.constant 6 : index
    %c0_37 = arith.constant 0 : index
    %c0_38 = arith.constant 0 : index
    %52 = vector.load %arg2[%c6, %c0_37, %c0_38] : memref<9x128x128xbf16, #tpu.memory_space<vmem>>, vector<1x128x128xbf16>
    %53 = vector.shape_cast %52 : vector<1x128x128xbf16> to vector<128x128xbf16>
    %cst_39 = arith.constant dense<0.000000e+00> : vector<288x128xf32>
    %54 = tpu.matmul %51, %53, %cst_39 {dimension_numbers = #tpu.dot_dimension_numbers<[1], [0], [0], [1], [0, 0, 1, 1], [], []>} : vector<288x128xbf16>, vector<128x128xbf16>, vector<288x128xf32> -> vector<288x128xf32>
    %55 = arith.addf %49, %54 : vector<288x128xf32>
    %c54 = arith.constant 54 : index
    %c0_40 = arith.constant 0 : index
    %56 = vector.load %arg10[%c54, %c0_40] : memref<360x128xf32, #tpu.memory_space<vmem>>, vector<288x128xf32>
    %57 = arith.truncf %56 : vector<288x128xf32> to vector<288x128xbf16>
    %c7 = arith.constant 7 : index
    %c0_41 = arith.constant 0 : index
    %c0_42 = arith.constant 0 : index
    %58 = vector.load %arg2[%c7, %c0_41, %c0_42] : memref<9x128x128xbf16, #tpu.memory_space<vmem>>, vector<1x128x128xbf16>
    %59 = vector.shape_cast %58 : vector<1x128x128xbf16> to vector<128x128xbf16>
    %cst_43 = arith.constant dense<0.000000e+00> : vector<288x128xf32>
    %60 = tpu.matmul %57, %59, %cst_43 {dimension_numbers = #tpu.dot_dimension_numbers<[1], [0], [0], [1], [0, 0, 1, 1], [], []>} : vector<288x128xbf16>, vector<128x128xbf16>, vector<288x128xf32> -> vector<288x128xf32>
    %61 = arith.addf %55, %60 : vector<288x128xf32>
    %c55 = arith.constant 55 : index
    %c0_44 = arith.constant 0 : index
    %62 = vector.load %arg10[%c55, %c0_44] : memref<360x128xf32, #tpu.memory_space<vmem>>, vector<288x128xf32>
    %63 = arith.truncf %62 : vector<288x128xf32> to vector<288x128xbf16>
    %c8 = arith.constant 8 : index
    %c0_45 = arith.constant 0 : index
    %c0_46 = arith.constant 0 : index
    %64 = vector.load %arg2[%c8, %c0_45, %c0_46] : memref<9x128x128xbf16, #tpu.memory_space<vmem>>, vector<1x128x128xbf16>
    %65 = vector.shape_cast %64 : vector<1x128x128xbf16> to vector<128x128xbf16>
    %cst_47 = arith.constant dense<0.000000e+00> : vector<288x128xf32>
    %66 = tpu.matmul %63, %65, %cst_47 {dimension_numbers = #tpu.dot_dimension_numbers<[1], [0], [0], [1], [0, 0, 1, 1], [], []>} : vector<288x128xbf16>, vector<128x128xbf16>, vector<288x128xf32> -> vector<288x128xf32>
    %67 = arith.addf %61, %66 : vector<288x128xf32>
    %c0_48 = arith.constant 0 : index
    %c0_49 = arith.constant 0 : index
    %68 = vector.load %arg6[%c0_48, %c0_49] : memref<288x128xf32, #tpu.memory_space<vmem>>, vector<288x128xf32>
    %69 = arith.mulf %67, %68 : vector<288x128xf32>
    %cst_50 = arith.constant dense<0.000000e+00> : vector<128xf32>
    %70 = vector.multi_reduction <add>, %69, %cst_50 [0] : vector<288x128xf32> to vector<128xf32>
    %71 = vector.shape_cast %70 : vector<128xf32> to vector<1x128xf32>
    %c0_51 = arith.constant 0 : index
    %c0_52 = arith.constant 0 : index
    %c0_53 = arith.constant 0 : index
    %72 = vector.load %arg8[%c0_51, %c0_52, %c0_53] : memref<1x1x128xf32, #tpu.memory_space<vmem>>, vector<1x1x128xf32>
    %73 = vector.shape_cast %72 : vector<1x1x128xf32> to vector<1x128xf32>
    %74 = vector.shape_cast %71 : vector<1x128xf32> to vector<1x1x128xf32>
    tpu.vector_store %arg8[%c0_51, %c0_52, %c0_53], %74 {strides = array<i32>} : memref<1x1x128xf32, #tpu.memory_space<vmem>>, vector<1x1x128xf32>,
    %75 = arith.mulf %69, %69 : vector<288x128xf32>
    %cst_54 = arith.constant dense<0.000000e+00> : vector<128xf32>
    %76 = vector.multi_reduction <add>, %75, %cst_54 [0] : vector<288x128xf32> to vector<128xf32>
    %77 = vector.shape_cast %76 : vector<128xf32> to vector<1x128xf32>
    %c0_55 = arith.constant 0 : index
    %c0_56 = arith.constant 0 : index
    %c0_57 = arith.constant 0 : index
    %78 = vector.load %arg9[%c0_55, %c0_56, %c0_57] : memref<1x1x128xf32, #tpu.memory_space<vmem>>, vector<1x1x128xf32>
    %79 = vector.shape_cast %78 : vector<1x1x128xf32> to vector<1x128xf32>
    %80 = vector.shape_cast %77 : vector<1x128xf32> to vector<1x1x128xf32>
    tpu.vector_store %arg9[%c0_55, %c0_56, %c0_57], %80 {strides = array<i32>} : memref<1x1x128xf32, #tpu.memory_space<vmem>>, vector<1x1x128xf32>,
    %c0_58 = arith.constant 0 : index
    %c0_59 = arith.constant 0 : index
    %c0_60 = arith.constant 0 : index
    %81 = vector.load %arg7[%c0_58, %c0_59, %c0_60] : memref<1x288x128xf32, #tpu.memory_space<vmem>>, vector<1x288x128xf32>
    %82 = vector.shape_cast %81 : vector<1x288x128xf32> to vector<288x128xf32>
    %83 = vector.shape_cast %69 : vector<288x128xf32> to vector<1x288x128xf32>
    tpu.vector_store %arg7[%c0_58, %c0_59, %c0_60], %83 {strides = array<i32>} : memref<1x288x128xf32, #tpu.memory_space<vmem>>, vector<1x288x128xf32>,
    return
  }
  func.func @transform_0(%arg0: i32) -> (i32, i32, i32) {
    %c0_i32 = arith.constant 0 : i32
    %c0_i32_0 = arith.constant 0 : i32
    %c0_i32_1 = arith.constant 0 : i32
    return %arg0, %c0_i32, %c0_i32_0 : i32, i32, i32
  }
  func.func @transform_1(%arg0: i32) -> (i32, i32, i32) {
    %c0_i32 = arith.constant 0 : i32
    %c0_i32_0 = arith.constant 0 : i32
    %c0_i32_1 = arith.constant 0 : i32
    %c0_i32_2 = arith.constant 0 : i32
    return %c0_i32, %c0_i32_0, %c0_i32_1 : i32, i32, i32
  }
  func.func @transform_2(%arg0: i32) -> (i32, i32) {
    %c0_i32 = arith.constant 0 : i32
    %c0_i32_0 = arith.constant 0 : i32
    %c0_i32_1 = arith.constant 0 : i32
    return %c0_i32, %c0_i32_0 : i32, i32
  }
  func.func @transform_3(%arg0: i32) -> (i32, i32) {
    %c0_i32 = arith.constant 0 : i32
    %c0_i32_0 = arith.constant 0 : i32
    %c0_i32_1 = arith.constant 0 : i32
    return %c0_i32, %c0_i32_0 : i32, i32
  }
  func.func @transform_4(%arg0: i32) -> (i32, i32) {
    %c0_i32 = arith.constant 0 : i32
    %c0_i32_0 = arith.constant 0 : i32
    %c0_i32_1 = arith.constant 0 : i32
    return %c0_i32, %c0_i32_0 : i32, i32
  }
  func.func @transform_5(%arg0: i32) -> (i32, i32) {
    %c0_i32 = arith.constant 0 : i32
    %c0_i32_0 = arith.constant 0 : i32
    %c0_i32_1 = arith.constant 0 : i32
    return %c0_i32, %c0_i32_0 : i32, i32
  }
  func.func @transform_6(%arg0: i32) -> (i32, i32, i32) {
    %c0_i32 = arith.constant 0 : i32
    %c0_i32_0 = arith.constant 0 : i32
    %c0_i32_1 = arith.constant 0 : i32
    return %arg0, %c0_i32, %c0_i32_0 : i32, i32, i32
  }
  func.func @transform_7(%arg0: i32) -> (i32, i32, i32) {
    %c0_i32 = arith.constant 0 : i32
    %c0_i32_0 = arith.constant 0 : i32
    %c0_i32_1 = arith.constant 0 : i32
    return %arg0, %c0_i32, %c0_i32_0 : i32, i32, i32
  }
  func.func @transform_8(%arg0: i32) -> (i32, i32, i32) {
    %c0_i32 = arith.constant 0 : i32
    %c0_i32_0 = arith.constant 0 : i32
    %c0_i32_1 = arith.constant 0 : i32
    return %arg0, %c0_i32, %c0_i32_0 : i32, i32, i32
  }
}

</mosaic_0001>

<llo_original>
// kernel: basic_block_forward.5
$region0: #{basic_block_forward.5}
  #allocation0 [shape = 'u32[]', space=smem, size = 0x4, offset = 0x4, fixed_abs, tag = 'smem constant byte address 0x4 - core index']
  #allocation1 [shape = 'u32[144,128]{1,0:T(1,128)}', space=vmem, size = 0x12000, scoped, tag = 'internal scratch']
  %s0 = inlined_call_operand.vmem [shape: f32[2,288,128], index: 0, kind: input, shape index: {}]
  %s1 = inlined_call_operand.vmem [shape: f32[2,432,128], index: 1, kind: input, shape index: {}]
  %s2 = inlined_call_operand.vmem [shape: f32[1,128], index: 2, kind: input, shape index: {}]
  %s3 = inlined_call_operand.vmem [shape: f32[1,128], index: 3, kind: input, shape index: {}]
  %s4 = inlined_call_operand.vmem [shape: f32[2,288,128], index: 4, kind: output, shape index: {}]
  %s5 = sld [smem:[#allocation0]]
  $region49: #{basic_block_forward.5} parent=0
    _
  %s7 = ssub.s32 1, %s5
  %s8 = scalar_select 0, %s7, %s5
  loop: start=0, step=1, limit=4
  $region2: #{basic_block_forward.5} parent=0 // loop_pre_header
    _
  $region3: #{basic_block_forward.5} parent=0 // loop_header
    %s10 = sphi 0, %s14
    %p11 = scmp.ge.s32.totalorder %s10, 4
    %s20 = sphi 0, %s22
    %s23 = sphi 0, %s20
    %s24 = sphi 0, %s23
    %s40 = sphi 0, %s24
    %s46 = sphi 0, %s48
    %s49 = sphi 0, %s46
    %s50 = sphi 0, %s49
    %s66 = sphi 0, %s50
    %s70 = sphi 0, %s70
    %s72 = sphi 0, %s70
    %s73 = sphi 0, %s72
    %s87 = sphi 0, %s73
    %s91 = sphi 0, %s91
    %s93 = sphi 0, %s91
    %s94 = sphi 0, %s93
    %s108 = sphi 0, %s94
    %s114 = sphi 0, %s116
    %s117 = sphi 0, %s114
    %s118 = sphi 0, %s117
    %s134 = sphi 0, %s118
  $region4: #{basic_block_forward.5} parent=0 // loop_header_branch
    %13 = sbr.rel (%p11) target = $region8
  $region5: #{basic_block_forward.5} parent=0 // loop_body
    %s15 = ssub.s32 %s10, 1
    %s16 = ssub.s32 %s10, 2
    %s17 = sadd.s32 %s10, 1
    %s18 = ssub.s32 %s10, %s17
    %p19 = scmp.eq.s32.totalorder %s18, 0
    %s21 = sadd.s32 %s20, 1
    %s22 = scalar_select %p19, %s20, %s21
    %p25 = pneg %p19
    %p26 = scmp.eq.s32.totalorder %s10, 1
    %p27 = por %p25, %p26
    %p28 = scmp.ne.s32.totalorder %s20, %s23
    %p29 = scmp.eq.s32.totalorder %s10, 0
    %p30 = por %p28, %p29
    %p31 = scmp.ne.s32.totalorder %s20, %s23
    %p32 = scmp.eq.s32.totalorder %s15, 1
    %p33 = por %p31, %p32
    %p34 = scmp.ne.s32.totalorder %s23, %s24
    %p35 = scmp.eq.s32.totalorder %s15, 0
    %p36 = por %p34, %p35
    %p37 = scmp.ne.s32.totalorder %s23, %s24
    %p38 = scmp.eq.s32.totalorder %s16, 1
    %p39 = por %p37, %p38
    %p41 = scmp.ne.s32.totalorder %s24, %s40
    %p42 = scmp.eq.s32.totalorder %s16, 0
    %p43 = por %p41, %p42
    %s44 = ssub.s32 %s10, %s17
    %p45 = scmp.eq.s32.totalorder %s44, 0
    %s47 = sadd.s32 %s46, 1
    %s48 = scalar_select %p45, %s46, %s47
    %p51 = pneg %p45
    %p52 = scmp.eq.s32.totalorder %s10, 1
    %p53 = por %p51, %p52
    %p54 = scmp.ne.s32.totalorder %s46, %s49
    %p55 = scmp.eq.s32.totalorder %s10, 0
    %p56 = por %p54, %p55
    %p57 = scmp.ne.s32.totalorder %s46, %s49
    %p58 = scmp.eq.s32.totalorder %s15, 1
    %p59 = por %p57, %p58
    %p60 = scmp.ne.s32.totalorder %s49, %s50
    %p61 = scmp.eq.s32.totalorder %s15, 0
    %p62 = por %p60, %p61
    %p63 = scmp.ne.s32.totalorder %s49, %s50
    %p64 = scmp.eq.s32.totalorder %s16, 1
    %p65 = por %p63, %p64
    %p67 = scmp.ne.s32.totalorder %s50, %s66
    %p68 = scmp.eq.s32.totalorder %s16, 0
    %p69 = por %p67, %p68
    %s71 = sadd.s32 %s70, 1
    %p74 = scmp.eq.s32.totalorder %s10, 1
    %p75 = scmp.ne.s32.totalorder %s70, %s72
    %p76 = scmp.eq.s32.totalorder %s10, 0
    %p77 = por %p75, %p76
    %p78 = scmp.ne.s32.totalorder %s70, %s72
    %p79 = scmp.eq.s32.totalorder %s15, 1
    %p80 = por %p78, %p79
    %p81 = scmp.ne.s32.totalorder %s72, %s73
    %p82 = scmp.eq.s32.totalorder %s15, 0
    %p83 = por %p81, %p82
    %p84 = scmp.ne.s32.totalorder %s72, %s73
    %p85 = scmp.eq.s32.totalorder %s16, 1
    %p86 = por %p84, %p85
    %p88 = scmp.ne.s32.totalorder %s73, %s87
    %p89 = scmp.eq.s32.totalorder %s16, 0
    %p90 = por %p88, %p89
    %s92 = sadd.s32 %s91, 1
    %p95 = scmp.eq.s32.totalorder %s10, 1
    %p96 = scmp.ne.s32.totalorder %s91, %s93
    %p97 = scmp.eq.s32.totalorder %s10, 0
    %p98 = por %p96, %p97
    %p99 = scmp.ne.s32.totalorder %s91, %s93
    %p100 = scmp.eq.s32.totalorder %s15, 1
    %p101 = por %p99, %p100
    %p102 = scmp.ne.s32.totalorder %s93, %s94
    %p103 = scmp.eq.s32.totalorder %s15, 0
    %p104 = por %p102, %p103
    %p105 = scmp.ne.s32.totalorder %s93, %s94
    %p106 = scmp.eq.s32.totalorder %s16, 1
    %p107 = por %p105, %p106
    %p109 = scmp.ne.s32.totalorder %s94, %s108
    %p110 = scmp.eq.s32.totalorder %s16, 0
    %p111 = por %p109, %p110
    %s112 = ssub.s32 %s10, %s17
    %p113 = scmp.eq.s32.totalorder %s112, 0
    %s115 = sadd.s32 %s114, 1
    %s116 = scalar_select %p113, %s114, %s115
    %p119 = pneg %p113
    %p120 = scmp.eq.s32.totalorder %s10, 1
    %p121 = por %p119, %p120
    %p122 = scmp.ne.s32.totalorder %s114, %s117
    %p123 = scmp.eq.s32.totalorder %s10, 0
    %p124 = por %p122, %p123
    %p125 = scmp.ne.s32.totalorder %s114, %s117
    %p126 = scmp.eq.s32.totalorder %s15, 1
    %p127 = por %p125, %p126
    %p128 = scmp.ne.s32.totalorder %s117, %s118
    %p129 = scmp.eq.s32.totalorder %s15, 0
    %p130 = por %p128, %p129
    %p131 = scmp.ne.s32.totalorder %s117, %s118
    %p132 = scmp.eq.s32.totalorder %s16, 1
    %p133 = por %p131, %p132
    %p135 = scmp.ne.s32.totalorder %s118, %s134
    %p136 = scmp.eq.s32.totalorder %s16, 0
    %p137 = por %p135, %p136
    %p138 = scmp.le.s32.totalorder 1, %s10
    %p139 = scmp.lt.s32.totalorder %s10, 3
    %p140 = pnand %p138, %p139
    %p141 = pneg %p140
    // Predicated region
    $region9: #{basic_block_forward.5} parent=5 // pred_check
      _
    $region10: #{basic_block_forward.5} parent=5 // pred_check_branch
      %143 = sbr.rel (%p140) target = $region12
    $region11: #{basic_block_forward.5} parent=5 // pred_region
      %s144 = ssub.s32 %s10, 1
      // Predicated region
      $region13: #{basic_block_forward.5} parent=11 // pred_check
        %p145 = pneg %p83
      $region14: #{basic_block_forward.5} parent=11 // pred_check_branch
        %147 = sbr.rel (%p145) target = $region16
      $region15: #{basic_block_forward.5} parent=11 // pred_region
        _
      $region16: #{basic_block_forward.5} parent=11 // pred_fallthru
        _
      // Predicated region
      $region17: #{basic_block_forward.5} parent=11 // pred_check
        %p148 = pneg %p104
      $region18: #{basic_block_forward.5} parent=11 // pred_check_branch
        %150 = sbr.rel (%p148) target = $region20
      $region19: #{basic_block_forward.5} parent=11 // pred_region
        _
      $region20: #{basic_block_forward.5} parent=11 // pred_fallthru
        _
    $region12: #{basic_block_forward.5} parent=5 // pred_fallthru
      _
    %p151 = scmp.lt.s32.totalorder %s10, 2
    // Predicated region
    $region21: #{basic_block_forward.5} parent=5 // pred_check
      %p152 = pneg %p151
    $region22: #{basic_block_forward.5} parent=5 // pred_check_branch
      %154 = sbr.rel (%p152) target = $region24
    $region23: #{basic_block_forward.5} parent=5 // pred_region
      // Predicated region
      $region25: #{basic_block_forward.5} parent=23 // pred_check
        %p155 = pneg %p30
      $region26: #{basic_block_forward.5} parent=23 // pred_check_branch
        %157 = sbr.rel (%p155) target = $region28
      $region27: #{basic_block_forward.5} parent=23 // pred_region
        %p158 = scmp.lt.s32.totalorder %s10, 1
        %s159 = scalar_select %p158, %s10, 1
        %s160 = smul.addr %s159, 36
        %s161 = smul.addr %s160, 8
        %s162 = scalar_lea.vmem %s0, %s161
      $region28: #{basic_block_forward.5} parent=23 // pred_fallthru
        _
      // Predicated region
      $region29: #{basic_block_forward.5} parent=23 // pred_check
        %p163 = pneg %p56
      $region30: #{basic_block_forward.5} parent=23 // pred_check_branch
        %165 = sbr.rel (%p163) target = $region32
      $region31: #{basic_block_forward.5} parent=23 // pred_region
        %p166 = scmp.lt.s32.totalorder %s10, 1
        %s167 = scalar_select %p166, %s10, 1
        %s168 = smul.addr %s167, 54
        %s169 = smul.addr %s168, 8
        %s170 = scalar_lea.vmem %s1, %s169
      $region32: #{basic_block_forward.5} parent=23 // pred_fallthru
        _
    $region24: #{basic_block_forward.5} parent=5 // pred_fallthru
      _
    %p171 = scmp.le.s32.totalorder 1, %s10
    %p172 = scmp.lt.s32.totalorder %s10, 3
    %p173 = pnand %p171, %p172
    %p174 = pneg %p173
    // Predicated region
    $region33: #{basic_block_forward.5} parent=5 // pred_check
      _
    $region34: #{basic_block_forward.5} parent=5 // pred_check_branch
      %176 = sbr.rel (%p173) target = $region36
    $region35: #{basic_block_forward.5} parent=5 // pred_region
      %s177 = ssub.s32 %s10, 1
      %p178 = scmp.lt.s32.totalorder %s15, 1
      %s179 = scalar_select %p178, %s15, 1
      %s180 = smul.addr %s179, 36
      %s181 = smul.addr %s180, 8
      %s182 = scalar_lea.vmem %s0, %s181
      %p183 = pneg %p36
      %p184 = pneg %p33
      %p185 = scmp.lt.s32.totalorder %s15, 1
      %s186 = scalar_select %p185, %s15, 1
      %s187 = smul.addr %s186, 54
      %s188 = smul.addr %s187, 8
      %s189 = scalar_lea.vmem %s1, %s188
      %p190 = pneg %p62
      %p191 = pneg %p59
      %p192 = pneg %p83
      %p193 = pneg %p80
      %p194 = pneg %p104
      %p195 = pneg %p101
      %p196 = pneg %p130
      %p197 = pneg %p127
      %p198 = scmp.lt.s32.totalorder %s15, 1
      %s199 = scalar_select %p198, %s15, 1
      %s200 = smul.addr %s199, 36
      %s201 = smul.addr %s200, 8
      %s202 = scalar_lea.vmem %s4, %s201
      %p203 = scmp.lt.s32.totalorder %s15, 1
      %s204 = scalar_select %p203, %s15, 1
      %s205 = smul.addr %s204, 36
      %s206 = smul.addr %s205, 8
      %s207 = scalar_lea.vmem %s0, %s206
      %p208 = scmp.lt.s32.totalorder %s15, 1
      %s209 = scalar_select %p208, %s15, 1
      %s210 = smul.addr %s209, 54
      %s211 = smul.addr %s210, 8
      %s212 = scalar_lea.vmem %s1, %s211
      %p213 = scmp.lt.s32.totalorder %s15, 1
      %s214 = scalar_select %p213, %s15, 1
      %s215 = smul.addr %s214, 36
      %s216 = smul.addr %s215, 8
      %s217 = scalar_lea.vmem %s4, %s216
      %v218 = vld [vmem:[%s207] sm:$0xff]
      %v219 = vld [vmem:[%s207 + $0x8] sm:$0xff]
      %v220 = vld [vmem:[%s207 + $0x10] sm:$0xff]
      %v221 = vld [vmem:[%s207 + $0x18] sm:$0xff]
      %v222 = vld [vmem:[%s207 + $0x20] sm:$0xff]
      %v223 = vld [vmem:[%s207 + $0x28] sm:$0xff]
      %v224 = vld [vmem:[%s207 + $0x30] sm:$0xff]
      %v225 = vld [vmem:[%s207 + $0x38] sm:$0xff]
      %v226 = vld [vmem:[%s207 + $0x40] sm:$0xff]
      %v227 = vld [vmem:[%s207 + $0x48] sm:$0xff]
      %v228 = vld [vmem:[%s207 + $0x50] sm:$0xff]
      %v229 = vld [vmem:[%s207 + $0x58] sm:$0xff]
      %v230 = vld [vmem:[%s207 + $0x60] sm:$0xff]
      %v231 = vld [vmem:[%s207 + $0x68] sm:$0xff]
      %v232 = vld [vmem:[%s207 + $0x70] sm:$0xff]
      %v233 = vld [vmem:[%s207 + $0x78] sm:$0xff]
      %v234 = vld [vmem:[%s207 + $0x80] sm:$0xff]
      %v235 = vld [vmem:[%s207 + $0x88] sm:$0xff]
      %v236 = vld [vmem:[%s207 + $0x90] sm:$0xff]
      %v237 = vld [vmem:[%s207 + $0x98] sm:$0xff]
      %v238 = vld [vmem:[%s207 + $0xa0] sm:$0xff]
      %v239 = vld [vmem:[%s207 + $0xa8] sm:$0xff]
      %v240 = vld [vmem:[%s207 + $0xb0] sm:$0xff]
      %v241 = vld [vmem:[%s207 + $0xb8] sm:$0xff]
      %v242 = vld [vmem:[%s207 + $0xc0] sm:$0xff]
      %v243 = vld [vmem:[%s207 + $0xc8] sm:$0xff]
      %v244 = vld [vmem:[%s207 + $0xd0] sm:$0xff]
      %v245 = vld [vmem:[%s207 + $0xd8] sm:$0xff]
      %v246 = vld [vmem:[%s207 + $0xe0] sm:$0xff]
      %v247 = vld [vmem:[%s207 + $0xe8] sm:$0xff]
      %v248 = vld [vmem:[%s207 + $0xf0] sm:$0xff]
      %v249 = vld [vmem:[%s207 + $0xf8] sm:$0xff]
      %v250 = vld [vmem:[%s207 + $0x100] sm:$0xff]
      %v251 = vld [vmem:[%s207 + $0x108] sm:$0xff]
      %v252 = vld [vmem:[%s207 + $0x110] sm:$0xff]
      %v253 = vld [vmem:[%s207 + $0x118] sm:$0xff]
      %v254 = vld [vmem:[%s212 + $0x48] sm:$0xff]
      %v255 = vld [vmem:[%s212 + $0x50] sm:$0xff]
      %v256 = vld [vmem:[%s212 + $0x58] sm:$0xff]
      %v257 = vld [vmem:[%s212 + $0x60] sm:$0xff]
      %v258 = vld [vmem:[%s212 + $0x68] sm:$0xff]
      %v259 = vld [vmem:[%s212 + $0x70] sm:$0xff]
      %v260 = vld [vmem:[%s212 + $0x78] sm:$0xff]
      %v261 = vld [vmem:[%s212 + $0x80] sm:$0xff]
      %v262 = vld [vmem:[%s212 + $0x88] sm:$0xff]
      %v263 = vld [vmem:[%s212 + $0x90] sm:$0xff]
      %v264 = vld [vmem:[%s212 + $0x98] sm:$0xff]
      %v265 = vld [vmem:[%s212 + $0xa0] sm:$0xff]
      %v266 = vld [vmem:[%s212 + $0xa8] sm:$0xff]
      %v267 = vld [vmem:[%s212 + $0xb0] sm:$0xff]
      %v268 = vld [vmem:[%s212 + $0xb8] sm:$0xff]
      %v269 = vld [vmem:[%s212 + $0xc0] sm:$0xff]
      %v270 = vld [vmem:[%s212 + $0xc8] sm:$0xff]
      %v271 = vld [vmem:[%s212 + $0xd0] sm:$0xff]
      %v272 = vld [vmem:[%s212 + $0xd8] sm:$0xff]
      %v273 = vld [vmem:[%s212 + $0xe0] sm:$0xff]
      %v274 = vld [vmem:[%s212 + $0xe8] sm:$0xff]
      %v275 = vld [vmem:[%s212 + $0xf0] sm:$0xff]
      %v276 = vld [vmem:[%s212 + $0xf8] sm:$0xff]
      %v277 = vld [vmem:[%s212 + $0x100] sm:$0xff]
      %v278 = vld [vmem:[%s212 + $0x108] sm:$0xff]
      %v279 = vld [vmem:[%s212 + $0x110] sm:$0xff]
      %v280 = vld [vmem:[%s212 + $0x118] sm:$0xff]
      %v281 = vld [vmem:[%s212 + $0x120] sm:$0xff]
      %v282 = vld [vmem:[%s212 + $0x128] sm:$0xff]
      %v283 = vld [vmem:[%s212 + $0x130] sm:$0xff]
      %v284 = vld [vmem:[%s212 + $0x138] sm:$0xff]
      %v285 = vld [vmem:[%s212 + $0x140] sm:$0xff]
      %v286 = vld [vmem:[%s212 + $0x148] sm:$0xff]
      %v287 = vld [vmem:[%s212 + $0x150] sm:$0xff]
      %v288 = vld [vmem:[%s212 + $0x158] sm:$0xff]
      %v289 = vld [vmem:[%s212 + $0x160] sm:$0xff]
      %v290 = vld [vmem:[%s2] sm:$0x1]
      %v292 = vlaneseq
      %v293 = vshrl.u32 %v292, 7
      %v294 = vsub.s32 0, %v293
      %v295 = vrot.slane %v290, %v294
      %v297 = vmul.f32 %v218, %v295
      %v298 = vmul.f32 %v219, %v295
      %v299 = vmul.f32 %v220, %v295
      %v300 = vmul.f32 %v221, %v295
      %v301 = vmul.f32 %v222, %v295
      %v302 = vmul.f32 %v223, %v295
      %v303 = vmul.f32 %v224, %v295
      %v304 = vmul.f32 %v225, %v295
      %v305 = vmul.f32 %v226, %v295
      %v306 = vmul.f32 %v227, %v295
      %v307 = vmul.f32 %v228, %v295
      %v308 = vmul.f32 %v229, %v295
      %v309 = vmul.f32 %v230, %v295
      %v310 = vmul.f32 %v231, %v295
      %v311 = vmul.f32 %v232, %v295
      %v312 = vmul.f32 %v233, %v295
      %v313 = vmul.f32 %v234, %v295
      %v314 = vmul.f32 %v235, %v295
      %v315 = vmul.f32 %v236, %v295
      %v316 = vmul.f32 %v237, %v295
      %v317 = vmul.f32 %v238, %v295
      %v318 = vmul.f32 %v239, %v295
      %v319 = vmul.f32 %v240, %v295
      %v320 = vmul.f32 %v241, %v295
      %v321 = vmul.f32 %v242, %v295
      %v322 = vmul.f32 %v243, %v295
      %v323 = vmul.f32 %v244, %v295
      %v324 = vmul.f32 %v245, %v295
      %v325 = vmul.f32 %v246, %v295
      %v326 = vmul.f32 %v247, %v295
      %v327 = vmul.f32 %v248, %v295
      %v328 = vmul.f32 %v249, %v295
      %v329 = vmul.f32 %v250, %v295
      %v330 = vmul.f32 %v251, %v295
      %v331 = vmul.f32 %v252, %v295
      %v332 = vmul.f32 %v253, %v295
      %v333 = vld [vmem:[%s3] sm:$0x1]
      %v335 = vlaneseq
      %v336 = vshrl.u32 %v335, 7
      %v337 = vsub.s32 0, %v336
      %v338 = vrot.slane %v333, %v337
      %v340 = vadd.f32 %v297, %v338
      %v341 = vadd.f32 %v298, %v338
      %v342 = vadd.f32 %v299, %v338
      %v343 = vadd.f32 %v300, %v338
      %v344 = vadd.f32 %v301, %v338
      %v345 = vadd.f32 %v302, %v338
      %v346 = vadd.f32 %v303, %v338
      %v347 = vadd.f32 %v304, %v338
      %v348 = vadd.f32 %v305, %v338
      %v349 = vadd.f32 %v306, %v338
      %v350 = vadd.f32 %v307, %v338
      %v351 = vadd.f32 %v308, %v338
      %v352 = vadd.f32 %v309, %v338
      %v353 = vadd.f32 %v310, %v338
      %v354 = vadd.f32 %v311, %v338
      %v355 = vadd.f32 %v312, %v338
      %v356 = vadd.f32 %v313, %v338
      %v357 = vadd.f32 %v314, %v338
      %v358 = vadd.f32 %v315, %v338
      %v359 = vadd.f32 %v316, %v338
      %v360 = vadd.f32 %v317, %v338
      %v361 = vadd.f32 %v318, %v338
      %v362 = vadd.f32 %v319, %v338
      %v363 = vadd.f32 %v320, %v338
      %v364 = vadd.f32 %v321, %v338
      %v365 = vadd.f32 %v322, %v338
      %v366 = vadd.f32 %v323, %v338
      %v367 = vadd.f32 %v324, %v338
      %v368 = vadd.f32 %v325, %v338
      %v369 = vadd.f32 %v326, %v338
      %v370 = vadd.f32 %v327, %v338
      %v371 = vadd.f32 %v328, %v338
      %v372 = vadd.f32 %v329, %v338
      %v373 = vadd.f32 %v330, %v338
      %v374 = vadd.f32 %v331, %v338
      %v375 = vadd.f32 %v332, %v338
      %v376 = vadd.f32 %v340, %v254
      %v377 = vadd.f32 %v341, %v255
      %v378 = vadd.f32 %v342, %v256
      %v379 = vadd.f32 %v343, %v257
      %v380 = vadd.f32 %v344, %v258
      %v381 = vadd.f32 %v345, %v259
      %v382 = vadd.f32 %v346, %v260
      %v383 = vadd.f32 %v347, %v261
      %v384 = vadd.f32 %v348, %v262
      %v385 = vadd.f32 %v349, %v263
      %v386 = vadd.f32 %v350, %v264
      %v387 = vadd.f32 %v351, %v265
      %v388 = vadd.f32 %v352, %v266
      %v389 = vadd.f32 %v353, %v267
      %v390 = vadd.f32 %v354, %v268
      %v391 = vadd.f32 %v355, %v269
      %v392 = vadd.f32 %v356, %v270
      %v393 = vadd.f32 %v357, %v271
      %v394 = vadd.f32 %v358, %v272
      %v395 = vadd.f32 %v359, %v273
      %v396 = vadd.f32 %v360, %v274
      %v397 = vadd.f32 %v361, %v275
      %v398 = vadd.f32 %v362, %v276
      %v399 = vadd.f32 %v363, %v277
      %v400 = vadd.f32 %v364, %v278
      %v401 = vadd.f32 %v365, %v279
      %v402 = vadd.f32 %v366, %v280
      %v403 = vadd.f32 %v367, %v281
      %v404 = vadd.f32 %v368, %v282
      %v405 = vadd.f32 %v369, %v283
      %v406 = vadd.f32 %v370, %v284
      %v407 = vadd.f32 %v371, %v285
      %v408 = vadd.f32 %v372, %v286
      %v409 = vadd.f32 %v373, %v287
      %v410 = vadd.f32 %v374, %v288
      %v411 = vadd.f32 %v375, %v289
      %v412 = vmax.f32 %v376, 0.0
      %v413 = vmax.f32 %v377, 0.0
      %v414 = vmax.f32 %v378, 0.0
      %v415 = vmax.f32 %v379, 0.0
      %v416 = vmax.f32 %v380, 0.0
      %v417 = vmax.f32 %v381, 0.0
      %v418 = vmax.f32 %v382, 0.0
      %v419 = vmax.f32 %v383, 0.0
      %v420 = vmax.f32 %v384, 0.0
      %v421 = vmax.f32 %v385, 0.0
      %v422 = vmax.f32 %v386, 0.0
      %v423 = vmax.f32 %v387, 0.0
      %v424 = vmax.f32 %v388, 0.0
      %v425 = vmax.f32 %v389, 0.0
      %v426 = vmax.f32 %v390, 0.0
      %v427 = vmax.f32 %v391, 0.0
      %v428 = vmax.f32 %v392, 0.0
      %v429 = vmax.f32 %v393, 0.0
      %v430 = vmax.f32 %v394, 0.0
      %v431 = vmax.f32 %v395, 0.0
      %v432 = vmax.f32 %v396, 0.0
      %v433 = vmax.f32 %v397, 0.0
      %v434 = vmax.f32 %v398, 0.0
      %v435 = vmax.f32 %v399, 0.0
      %v436 = vmax.f32 %v400, 0.0
      %v437 = vmax.f32 %v401, 0.0
      %v438 = vmax.f32 %v402, 0.0
      %v439 = vmax.f32 %v403, 0.0
      %v440 = vmax.f32 %v404, 0.0
      %v441 = vmax.f32 %v405, 0.0
      %v442 = vmax.f32 %v406, 0.0
      %v443 = vmax.f32 %v407, 0.0
      %v444 = vmax.f32 %v408, 0.0
      %v445 = vmax.f32 %v409, 0.0
      %v446 = vmax.f32 %v410, 0.0
      %v447 = vmax.f32 %v411, 0.0
      %448 = vst [vmem:[%s217] sm:$0xff] %v412
      %449 = vst [vmem:[%s217 + $0x8] sm:$0xff] %v413
      %450 = vst [vmem:[%s217 + $0x10] sm:$0xff] %v414
      %451 = vst [vmem:[%s217 + $0x18] sm:$0xff] %v415
      %452 = vst [vmem:[%s217 + $0x20] sm:$0xff] %v416
      %453 = vst [vmem:[%s217 + $0x28] sm:$0xff] %v417
      %454 = vst [vmem:[%s217 + $0x30] sm:$0xff] %v418
      %455 = vst [vmem:[%s217 + $0x38] sm:$0xff] %v419
      %456 = vst [vmem:[%s217 + $0x40] sm:$0xff] %v420
      %457 = vst [vmem:[%s217 + $0x48] sm:$0xff] %v421
      %458 = vst [vmem:[%s217 + $0x50] sm:$0xff] %v422
      %459 = vst [vmem:[%s217 + $0x58] sm:$0xff] %v423
      %460 = vst [vmem:[%s217 + $0x60] sm:$0xff] %v424
      %461 = vst [vmem:[%s217 + $0x68] sm:$0xff] %v425
      %462 = vst [vmem:[%s217 + $0x70] sm:$0xff] %v426
      %463 = vst [vmem:[%s217 + $0x78] sm:$0xff] %v427
      %464 = vst [vmem:[%s217 + $0x80] sm:$0xff] %v428
      %465 = vst [vmem:[%s217 + $0x88] sm:$0xff] %v429
      %466 = vst [vmem:[%s217 + $0x90] sm:$0xff] %v430
      %467 = vst [vmem:[%s217 + $0x98] sm:$0xff] %v431
      %468 = vst [vmem:[%s217 + $0xa0] sm:$0xff] %v432
      %469 = vst [vmem:[%s217 + $0xa8] sm:$0xff] %v433
      %470 = vst [vmem:[%s217 + $0xb0] sm:$0xff] %v434
      %471 = vst [vmem:[%s217 + $0xb8] sm:$0xff] %v435
      %472 = vst [vmem:[%s217 + $0xc0] sm:$0xff] %v436
      %473 = vst [vmem:[%s217 + $0xc8] sm:$0xff] %v437
      %474 = vst [vmem:[%s217 + $0xd0] sm:$0xff] %v438
      %475 = vst [vmem:[%s217 + $0xd8] sm:$0xff] %v439
      %476 = vst [vmem:[%s217 + $0xe0] sm:$0xff] %v440
      %477 = vst [vmem:[%s217 + $0xe8] sm:$0xff] %v441
      %478 = vst [vmem:[%s217 + $0xf0] sm:$0xff] %v442
      %479 = vst [vmem:[%s217 + $0xf8] sm:$0xff] %v443
      %480 = vst [vmem:[%s217 + $0x100] sm:$0xff] %v444
      %481 = vst [vmem:[%s217 + $0x108] sm:$0xff] %v445
      %482 = vst [vmem:[%s217 + $0x110] sm:$0xff] %v446
      %483 = vst [vmem:[%s217 + $0x118] sm:$0xff] %v447
      %p484 = scmp.lt.s32.totalorder %s15, 1
      %s485 = scalar_select %p484, %s15, 1
      %s486 = smul.addr %s485, 36
      %s487 = smul.addr %s486, 8
      %s488 = scalar_lea.vmem %s4, %s487
      // Predicated region
      $region37: #{basic_block_forward.5} parent=35 // pred_check
        %p489 = pneg %p127
      $region38: #{basic_block_forward.5} parent=35 // pred_check_branch
        %491 = sbr.rel (%p489) target = $region40
      $region39: #{basic_block_forward.5} parent=35 // pred_region
        _
      $region40: #{basic_block_forward.5} parent=35 // pred_fallthru
        _
    $region36: #{basic_block_forward.5} parent=5 // pred_fallthru
      _
    %p492 = scmp.le.s32.totalorder 2, %s10
    // Predicated region
    $region41: #{basic_block_forward.5} parent=5 // pred_check
      %p493 = pneg %p492
    $region42: #{basic_block_forward.5} parent=5 // pred_check_branch
      %495 = sbr.rel (%p493) target = $region44
    $region43: #{basic_block_forward.5} parent=5 // pred_region
      %s496 = ssub.s32 %s10, 2
      // Predicated region
      $region45: #{basic_block_forward.5} parent=43 // pred_check
        %p497 = pneg %p133
      $region46: #{basic_block_forward.5} parent=43 // pred_check_branch
        %499 = sbr.rel (%p497) target = $region48
      $region47: #{basic_block_forward.5} parent=43 // pred_region
        %p500 = scmp.lt.s32.totalorder %s16, 1
        %s501 = scalar_select %p500, %s16, 1
        %s502 = smul.addr %s501, 36
        %s503 = smul.addr %s502, 8
        %s504 = scalar_lea.vmem %s4, %s503
      $region48: #{basic_block_forward.5} parent=43 // pred_fallthru
        _
    $region44: #{basic_block_forward.5} parent=5 // pred_fallthru
      _
  $region6: #{basic_block_forward.5} parent=0 // loop_footer
    %s14 = sadd.s32 1, %s10
  $region7: #{basic_block_forward.5} parent=0 // loop_footer_branch
    %9 = sbr.rel target = $region3
  $region8: #{basic_block_forward.5} parent=0 // loop_exit
    _

// kernel: basic_block_forward.3
$region0: #{basic_block_forward.3}
  #allocation0 [shape = 'u32[]', space=smem, size = 0x4, offset = 0x4, fixed_abs, tag = 'smem constant byte address 0x4 - core index']
  #allocation1 [shape = 'u32[144,128]{1,0:T(1,128)}', space=vmem, size = 0x12000, scoped, tag = 'internal scratch']
  %s0 = inlined_call_operand.vmem [shape: f32[2,432,128], index: 0, kind: input, shape index: {}]
  %s1 = inlined_call_operand.vmem [shape: bf16[9,128,128], index: 1, kind: input, shape index: {}]
  %s2 = inlined_call_operand.vmem [shape: f32[360,128], index: 2, kind: input, shape index: {}]
  %s3 = inlined_call_operand.vmem [shape: f32[2,360,128], index: 3, kind: output, shape index: {0}]
  %s4 = inlined_call_operand.vmem [shape: f32[2,1,128], index: 4, kind: output, shape index: {1}]
  %s5 = inlined_call_operand.vmem [shape: f32[2,1,128], index: 5, kind: output, shape index: {2}]
  %6 = xla_tuple %s3, %s4, %s5
  %s7 = sld [smem:[#allocation0]]
  $region61: #{basic_block_forward.3} parent=0
    _
  %s9 = ssub.s32 1, %s7
  %s10 = scalar_select 0, %s9, %s7
  loop: start=0, step=1, limit=4
  $region2: #{basic_block_forward.3} parent=0 // loop_pre_header
    _
  $region3: #{basic_block_forward.3} parent=0 // loop_header
    %s12 = sphi 0, %s16
    %p13 = scmp.ge.s32.totalorder %s12, 4
    %s22 = sphi 0, %s24
    %s25 = sphi 0, %s22
    %s26 = sphi 0, %s25
    %s42 = sphi 0, %s26
    %s46 = sphi 0, %s46
    %s48 = sphi 0, %s46
    %s49 = sphi 0, %s48
    %s63 = sphi 0, %s49
    %s67 = sphi 0, %s67
    %s69 = sphi 0, %s67
    %s70 = sphi 0, %s69
    %s84 = sphi 0, %s70
    %s90 = sphi 0, %s92
    %s93 = sphi 0, %s90
    %s94 = sphi 0, %s93
    %s110 = sphi 0, %s94
    %s116 = sphi 0, %s118
    %s119 = sphi 0, %s116
    %s120 = sphi 0, %s119
    %s136 = sphi 0, %s120
    %s142 = sphi 0, %s144
    %s145 = sphi 0, %s142
    %s146 = sphi 0, %s145
    %s162 = sphi 0, %s146
  $region4: #{basic_block_forward.3} parent=0 // loop_header_branch
    %15 = sbr.rel (%p13) target = $region8
  $region5: #{basic_block_forward.3} parent=0 // loop_body
    %s17 = ssub.s32 %s12, 1
    %s18 = ssub.s32 %s12, 2
    %s19 = sadd.s32 %s12, 1
    %s20 = ssub.s32 %s12, %s19
    %p21 = scmp.eq.s32.totalorder %s20, 0
    %s23 = sadd.s32 %s22, 1
    %s24 = scalar_select %p21, %s22, %s23
    %p27 = pneg %p21
    %p28 = scmp.eq.s32.totalorder %s12, 1
    %p29 = por %p27, %p28
    %p30 = scmp.ne.s32.totalorder %s22, %s25
    %p31 = scmp.eq.s32.totalorder %s12, 0
    %p32 = por %p30, %p31
    %p33 = scmp.ne.s32.totalorder %s22, %s25
    %p34 = scmp.eq.s32.totalorder %s17, 1
    %p35 = por %p33, %p34
    %p36 = scmp.ne.s32.totalorder %s25, %s26
    %p37 = scmp.eq.s32.totalorder %s17, 0
    %p38 = por %p36, %p37
    %p39 = scmp.ne.s32.totalorder %s25, %s26
    %p40 = scmp.eq.s32.totalorder %s18, 1
    %p41 = por %p39, %p40
    %p43 = scmp.ne.s32.totalorder %s26, %s42
    %p44 = scmp.eq.s32.totalorder %s18, 0
    %p45 = por %p43, %p44
    %s47 = sadd.s32 %s46, 1
    %p50 = scmp.eq.s32.totalorder %s12, 1
    %p51 = scmp.ne.s32.totalorder %s46, %s48
    %p52 = scmp.eq.s32.totalorder %s12, 0
    %p53 = por %p51, %p52
    %p54 = scmp.ne.s32.totalorder %s46, %s48
    %p55 = scmp.eq.s32.totalorder %s17, 1
    %p56 = por %p54, %p55
    %p57 = scmp.ne.s32.totalorder %s48, %s49
    %p58 = scmp.eq.s32.totalorder %s17, 0
    %p59 = por %p57, %p58
    %p60 = scmp.ne.s32.totalorder %s48, %s49
    %p61 = scmp.eq.s32.totalorder %s18, 1
    %p62 = por %p60, %p61
    %p64 = scmp.ne.s32.totalorder %s49, %s63
    %p65 = scmp.eq.s32.totalorder %s18, 0
    %p66 = por %p64, %p65
    %s68 = sadd.s32 %s67, 1
    %p71 = scmp.eq.s32.totalorder %s12, 1
    %p72 = scmp.ne.s32.totalorder %s67, %s69
    %p73 = scmp.eq.s32.totalorder %s12, 0
    %p74 = por %p72, %p73
    %p75 = scmp.ne.s32.totalorder %s67, %s69
    %p76 = scmp.eq.s32.totalorder %s17, 1
    %p77 = por %p75, %p76
    %p78 = scmp.ne.s32.totalorder %s69, %s70
    %p79 = scmp.eq.s32.totalorder %s17, 0
    %p80 = por %p78, %p79
    %p81 = scmp.ne.s32.totalorder %s69, %s70
    %p82 = scmp.eq.s32.totalorder %s18, 1
    %p83 = por %p81, %p82
    %p85 = scmp.ne.s32.totalorder %s70, %s84
    %p86 = scmp.eq.s32.totalorder %s18, 0
    %p87 = por %p85, %p86
    %s88 = ssub.s32 %s12, %s19
    %p89 = scmp.eq.s32.totalorder %s88, 0
    %s91 = sadd.s32 %s90, 1
    %s92 = scalar_select %p89, %s90, %s91
    %p95 = pneg %p89
    %p96 = scmp.eq.s32.totalorder %s12, 1
    %p97 = por %p95, %p96
    %p98 = scmp.ne.s32.totalorder %s90, %s93
    %p99 = scmp.eq.s32.totalorder %s12, 0
    %p100 = por %p98, %p99
    %p101 = scmp.ne.s32.totalorder %s90, %s93
    %p102 = scmp.eq.s32.totalorder %s17, 1
    %p103 = por %p101, %p102
    %p104 = scmp.ne.s32.totalorder %s93, %s94
    %p105 = scmp.eq.s32.totalorder %s17, 0
    %p106 = por %p104, %p105
    %p107 = scmp.ne.s32.totalorder %s93, %s94
    %p108 = scmp.eq.s32.totalorder %s18, 1
    %p109 = por %p107, %p108
    %p111 = scmp.ne.s32.totalorder %s94, %s110
    %p112 = scmp.eq.s32.totalorder %s18, 0
    %p113 = por %p111, %p112
    %s114 = ssub.s32 %s12, %s19
    %p115 = scmp.eq.s32.totalorder %s114, 0
    %s117 = sadd.s32 %s116, 1
    %s118 = scalar_select %p115, %s116, %s117
    %p121 = pneg %p115
    %p122 = scmp.eq.s32.totalorder %s12, 1
    %p123 = por %p121, %p122
    %p124 = scmp.ne.s32.totalorder %s116, %s119
    %p125 = scmp.eq.s32.totalorder %s12, 0
    %p126 = por %p124, %p125
    %p127 = scmp.ne.s32.totalorder %s116, %s119
    %p128 = scmp.eq.s32.totalorder %s17, 1
    %p129 = por %p127, %p128
    %p130 = scmp.ne.s32.totalorder %s119, %s120
    %p131 = scmp.eq.s32.totalorder %s17, 0
    %p132 = por %p130, %p131
    %p133 = scmp.ne.s32.totalorder %s119, %s120
    %p134 = scmp.eq.s32.totalorder %s18, 1
    %p135 = por %p133, %p134
    %p137 = scmp.ne.s32.totalorder %s120, %s136
    %p138 = scmp.eq.s32.totalorder %s18, 0
    %p139 = por %p137, %p138
    %s140 = ssub.s32 %s12, %s19
    %p141 = scmp.eq.s32.totalorder %s140, 0
    %s143 = sadd.s32 %s142, 1
    %s144 = scalar_select %p141, %s142, %s143
    %p147 = pneg %p141
    %p148 = scmp.eq.s32.totalorder %s12, 1
    %p149 = por %p147, %p148
    %p150 = scmp.ne.s32.totalorder %s142, %s145
    %p151 = scmp.eq.s32.totalorder %s12, 0
    %p152 = por %p150, %p151
    %p153 = scmp.ne.s32.totalorder %s142, %s145
    %p154 = scmp.eq.s32.totalorder %s17, 1
    %p155 = por %p153, %p154
    %p156 = scmp.ne.s32.totalorder %s145, %s146
    %p157 = scmp.eq.s32.totalorder %s17, 0
    %p158 = por %p156, %p157
    %p159 = scmp.ne.s32.totalorder %s145, %s146
    %p160 = scmp.eq.s32.totalorder %s18, 1
    %p161 = por %p159, %p160
    %p163 = scmp.ne.s32.totalorder %s146, %s162
    %p164 = scmp.eq.s32.totalorder %s18, 0
    %p165 = por %p163, %p164
    %p166 = scmp.le.s32.totalorder 1, %s12
    %p167 = scmp.lt.s32.totalorder %s12, 3
    %p168 = pnand %p166, %p167
    %p169 = pneg %p168
    // Predicated region
    $region9: #{basic_block_forward.3} parent=5 // pred_check
      _
    $region10: #{basic_block_forward.3} parent=5 // pred_check_branch
      %171 = sbr.rel (%p168) target = $region12
    $region11: #{basic_block_forward.3} parent=5 // pred_region
      %s172 = ssub.s32 %s12, 1
      // Predicated region
      $region13: #{basic_block_forward.3} parent=11 // pred_check
        %p173 = pneg %p59
      $region14: #{basic_block_forward.3} parent=11 // pred_check_branch
        %175 = sbr.rel (%p173) target = $region16
      $region15: #{basic_block_forward.3} parent=11 // pred_region
        _
      $region16: #{basic_block_forward.3} parent=11 // pred_fallthru
        _
      // Predicated region
      $region17: #{basic_block_forward.3} parent=11 // pred_check
        %p176 = pneg %p80
      $region18: #{basic_block_forward.3} parent=11 // pred_check_branch
        %178 = sbr.rel (%p176) target = $region20
      $region19: #{basic_block_forward.3} parent=11 // pred_region
        _
      $region20: #{basic_block_forward.3} parent=11 // pred_fallthru
        _
    $region12: #{basic_block_forward.3} parent=5 // pred_fallthru
      _
    %p179 = scmp.lt.s32.totalorder %s12, 2
    // Predicated region
    $region21: #{basic_block_forward.3} parent=5 // pred_check
      %p180 = pneg %p179
    $region22: #{basic_block_forward.3} parent=5 // pred_check_branch
      %182 = sbr.rel (%p180) target = $region24
    $region23: #{basic_block_forward.3} parent=5 // pred_region
      // Predicated region
      $region25: #{basic_block_forward.3} parent=23 // pred_check
        %p183 = pneg %p32
      $region26: #{basic_block_forward.3} parent=23 // pred_check_branch
        %185 = sbr.rel (%p183) target = $region28
      $region27: #{basic_block_forward.3} parent=23 // pred_region
        %p186 = scmp.lt.s32.totalorder %s12, 1
        %s187 = scalar_select %p186, %s12, 1
        %s188 = smul.addr %s187, 54
        %s189 = smul.addr %s188, 8
        %s190 = scalar_lea.vmem %s0, %s189
      $region28: #{basic_block_forward.3} parent=23 // pred_fallthru
        _
    $region24: #{basic_block_forward.3} parent=5 // pred_fallthru
      _
    %p191 = scmp.le.s32.totalorder 1, %s12
    %p192 = scmp.lt.s32.totalorder %s12, 3
    %p193 = pnand %p191, %p192
    %p194 = pneg %p193
    // Predicated region
    $region29: #{basic_block_forward.3} parent=5 // pred_check
      _
    $region30: #{basic_block_forward.3} parent=5 // pred_check_branch
      %196 = sbr.rel (%p193) target = $region32
    $region31: #{basic_block_forward.3} parent=5 // pred_region
      %s197 = ssub.s32 %s12, 1
      %p198 = scmp.lt.s32.totalorder %s17, 1
      %s199 = scalar_select %p198, %s17, 1
      %s200 = smul.addr %s199, 54
      %s201 = smul.addr %s200, 8
      %s202 = scalar_lea.vmem %s0, %s201
      %p203 = pneg %p38
      %p204 = pneg %p35
      %p205 = pneg %p59
      %p206 = pneg %p56
      %p207 = pneg %p80
      %p208 = pneg %p77
      %p209 = pneg %p106
      %p210 = pneg %p103
      %p211 = scmp.lt.s32.totalorder %s17, 1
      %s212 = scalar_select %p211, %s17, 1
      %s213 = smul.addr %s212, 45
      %s214 = smul.addr %s213, 8
      %s215 = scalar_lea.vmem %s3, %s214
      %p216 = pneg %p132
      %p217 = pneg %p129
      %p218 = scmp.lt.s32.totalorder %s17, 1
      %s219 = scalar_select %p218, %s17, 1
      %s220 = scalar_lea.vmem %s4, %s219
      %p221 = pneg %p158
      %p222 = pneg %p155
      %p223 = scmp.lt.s32.totalorder %s17, 1
      %s224 = scalar_select %p223, %s17, 1
      %s225 = scalar_lea.vmem %s5, %s224
      %p226 = scmp.lt.s32.totalorder %s17, 1
      %s227 = scalar_select %p226, %s17, 1
      %s228 = smul.addr %s227, 54
      %s229 = smul.addr %s228, 8
      %s230 = scalar_lea.vmem %s0, %s229
      %p231 = scmp.lt.s32.totalorder %s17, 1
      %s232 = scalar_select %p231, %s17, 1
      %s233 = smul.addr %s232, 45
      %s234 = smul.addr %s233, 8
      %s235 = scalar_lea.vmem %s3, %s234
      %p236 = scmp.lt.s32.totalorder %s17, 1
      %s237 = scalar_select %p236, %s17, 1
      %s238 = scalar_lea.vmem %s4, %s237
      %p239 = scmp.lt.s32.totalorder %s17, 1
      %s240 = scalar_select %p239, %s17, 1
      %s241 = scalar_lea.vmem %s5, %s240
      %v243 = vld [vmem:[%s230 + $0x11] sm:$0xff]
      %v244 = vld [vmem:[%s230 + $0x19] sm:$0xff]
      %v245 = vld [vmem:[%s230 + $0x21] sm:$0xff]
      %v246 = vld [vmem:[%s230 + $0x29] sm:$0xff]
      %v247 = vld [vmem:[%s230 + $0x31] sm:$0xff]
      %v248 = vld [vmem:[%s230 + $0x39] sm:$0xff]
      %v249 = vld [vmem:[%s230 + $0x41] sm:$0xff]
      %v250 = vld [vmem:[%s230 + $0x49] sm:$0xff]
      %v251 = vld [vmem:[%s230 + $0x51] sm:$0xff]
      %v252 = vld [vmem:[%s230 + $0x59] sm:$0xff]
      %v253 = vld [vmem:[%s230 + $0x61] sm:$0xff]
      %v254 = vld [vmem:[%s230 + $0x69] sm:$0xff]
      %v255 = vld [vmem:[%s230 + $0x71] sm:$0xff]
      %v256 = vld [vmem:[%s230 + $0x79] sm:$0xff]
      %v257 = vld [vmem:[%s230 + $0x81] sm:$0xff]
      %v258 = vld [vmem:[%s230 + $0x89] sm:$0xff]
      %v259 = vld [vmem:[%s230 + $0x91] sm:$0xff]
      %v260 = vld [vmem:[%s230 + $0x99] sm:$0xff]
      %v261 = vld [vmem:[%s230 + $0xa1] sm:$0xff]
      %v262 = vld [vmem:[%s230 + $0xa9] sm:$0xff]
      %v263 = vld [vmem:[%s230 + $0xb1] sm:$0xff]
      %v264 = vld [vmem:[%s230 + $0xb9] sm:$0xff]
      %v265 = vld [vmem:[%s230 + $0xc1] sm:$0xff]
      %v266 = vld [vmem:[%s230 + $0xc9] sm:$0xff]
      %v267 = vld [vmem:[%s230 + $0xd1] sm:$0xff]
      %v268 = vld [vmem:[%s230 + $0xd9] sm:$0xff]
      %v269 = vld [vmem:[%s230 + $0xe1] sm:$0xff]
      %v270 = vld [vmem:[%s230 + $0xe9] sm:$0xff]
      %v271 = vld [vmem:[%s230 + $0xf1] sm:$0xff]
      %v272 = vld [vmem:[%s230 + $0xf9] sm:$0xff]
      %v273 = vld [vmem:[%s230 + $0x101] sm:$0xff]
      %v274 = vld [vmem:[%s230 + $0x109] sm:$0xff]
      %v275 = vld [vmem:[%s230 + $0x111] sm:$0xff]
      %v276 = vld [vmem:[%s230 + $0x119] sm:$0xff]
      %v277 = vld [vmem:[%s230 + $0x121] sm:$0xff]
      %v278 = vld [vmem:[%s230 + $0x129] sm:$0xff]
      %v279 = vld [vmem:[%s230 + $0x131] sm:$0xff]
      %v280 = vld [vmem:[%s230 + $0x139] sm:$0xff]
      %v281 = vld [vmem:[%s230 + $0x141] sm:$0xff]
      %v282 = vld [vmem:[%s230 + $0x149] sm:$0xff]
      %v283 = vld [vmem:[%s230 + $0x151] sm:$0xff]
      %v284 = vld [vmem:[%s230 + $0x159] sm:$0xff]
      %v285 = vld [vmem:[%s230 + $0x161] sm:$0xff]
      %v286 = vld [vmem:[%s230 + $0x169] sm:$0xff]
      %v287 = vld [vmem:[%s230 + $0x171] sm:$0xff]
      %v288 = vpack.c.bf16 %v244, %v243
      %v289 = vpack.c.bf16 %v246, %v245
      %v290 = vpack.c.bf16 %v248, %v247
      %v291 = vpack.c.bf16 %v250, %v249
      %v292 = vpack.c.bf16 %v252, %v251
      %v293 = vpack.c.bf16 %v254, %v253
      %v294 = vpack.c.bf16 %v256, %v255
      %v295 = vpack.c.bf16 %v258, %v257
      %v296 = vpack.c.bf16 %v260, %v259
      %v297 = vpack.c.bf16 %v262, %v261
      %v298 = vpack.c.bf16 %v264, %v263
      %v299 = vpack.c.bf16 %v266, %v265
      %v300 = vpack.c.bf16 %v268, %v267
      %v301 = vpack.c.bf16 %v270, %v269
      %v302 = vpack.c.bf16 %v272, %v271
      %v303 = vpack.c.bf16 %v274, %v273
      %v304 = vpack.c.bf16 %v276, %v275
      %v305 = vpack.c.bf16 %v278, %v277
      %v306 = vpack.c.bf16 %v280, %v279
      %v307 = vpack.c.bf16 %v282, %v281
      %v308 = vpack.c.bf16 %v284, %v283
      %v309 = vpack.c.bf16 %v286, %v285
      %v310 = vpack.c.bf16 %v287, %v287
      %v311 = vld [vmem:[%s1] sm:$0xf]
      %v312 = vld [vmem:[%s1 + $0x4] sm:$0xf]
      %v313 = vld [vmem:[%s1 + $0x8] sm:$0xf]
      %v314 = vld [vmem:[%s1 + $0xc] sm:$0xf]
      %v315 = vld [vmem:[%s1 + $0x10] sm:$0xf]
      %v316 = vld [vmem:[%s1 + $0x14] sm:$0xf]
      %v317 = vld [vmem:[%s1 + $0x18] sm:$0xf]
      %v318 = vld [vmem:[%s1 + $0x1c] sm:$0xf]
      %v319 = vld [vmem:[%s1 + $0x20] sm:$0xf]
      %v320 = vld [vmem:[%s1 + $0x24] sm:$0xf]
      %v321 = vld [vmem:[%s1 + $0x28] sm:$0xf]
      %v322 = vld [vmem:[%s1 + $0x2c] sm:$0xf]
      %v323 = vld [vmem:[%s1 + $0x30] sm:$0xf]
      %v324 = vld [vmem:[%s1 + $0x34] sm:$0xf]
      %v325 = vld [vmem:[%s1 + $0x38] sm:$0xf]
      %v326 = vld [vmem:[%s1 + $0x3c] sm:$0xf]
      %v327 = vld [vmem:[%s230 + $0x12] sm:$0xff]
      %v328 = vld [vmem:[%s230 + $0x1a] sm:$0xff]
      %v329 = vld [vmem:[%s230 + $0x22] sm:$0xff]
      %v330 = vld [vmem:[%s230 + $0x2a] sm:$0xff]
      %v331 = vld [vmem:[%s230 + $0x32] sm:$0xff]
      %v332 = vld [vmem:[%s230 + $0x3a] sm:$0xff]
      %v333 = vld [vmem:[%s230 + $0x42] sm:$0xff]
      %v334 = vld [vmem:[%s230 + $0x4a] sm:$0xff]
      %v335 = vld [vmem:[%s230 + $0x52] sm:$0xff]
      %v336 = vld [vmem:[%s230 + $0x5a] sm:$0xff]
      %v337 = vld [vmem:[%s230 + $0x62] sm:$0xff]
      %v338 = vld [vmem:[%s230 + $0x6a] sm:$0xff]
      %v339 = vld [vmem:[%s230 + $0x72] sm:$0xff]
      %v340 = vld [vmem:[%s230 + $0x7a] sm:$0xff]
      %v341 = vld [vmem:[%s230 + $0x82] sm:$0xff]
      %v342 = vld [vmem:[%s230 + $0x8a] sm:$0xff]
      %v343 = vld [vmem:[%s230 + $0x92] sm:$0xff]
      %v344 = vld [vmem:[%s230 + $0x9a] sm:$0xff]
      %v345 = vld [vmem:[%s230 + $0xa2] sm:$0xff]
      %v346 = vld [vmem:[%s230 + $0xaa] sm:$0xff]
      %v347 = vld [vmem:[%s230 + $0xb2] sm:$0xff]
      %v348 = vld [vmem:[%s230 + $0xba] sm:$0xff]
      %v349 = vld [vmem:[%s230 + $0xc2] sm:$0xff]
      %v350 = vld [vmem:[%s230 + $0xca] sm:$0xff]
      %v351 = vld [vmem:[%s230 + $0xd2] sm:$0xff]
      %v352 = vld [vmem:[%s230 + $0xda] sm:$0xff]
      %v353 = vld [vmem:[%s230 + $0xe2] sm:$0xff]
      %v354 = vld [vmem:[%s230 + $0xea] sm:$0xff]
      %v355 = vld [vmem:[%s230 + $0xf2] sm:$0xff]
      %v356 = vld [vmem:[%s230 + $0xfa] sm:$0xff]
      %v357 = vld [vmem:[%s230 + $0x102] sm:$0xff]
      %v358 = vld [vmem:[%s230 + $0x10a] sm:$0xff]
      %v359 = vld [vmem:[%s230 + $0x112] sm:$0xff]
      %v360 = vld [vmem:[%s230 + $0x11a] sm:$0xff]
      %v361 = vld [vmem:[%s230 + $0x122] sm:$0xff]
      %v362 = vld [vmem:[%s230 + $0x12a] sm:$0xff]
      %v363 = vld [vmem:[%s230 + $0x132] sm:$0xff]
      %v364 = vld [vmem:[%s230 + $0x13a] sm:$0xff]
      %v365 = vld [vmem:[%s230 + $0x142] sm:$0xff]
      %v366 = vld [vmem:[%s230 + $0x14a] sm:$0xff]
      %v367 = vld [vmem:[%s230 + $0x152] sm:$0xff]
      %v368 = vld [vmem:[%s230 + $0x15a] sm:$0xff]
      %v369 = vld [vmem:[%s230 + $0x162] sm:$0xff]
      %v370 = vld [vmem:[%s230 + $0x16a] sm:$0xff]
      %v371 = vld [vmem:[%s230 + $0x172] sm:$0xff]
      %v372 = vpack.c.bf16 %v328, %v327
      %v373 = vpack.c.bf16 %v330, %v329
      %v374 = vpack.c.bf16 %v332, %v331
      %v375 = vpack.c.bf16 %v334, %v333
      %v376 = vpack.c.bf16 %v336, %v335
      %v377 = vpack.c.bf16 %v338, %v337
      %v378 = vpack.c.bf16 %v340, %v339
      %v379 = vpack.c.bf16 %v342, %v341
      %v380 = vpack.c.bf16 %v344, %v343
      %v381 = vpack.c.bf16 %v346, %v345
      %v382 = vpack.c.bf16 %v348, %v347
      %v383 = vpack.c.bf16 %v350, %v349
      %v384 = vpack.c.bf16 %v352, %v351
      %v385 = vpack.c.bf16 %v354, %v353
      %v386 = vpack.c.bf16 %v356, %v355
      %v387 = vpack.c.bf16 %v358, %v357
      %v388 = vpack.c.bf16 %v360, %v359
      %v389 = vpack.c.bf16 %v362, %v361
      %v390 = vpack.c.bf16 %v364, %v363
      %v391 = vpack.c.bf16 %v366, %v365
      %v392 = vpack.c.bf16 %v368, %v367
      %v393 = vpack.c.bf16 %v370, %v369
      %v394 = vpack.c.bf16 %v371, %v371
      %s395 = scalar_lea.vmem %s1, 64
      %v396 = vld [vmem:[%s395] sm:$0xf]
      %v397 = vld [vmem:[%s395 + $0x4] sm:$0xf]
      %v398 = vld [vmem:[%s395 + $0x8] sm:$0xf]
      %v399 = vld [vmem:[%s395 + $0xc] sm:$0xf]
      %v400 = vld [vmem:[%s395 + $0x10] sm:$0xf]
      %v401 = vld [vmem:[%s395 + $0x14] sm:$0xf]
      %v402 = vld [vmem:[%s395 + $0x18] sm:$0xf]
      %v403 = vld [vmem:[%s395 + $0x1c] sm:$0xf]
      %v404 = vld [vmem:[%s395 + $0x20] sm:$0xf]
      %v405 = vld [vmem:[%s395 + $0x24] sm:$0xf]
      %v406 = vld [vmem:[%s395 + $0x28] sm:$0xf]
      %v407 = vld [vmem:[%s395 + $0x2c] sm:$0xf]
      %v408 = vld [vmem:[%s395 + $0x30] sm:$0xf]
      %v409 = vld [vmem:[%s395 + $0x34] sm:$0xf]
      %v410 = vld [vmem:[%s395 + $0x38] sm:$0xf]
      %v411 = vld [vmem:[%s395 + $0x3c] sm:$0xf]
      %v428 = vunpack.c.l.b16 %v396
      %v429 = vunpack.c.l.b16 %v397
      %v430 = vunpack.c.l.b16 %v398
      %v431 = vunpack.c.l.b16 %v399
      %v432 = vunpack.c.l.b16 %v400
      %v433 = vunpack.c.l.b16 %v401
      %v434 = vunpack.c.l.b16 %v402
      %v435 = vunpack.c.l.b16 %v403
      %v436 = vunpack.c.l.b16 %v404
      %v437 = vunpack.c.l.b16 %v405
      %v438 = vunpack.c.l.b16 %v406
      %v439 = vunpack.c.l.b16 %v407
      %v440 = vunpack.c.l.b16 %v408
      %v441 = vunpack.c.l.b16 %v409
      %v442 = vunpack.c.l.b16 %v410
      %v443 = vunpack.c.l.b16 %v411
      %v444 = vpack.c.b16 %v429, %v428
      %v445 = vpack.c.b16 %v431, %v430
      %v446 = vpack.c.b16 %v433, %v432
      %v447 = vpack.c.b16 %v435, %v434
      %v448 = vpack.c.b16 %v437, %v436
      %v449 = vpack.c.b16 %v439, %v438
      %v450 = vpack.c.b16 %v441, %v440
      %v451 = vpack.c.b16 %v443, %v442
      %460 = vmatprep.subr.bf16.mxu0 0
      %461 = vmatpush1.bf16.msra.mxu0 %v444
      %462 = vmatprep.subr.bf16.mxu0 0
      %463 = vmatpush1.bf16.msra.mxu0 %v445
      %464 = vmatprep.subr.bf16.mxu0 0
      %465 = vmatpush1.bf16.msra.mxu0 %v446
      %466 = vmatprep.subr.bf16.mxu0 0
      %467 = vmatpush1.bf16.msra.mxu0 %v447
      %468 = vmatprep.subr.bf16.mxu0 0
      %469 = vmatpush1.bf16.msra.mxu0 %v448
      %470 = vmatprep.subr.bf16.mxu0 0
      %471 = vmatpush1.bf16.msra.mxu0 %v449
      %472 = vmatprep.subr.bf16.mxu0 0
      %473 = vmatpush1.bf16.msra.mxu0 %v450
      %474 = vmatprep.subr.bf16.mxu0 0
      %475 = vmatpush1.bf16.msra.mxu0 %v451
      %476 = vmatprep.subr.bf16.mxu0 0
      %477 = vmatpush1.bf16.msra.mxu0 0
      %478 = vmatprep.subr.bf16.mxu0 0
      %479 = vmatpush1.bf16.msra.mxu0 0
      %480 = vmatprep.subr.bf16.mxu0 0
      %481 = vmatpush1.bf16.msra.mxu0 0
      %482 = vmatprep.subr.bf16.mxu0 0
      %483 = vmatpush1.bf16.msra.mxu0 0
      %484 = vmatprep.subr.bf16.mxu0 0
      %485 = vmatpush1.bf16.msra.mxu0 0
      %486 = vmatprep.subr.bf16.mxu0 0
      %487 = vmatpush1.bf16.msra.mxu0 0
      %488 = vmatprep.subr.bf16.mxu0 0
      %489 = vmatpush1.bf16.msra.mxu0 0
      %490 = vmatprep.subr.bf16.mxu0 0
      %491 = vmatpush1.bf16.msra.mxu0 0
      %492 = vmatprep.mubr.bf16.mxu0 0
      %493 = vmatmul.mubr.bf16.gmra.mrb[0].mxu0 %v372
      %v494 = vpop.f32.mrb[0].mxu0
      %v495 = vadd.f32 0.0, %v494
      %v496 = vpop.f32.mrb[0].mxu0
      %v497 = vpop.f32.mrb[0].mxu0
      %v498 = vadd.f32 0.0, %v497
      %v499 = vpop.f32.mrb[0].mxu0
      %500 = vmatprep.mubr.bf16.mxu0 0
      %501 = vmatmul.mubr.bf16.gmra.mrb[0].mxu0 %v373
      %v502 = vpop.f32.mrb[0].mxu0
      %v503 = vadd.f32 0.0, %v502
      %v504 = vpop.f32.mrb[0].mxu0
      %v505 = vpop.f32.mrb[0].mxu0
      %v506 = vadd.f32 0.0, %v505
      %v507 = vpop.f32.mrb[0].mxu0
      %508 = vmatprep.mubr.bf16.mxu0 0
      %509 = vmatmul.mubr.bf16.gmra.mrb[0].mxu0 %v374
      %v510 = vpop.f32.mrb[0].mxu0
      %v511 = vadd.f32 0.0, %v510
      %v512 = vpop.f32.mrb[0].mxu0
      %v513 = vpop.f32.mrb[0].mxu0
      %v514 = vadd.f32 0.0, %v513
      %v515 = vpop.f32.mrb[0].mxu0
      %516 = vmatprep.mubr.bf16.mxu0 0
      %517 = vmatmul.mubr.bf16.gmra.mrb[0].mxu0 %v375
      %v518 = vpop.f32.mrb[0].mxu0
      %v519 = vadd.f32 0.0, %v518
      %v520 = vpop.f32.mrb[0].mxu0
      %v521 = vpop.f32.mrb[0].mxu0
      %v522 = vadd.f32 0.0, %v521
      %v523 = vpop.f32.mrb[0].mxu0
      %524 = vmatprep.mubr.bf16.mxu0 0
      %525 = vmatmul.mubr.bf16.gmra.mrb[0].mxu0 %v376
      %v526 = vpop.f32.mrb[0].mxu0
      %v527 = vadd.f32 0.0, %v526
      %v528 = vpop.f32.mrb[0].mxu0
      %v529 = vpop.f32.mrb[0].mxu0
      %v530 = vadd.f32 0.0, %v529
      %v531 = vpop.f32.mrb[0].mxu0
      %532 = vmatprep.mubr.bf16.mxu0 0
      %533 = vmatmul.mubr.bf16.gmra.mrb[0].mxu0 %v377
      %v534 = vpop.f32.mrb[0].mxu0
      %v535 = vadd.f32 0.0, %v534
      %v536 = vpop.f32.mrb[0].mxu0
      %v537 = vpop.f32.mrb[0].mxu0
      %v538 = vadd.f32 0.0, %v537
      %v539 = vpop.f32.mrb[0].mxu0
      %540 = vmatprep.mubr.bf16.mxu0 0
      %541 = vmatmul.mubr.bf16.gmra.mrb[0].mxu0 %v378
      %v542 = vpop.f32.mrb[0].mxu0
      %v543 = vadd.f32 0.0, %v542
      %v544 = vpop.f32.mrb[0].mxu0
      %v545 = vpop.f32.mrb[0].mxu0
      %v546 = vadd.f32 0.0, %v545
      %v547 = vpop.f32.mrb[0].mxu0
      %548 = vmatprep.mubr.bf16.mxu0 0
      %549 = vmatmul.mubr.bf16.gmra.mrb[0].mxu0 %v379
      %v550 = vpop.f32.mrb[0].mxu0
      %v551 = vadd.f32 0.0, %v550
      %v552 = vpop.f32.mrb[0].mxu0
      %v553 = vpop.f32.mrb[0].mxu0
      %v554 = vadd.f32 0.0, %v553
      %v555 = vpop.f32.mrb[0].mxu0
      %556 = vmatprep.mubr.bf16.mxu0 0
      %557 = vmatmul.mubr.bf16.gmra.mrb[0].mxu0 %v380
      %v558 = vpop.f32.mrb[0].mxu0
      %v559 = vadd.f32 0.0, %v558
      %v560 = vpop.f32.mrb[0].mxu0
      %v561 = vpop.f32.mrb[0].mxu0
      %v562 = vadd.f32 0.0, %v561
      %v563 = vpop.f32.mrb[0].mxu0
      %564 = vmatprep.mubr.bf16.mxu0 0
      %565 = vmatmul.mubr.bf16.gmra.mrb[0].mxu0 %v381
      %v566 = vpop.f32.mrb[0].mxu0
      %v567 = vadd.f32 0.0, %v566
      %v568 = vpop.f32.mrb[0].mxu0
      %v569 = vpop.f32.mrb[0].mxu0
      %v570 = vadd.f32 0.0, %v569
      %v571 = vpop.f32.mrb[0].mxu0
      %572 = vmatprep.mubr.bf16.mxu0 0
      %573 = vmatmul.mubr.bf16.gmra.mrb[0].mxu0 %v382
      %v574 = vpop.f32.mrb[0].mxu0
      %v575 = vadd.f32 0.0, %v574
      %v576 = vpop.f32.mrb[0].mxu0
      %v577 = vpop.f32.mrb[0].mxu0
      %v578 = vadd.f32 0.0, %v577
      %v579 = vpop.f32.mrb[0].mxu0
      %580 = vmatprep.mubr.bf16.mxu0 0
      %581 = vmatmul.mubr.bf16.gmra.mrb[0].mxu0 %v383
      %v582 = vpop.f32.mrb[0].mxu0
      %v583 = vadd.f32 0.0, %v582
      %v584 = vpop.f32.mrb[0].mxu0
      %v585 = vpop.f32.mrb[0].mxu0
      %v586 = vadd.f32 0.0, %v585
      %v587 = vpop.f32.mrb[0].mxu0
      %588 = vmatprep.mubr.bf16.mxu0 0
      %589 = vmatmul.mubr.bf16.gmra.mrb[0].mxu0 %v384
      %v590 = vpop.f32.mrb[0].mxu0
      %v591 = vadd.f32 0.0, %v590
      %v592 = vpop.f32.mrb[0].mxu0
      %v593 = vpop.f32.mrb[0].mxu0
      %v594 = vadd.f32 0.0, %v593
      %v595 = vpop.f32.mrb[0].mxu0
      %596 = vmatprep.mubr.bf16.mxu0 0
      %597 = vmatmul.mubr.bf16.gmra.mrb[0].mxu0 %v385
      %v598 = vpop.f32.mrb[0].mxu0
      %v599 = vadd.f32 0.0, %v598
      %v600 = vpop.f32.mrb[0].mxu0
      %v601 = vpop.f32.mrb[0].mxu0
      %v602 = vadd.f32 0.0, %v601
      %v603 = vpop.f32.mrb[0].mxu0
      %604 = vmatprep.mubr.bf16.mxu0 0
      %605 = vmatmul.mubr.bf16.gmra.mrb[0].mxu0 %v386
      %v606 = vpop.f32.mrb[0].mxu0
      %v607 = vadd.f32 0.0, %v606
      %v608 = vpop.f32.mrb[0].mxu0
      %v609 = vpop.f32.mrb[0].mxu0
      %v610 = vadd.f32 0.0, %v609
      %v611 = vpop.f32.mrb[0].mxu0
      %612 = vmatprep.mubr.bf16.mxu0 0
      %613 = vmatmul.mubr.bf16.gmra.mrb[0].mxu0 %v387
      %v614 = vpop.f32.mrb[0].mxu0
      %v615 = vadd.f32 0.0, %v614
      %v616 = vpop.f32.mrb[0].mxu0
      %v617 = vpop.f32.mrb[0].mxu0
      %v618 = vadd.f32 0.0, %v617
      %v619 = vpop.f32.mrb[0].mxu0
      %620 = vmatprep.mubr.bf16.mxu0 0
      %621 = vmatmul.mubr.bf16.gmra.mrb[0].mxu0 %v388
      %v622 = vpop.f32.mrb[0].mxu0
      %v623 = vadd.f32 0.0, %v622
      %v624 = vpop.f32.mrb[0].mxu0
      %v625 = vpop.f32.mrb[0].mxu0
      %v626 = vadd.f32 0.0, %v625
      %v627 = vpop.f32.mrb[0].mxu0
      %628 = vmatprep.mubr.bf16.mxu0 0
      %629 = vmatmul.mubr.bf16.gmra.mrb[0].mxu0 %v389
      %v630 = vpop.f32.mrb[0].mxu0
      %v631 = vadd.f32 0.0, %v630
      %v632 = vpop.f32.mrb[0].mxu0
      %v633 = vpop.f32.mrb[0].mxu0
      %v634 = vadd.f32 0.0, %v633
      %v635 = vpop.f32.mrb[0].mxu0
      %636 = vmatprep.mubr.bf16.mxu0 0
      %637 = vmatmul.mubr.bf16.gmra.mrb[0].mxu0 %v390
      %v638 = vpop.f32.mrb[0].mxu0
      %v639 = vadd.f32 0.0, %v638
      %v640 = vpop.f32.mrb[0].mxu0
      %v641 = vpop.f32.mrb[0].mxu0
      %v642 = vadd.f32 0.0, %v641
      %v643 = vpop.f32.mrb[0].mxu0
      %644 = vmatprep.mubr.bf16.mxu0 0
      %645 = vmatmul.mubr.bf16.gmra.mrb[0].mxu0 %v391
      %v646 = vpop.f32.mrb[0].mxu0
      %v647 = vadd.f32 0.0, %v646
      %v648 = vpop.f32.mrb[0].mxu0
      %v649 = vpop.f32.mrb[0].mxu0
      %v650 = vadd.f32 0.0, %v649
      %v651 = vpop.f32.mrb[0].mxu0
      %652 = vmatprep.mubr.bf16.mxu0 0
      %653 = vmatmul.mubr.bf16.gmra.mrb[0].mxu0 %v392
      %v654 = vpop.f32.mrb[0].mxu0
      %v655 = vadd.f32 0.0, %v654
      %v656 = vpop.f32.mrb[0].mxu0
      %v657 = vpop.f32.mrb[0].mxu0
      %v658 = vadd.f32 0.0, %v657
      %v659 = vpop.f32.mrb[0].mxu0
      %660 = vmatprep.mubr.bf16.mxu0 0
      %661 = vmatmul.mubr.bf16.gmra.mrb[0].mxu0 %v393
      %v662 = vpop.f32.mrb[0].mxu0
      %v663 = vadd.f32 0.0, %v662
      %v664 = vpop.f32.mrb[0].mxu0
      %v665 = vpop.f32.mrb[0].mxu0
      %v666 = vadd.f32 0.0, %v665
      %v667 = vpop.f32.mrb[0].mxu0
      %668 = vmatprep.mubr.bf16.mxu0 0
      %669 = vmatmul.mubr.bf16.gmra.mrb[0].mxu0 %v394
      %v670 = vpop.f32.mrb[0].mxu0
      %v671 = vadd.f32 0.0, %v670
      %v672 = vpop.f32.mrb[0].mxu0
      %v673 = vpop.f32.mrb[0].mxu0
      %v674 = vpop.f32.mrb[0].mxu0
      %675 = vdwg.mxu0
      %v692 = vunpack.c.l.b16 %v311
      %v693 = vunpack.c.l.b16 %v312
      %v694 = vunpack.c.l.b16 %v313
      %v695 = vunpack.c.l.b16 %v314
      %v696 = vunpack.c.l.b16 %v315
      %v697 = vunpack.c.l.b16 %v316
      %v698 = vunpack.c.l.b16 %v317
      %v699 = vunpack.c.l.b16 %v318
      %v700 = vunpack.c.l.b16 %v319
      %v701 = vunpack.c.l.b16 %v320
      %v702 = vunpack.c.l.b16 %v321
      %v703 = vunpack.c.l.b16 %v322
      %v704 = vunpack.c.l.b16 %v323
      %v705 = vunpack.c.l.b16 %v324
      %v706 = vunpack.c.l.b16 %v325
      %v707 = vunpack.c.l.b16 %v326
      %v708 = vpack.c.b16 %v693, %v692
      %v709 = vpack.c.b16 %v695, %v694
      %v710 = vpack.c.b16 %v697, %v696
      %v711 = vpack.c.b16 %v699, %v698
      %v712 = vpack.c.b16 %v701, %v700
      %v713 = vpack.c.b16 %v703, %v702
      %v714 = vpack.c.b16 %v705, %v704
      %v715 = vpack.c.b16 %v707, %v706
      %724 = vmatprep.subr.bf16.mxu0 0
      %725 = vmatpush1.bf16.msra.mxu0 %v708
      %726 = vmatprep.subr.bf16.mxu0 0
      %727 = vmatpush1.bf16.msra.mxu0 %v709
      %728 = vmatprep.subr.bf16.mxu0 0
      %729 = vmatpush1.bf16.msra.mxu0 %v710
      %730 = vmatprep.subr.bf16.mxu0 0
      %731 = vmatpush1.bf16.msra.mxu0 %v711
      %732 = vmatprep.subr.bf16.mxu0 0
      %733 = vmatpush1.bf16.msra.mxu0 %v712
      %734 = vmatprep.subr.bf16.mxu0 0
      %735 = vmatpush1.bf16.msra.mxu0 %v713
      %736 = vmatprep.subr.bf16.mxu0 0
      %737 = vmatpush1.bf16.msra.mxu0 %v714
      %738 = vmatprep.subr.bf16.mxu0 0
      %739 = vmatpush1.bf16.msra.mxu0 %v715
      %740 = vmatprep.subr.bf16.mxu0 0
      %741 = vmatpush1.bf16.msra.mxu0 0
      %742 = vmatprep.subr.bf16.mxu0 0
      %743 = vmatpush1.bf16.msra.mxu0 0
      %744 = vmatprep.subr.bf16.mxu0 0
      %745 = vmatpush1.bf16.msra.mxu0 0
      %746 = vmatprep.subr.bf16.mxu0 0
      %747 = vmatpush1.bf16.msra.mxu0 0
      %748 = vmatprep.subr.bf16.mxu0 0
      %749 = vmatpush1.bf16.msra.mxu0 0
      %750 = vmatprep.subr.bf16.mxu0 0
      %751 = vmatpush1.bf16.msra.mxu0 0
      %752 = vmatprep.subr.bf16.mxu0 0
      %753 = vmatpush1.bf16.msra.mxu0 0
      %754 = vmatprep.subr.bf16.mxu0 0
      %755 = vmatpush1.bf16.msra.mxu0 0
      %756 = vmatprep.mubr.bf16.mxu0 0
      %757 = vmatmul.mubr.bf16.gmra.mrb[0].mxu0 %v288
      %v758 = vpop.f32.mrb[0].mxu0
      %v759 = vadd.f32 %v495, %v758
      %v760 = vpop.f32.mrb[0].mxu0
      %v761 = vpop.f32.mrb[0].mxu0
      %v762 = vadd.f32 %v498, %v761
      %v763 = vpop.f32.mrb[0].mxu0
      %764 = vmatprep.mubr.bf16.mxu0 0
      %765 = vmatmul.mubr.bf16.gmra.mrb[0].mxu0 %v289
      %v766 = vpop.f32.mrb[0].mxu0
      %v767 = vadd.f32 %v503, %v766
      %v768 = vpop.f32.mrb[0].mxu0
      %v769 = vpop.f32.mrb[0].mxu0
      %v770 = vadd.f32 %v506, %v769
      %v771 = vpop.f32.mrb[0].mxu0
      %772 = vmatprep.mubr.bf16.mxu0 0
      %773 = vmatmul.mubr.bf16.gmra.mrb[0].mxu0 %v290
      %v774 = vpop.f32.mrb[0].mxu0
      %v775 = vadd.f32 %v511, %v774
      %v776 = vpop.f32.mrb[0].mxu0
      %v777 = vpop.f32.mrb[0].mxu0
      %v778 = vadd.f32 %v514, %v777
      %v779 = vpop.f32.mrb[0].mxu0
      %780 = vmatprep.mubr.bf16.mxu0 0
      %781 = vmatmul.mubr.bf16.gmra.mrb[0].mxu0 %v291
      %v782 = vpop.f32.mrb[0].mxu0
      %v783 = vadd.f32 %v519, %v782
      %v784 = vpop.f32.mrb[0].mxu0
      %v785 = vpop.f32.mrb[0].mxu0
      %v786 = vadd.f32 %v522, %v785
      %v787 = vpop.f32.mrb[0].mxu0
      %788 = vmatprep.mubr.bf16.mxu0 0
      %789 = vmatmul.mubr.bf16.gmra.mrb[0].mxu0 %v292
      %v790 = vpop.f32.mrb[0].mxu0
      %v791 = vadd.f32 %v527, %v790
      %v792 = vpop.f32.mrb[0].mxu0
      %v793 = vpop.f32.mrb[0].mxu0
      %v794 = vadd.f32 %v530, %v793
      %v795 = vpop.f32.mrb[0].mxu0
      %796 = vmatprep.mubr.bf16.mxu0 0
      %797 = vmatmul.mubr.bf16.gmra.mrb[0].mxu0 %v293
      %v798 = vpop.f32.mrb[0].mxu0
      %v799 = vadd.f32 %v535, %v798
      %v800 = vpop.f32.mrb[0].mxu0
      %v801 = vpop.f32.mrb[0].mxu0
      %v802 = vadd.f32 %v538, %v801
      %v803 = vpop.f32.mrb[0].mxu0
      %804 = vmatprep.mubr.bf16.mxu0 0
      %805 = vmatmul.mubr.bf16.gmra.mrb[0].mxu0 %v294
      %v806 = vpop.f32.mrb[0].mxu0
      %v807 = vadd.f32 %v543, %v806
      %v808 = vpop.f32.mrb[0].mxu0
      %v809 = vpop.f32.mrb[0].mxu0
      %v810 = vadd.f32 %v546, %v809
      %v811 = vpop.f32.mrb[0].mxu0
      %812 = vmatprep.mubr.bf16.mxu0 0
      %813 = vmatmul.mubr.bf16.gmra.mrb[0].mxu0 %v295
      %v814 = vpop.f32.mrb[0].mxu0
      %v815 = vadd.f32 %v551, %v814
      %v816 = vpop.f32.mrb[0].mxu0
      %v817 = vpop.f32.mrb[0].mxu0
      %v818 = vadd.f32 %v554, %v817
      %v819 = vpop.f32.mrb[0].mxu0
      %820 = vmatprep.mubr.bf16.mxu0 0
      %821 = vmatmul.mubr.bf16.gmra.mrb[0].mxu0 %v296
      %v822 = vpop.f32.mrb[0].mxu0
      %v823 = vadd.f32 %v559, %v822
      %v824 = vpop.f32.mrb[0].mxu0
      %v825 = vpop.f32.mrb[0].mxu0
      %v826 = vadd.f32 %v562, %v825
      %v827 = vpop.f32.mrb[0].mxu0
      %828 = vmatprep.mubr.bf16.mxu0 0
      %829 = vmatmul.mubr.bf16.gmra.mrb[0].mxu0 %v297
      %v830 = vpop.f32.mrb[0].mxu0
      %v831 = vadd.f32 %v567, %v830
      %v832 = vpop.f32.mrb[0].mxu0
      %v833 = vpop.f32.mrb[0].mxu0
      %v834 = vadd.f32 %v570, %v833
      %v835 = vpop.f32.mrb[0].mxu0
      %836 = vmatprep.mubr.bf16.mxu0 0
      %837 = vmatmul.mubr.bf16.gmra.mrb[0].mxu0 %v298
      %v838 = vpop.f32.mrb[0].mxu0
      %v839 = vadd.f32 %v575, %v838
      %v840 = vpop.f32.mrb[0].mxu0
      %v841 = vpop.f32.mrb[0].mxu0
      %v842 = vadd.f32 %v578, %v841
      %v843 = vpop.f32.mrb[0].mxu0
      %844 = vmatprep.mubr.bf16.mxu0 0
      %845 = vmatmul.mubr.bf16.gmra.mrb[0].mxu0 %v299
      %v846 = vpop.f32.mrb[0].mxu0
      %v847 = vadd.f32 %v583, %v846
      %v848 = vpop.f32.mrb[0].mxu0
      %v849 = vpop.f32.mrb[0].mxu0
      %v850 = vadd.f32 %v586, %v849
      %v851 = vpop.f32.mrb[0].mxu0
      %852 = vmatprep.mubr.bf16.mxu0 0
      %853 = vmatmul.mubr.bf16.gmra.mrb[0].mxu0 %v300
      %v854 = vpop.f32.mrb[0].mxu0
      %v855 = vadd.f32 %v591, %v854
      %v856 = vpop.f32.mrb[0].mxu0
      %v857 = vpop.f32.mrb[0].mxu0
      %v858 = vadd.f32 %v594, %v857
      %v859 = vpop.f32.mrb[0].mxu0
      %860 = vmatprep.mubr.bf16.mxu0 0
      %861 = vmatmul.mubr.bf16.gmra.mrb[0].mxu0 %v301
      %v862 = vpop.f32.mrb[0].mxu0
      %v863 = vadd.f32 %v599, %v862
      %v864 = vpop.f32.mrb[0].mxu0
      %v865 = vpop.f32.mrb[0].mxu0
      %v866 = vadd.f32 %v602, %v865
      %v867 = vpop.f32.mrb[0].mxu0
      %868 = vmatprep.mubr.bf16.mxu0 0
      %869 = vmatmul.mubr.bf16.gmra.mrb[0].mxu0 %v302
      %v870 = vpop.f32.mrb[0].mxu0
      %v871 = vadd.f32 %v607, %v870
      %v872 = vpop.f32.mrb[0].mxu0
      %v873 = vpop.f32.mrb[0].mxu0
      %v874 = vadd.f32 %v610, %v873
      %v875 = vpop.f32.mrb[0].mxu0
      %876 = vmatprep.mubr.bf16.mxu0 0
      %877 = vmatmul.mubr.bf16.gmra.mrb[0].mxu0 %v303
      %v878 = vpop.f32.mrb[0].mxu0
      %v879 = vadd.f32 %v615, %v878
      %v880 = vpop.f32.mrb[0].mxu0
      %v881 = vpop.f32.mrb[0].mxu0
      %v882 = vadd.f32 %v618, %v881
      %v883 = vpop.f32.mrb[0].mxu0
      %884 = vmatprep.mubr.bf16.mxu0 0
      %885 = vmatmul.mubr.bf16.gmra.mrb[0].mxu0 %v304
      %v886 = vpop.f32.mrb[0].mxu0
      %v887 = vadd.f32 %v623, %v886
      %v888 = vpop.f32.mrb[0].mxu0
      %v889 = vpop.f32.mrb[0].mxu0
      %v890 = vadd.f32 %v626, %v889
      %v891 = vpop.f32.mrb[0].mxu0
      %892 = vmatprep.mubr.bf16.mxu0 0
      %893 = vmatmul.mubr.bf16.gmra.mrb[0].mxu0 %v305
      %v894 = vpop.f32.mrb[0].mxu0
      %v895 = vadd.f32 %v631, %v894
      %v896 = vpop.f32.mrb[0].mxu0
      %v897 = vpop.f32.mrb[0].mxu0
      %v898 = vadd.f32 %v634, %v897
      %v899 = vpop.f32.mrb[0].mxu0
      %900 = vmatprep.mubr.bf16.mxu0 0
      %901 = vmatmul.mubr.bf16.gmra.mrb[0].mxu0 %v306
      %v902 = vpop.f32.mrb[0].mxu0
      %v903 = vadd.f32 %v639, %v902
      %v904 = vpop.f32.mrb[0].mxu0
      %v905 = vpop.f32.mrb[0].mxu0
      %v906 = vadd.f32 %v642, %v905
      %v907 = vpop.f32.mrb[0].mxu0
      %908 = vmatprep.mubr.bf16.mxu0 0
      %909 = vmatmul.mubr.bf16.gmra.mrb[0].mxu0 %v307
      %v910 = vpop.f32.mrb[0].mxu0
      %v911 = vadd.f32 %v647, %v910
      %v912 = vpop.f32.mrb[0].mxu0
      %v913 = vpop.f32.mrb[0].mxu0
      %v914 = vadd.f32 %v650, %v913
      %v915 = vpop.f32.mrb[0].mxu0
      %916 = vmatprep.mubr.bf16.mxu0 0
      %917 = vmatmul.mubr.bf16.gmra.mrb[0].mxu0 %v308
      %v918 = vpop.f32.mrb[0].mxu0
      %v919 = vadd.f32 %v655, %v918
      %v920 = vpop.f32.mrb[0].mxu0
      %v921 = vpop.f32.mrb[0].mxu0
      %v922 = vadd.f32 %v658, %v921
      %v923 = vpop.f32.mrb[0].mxu0
      %924 = vmatprep.mubr.bf16.mxu0 0
      %925 = vmatmul.mubr.bf16.gmra.mrb[0].mxu0 %v309
      %v926 = vpop.f32.mrb[0].mxu0
      %v927 = vadd.f32 %v663, %v926
      %v928 = vpop.f32.mrb[0].mxu0
      %v929 = vpop.f32.mrb[0].mxu0
      %v930 = vadd.f32 %v666, %v929
      %v931 = vpop.f32.mrb[0].mxu0
      %932 = vmatprep.mubr.bf16.mxu0 0
      %933 = vmatmul.mubr.bf16.gmra.mrb[0].mxu0 %v310
      %v934 = vpop.f32.mrb[0].mxu0
      %v935 = vadd.f32 %v671, %v934
      %v936 = vpop.f32.mrb[0].mxu0
      %v937 = vpop.f32.mrb[0].mxu0
      %v938 = vpop.f32.mrb[0].mxu0
      %939 = vdwg.mxu0
      %v940 = vld [vmem:[%s230 + $0x13] sm:$0xff]
      %v941 = vld [vmem:[%s230 + $0x1b] sm:$0xff]
      %v942 = vld [vmem:[%s230 + $0x23] sm:$0xff]
      %v943 = vld [vmem:[%s230 + $0x2b] sm:$0xff]
      %v944 = vld [vmem:[%s230 + $0x33] sm:$0xff]
      %v945 = vld [vmem:[%s230 + $0x3b] sm:$0xff]
      %v946 = vld [vmem:[%s230 + $0x43] sm:$0xff]
      %v947 = vld [vmem:[%s230 + $0x4b] sm:$0xff]
      %v948 = vld [vmem:[%s230 + $0x53] sm:$0xff]
      %v949 = vld [vmem:[%s230 + $0x5b] sm:$0xff]
      %v950 = vld [vmem:[%s230 + $0x63] sm:$0xff]
      %v951 = vld [vmem:[%s230 + $0x6b] sm:$0xff]
      %v952 = vld [vmem:[%s230 + $0x73] sm:$0xff]
      %v953 = vld [vmem:[%s230 + $0x7b] sm:$0xff]
      %v954 = vld [vmem:[%s230 + $0x83] sm:$0xff]
      %v955 = vld [vmem:[%s230 + $0x8b] sm:$0xff]
      %v956 = vld [vmem:[%s230 + $0x93] sm:$0xff]
      %v957 = vld [vmem:[%s230 + $0x9b] sm:$0xff]
      %v958 = vld [vmem:[%s230 + $0xa3] sm:$0xff]
      %v959 = vld [vmem:[%s230 + $0xab] sm:$0xff]
      %v960 = vld [vmem:[%s230 + $0xb3] sm:$0xff]
      %v961 = vld [vmem:[%s230 + $0xbb] sm:$0xff]
      %v962 = vld [vmem:[%s230 + $0xc3] sm:$0xff]
      %v963 = vld [vmem:[%s230 + $0xcb] sm:$0xff]
      %v964 = vld [vmem:[%s230 + $0xd3] sm:$0xff]
      %v965 = vld [vmem:[%s230 + $0xdb] sm:$0xff]
      %v966 = vld [vmem:[%s230 + $0xe3] sm:$0xff]
      %v967 = vld [vmem:[%s230 + $0xeb] sm:$0xff]
      %v968 = vld [vmem:[%s230 + $0xf3] sm:$0xff]
      %v969 = vld [vmem:[%s230 + $0xfb] sm:$0xff]
      %v970 = vld [vmem:[%s230 + $0x103] sm:$0xff]
      %v971 = vld [vmem:[%s230 + $0x10b] sm:$0xff]
      %v972 = vld [vmem:[%s230 + $0x113] sm:$0xff]
      %v973 = vld [vmem:[%s230 + $0x11b] sm:$0xff]
      %v974 = vld [vmem:[%s230 + $0x123] sm:$0xff]
      %v975 = vld [vmem:[%s230 + $0x12b] sm:$0xff]
      %v976 = vld [vmem:[%s230 + $0x133] sm:$0xff]
      %v977 = vld [vmem:[%s230 + $0x13b] sm:$0xff]
      %v978 = vld [vmem:[%s230 + $0x143] sm:$0xff]
      %v979 = vld [vmem:[%s230 + $0x14b] sm:$0xff]
      %v980 = vld [vmem:[%s230 + $0x153] sm:$0xff]
      %v981 = vld [vmem:[%s230 + $0x15b] sm:$0xff]
      %v982 = vld [vmem:[%s230 + $0x163] sm:$0xff]
      %v983 = vld [vmem:[%s230 + $0x16b] sm:$0xff]
      %v984 = vld [vmem:[%s230 + $0x173] sm:$0xff]
      %v985 = vpack.c.bf16 %v941, %v940
      %v986 = vpack.c.bf16 %v943, %v942
      %v987 = vpack.c.bf16 %v945, %v944
      %v988 = vpack.c.bf16 %v947, %v946
      %v989 = vpack.c.bf16 %v949, %v948
      %v990 = vpack.c.bf16 %v951, %v950
      %v991 = vpack.c.bf16 %v953, %v952
      %v992 = vpack.c.bf16 %v955, %v954
      %v993 = vpack.c.bf16 %v957, %v956
      %v994 = vpack.c.bf16 %v959, %v958
      %v995 = vpack.c.bf16 %v961, %v960
      %v996 = vpack.c.bf16 %v963, %v962
      %v997 = vpack.c.bf16 %v965, %v964
      %v998 = vpack.c.bf16 %v967, %v966
      %v999 = vpack.c.bf16 %v969, %v968
      %v1000 = vpack.c.bf16 %v971, %v970
      %v1001 = vpack.c.bf16 %v973, %v972
      %v1002 = vpack.c.bf16 %v975, %v974
      %v1003 = vpack.c.bf16 %v977, %v976
      %v1004 = vpack.c.bf16 %v979, %v978
      %v1005 = vpack.c.bf16 %v981, %v980
      %v1006 = vpack.c.bf16 %v983, %v982
      %v1007 = vpack.c.bf16 %v984, %v984
      %s1008 = scalar_lea.vmem %s1, 128
      %v1009 = vld [vmem:[%s1008] sm:$0xf]
      %v1010 = vld [vmem:[%s1008 + $0x4] sm:$0xf]
      %v1011 = vld [vmem:[%s1008 + $0x8] sm:$0xf]
      %v1012 = vld [vmem:[%s1008 + $0xc] sm:$0xf]
      %v1013 = vld [vmem:[%s1008 + $0x10] sm:$0xf]
      %v1014 = vld [vmem:[%s1008 + $0x14] sm:$0xf]
      %v1015 = vld [vmem:[%s1008 + $0x18] sm:$0xf]
      %v1016 = vld [vmem:[%s1008 + $0x1c] sm:$0xf]
      %v1017 = vld [vmem:[%s1008 + $0x20] sm:$0xf]
      %v1018 = vld [vmem:[%s1008 + $0x24] sm:$0xf]
      %v1019 = vld [vmem:[%s1008 + $0x28] sm:$0xf]
      %v1020 = vld [vmem:[%s1008 + $0x2c] sm:$0xf]
      %v1021 = vld [vmem:[%s1008 + $0x30] sm:$0xf]
      %v1022 = vld [vmem:[%s1008 + $0x34] sm:$0xf]
      %v1023 = vld [vmem:[%s1008 + $0x38] sm:$0xf]
      %v1024 = vld [vmem:[%s1008 + $0x3c] sm:$0xf]
      %v1041 = vunpack.c.l.b16 %v1009
      %v1042 = vunpack.c.l.b16 %v1010
      %v1043 = vunpack.c.l.b16 %v1011
      %v1044 = vunpack.c.l.b16 %v1012
      %v1045 = vunpack.c.l.b16 %v1013
      %v1046 = vunpack.c.l.b16 %v1014
      %v1047 = vunpack.c.l.b16 %v1015
      %v1048 = vunpack.c.l.b16 %v1016
      %v1049 = vunpack.c.l.b16 %v1017
      %v1050 = vunpack.c.l.b16 %v1018
      %v1051 = vunpack.c.l.b16 %v1019
      %v1052 = vunpack.c.l.b16 %v1020
      %v1053 = vunpack.c.l.b16 %v1021
      %v1054 = vunpack.c.l.b16 %v1022
      %v1055 = vunpack.c.l.b16 %v1023
      %v1056 = vunpack.c.l.b16 %v1024
      %v1057 = vpack.c.b16 %v1042, %v1041
      %v1058 = vpack.c.b16 %v1044, %v1043
      %v1059 = vpack.c.b16 %v1046, %v1045
      %v1060 = vpack.c.b16 %v1048, %v1047
      %v1061 = vpack.c.b16 %v1050, %v1049
      %v1062 = vpack.c.b16 %v1052, %v1051
      %v1063 = vpack.c.b16 %v1054, %v1053
      %v1064 = vpack.c.b16 %v1056, %v1055
      %1073 = vmatprep.subr.bf16.mxu0 0
      %1074 = vmatpush1.bf16.msra.mxu0 %v1057
      %1075 = vmatprep.subr.bf16.mxu0 0
      %1076 = vmatpush1.bf16.msra.mxu0 %v1058
      %1077 = vmatprep.subr.bf16.mxu0 0
      %1078 = vmatpush1.bf16.msra.mxu0 %v1059
      %1079 = vmatprep.subr.bf16.mxu0 0
      %1080 = vmatpush1.bf16.msra.mxu0 %v1060
      %1081 = vmatprep.subr.bf16.mxu0 0
      %1082 = vmatpush1.bf16.msra.mxu0 %v1061
      %1083 = vmatprep.subr.bf16.mxu0 0
      %1084 = vmatpush1.bf16.msra.mxu0 %v1062
      %1085 = vmatprep.subr.bf16.mxu0 0
      %1086 = vmatpush1.bf16.msra.mxu0 %v1063
      %1087 = vmatprep.subr.bf16.mxu0 0
      %1088 = vmatpush1.bf16.msra.mxu0 %v1064
      %1089 = vmatprep.subr.bf16.mxu0 0
      %1090 = vmatpush1.bf16.msra.mxu0 0
      %1091 = vmatprep.subr.bf16.mxu0 0
      %1092 = vmatpush1.bf16.msra.mxu0 0
      %1093 = vmatprep.subr.bf16.mxu0 0
      %1094 = vmatpush1.bf16.msra.mxu0 0
      %1095 = vmatprep.subr.bf16.mxu0 0
      %1096 = vmatpush1.bf16.msra.mxu0 0
      %1097 = vmatprep.subr.bf16.mxu0 0
      %1098 = vmatpush1.bf16.msra.mxu0 0
      %1099 = vmatprep.subr.bf16.mxu0 0
      %1100 = vmatpush1.bf16.msra.mxu0 0
      %1101 = vmatprep.subr.bf16.mxu0 0
      %1102 = vmatpush1.bf16.msra.mxu0 0
      %1103 = vmatprep.subr.bf16.mxu0 0
      %1104 = vmatpush1.bf16.msra.mxu0 0
      %1105 = vmatprep.mubr.bf16.mxu0 0
      %1106 = vmatmul.mubr.bf16.gmra.mrb[0].mxu0 %v985
      %v1107 = vpop.f32.mrb[0].mxu0
      %v1108 = vadd.f32 0.0, %v1107
      %v1109 = vpop.f32.mrb[0].mxu0
      %v1110 = vpop.f32.mrb[0].mxu0
      %v1111 = vadd.f32 0.0, %v1110
      %v1112 = vpop.f32.mrb[0].mxu0
      %1113 = vmatprep.mubr.bf16.mxu0 0
      %1114 = vmatmul.mubr.bf16.gmra.mrb[0].mxu0 %v986
      %v1115 = vpop.f32.mrb[0].mxu0
      %v1116 = vadd.f32 0.0, %v1115
      %v1117 = vpop.f32.mrb[0].mxu0
      %v1118 = vpop.f32.mrb[0].mxu0
      %v1119 = vadd.f32 0.0, %v1118
      %v1120 = vpop.f32.mrb[0].mxu0
      %1121 = vmatprep.mubr.bf16.mxu0 0
      %1122 = vmatmul.mubr.bf16.gmra.mrb[0].mxu0 %v987
      %v1123 = vpop.f32.mrb[0].mxu0
      %v1124 = vadd.f32 0.0, %v1123
      %v1125 = vpop.f32.mrb[0].mxu0
      %v1126 = vpop.f32.mrb[0].mxu0
      %v1127 = vadd.f32 0.0, %v1126
      %v1128 = vpop.f32.mrb[0].mxu0
      %1129 = vmatprep.mubr.bf16.mxu0 0
      %1130 = vmatmul.mubr.bf16.gmra.mrb[0].mxu0 %v988
      %v1131 = vpop.f32.mrb[0].mxu0
      %v1132 = vadd.f32 0.0, %v1131
      %v1133 = vpop.f32.mrb[0].mxu0
      %v1134 = vpop.f32.mrb[0].mxu0
      %v1135 = vadd.f32 0.0, %v1134
      %v1136 = vpop.f32.mrb[0].mxu0
      %1137 = vmatprep.mubr.bf16.mxu0 0
      %1138 = vmatmul.mubr.bf16.gmra.mrb[0].mxu0 %v989
      %v1139 = vpop.f32.mrb[0].mxu0
      %v1140 = vadd.f32 0.0, %v1139
      %v1141 = vpop.f32.mrb[0].mxu0
      %v1142 = vpop.f32.mrb[0].mxu0
      %v1143 = vadd.f32 0.0, %v1142
      %v1144 = vpop.f32.mrb[0].mxu0
      %1145 = vmatprep.mubr.bf16.mxu0 0
      %1146 = vmatmul.mubr.bf16.gmra.mrb[0].mxu0 %v990
      %v1147 = vpop.f32.mrb[0].mxu0
      %v1148 = vadd.f32 0.0, %v1147
      %v1149 = vpop.f32.mrb[0].mxu0
      %v1150 = vpop.f32.mrb[0].mxu0
      %v1151 = vadd.f32 0.0, %v1150
      %v1152 = vpop.f32.mrb[0].mxu0
      %1153 = vmatprep.mubr.bf16.mxu0 0
      %1154 = vmatmul.mubr.bf16.gmra.mrb[0].mxu0 %v991
      %v1155 = vpop.f32.mrb[0].mxu0
      %v1156 = vadd.f32 0.0, %v1155
      %v1157 = vpop.f32.mrb[0].mxu0
      %v1158 = vpop.f32.mrb[0].mxu0
      %v1159 = vadd.f32 0.0, %v1158
      %v1160 = vpop.f32.mrb[0].mxu0
      %1161 = vmatprep.mubr.bf16.mxu0 0
      %1162 = vmatmul.mubr.bf16.gmra.mrb[0].mxu0 %v992
      %v1163 = vpop.f32.mrb[0].mxu0
      %v1164 = vadd.f32 0.0, %v1163
      %v1165 = vpop.f32.mrb[0].mxu0
      %v1166 = vpop.f32.mrb[0].mxu0
      %v1167 = vadd.f32 0.0, %v1166
      %v1168 = vpop.f32.mrb[0].mxu0
      %1169 = vmatprep.mubr.bf16.mxu0 0
      %1170 = vmatmul.mubr.bf16.gmra.mrb[0].mxu0 %v993
      %v1171 = vpop.f32.mrb[0].mxu0
      %v1172 = vadd.f32 0.0, %v1171
      %v1173 = vpop.f32.mrb[0].mxu0
      %v1174 = vpop.f32.mrb[0].mxu0
      %v1175 = vadd.f32 0.0, %v1174
      %v1176 = vpop.f32.mrb[0].mxu0
      %1177 = vmatprep.mubr.bf16.mxu0 0
      %1178 = vmatmul.mubr.bf16.gmra.mrb[0].mxu0 %v994
      %v1179 = vpop.f32.mrb[0].mxu0
      %v1180 = vadd.f32 0.0, %v1179
      %v1181 = vpop.f32.mrb[0].mxu0
      %v1182 = vpop.f32.mrb[0].mxu0
      %v1183 = vadd.f32 0.0, %v1182
      %v1184 = vpop.f32.mrb[0].mxu0
      %1185 = vmatprep.mubr.bf16.mxu0 0
      %1186 = vmatmul.mubr.bf16.gmra.mrb[0].mxu0 %v995
      %v1187 = vpop.f32.mrb[0].mxu0
      %v1188 = vadd.f32 0.0, %v1187
      %v1189 = vpop.f32.mrb[0].mxu0
      %v1190 = vpop.f32.mrb[0].mxu0
      %v1191 = vadd.f32 0.0, %v1190
      %v1192 = vpop.f32.mrb[0].mxu0
      %1193 = vmatprep.mubr.bf16.mxu0 0
      %1194 = vmatmul.mubr.bf16.gmra.mrb[0].mxu0 %v996
      %v1195 = vpop.f32.mrb[0].mxu0
      %v1196 = vadd.f32 0.0, %v1195
      %v1197 = vpop.f32.mrb[0].mxu0
      %v1198 = vpop.f32.mrb[0].mxu0
      %v1199 = vadd.f32 0.0, %v1198
      %v1200 = vpop.f32.mrb[0].mxu0
      %1201 = vmatprep.mubr.bf16.mxu0 0
      %1202 = vmatmul.mubr.bf16.gmra.mrb[0].mxu0 %v997
      %v1203 = vpop.f32.mrb[0].mxu0
      %v1204 = vadd.f32 0.0, %v1203
      %v1205 = vpop.f32.mrb[0].mxu0
      %v1206 = vpop.f32.mrb[0].mxu0
      %v1207 = vadd.f32 0.0, %v1206
      %v1208 = vpop.f32.mrb[0].mxu0
      %1209 = vmatprep.mubr.bf16.mxu0 0
      %1210 = vmatmul.mubr.bf16.gmra.mrb[0].mxu0 %v998
      %v1211 = vpop.f32.mrb[0].mxu0
      %v1212 = vadd.f32 0.0, %v1211
      %v1213 = vpop.f32.mrb[0].mxu0
      %v1214 = vpop.f32.mrb[0].mxu0
      %v1215 = vadd.f32 0.0, %v1214
      %v1216 = vpop.f32.mrb[0].mxu0
      %1217 = vmatprep.mubr.bf16.mxu0 0
      %1218 = vmatmul.mubr.bf16.gmra.mrb[0].mxu0 %v999
      %v1219 = vpop.f32.mrb[0].mxu0
      %v1220 = vadd.f32 0.0, %v1219
      %v1221 = vpop.f32.mrb[0].mxu0
      %v1222 = vpop.f32.mrb[0].mxu0
      %v1223 = vadd.f32 0.0, %v1222
      %v1224 = vpop.f32.mrb[0].mxu0
      %1225 = vmatprep.mubr.bf16.mxu0 0
      %1226 = vmatmul.mubr.bf16.gmra.mrb[0].mxu0 %v1000
      %v1227 = vpop.f32.mrb[0].mxu0
      %v1228 = vadd.f32 0.0, %v1227
      %v1229 = vpop.f32.mrb[0].mxu0
      %v1230 = vpop.f32.mrb[0].mxu0
      %v1231 = vadd.f32 0.0, %v1230
      %v1232 = vpop.f32.mrb[0].mxu0
      %1233 = vmatprep.mubr.bf16.mxu0 0
      %1234 = vmatmul.mubr.bf16.gmra.mrb[0].mxu0 %v1001
      %v1235 = vpop.f32.mrb[0].mxu0
      %v1236 = vadd.f32 0.0, %v1235
      %v1237 = vpop.f32.mrb[0].mxu0
      %v1238 = vpop.f32.mrb[0].mxu0
      %v1239 = vadd.f32 0.0, %v1238
      %v1240 = vpop.f32.mrb[0].mxu0
      %1241 = vmatprep.mubr.bf16.mxu0 0
      %1242 = vmatmul.mubr.bf16.gmra.mrb[0].mxu0 %v1002
      %v1243 = vpop.f32.mrb[0].mxu0
      %v1244 = vadd.f32 0.0, %v1243
      %v1245 = vpop.f32.mrb[0].mxu0
      %v1246 = vpop.f32.mrb[0].mxu0
      %v1247 = vadd.f32 0.0, %v1246
      %v1248 = vpop.f32.mrb[0].mxu0
      %1249 = vmatprep.mubr.bf16.mxu0 0
      %1250 = vmatmul.mubr.bf16.gmra.mrb[0].mxu0 %v1003
      %v1251 = vpop.f32.mrb[0].mxu0
      %v1252 = vadd.f32 0.0, %v1251
      %v1253 = vpop.f32.mrb[0].mxu0
      %v1254 = vpop.f32.mrb[0].mxu0
      %v1255 = vadd.f32 0.0, %v1254
      %v1256 = vpop.f32.mrb[0].mxu0
      %1257 = vmatprep.mubr.bf16.mxu0 0
      %1258 = vmatmul.mubr.bf16.gmra.mrb[0].mxu0 %v1004
      %v1259 = vpop.f32.mrb[0].mxu0
      %v1260 = vadd.f32 0.0, %v1259
      %v1261 = vpop.f32.mrb[0].mxu0
      %v1262 = vpop.f32.mrb[0].mxu0
      %v1263 = vadd.f32 0.0, %v1262
      %v1264 = vpop.f32.mrb[0].mxu0
      %1265 = vmatprep.mubr.bf16.mxu0 0
      %1266 = vmatmul.mubr.bf16.gmra.mrb[0].mxu0 %v1005
      %v1267 = vpop.f32.mrb[0].mxu0
      %v1268 = vadd.f32 0.0, %v1267
      %v1269 = vpop.f32.mrb[0].mxu0
      %v1270 = vpop.f32.mrb[0].mxu0
      %v1271 = vadd.f32 0.0, %v1270
      %v1272 = vpop.f32.mrb[0].mxu0
      %1273 = vmatprep.mubr.bf16.mxu0 0
      %1274 = vmatmul.mubr.bf16.gmra.mrb[0].mxu0 %v1006
      %v1275 = vpop.f32.mrb[0].mxu0
      %v1276 = vadd.f32 0.0, %v1275
      %v1277 = vpop.f32.mrb[0].mxu0
      %v1278 = vpop.f32.mrb[0].mxu0
      %v1279 = vadd.f32 0.0, %v1278
      %v1280 = vpop.f32.mrb[0].mxu0
      %1281 = vmatprep.mubr.bf16.mxu0 0
      %1282 = vmatmul.mubr.bf16.gmra.mrb[0].mxu0 %v1007
      %v1283 = vpop.f32.mrb[0].mxu0
      %v1284 = vadd.f32 0.0, %v1283
      %v1285 = vpop.f32.mrb[0].mxu0
      %v1286 = vpop.f32.mrb[0].mxu0
      %v1287 = vpop.f32.mrb[0].mxu0
      %1288 = vdwg.mxu0
      %v1289 = vadd.f32 %v759, %v1108
      %v1290 = vadd.f32 %v762, %v1111
      %v1291 = vadd.f32 %v767, %v1116
      %v1292 = vadd.f32 %v770, %v1119
      %v1293 = vadd.f32 %v775, %v1124
      %v1294 = vadd.f32 %v778, %v1127
      %v1295 = vadd.f32 %v783, %v1132
      %v1296 = vadd.f32 %v786, %v1135
      %v1297 = vadd.f32 %v791, %v1140
      %v1298 = vadd.f32 %v794, %v1143
      %v1299 = vadd.f32 %v799, %v1148
      %v1300 = vadd.f32 %v802, %v1151
      %v1301 = vadd.f32 %v807, %v1156
      %v1302 = vadd.f32 %v810, %v1159
      %v1303 = vadd.f32 %v815, %v1164
      %v1304 = vadd.f32 %v818, %v1167
      %v1305 = vadd.f32 %v823, %v1172
      %v1306 = vadd.f32 %v826, %v1175
      %v1307 = vadd.f32 %v831, %v1180
      %v1308 = vadd.f32 %v834, %v1183
      %v1309 = vadd.f32 %v839, %v1188
      %v1310 = vadd.f32 %v842, %v1191
      %v1311 = vadd.f32 %v847, %v1196
      %v1312 = vadd.f32 %v850, %v1199
      %v1313 = vadd.f32 %v855, %v1204
      %v1314 = vadd.f32 %v858, %v1207
      %v1315 = vadd.f32 %v863, %v1212
      %v1316 = vadd.f32 %v866, %v1215
      %v1317 = vadd.f32 %v871, %v1220
      %v1318 = vadd.f32 %v874, %v1223
      %v1319 = vadd.f32 %v879, %v1228
      %v1320 = vadd.f32 %v882, %v1231
      %v1321 = vadd.f32 %v887, %v1236
      %v1322 = vadd.f32 %v890, %v1239
      %v1323 = vadd.f32 %v895, %v1244
      %v1324 = vadd.f32 %v898, %v1247
      %v1325 = vadd.f32 %v903, %v1252
      %v1326 = vadd.f32 %v906, %v1255
      %v1327 = vadd.f32 %v911, %v1260
      %v1328 = vadd.f32 %v914, %v1263
      %v1329 = vadd.f32 %v919, %v1268
      %v1330 = vadd.f32 %v922, %v1271
      %v1331 = vadd.f32 %v927, %v1276
      %v1332 = vadd.f32 %v930, %v1279
      %v1333 = vadd.f32 %v935, %v1284
      %v1334 = vld [vmem:[%s230 + $0x23] sm:$0xff]
      %v1335 = vld [vmem:[%s230 + $0x2b] sm:$0xff]
      %v1336 = vld [vmem:[%s230 + $0x33] sm:$0xff]
      %v1337 = vld [vmem:[%s230 + $0x3b] sm:$0xff]
      %v1338 = vld [vmem:[%s230 + $0x43] sm:$0xff]
      %v1339 = vld [vmem:[%s230 + $0x4b] sm:$0xff]
      %v1340 = vld [vmem:[%s230 + $0x53] sm:$0xff]
      %v1341 = vld [vmem:[%s230 + $0x5b] sm:$0xff]
      %v1342 = vld [vmem:[%s230 + $0x63] sm:$0xff]
      %v1343 = vld [vmem:[%s230 + $0x6b] sm:$0xff]
      %v1344 = vld [vmem:[%s230 + $0x73] sm:$0xff]
      %v1345 = vld [vmem:[%s230 + $0x7b] sm:$0xff]
      %v1346 = vld [vmem:[%s230 + $0x83] sm:$0xff]
      %v1347 = vld [vmem:[%s230 + $0x8b] sm:$0xff]
      %v1348 = vld [vmem:[%s230 + $0x93] sm:$0xff]
      %v1349 = vld [vmem:[%s230 + $0x9b] sm:$0xff]
      %v1350 = vld [vmem:[%s230 + $0xa3] sm:$0xff]
      %v1351 = vld [vmem:[%s230 + $0xab] sm:$0xff]
      %v1352 = vld [vmem:[%s230 + $0xb3] sm:$0xff]
      %v1353 = vld [vmem:[%s230 + $0xbb] sm:$0xff]
      %v1354 = vld [vmem:[%s230 + $0xc3] sm:$0xff]
      %v1355 = vld [vmem:[%s230 + $0xcb] sm:$0xff]
      %v1356 = vld [vmem:[%s230 + $0xd3] sm:$0xff]
      %v1357 = vld [vmem:[%s230 + $0xdb] sm:$0xff]
      %v1358 = vld [vmem:[%s230 + $0xe3] sm:$0xff]
      %v1359 = vld [vmem:[%s230 + $0xeb] sm:$0xff]
      %v1360 = vld [vmem:[%s230 + $0xf3] sm:$0xff]
      %v1361 = vld [vmem:[%s230 + $0xfb] sm:$0xff]
      %v1362 = vld [vmem:[%s230 + $0x103] sm:$0xff]
      %v1363 = vld [vmem:[%s230 + $0x10b] sm:$0xff]
      %v1364 = vld [vmem:[%s230 + $0x113] sm:$0xff]
      %v1365 = vld [vmem:[%s230 + $0x11b] sm:$0xff]
      %v1366 = vld [vmem:[%s230 + $0x123] sm:$0xff]
      %v1367 = vld [vmem:[%s230 + $0x12b] sm:$0xff]
      %v1368 = vld [vmem:[%s230 + $0x133] sm:$0xff]
      %v1369 = vld [vmem:[%s230 + $0x13b] sm:$0xff]
      %v1370 = vld [vmem:[%s230 + $0x143] sm:$0xff]
      %v1371 = vld [vmem:[%s230 + $0x14b] sm:$0xff]
      %v1372 = vld [vmem:[%s230 + $0x153] sm:$0xff]
      %v1373 = vld [vmem:[%s230 + $0x15b] sm:$0xff]
      %v1374 = vld [vmem:[%s230 + $0x163] sm:$0xff]
      %v1375 = vld [vmem:[%s230 + $0x16b] sm:$0xff]
      %v1376 = vld [vmem:[%s230 + $0x173] sm:$0xff]
      %v1377 = vld [vmem:[%s230 + $0x17b] sm:$0xff]
      %v1378 = vld [vmem:[%s230 + $0x183] sm:$0xff]
      %v1379 = vpack.c.bf16 %v1335, %v1334
      %v1380 = vpack.c.bf16 %v1337, %v1336
      %v1381 = vpack.c.bf16 %v1339, %v1338
      %v1382 = vpack.c.bf16 %v1341, %v1340
      %v1383 = vpack.c.bf16 %v1343, %v1342
      %v1384 = vpack.c.bf16 %v1345, %v1344
      %v1385 = vpack.c.bf16 %v1347, %v1346
      %v1386 = vpack.c.bf16 %v1349, %v1348
      %v1387 = vpack.c.bf16 %v1351, %v1350
      %v1388 = vpack.c.bf16 %v1353, %v1352
      %v1389 = vpack.c.bf16 %v1355, %v1354
      %v1390 = vpack.c.bf16 %v1357, %v1356
      %v1391 = vpack.c.bf16 %v1359, %v1358
      %v1392 = vpack.c.bf16 %v1361, %v1360
      %v1393 = vpack.c.bf16 %v1363, %v1362
      %v1394 = vpack.c.bf16 %v1365, %v1364
      %v1395 = vpack.c.bf16 %v1367, %v1366
      %v1396 = vpack.c.bf16 %v1369, %v1368
      %v1397 = vpack.c.bf16 %v1371, %v1370
      %v1398 = vpack.c.bf16 %v1373, %v1372
      %v1399 = vpack.c.bf16 %v1375, %v1374
      %v1400 = vpack.c.bf16 %v1377, %v1376
      %v1401 = vpack.c.bf16 %v1378, %v1378
      %s1402 = scalar_lea.vmem %s1, 192
      %v1403 = vld [vmem:[%s1402] sm:$0xf]
      %v1404 = vld [vmem:[%s1402 + $0x4] sm:$0xf]
      %v1405 = vld [vmem:[%s1402 + $0x8] sm:$0xf]
      %v1406 = vld [vmem:[%s1402 + $0xc] sm:$0xf]
      %v1407 = vld [vmem:[%s1402 + $0x10] sm:$0xf]
      %v1408 = vld [vmem:[%s1402 + $0x14] sm:$0xf]
      %v1409 = vld [vmem:[%s1402 + $0x18] sm:$0xf]
      %v1410 = vld [vmem:[%s1402 + $0x1c] sm:$0xf]
      %v1411 = vld [vmem:[%s1402 + $0x20] sm:$0xf]
      %v1412 = vld [vmem:[%s1402 + $0x24] sm:$0xf]
      %v1413 = vld [vmem:[%s1402 + $0x28] sm:$0xf]
      %v1414 = vld [vmem:[%s1402 + $0x2c] sm:$0xf]
      %v1415 = vld [vmem:[%s1402 + $0x30] sm:$0xf]
      %v1416 = vld [vmem:[%s1402 + $0x34] sm:$0xf]
      %v1417 = vld [vmem:[%s1402 + $0x38] sm:$0xf]
      %v1418 = vld [vmem:[%s1402 + $0x3c] sm:$0xf]
      %v1435 = vunpack.c.l.b16 %v1403
      %v1436 = vunpack.c.l.b16 %v1404
      %v1437 = vunpack.c.l.b16 %v1405
      %v1438 = vunpack.c.l.b16 %v1406
      %v1439 = vunpack.c.l.b16 %v1407
      %v1440 = vunpack.c.l.b16 %v1408
      %v1441 = vunpack.c.l.b16 %v1409
      %v1442 = vunpack.c.l.b16 %v1410
      %v1443 = vunpack.c.l.b16 %v1411
      %v1444 = vunpack.c.l.b16 %v1412
      %v1445 = vunpack.c.l.b16 %v1413
      %v1446 = vunpack.c.l.b16 %v1414
      %v1447 = vunpack.c.l.b16 %v1415
      %v1448 = vunpack.c.l.b16 %v1416
      %v1449 = vunpack.c.l.b16 %v1417
      %v1450 = vunpack.c.l.b16 %v1418
      %v1451 = vpack.c.b16 %v1436, %v1435
      %v1452 = vpack.c.b16 %v1438, %v1437
      %v1453 = vpack.c.b16 %v1440, %v1439
      %v1454 = vpack.c.b16 %v1442, %v1441
      %v1455 = vpack.c.b16 %v1444, %v1443
      %v1456 = vpack.c.b16 %v1446, %v1445
      %v1457 = vpack.c.b16 %v1448, %v1447
      %v1458 = vpack.c.b16 %v1450, %v1449
      %1467 = vmatprep.subr.bf16.mxu0 0
      %1468 = vmatpush1.bf16.msra.mxu0 %v1451
      %1469 = vmatprep.subr.bf16.mxu0 0
      %1470 = vmatpush1.bf16.msra.mxu0 %v1452
      %1471 = vmatprep.subr.bf16.mxu0 0
      %1472 = vmatpush1.bf16.msra.mxu0 %v1453
      %1473 = vmatprep.subr.bf16.mxu0 0
      %1474 = vmatpush1.bf16.msra.mxu0 %v1454
      %1475 = vmatprep.subr.bf16.mxu0 0
      %1476 = vmatpush1.bf16.msra.mxu0 %v1455
      %1477 = vmatprep.subr.bf16.mxu0 0
      %1478 = vmatpush1.bf16.msra.mxu0 %v1456
      %1479 = vmatprep.subr.bf16.mxu0 0
      %1480 = vmatpush1.bf16.msra.mxu0 %v1457
      %1481 = vmatprep.subr.bf16.mxu0 0
      %1482 = vmatpush1.bf16.msra.mxu0 %v1458
      %1483 = vmatprep.subr.bf16.mxu0 0
      %1484 = vmatpush1.bf16.msra.mxu0 0
      %1485 = vmatprep.subr.bf16.mxu0 0
      %1486 = vmatpush1.bf16.msra.mxu0 0
      %1487 = vmatprep.subr.bf16.mxu0 0
      %1488 = vmatpush1.bf16.msra.mxu0 0
      %1489 = vmatprep.subr.bf16.mxu0 0
      %1490 = vmatpush1.bf16.msra.mxu0 0
      %1491 = vmatprep.subr.bf16.mxu0 0
      %1492 = vmatpush1.bf16.msra.mxu0 0
      %1493 = vmatprep.subr.bf16.mxu0 0
      %1494 = vmatpush1.bf16.msra.mxu0 0
      %1495 = vmatprep.subr.bf16.mxu0 0
      %1496 = vmatpush1.bf16.msra.mxu0 0
      %1497 = vmatprep.subr.bf16.mxu0 0
      %1498 = vmatpush1.bf16.msra.mxu0 0
      %1499 = vmatprep.mubr.bf16.mxu0 0
      %1500 = vmatmul.mubr.bf16.gmra.mrb[0].mxu0 %v1379
      %v1501 = vpop.f32.mrb[0].mxu0
      %v1502 = vadd.f32 0.0, %v1501
      %v1503 = vpop.f32.mrb[0].mxu0
      %v1504 = vpop.f32.mrb[0].mxu0
      %v1505 = vadd.f32 0.0, %v1504
      %v1506 = vpop.f32.mrb[0].mxu0
      %1507 = vmatprep.mubr.bf16.mxu0 0
      %1508 = vmatmul.mubr.bf16.gmra.mrb[0].mxu0 %v1380
      %v1509 = vpop.f32.mrb[0].mxu0
      %v1510 = vadd.f32 0.0, %v1509
      %v1511 = vpop.f32.mrb[0].mxu0
      %v1512 = vpop.f32.mrb[0].mxu0
      %v1513 = vadd.f32 0.0, %v1512
      %v1514 = vpop.f32.mrb[0].mxu0
      %1515 = vmatprep.mubr.bf16.mxu0 0
      %1516 = vmatmul.mubr.bf16.gmra.mrb[0].mxu0 %v1381
      %v1517 = vpop.f32.mrb[0].mxu0
      %v1518 = vadd.f32 0.0, %v1517
      %v1519 = vpop.f32.mrb[0].mxu0
      %v1520 = vpop.f32.mrb[0].mxu0
      %v1521 = vadd.f32 0.0, %v1520
      %v1522 = vpop.f32.mrb[0].mxu0
      %1523 = vmatprep.mubr.bf16.mxu0 0
      %1524 = vmatmul.mubr.bf16.gmra.mrb[0].mxu0 %v1382
      %v1525 = vpop.f32.mrb[0].mxu0
      %v1526 = vadd.f32 0.0, %v1525
      %v1527 = vpop.f32.mrb[0].mxu0
      %v1528 = vpop.f32.mrb[0].mxu0
      %v1529 = vadd.f32 0.0, %v1528
      %v1530 = vpop.f32.mrb[0].mxu0
      %1531 = vmatprep.mubr.bf16.mxu0 0
      %1532 = vmatmul.mubr.bf16.gmra.mrb[0].mxu0 %v1383
      %v1533 = vpop.f32.mrb[0].mxu0
      %v1534 = vadd.f32 0.0, %v1533
      %v1535 = vpop.f32.mrb[0].mxu0
      %v1536 = vpop.f32.mrb[0].mxu0
      %v1537 = vadd.f32 0.0, %v1536
      %v1538 = vpop.f32.mrb[0].mxu0
      %1539 = vmatprep.mubr.bf16.mxu0 0
      %1540 = vmatmul.mubr.bf16.gmra.mrb[0].mxu0 %v1384
      %v1541 = vpop.f32.mrb[0].mxu0
      %v1542 = vadd.f32 0.0, %v1541
      %v1543 = vpop.f32.mrb[0].mxu0
      %v1544 = vpop.f32.mrb[0].mxu0
      %v1545 = vadd.f32 0.0, %v1544
      %v1546 = vpop.f32.mrb[0].mxu0
      %1547 = vmatprep.mubr.bf16.mxu0 0
      %1548 = vmatmul.mubr.bf16.gmra.mrb[0].mxu0 %v1385
      %v1549 = vpop.f32.mrb[0].mxu0
      %v1550 = vadd.f32 0.0, %v1549
      %v1551 = vpop.f32.mrb[0].mxu0
      %v1552 = vpop.f32.mrb[0].mxu0
      %v1553 = vadd.f32 0.0, %v1552
      %v1554 = vpop.f32.mrb[0].mxu0
      %1555 = vmatprep.mubr.bf16.mxu0 0
      %1556 = vmatmul.mubr.bf16.gmra.mrb[0].mxu0 %v1386
      %v1557 = vpop.f32.mrb[0].mxu0
      %v1558 = vadd.f32 0.0, %v1557
      %v1559 = vpop.f32.mrb[0].mxu0
      %v1560 = vpop.f32.mrb[0].mxu0
      %v1561 = vadd.f32 0.0, %v1560
      %v1562 = vpop.f32.mrb[0].mxu0
      %1563 = vmatprep.mubr.bf16.mxu0 0
      %1564 = vmatmul.mubr.bf16.gmra.mrb[0].mxu0 %v1387
      %v1565 = vpop.f32.mrb[0].mxu0
      %v1566 = vadd.f32 0.0, %v1565
      %v1567 = vpop.f32.mrb[0].mxu0
      %v1568 = vpop.f32.mrb[0].mxu0
      %v1569 = vadd.f32 0.0, %v1568
      %v1570 = vpop.f32.mrb[0].mxu0
      %1571 = vmatprep.mubr.bf16.mxu0 0
      %1572 = vmatmul.mubr.bf16.gmra.mrb[0].mxu0 %v1388
      %v1573 = vpop.f32.mrb[0].mxu0
      %v1574 = vadd.f32 0.0, %v1573
      %v1575 = vpop.f32.mrb[0].mxu0
      %v1576 = vpop.f32.mrb[0].mxu0
      %v1577 = vadd.f32 0.0, %v1576
      %v1578 = vpop.f32.mrb[0].mxu0
      %1579 = vmatprep.mubr.bf16.mxu0 0
      %1580 = vmatmul.mubr.bf16.gmra.mrb[0].mxu0 %v1389
      %v1581 = vpop.f32.mrb[0].mxu0
      %v1582 = vadd.f32 0.0, %v1581
      %v1583 = vpop.f32.mrb[0].mxu0
      %v1584 = vpop.f32.mrb[0].mxu0
      %v1585 = vadd.f32 0.0, %v1584
      %v1586 = vpop.f32.mrb[0].mxu0
      %1587 = vmatprep.mubr.bf16.mxu0 0
      %1588 = vmatmul.mubr.bf16.gmra.mrb[0].mxu0 %v1390
      %v1589 = vpop.f32.mrb[0].mxu0
      %v1590 = vadd.f32 0.0, %v1589
      %v1591 = vpop.f32.mrb[0].mxu0
      %v1592 = vpop.f32.mrb[0].mxu0
      %v1593 = vadd.f32 0.0, %v1592
      %v1594 = vpop.f32.mrb[0].mxu0
      %1595 = vmatprep.mubr.bf16.mxu0 0
      %1596 = vmatmul.mubr.bf16.gmra.mrb[0].mxu0 %v1391
      %v1597 = vpop.f32.mrb[0].mxu0
      %v1598 = vadd.f32 0.0, %v1597
      %v1599 = vpop.f32.mrb[0].mxu0
      %v1600 = vpop.f32.mrb[0].mxu0
      %v1601 = vadd.f32 0.0, %v1600
      %v1602 = vpop.f32.mrb[0].mxu0
      %1603 = vmatprep.mubr.bf16.mxu0 0
      %1604 = vmatmul.mubr.bf16.gmra.mrb[0].mxu0 %v1392
      %v1605 = vpop.f32.mrb[0].mxu0
      %v1606 = vadd.f32 0.0, %v1605
      %v1607 = vpop.f32.mrb[0].mxu0
      %v1608 = vpop.f32.mrb[0].mxu0
      %v1609 = vadd.f32 0.0, %v1608
      %v1610 = vpop.f32.mrb[0].mxu0
      %1611 = vmatprep.mubr.bf16.mxu0 0
      %1612 = vmatmul.mubr.bf16.gmra.mrb[0].mxu0 %v1393
      %v1613 = vpop.f32.mrb[0].mxu0
      %v1614 = vadd.f32 0.0, %v1613
      %v1615 = vpop.f32.mrb[0].mxu0
      %v1616 = vpop.f32.mrb[0].mxu0
      %v1617 = vadd.f32 0.0, %v1616
      %v1618 = vpop.f32.mrb[0].mxu0
      %1619 = vmatprep.mubr.bf16.mxu0 0
      %1620 = vmatmul.mubr.bf16.gmra.mrb[0].mxu0 %v1394
      %v1621 = vpop.f32.mrb[0].mxu0
      %v1622 = vadd.f32 0.0, %v1621
      %v1623 = vpop.f32.mrb[0].mxu0
      %v1624 = vpop.f32.mrb[0].mxu0
      %v1625 = vadd.f32 0.0, %v1624
      %v1626 = vpop.f32.mrb[0].mxu0
      %1627 = vmatprep.mubr.bf16.mxu0 0
      %1628 = vmatmul.mubr.bf16.gmra.mrb[0].mxu0 %v1395
      %v1629 = vpop.f32.mrb[0].mxu0
      %v1630 = vadd.f32 0.0, %v1629
      %v1631 = vpop.f32.mrb[0].mxu0
      %v1632 = vpop.f32.mrb[0].mxu0
      %v1633 = vadd.f32 0.0, %v1632
      %v1634 = vpop.f32.mrb[0].mxu0
      %1635 = vmatprep.mubr.bf16.mxu0 0
      %1636 = vmatmul.mubr.bf16.gmra.mrb[0].mxu0 %v1396
      %v1637 = vpop.f32.mrb[0].mxu0
      %v1638 = vadd.f32 0.0, %v1637
      %v1639 = vpop.f32.mrb[0].mxu0
      %v1640 = vpop.f32.mrb[0].mxu0
      %v1641 = vadd.f32 0.0, %v1640
      %v1642 = vpop.f32.mrb[0].mxu0
      %1643 = vmatprep.mubr.bf16.mxu0 0
      %1644 = vmatmul.mubr.bf16.gmra.mrb[0].mxu0 %v1397
      %v1645 = vpop.f32.mrb[0].mxu0
      %v1646 = vadd.f32 0.0, %v1645
      %v1647 = vpop.f32.mrb[0].mxu0
      %v1648 = vpop.f32.mrb[0].mxu0
      %v1649 = vadd.f32 0.0, %v1648
      %v1650 = vpop.f32.mrb[0].mxu0
      %1651 = vmatprep.mubr.bf16.mxu0 0
      %1652 = vmatmul.mubr.bf16.gmra.mrb[0].mxu0 %v1398
      %v1653 = vpop.f32.mrb[0].mxu0
      %v1654 = vadd.f32 0.0, %v1653
      %v1655 = vpop.f32.mrb[0].mxu0
      %v1656 = vpop.f32.mrb[0].mxu0
      %v1657 = vadd.f32 0.0, %v1656
      %v1658 = vpop.f32.mrb[0].mxu0
      %1659 = vmatprep.mubr.bf16.mxu0 0
      %1660 = vmatmul.mubr.bf16.gmra.mrb[0].mxu0 %v1399
      %v1661 = vpop.f32.mrb[0].mxu0
      %v1662 = vadd.f32 0.0, %v1661
      %v1663 = vpop.f32.mrb[0].mxu0
      %v1664 = vpop.f32.mrb[0].mxu0
      %v1665 = vadd.f32 0.0, %v1664
      %v1666 = vpop.f32.mrb[0].mxu0
      %1667 = vmatprep.mubr.bf16.mxu0 0
      %1668 = vmatmul.mubr.bf16.gmra.mrb[0].mxu0 %v1400
      %v1669 = vpop.f32.mrb[0].mxu0
      %v1670 = vadd.f32 0.0, %v1669
      %v1671 = vpop.f32.mrb[0].mxu0
      %v1672 = vpop.f32.mrb[0].mxu0
      %v1673 = vadd.f32 0.0, %v1672
      %v1674 = vpop.f32.mrb[0].mxu0
      %1675 = vmatprep.mubr.bf16.mxu0 0
      %1676 = vmatmul.mubr.bf16.gmra.mrb[0].mxu0 %v1401
      %v1677 = vpop.f32.mrb[0].mxu0
      %v1678 = vadd.f32 0.0, %v1677
      %v1679 = vpop.f32.mrb[0].mxu0
      %v1680 = vpop.f32.mrb[0].mxu0
      %v1681 = vpop.f32.mrb[0].mxu0
      %1682 = vdwg.mxu0
      %v1683 = vadd.f32 %v1289, %v1502
      %v1684 = vadd.f32 %v1290, %v1505
      %v1685 = vadd.f32 %v1291, %v1510
      %v1686 = vadd.f32 %v1292, %v1513
      %v1687 = vadd.f32 %v1293, %v1518
      %v1688 = vadd.f32 %v1294, %v1521
      %v1689 = vadd.f32 %v1295, %v1526
      %v1690 = vadd.f32 %v1296, %v1529
      %v1691 = vadd.f32 %v1297, %v1534
      %v1692 = vadd.f32 %v1298, %v1537
      %v1693 = vadd.f32 %v1299, %v1542
      %v1694 = vadd.f32 %v1300, %v1545
      %v1695 = vadd.f32 %v1301, %v1550
      %v1696 = vadd.f32 %v1302, %v1553
      %v1697 = vadd.f32 %v1303, %v1558
      %v1698 = vadd.f32 %v1304, %v1561
      %v1699 = vadd.f32 %v1305, %v1566
      %v1700 = vadd.f32 %v1306, %v1569
      %v1701 = vadd.f32 %v1307, %v1574
      %v1702 = vadd.f32 %v1308, %v1577
      %v1703 = vadd.f32 %v1309, %v1582
      %v1704 = vadd.f32 %v1310, %v1585
      %v1705 = vadd.f32 %v1311, %v1590
      %v1706 = vadd.f32 %v1312, %v1593
      %v1707 = vadd.f32 %v1313, %v1598
      %v1708 = vadd.f32 %v1314, %v1601
      %v1709 = vadd.f32 %v1315, %v1606
      %v1710 = vadd.f32 %v1316, %v1609
      %v1711 = vadd.f32 %v1317, %v1614
      %v1712 = vadd.f32 %v1318, %v1617
      %v1713 = vadd.f32 %v1319, %v1622
      %v1714 = vadd.f32 %v1320, %v1625
      %v1715 = vadd.f32 %v1321, %v1630
      %v1716 = vadd.f32 %v1322, %v1633
      %v1717 = vadd.f32 %v1323, %v1638
      %v1718 = vadd.f32 %v1324, %v1641
      %v1719 = vadd.f32 %v1325, %v1646
      %v1720 = vadd.f32 %v1326, %v1649
      %v1721 = vadd.f32 %v1327, %v1654
      %v1722 = vadd.f32 %v1328, %v1657
      %v1723 = vadd.f32 %v1329, %v1662
      %v1724 = vadd.f32 %v1330, %v1665
      %v1725 = vadd.f32 %v1331, %v1670
      %v1726 = vadd.f32 %v1332, %v1673
      %v1727 = vadd.f32 %v1333, %v1678
      %v1728 = vld [vmem:[%s230 + $0x24] sm:$0xff]
      %v1729 = vld [vmem:[%s230 + $0x2c] sm:$0xff]
      %v1730 = vld [vmem:[%s230 + $0x34] sm:$0xff]
      %v1731 = vld [vmem:[%s230 + $0x3c] sm:$0xff]
      %v1732 = vld [vmem:[%s230 + $0x44] sm:$0xff]
      %v1733 = vld [vmem:[%s230 + $0x4c] sm:$0xff]
      %v1734 = vld [vmem:[%s230 + $0x54] sm:$0xff]
      %v1735 = vld [vmem:[%s230 + $0x5c] sm:$0xff]
      %v1736 = vld [vmem:[%s230 + $0x64] sm:$0xff]
      %v1737 = vld [vmem:[%s230 + $0x6c] sm:$0xff]
      %v1738 = vld [vmem:[%s230 + $0x74] sm:$0xff]
      %v1739 = vld [vmem:[%s230 + $0x7c] sm:$0xff]
      %v1740 = vld [vmem:[%s230 + $0x84] sm:$0xff]
      %v1741 = vld [vmem:[%s230 + $0x8c] sm:$0xff]
      %v1742 = vld [vmem:[%s230 + $0x94] sm:$0xff]
      %v1743 = vld [vmem:[%s230 + $0x9c] sm:$0xff]
      %v1744 = vld [vmem:[%s230 + $0xa4] sm:$0xff]
      %v1745 = vld [vmem:[%s230 + $0xac] sm:$0xff]
      %v1746 = vld [vmem:[%s230 + $0xb4] sm:$0xff]
      %v1747 = vld [vmem:[%s230 + $0xbc] sm:$0xff]
      %v1748 = vld [vmem:[%s230 + $0xc4] sm:$0xff]
      %v1749 = vld [vmem:[%s230 + $0xcc] sm:$0xff]
      %v1750 = vld [vmem:[%s230 + $0xd4] sm:$0xff]
      %v1751 = vld [vmem:[%s230 + $0xdc] sm:$0xff]
      %v1752 = vld [vmem:[%s230 + $0xe4] sm:$0xff]
      %v1753 = vld [vmem:[%s230 + $0xec] sm:$0xff]
      %v1754 = vld [vmem:[%s230 + $0xf4] sm:$0xff]
      %v1755 = vld [vmem:[%s230 + $0xfc] sm:$0xff]
      %v1756 = vld [vmem:[%s230 + $0x104] sm:$0xff]
      %v1757 = vld [vmem:[%s230 + $0x10c] sm:$0xff]
      %v1758 = vld [vmem:[%s230 + $0x114] sm:$0xff]
      %v1759 = vld [vmem:[%s230 + $0x11c] sm:$0xff]
      %v1760 = vld [vmem:[%s230 + $0x124] sm:$0xff]
      %v1761 = vld [vmem:[%s230 + $0x12c] sm:$0xff]
      %v1762 = vld [vmem:[%s230 + $0x134] sm:$0xff]
      %v1763 = vld [vmem:[%s230 + $0x13c] sm:$0xff]
      %v1764 = vld [vmem:[%s230 + $0x144] sm:$0xff]
      %v1765 = vld [vmem:[%s230 + $0x14c] sm:$0xff]
      %v1766 = vld [vmem:[%s230 + $0x154] sm:$0xff]
      %v1767 = vld [vmem:[%s230 + $0x15c] sm:$0xff]
      %v1768 = vld [vmem:[%s230 + $0x164] sm:$0xff]
      %v1769 = vld [vmem:[%s230 + $0x16c] sm:$0xff]
      %v1770 = vld [vmem:[%s230 + $0x174] sm:$0xff]
      %v1771 = vld [vmem:[%s230 + $0x17c] sm:$0xff]
      %v1772 = vld [vmem:[%s230 + $0x184] sm:$0xff]
      %v1773 = vpack.c.bf16 %v1729, %v1728
      %v1774 = vpack.c.bf16 %v1731, %v1730
      %v1775 = vpack.c.bf16 %v1733, %v1732
      %v1776 = vpack.c.bf16 %v1735, %v1734
      %v1777 = vpack.c.bf16 %v1737, %v1736
      %v1778 = vpack.c.bf16 %v1739, %v1738
      %v1779 = vpack.c.bf16 %v1741, %v1740
      %v1780 = vpack.c.bf16 %v1743, %v1742
      %v1781 = vpack.c.bf16 %v1745, %v1744
      %v1782 = vpack.c.bf16 %v1747, %v1746
      %v1783 = vpack.c.bf16 %v1749, %v1748
      %v1784 = vpack.c.bf16 %v1751, %v1750
      %v1785 = vpack.c.bf16 %v1753, %v1752
      %v1786 = vpack.c.bf16 %v1755, %v1754
      %v1787 = vpack.c.bf16 %v1757, %v1756
      %v1788 = vpack.c.bf16 %v1759, %v1758
      %v1789 = vpack.c.bf16 %v1761, %v1760
      %v1790 = vpack.c.bf16 %v1763, %v1762
      %v1791 = vpack.c.bf16 %v1765, %v1764
      %v1792 = vpack.c.bf16 %v1767, %v1766
      %v1793 = vpack.c.bf16 %v1769, %v1768
      %v1794 = vpack.c.bf16 %v1771, %v1770
      %v1795 = vpack.c.bf16 %v1772, %v1772
      %s1796 = scalar_lea.vmem %s1, 256
      %v1797 = vld [vmem:[%s1796] sm:$0xf]
      %v1798 = vld [vmem:[%s1796 + $0x4] sm:$0xf]
      %v1799 = vld [vmem:[%s1796 + $0x8] sm:$0xf]
      %v1800 = vld [vmem:[%s1796 + $0xc] sm:$0xf]
      %v1801 = vld [vmem:[%s1796 + $0x10] sm:$0xf]
      %v1802 = vld [vmem:[%s1796 + $0x14] sm:$0xf]
      %v1803 = vld [vmem:[%s1796 + $0x18] sm:$0xf]
      %v1804 = vld [vmem:[%s1796 + $0x1c] sm:$0xf]
      %v1805 = vld [vmem:[%s1796 + $0x20] sm:$0xf]
      %v1806 = vld [vmem:[%s1796 + $0x24] sm:$0xf]
      %v1807 = vld [vmem:[%s1796 + $0x28] sm:$0xf]
      %v1808 = vld [vmem:[%s1796 + $0x2c] sm:$0xf]
      %v1809 = vld [vmem:[%s1796 + $0x30] sm:$0xf]
      %v1810 = vld [vmem:[%s1796 + $0x34] sm:$0xf]
      %v1811 = vld [vmem:[%s1796 + $0x38] sm:$0xf]
      %v1812 = vld [vmem:[%s1796 + $0x3c] sm:$0xf]
      %v1829 = vunpack.c.l.b16 %v1797
      %v1830 = vunpack.c.l.b16 %v1798
      %v1831 = vunpack.c.l.b16 %v1799
      %v1832 = vunpack.c.l.b16 %v1800
      %v1833 = vunpack.c.l.b16 %v1801
      %v1834 = vunpack.c.l.b16 %v1802
      %v1835 = vunpack.c.l.b16 %v1803
      %v1836 = vunpack.c.l.b16 %v1804
      %v1837 = vunpack.c.l.b16 %v1805
      %v1838 = vunpack.c.l.b16 %v1806
      %v1839 = vunpack.c.l.b16 %v1807
      %v1840 = vunpack.c.l.b16 %v1808
      %v1841 = vunpack.c.l.b16 %v1809
      %v1842 = vunpack.c.l.b16 %v1810
      %v1843 = vunpack.c.l.b16 %v1811
      %v1844 = vunpack.c.l.b16 %v1812
      %v1845 = vpack.c.b16 %v1830, %v1829
      %v1846 = vpack.c.b16 %v1832, %v1831
      %v1847 = vpack.c.b16 %v1834, %v1833
      %v1848 = vpack.c.b16 %v1836, %v1835
      %v1849 = vpack.c.b16 %v1838, %v1837
      %v1850 = vpack.c.b16 %v1840, %v1839
      %v1851 = vpack.c.b16 %v1842, %v1841
      %v1852 = vpack.c.b16 %v1844, %v1843
      %1861 = vmatprep.subr.bf16.mxu0 0
      %1862 = vmatpush1.bf16.msra.mxu0 %v1845
      %1863 = vmatprep.subr.bf16.mxu0 0
      %1864 = vmatpush1.bf16.msra.mxu0 %v1846
      %1865 = vmatprep.subr.bf16.mxu0 0
      %1866 = vmatpush1.bf16.msra.mxu0 %v1847
      %1867 = vmatprep.subr.bf16.mxu0 0
      %1868 = vmatpush1.bf16.msra.mxu0 %v1848
      %1869 = vmatprep.subr.bf16.mxu0 0
      %1870 = vmatpush1.bf16.msra.mxu0 %v1849
      %1871 = vmatprep.subr.bf16.mxu0 0
      %1872 = vmatpush1.bf16.msra.mxu0 %v1850
      %1873 = vmatprep.subr.bf16.mxu0 0
      %1874 = vmatpush1.bf16.msra.mxu0 %v1851
      %1875 = vmatprep.subr.bf16.mxu0 0
      %1876 = vmatpush1.bf16.msra.mxu0 %v1852
      %1877 = vmatprep.subr.bf16.mxu0 0
      %1878 = vmatpush1.bf16.msra.mxu0 0
      %1879 = vmatprep.subr.bf16.mxu0 0
      %1880 = vmatpush1.bf16.msra.mxu0 0
      %1881 = vmatprep.subr.bf16.mxu0 0
      %1882 = vmatpush1.bf16.msra.mxu0 0
      %1883 = vmatprep.subr.bf16.mxu0 0
      %1884 = vmatpush1.bf16.msra.mxu0 0
      %1885 = vmatprep.subr.bf16.mxu0 0
      %1886 = vmatpush1.bf16.msra.mxu0 0
      %1887 = vmatprep.subr.bf16.mxu0 0
      %1888 = vmatpush1.bf16.msra.mxu0 0
      %1889 = vmatprep.subr.bf16.mxu0 0
      %1890 = vmatpush1.bf16.msra.mxu0 0
      %1891 = vmatprep.subr.bf16.mxu0 0
      %1892 = vmatpush1.bf16.msra.mxu0 0
      %1893 = vmatprep.mubr.bf16.mxu0 0
      %1894 = vmatmul.mubr.bf16.gmra.mrb[0].mxu0 %v1773
      %v1895 = vpop.f32.mrb[0].mxu0
      %v1896 = vadd.f32 0.0, %v1895
      %v1897 = vpop.f32.mrb[0].mxu0
      %v1898 = vpop.f32.mrb[0].mxu0
      %v1899 = vadd.f32 0.0, %v1898
      %v1900 = vpop.f32.mrb[0].mxu0
      %1901 = vmatprep.mubr.bf16.mxu0 0
      %1902 = vmatmul.mubr.bf16.gmra.mrb[0].mxu0 %v1774
      %v1903 = vpop.f32.mrb[0].mxu0
      %v1904 = vadd.f32 0.0, %v1903
      %v1905 = vpop.f32.mrb[0].mxu0
      %v1906 = vpop.f32.mrb[0].mxu0
      %v1907 = vadd.f32 0.0, %v1906
      %v1908 = vpop.f32.mrb[0].mxu0
      %1909 = vmatprep.mubr.bf16.mxu0 0
      %1910 = vmatmul.mubr.bf16.gmra.mrb[0].mxu0 %v1775
      %v1911 = vpop.f32.mrb[0].mxu0
      %v1912 = vadd.f32 0.0, %v1911
      %v1913 = vpop.f32.mrb[0].mxu0
      %v1914 = vpop.f32.mrb[0].mxu0
      %v1915 = vadd.f32 0.0, %v1914
      %v1916 = vpop.f32.mrb[0].mxu0
      %1917 = vmatprep.mubr.bf16.mxu0 0
      %1918 = vmatmul.mubr.bf16.gmra.mrb[0].mxu0 %v1776
      %v1919 = vpop.f32.mrb[0].mxu0
      %v1920 = vadd.f32 0.0, %v1919
      %v1921 = vpop.f32.mrb[0].mxu0
      %v1922 = vpop.f32.mrb[0].mxu0
      %v1923 = vadd.f32 0.0, %v1922
      %v1924 = vpop.f32.mrb[0].mxu0
      %1925 = vmatprep.mubr.bf16.mxu0 0
      %1926 = vmatmul.mubr.bf16.gmra.mrb[0].mxu0 %v1777
      %v1927 = vpop.f32.mrb[0].mxu0
      %v1928 = vadd.f32 0.0, %v1927
      %v1929 = vpop.f32.mrb[0].mxu0
      %v1930 = vpop.f32.mrb[0].mxu0
      %v1931 = vadd.f32 0.0, %v1930
      %v1932 = vpop.f32.mrb[0].mxu0
      %1933 = vmatprep.mubr.bf16.mxu0 0
      %1934 = vmatmul.mubr.bf16.gmra.mrb[0].mxu0 %v1778
      %v1935 = vpop.f32.mrb[0].mxu0
      %v1936 = vadd.f32 0.0, %v1935
      %v1937 = vpop.f32.mrb[0].mxu0
      %v1938 = vpop.f32.mrb[0].mxu0
      %v1939 = vadd.f32 0.0, %v1938
      %v1940 = vpop.f32.mrb[0].mxu0
      %1941 = vmatprep.mubr.bf16.mxu0 0
      %1942 = vmatmul.mubr.bf16.gmra.mrb[0].mxu0 %v1779
      %v1943 = vpop.f32.mrb[0].mxu0
      %v1944 = vadd.f32 0.0, %v1943
      %v1945 = vpop.f32.mrb[0].mxu0
      %v1946 = vpop.f32.mrb[0].mxu0
      %v1947 = vadd.f32 0.0, %v1946
      %v1948 = vpop.f32.mrb[0].mxu0
      %1949 = vmatprep.mubr.bf16.mxu0 0
      %1950 = vmatmul.mubr.bf16.gmra.mrb[0].mxu0 %v1780
      %v1951 = vpop.f32.mrb[0].mxu0
      %v1952 = vadd.f32 0.0, %v1951
      %v1953 = vpop.f32.mrb[0].mxu0
      %v1954 = vpop.f32.mrb[0].mxu0
      %v1955 = vadd.f32 0.0, %v1954
      %v1956 = vpop.f32.mrb[0].mxu0
      %1957 = vmatprep.mubr.bf16.mxu0 0
      %1958 = vmatmul.mubr.bf16.gmra.mrb[0].mxu0 %v1781
      %v1959 = vpop.f32.mrb[0].mxu0
      %v1960 = vadd.f32 0.0, %v1959
      %v1961 = vpop.f32.mrb[0].mxu0
      %v1962 = vpop.f32.mrb[0].mxu0
      %v1963 = vadd.f32 0.0, %v1962
      %v1964 = vpop.f32.mrb[0].mxu0
      %1965 = vmatprep.mubr.bf16.mxu0 0
      %1966 = vmatmul.mubr.bf16.gmra.mrb[0].mxu0 %v1782
      %v1967 = vpop.f32.mrb[0].mxu0
      %v1968 = vadd.f32 0.0, %v1967
      %v1969 = vpop.f32.mrb[0].mxu0
      %v1970 = vpop.f32.mrb[0].mxu0
      %v1971 = vadd.f32 0.0, %v1970
      %v1972 = vpop.f32.mrb[0].mxu0
      %1973 = vmatprep.mubr.bf16.mxu0 0
      %1974 = vmatmul.mubr.bf16.gmra.mrb[0].mxu0 %v1783
      %v1975 = vpop.f32.mrb[0].mxu0
      %v1976 = vadd.f32 0.0, %v1975
      %v1977 = vpop.f32.mrb[0].mxu0
      %v1978 = vpop.f32.mrb[0].mxu0
      %v1979 = vadd.f32 0.0, %v1978
      %v1980 = vpop.f32.mrb[0].mxu0
      %1981 = vmatprep.mubr.bf16.mxu0 0
      %1982 = vmatmul.mubr.bf16.gmra.mrb[0].mxu0 %v1784
      %v1983 = vpop.f32.mrb[0].mxu0
      %v1984 = vadd.f32 0.0, %v1983
      %v1985 = vpop.f32.mrb[0].mxu0
      %v1986 = vpop.f32.mrb[0].mxu0
      %v1987 = vadd.f32 0.0, %v1986
      %v1988 = vpop.f32.mrb[0].mxu0
      %1989 = vmatprep.mubr.bf16.mxu0 0
      %1990 = vmatmul.mubr.bf16.gmra.mrb[0].mxu0 %v1785
      %v1991 = vpop.f32.mrb[0].mxu0
      %v1992 = vadd.f32 0.0, %v1991
      %v1993 = vpop.f32.mrb[0].mxu0
      %v1994 = vpop.f32.mrb[0].mxu0
      %v1995 = vadd.f32 0.0, %v1994
      %v1996 = vpop.f32.mrb[0].mxu0
      %1997 = vmatprep.mubr.bf16.mxu0 0
      %1998 = vmatmul.mubr.bf16.gmra.mrb[0].mxu0 %v1786
      %v1999 = vpop.f32.mrb[0].mxu0
      %v2000 = vadd.f32 0.0, %v1999
      %v2001 = vpop.f32.mrb[0].mxu0
      %v2002 = vpop.f32.mrb[0].mxu0
      %v2003 = vadd.f32 0.0, %v2002
      %v2004 = vpop.f32.mrb[0].mxu0
      %2005 = vmatprep.mubr.bf16.mxu0 0
      %2006 = vmatmul.mubr.bf16.gmra.mrb[0].mxu0 %v1787
      %v2007 = vpop.f32.mrb[0].mxu0
      %v2008 = vadd.f32 0.0, %v2007
      %v2009 = vpop.f32.mrb[0].mxu0
      %v2010 = vpop.f32.mrb[0].mxu0
      %v2011 = vadd.f32 0.0, %v2010
      %v2012 = vpop.f32.mrb[0].mxu0
      %2013 = vmatprep.mubr.bf16.mxu0 0
      %2014 = vmatmul.mubr.bf16.gmra.mrb[0].mxu0 %v1788
      %v2015 = vpop.f32.mrb[0].mxu0
      %v2016 = vadd.f32 0.0, %v2015
      %v2017 = vpop.f32.mrb[0].mxu0
      %v2018 = vpop.f32.mrb[0].mxu0
      %v2019 = vadd.f32 0.0, %v2018
      %v2020 = vpop.f32.mrb[0].mxu0
      %2021 = vmatprep.mubr.bf16.mxu0 0
      %2022 = vmatmul.mubr.bf16.gmra.mrb[0].mxu0 %v1789
      %v2023 = vpop.f32.mrb[0].mxu0
      %v2024 = vadd.f32 0.0, %v2023
      %v2025 = vpop.f32.mrb[0].mxu0
      %v2026 = vpop.f32.mrb[0].mxu0
      %v2027 = vadd.f32 0.0, %v2026
      %v2028 = vpop.f32.mrb[0].mxu0
      %2029 = vmatprep.mubr.bf16.mxu0 0
      %2030 = vmatmul.mubr.bf16.gmra.mrb[0].mxu0 %v1790
      %v2031 = vpop.f32.mrb[0].mxu0
      %v2032 = vadd.f32 0.0, %v2031
      %v2033 = vpop.f32.mrb[0].mxu0
      %v2034 = vpop.f32.mrb[0].mxu0
      %v2035 = vadd.f32 0.0, %v2034
      %v2036 = vpop.f32.mrb[0].mxu0
      %2037 = vmatprep.mubr.bf16.mxu0 0
      %2038 = vmatmul.mubr.bf16.gmra.mrb[0].mxu0 %v1791
      %v2039 = vpop.f32.mrb[0].mxu0
      %v2040 = vadd.f32 0.0, %v2039
      %v2041 = vpop.f32.mrb[0].mxu0
      %v2042 = vpop.f32.mrb[0].mxu0
      %v2043 = vadd.f32 0.0, %v2042
      %v2044 = vpop.f32.mrb[0].mxu0
      %2045 = vmatprep.mubr.bf16.mxu0 0
      %2046 = vmatmul.mubr.bf16.gmra.mrb[0].mxu0 %v1792
      %v2047 = vpop.f32.mrb[0].mxu0
      %v2048 = vadd.f32 0.0, %v2047
      %v2049 = vpop.f32.mrb[0].mxu0
      %v2050 = vpop.f32.mrb[0].mxu0
      %v2051 = vadd.f32 0.0, %v2050
      %v2052 = vpop.f32.mrb[0].mxu0
      %2053 = vmatprep.mubr.bf16.mxu0 0
      %2054 = vmatmul.mubr.bf16.gmra.mrb[0].mxu0 %v1793
      %v2055 = vpop.f32.mrb[0].mxu0
      %v2056 = vadd.f32 0.0, %v2055
      %v2057 = vpop.f32.mrb[0].mxu0
      %v2058 = vpop.f32.mrb[0].mxu0
      %v2059 = vadd.f32 0.0, %v2058
      %v2060 = vpop.f32.mrb[0].mxu0
      %2061 = vmatprep.mubr.bf16.mxu0 0
      %2062 = vmatmul.mubr.bf16.gmra.mrb[0].mxu0 %v1794
      %v2063 = vpop.f32.mrb[0].mxu0
      %v2064 = vadd.f32 0.0, %v2063
      %v2065 = vpop.f32.mrb[0].mxu0
      %v2066 = vpop.f32.mrb[0].mxu0
      %v2067 = vadd.f32 0.0, %v2066
      %v2068 = vpop.f32.mrb[0].mxu0
      %2069 = vmatprep.mubr.bf16.mxu0 0
      %2070 = vmatmul.mubr.bf16.gmra.mrb[0].mxu0 %v1795
      %v2071 = vpop.f32.mrb[0].mxu0
      %v2072 = vadd.f32 0.0, %v2071
      %v2073 = vpop.f32.mrb[0].mxu0
      %v2074 = vpop.f32.mrb[0].mxu0
      %v2075 = vpop.f32.mrb[0].mxu0
      %2076 = vdwg.mxu0
      %v2077 = vadd.f32 %v1683, %v1896
      %v2078 = vadd.f32 %v1684, %v1899
      %v2079 = vadd.f32 %v1685, %v1904
      %v2080 = vadd.f32 %v1686, %v1907
      %v2081 = vadd.f32 %v1687, %v1912
      %v2082 = vadd.f32 %v1688, %v1915
      %v2083 = vadd.f32 %v1689, %v1920
      %v2084 = vadd.f32 %v1690, %v1923
      %v2085 = vadd.f32 %v1691, %v1928
      %v2086 = vadd.f32 %v1692, %v1931
      %v2087 = vadd.f32 %v1693, %v1936
      %v2088 = vadd.f32 %v1694, %v1939
      %v2089 = vadd.f32 %v1695, %v1944
      %v2090 = vadd.f32 %v1696, %v1947
      %v2091 = vadd.f32 %v1697, %v1952
      %v2092 = vadd.f32 %v1698, %v1955
      %v2093 = vadd.f32 %v1699, %v1960
      %v2094 = vadd.f32 %v1700, %v1963
      %v2095 = vadd.f32 %v1701, %v1968
      %v2096 = vadd.f32 %v1702, %v1971
      %v2097 = vadd.f32 %v1703, %v1976
      %v2098 = vadd.f32 %v1704, %v1979
      %v2099 = vadd.f32 %v1705, %v1984
      %v2100 = vadd.f32 %v1706, %v1987
      %v2101 = vadd.f32 %v1707, %v1992
      %v2102 = vadd.f32 %v1708, %v1995
      %v2103 = vadd.f32 %v1709, %v2000
      %v2104 = vadd.f32 %v1710, %v2003
      %v2105 = vadd.f32 %v1711, %v2008
      %v2106 = vadd.f32 %v1712, %v2011
      %v2107 = vadd.f32 %v1713, %v2016
      %v2108 = vadd.f32 %v1714, %v2019
      %v2109 = vadd.f32 %v1715, %v2024
      %v2110 = vadd.f32 %v1716, %v2027
      %v2111 = vadd.f32 %v1717, %v2032
      %v2112 = vadd.f32 %v1718, %v2035
      %v2113 = vadd.f32 %v1719, %v2040
      %v2114 = vadd.f32 %v1720, %v2043
      %v2115 = vadd.f32 %v1721, %v2048
      %v2116 = vadd.f32 %v1722, %v2051
      %v2117 = vadd.f32 %v1723, %v2056
      %v2118 = vadd.f32 %v1724, %v2059
      %v2119 = vadd.f32 %v1725, %v2064
      %v2120 = vadd.f32 %v1726, %v2067
      %v2121 = vadd.f32 %v1727, %v2072
      %v2122 = vld [vmem:[%s230 + $0x25] sm:$0xff]
      %v2123 = vld [vmem:[%s230 + $0x2d] sm:$0xff]
      %v2124 = vld [vmem:[%s230 + $0x35] sm:$0xff]
      %v2125 = vld [vmem:[%s230 + $0x3d] sm:$0xff]
      %v2126 = vld [vmem:[%s230 + $0x45] sm:$0xff]
      %v2127 = vld [vmem:[%s230 + $0x4d] sm:$0xff]
      %v2128 = vld [vmem:[%s230 + $0x55] sm:$0xff]
      %v2129 = vld [vmem:[%s230 + $0x5d] sm:$0xff]
      %v2130 = vld [vmem:[%s230 + $0x65] sm:$0xff]
      %v2131 = vld [vmem:[%s230 + $0x6d] sm:$0xff]
      %v2132 = vld [vmem:[%s230 + $0x75] sm:$0xff]
      %v2133 = vld [vmem:[%s230 + $0x7d] sm:$0xff]
      %v2134 = vld [vmem:[%s230 + $0x85] sm:$0xff]
      %v2135 = vld [vmem:[%s230 + $0x8d] sm:$0xff]
      %v2136 = vld [vmem:[%s230 + $0x95] sm:$0xff]
      %v2137 = vld [vmem:[%s230 + $0x9d] sm:$0xff]
      %v2138 = vld [vmem:[%s230 + $0xa5] sm:$0xff]
      %v2139 = vld [vmem:[%s230 + $0xad] sm:$0xff]
      %v2140 = vld [vmem:[%s230 + $0xb5] sm:$0xff]
      %v2141 = vld [vmem:[%s230 + $0xbd] sm:$0xff]
      %v2142 = vld [vmem:[%s230 + $0xc5] sm:$0xff]
      %v2143 = vld [vmem:[%s230 + $0xcd] sm:$0xff]
      %v2144 = vld [vmem:[%s230 + $0xd5] sm:$0xff]
      %v2145 = vld [vmem:[%s230 + $0xdd] sm:$0xff]
      %v2146 = vld [vmem:[%s230 + $0xe5] sm:$0xff]
      %v2147 = vld [vmem:[%s230 + $0xed] sm:$0xff]
      %v2148 = vld [vmem:[%s230 + $0xf5] sm:$0xff]
      %v2149 = vld [vmem:[%s230 + $0xfd] sm:$0xff]
      %v2150 = vld [vmem:[%s230 + $0x105] sm:$0xff]
      %v2151 = vld [vmem:[%s230 + $0x10d] sm:$0xff]
      %v2152 = vld [vmem:[%s230 + $0x115] sm:$0xff]
      %v2153 = vld [vmem:[%s230 + $0x11d] sm:$0xff]
      %v2154 = vld [vmem:[%s230 + $0x125] sm:$0xff]
      %v2155 = vld [vmem:[%s230 + $0x12d] sm:$0xff]
      %v2156 = vld [vmem:[%s230 + $0x135] sm:$0xff]
      %v2157 = vld [vmem:[%s230 + $0x13d] sm:$0xff]
      %v2158 = vld [vmem:[%s230 + $0x145] sm:$0xff]
      %v2159 = vld [vmem:[%s230 + $0x14d] sm:$0xff]
      %v2160 = vld [vmem:[%s230 + $0x155] sm:$0xff]
      %v2161 = vld [vmem:[%s230 + $0x15d] sm:$0xff]
      %v2162 = vld [vmem:[%s230 + $0x165] sm:$0xff]
      %v2163 = vld [vmem:[%s230 + $0x16d] sm:$0xff]
      %v2164 = vld [vmem:[%s230 + $0x175] sm:$0xff]
      %v2165 = vld [vmem:[%s230 + $0x17d] sm:$0xff]
      %v2166 = vld [vmem:[%s230 + $0x185] sm:$0xff]
      %v2167 = vpack.c.bf16 %v2123, %v2122
      %v2168 = vpack.c.bf16 %v2125, %v2124
      %v2169 = vpack.c.bf16 %v2127, %v2126
      %v2170 = vpack.c.bf16 %v2129, %v2128
      %v2171 = vpack.c.bf16 %v2131, %v2130
      %v2172 = vpack.c.bf16 %v2133, %v2132
      %v2173 = vpack.c.bf16 %v2135, %v2134
      %v2174 = vpack.c.bf16 %v2137, %v2136
      %v2175 = vpack.c.bf16 %v2139, %v2138
      %v2176 = vpack.c.bf16 %v2141, %v2140
      %v2177 = vpack.c.bf16 %v2143, %v2142
      %v2178 = vpack.c.bf16 %v2145, %v2144
      %v2179 = vpack.c.bf16 %v2147, %v2146
      %v2180 = vpack.c.bf16 %v2149, %v2148
      %v2181 = vpack.c.bf16 %v2151, %v2150
      %v2182 = vpack.c.bf16 %v2153, %v2152
      %v2183 = vpack.c.bf16 %v2155, %v2154
      %v2184 = vpack.c.bf16 %v2157, %v2156
      %v2185 = vpack.c.bf16 %v2159, %v2158
      %v2186 = vpack.c.bf16 %v2161, %v2160
      %v2187 = vpack.c.bf16 %v2163, %v2162
      %v2188 = vpack.c.bf16 %v2165, %v2164
      %v2189 = vpack.c.bf16 %v2166, %v2166
      %s2190 = scalar_lea.vmem %s1, 320
      %v2191 = vld [vmem:[%s2190] sm:$0xf]
      %v2192 = vld [vmem:[%s2190 + $0x4] sm:$0xf]
      %v2193 = vld [vmem:[%s2190 + $0x8] sm:$0xf]
      %v2194 = vld [vmem:[%s2190 + $0xc] sm:$0xf]
      %v2195 = vld [vmem:[%s2190 + $0x10] sm:$0xf]
      %v2196 = vld [vmem:[%s2190 + $0x14] sm:$0xf]
      %v2197 = vld [vmem:[%s2190 + $0x18] sm:$0xf]
      %v2198 = vld [vmem:[%s2190 + $0x1c] sm:$0xf]
      %v2199 = vld [vmem:[%s2190 + $0x20] sm:$0xf]
      %v2200 = vld [vmem:[%s2190 + $0x24] sm:$0xf]
      %v2201 = vld [vmem:[%s2190 + $0x28] sm:$0xf]
      %v2202 = vld [vmem:[%s2190 + $0x2c] sm:$0xf]
      %v2203 = vld [vmem:[%s2190 + $0x30] sm:$0xf]
      %v2204 = vld [vmem:[%s2190 + $0x34] sm:$0xf]
      %v2205 = vld [vmem:[%s2190 + $0x38] sm:$0xf]
      %v2206 = vld [vmem:[%s2190 + $0x3c] sm:$0xf]
      %v2223 = vunpack.c.l.b16 %v2191
      %v2224 = vunpack.c.l.b16 %v2192
      %v2225 = vunpack.c.l.b16 %v2193
      %v2226 = vunpack.c.l.b16 %v2194
      %v2227 = vunpack.c.l.b16 %v2195
      %v2228 = vunpack.c.l.b16 %v2196
      %v2229 = vunpack.c.l.b16 %v2197
      %v2230 = vunpack.c.l.b16 %v2198
      %v2231 = vunpack.c.l.b16 %v2199
      %v2232 = vunpack.c.l.b16 %v2200
      %v2233 = vunpack.c.l.b16 %v2201
      %v2234 = vunpack.c.l.b16 %v2202
      %v2235 = vunpack.c.l.b16 %v2203
      %v2236 = vunpack.c.l.b16 %v2204
      %v2237 = vunpack.c.l.b16 %v2205
      %v2238 = vunpack.c.l.b16 %v2206
      %v2239 = vpack.c.b16 %v2224, %v2223
      %v2240 = vpack.c.b16 %v2226, %v2225
      %v2241 = vpack.c.b16 %v2228, %v2227
      %v2242 = vpack.c.b16 %v2230, %v2229
      %v2243 = vpack.c.b16 %v2232, %v2231
      %v2244 = vpack.c.b16 %v2234, %v2233
      %v2245 = vpack.c.b16 %v2236, %v2235
      %v2246 = vpack.c.b16 %v2238, %v2237
      %2255 = vmatprep.subr.bf16.mxu0 0
      %2256 = vmatpush1.bf16.msra.mxu0 %v2239
      %2257 = vmatprep.subr.bf16.mxu0 0
      %2258 = vmatpush1.bf16.msra.mxu0 %v2240
      %2259 = vmatprep.subr.bf16.mxu0 0
      %2260 = vmatpush1.bf16.msra.mxu0 %v2241
      %2261 = vmatprep.subr.bf16.mxu0 0
      %2262 = vmatpush1.bf16.msra.mxu0 %v2242
      %2263 = vmatprep.subr.bf16.mxu0 0
      %2264 = vmatpush1.bf16.msra.mxu0 %v2243
      %2265 = vmatprep.subr.bf16.mxu0 0
      %2266 = vmatpush1.bf16.msra.mxu0 %v2244
      %2267 = vmatprep.subr.bf16.mxu0 0
      %2268 = vmatpush1.bf16.msra.mxu0 %v2245
      %2269 = vmatprep.subr.bf16.mxu0 0
      %2270 = vmatpush1.bf16.msra.mxu0 %v2246
      %2271 = vmatprep.subr.bf16.mxu0 0
      %2272 = vmatpush1.bf16.msra.mxu0 0
      %2273 = vmatprep.subr.bf16.mxu0 0
      %2274 = vmatpush1.bf16.msra.mxu0 0
      %2275 = vmatprep.subr.bf16.mxu0 0
      %2276 = vmatpush1.bf16.msra.mxu0 0
      %2277 = vmatprep.subr.bf16.mxu0 0
      %2278 = vmatpush1.bf16.msra.mxu0 0
      %2279 = vmatprep.subr.bf16.mxu0 0
      %2280 = vmatpush1.bf16.msra.mxu0 0
      %2281 = vmatprep.subr.bf16.mxu0 0
      %2282 = vmatpush1.bf16.msra.mxu0 0
      %2283 = vmatprep.subr.bf16.mxu0 0
      %2284 = vmatpush1.bf16.msra.mxu0 0
      %2285 = vmatprep.subr.bf16.mxu0 0
      %2286 = vmatpush1.bf16.msra.mxu0 0
      %2287 = vmatprep.mubr.bf16.mxu0 0
      %2288 = vmatmul.mubr.bf16.gmra.mrb[0].mxu0 %v2167
      %v2289 = vpop.f32.mrb[0].mxu0
      %v2290 = vadd.f32 0.0, %v2289
      %v2291 = vpop.f32.mrb[0].mxu0
      %v2292 = vpop.f32.mrb[0].mxu0
      %v2293 = vadd.f32 0.0, %v2292
      %v2294 = vpop.f32.mrb[0].mxu0
      %2295 = vmatprep.mubr.bf16.mxu0 0
      %2296 = vmatmul.mubr.bf16.gmra.mrb[0].mxu0 %v2168
      %v2297 = vpop.f32.mrb[0].mxu0
      %v2298 = vadd.f32 0.0, %v2297
      %v2299 = vpop.f32.mrb[0].mxu0
      %v2300 = vpop.f32.mrb[0].mxu0
      %v2301 = vadd.f32 0.0, %v2300
      %v2302 = vpop.f32.mrb[0].mxu0
      %2303 = vmatprep.mubr.bf16.mxu0 0
      %2304 = vmatmul.mubr.bf16.gmra.mrb[0].mxu0 %v2169
      %v2305 = vpop.f32.mrb[0].mxu0
      %v2306 = vadd.f32 0.0, %v2305
      %v2307 = vpop.f32.mrb[0].mxu0
      %v2308 = vpop.f32.mrb[0].mxu0
      %v2309 = vadd.f32 0.0, %v2308
      %v2310 = vpop.f32.mrb[0].mxu0
      %2311 = vmatprep.mubr.bf16.mxu0 0
      %2312 = vmatmul.mubr.bf16.gmra.mrb[0].mxu0 %v2170
      %v2313 = vpop.f32.mrb[0].mxu0
      %v2314 = vadd.f32 0.0, %v2313
      %v2315 = vpop.f32.mrb[0].mxu0
      %v2316 = vpop.f32.mrb[0].mxu0
      %v2317 = vadd.f32 0.0, %v2316
      %v2318 = vpop.f32.mrb[0].mxu0
      %2319 = vmatprep.mubr.bf16.mxu0 0
      %2320 = vmatmul.mubr.bf16.gmra.mrb[0].mxu0 %v2171
      %v2321 = vpop.f32.mrb[0].mxu0
      %v2322 = vadd.f32 0.0, %v2321
      %v2323 = vpop.f32.mrb[0].mxu0
      %v2324 = vpop.f32.mrb[0].mxu0
      %v2325 = vadd.f32 0.0, %v2324
      %v2326 = vpop.f32.mrb[0].mxu0
      %2327 = vmatprep.mubr.bf16.mxu0 0
      %2328 = vmatmul.mubr.bf16.gmra.mrb[0].mxu0 %v2172
      %v2329 = vpop.f32.mrb[0].mxu0
      %v2330 = vadd.f32 0.0, %v2329
      %v2331 = vpop.f32.mrb[0].mxu0
      %v2332 = vpop.f32.mrb[0].mxu0
      %v2333 = vadd.f32 0.0, %v2332
      %v2334 = vpop.f32.mrb[0].mxu0
      %2335 = vmatprep.mubr.bf16.mxu0 0
      %2336 = vmatmul.mubr.bf16.gmra.mrb[0].mxu0 %v2173
      %v2337 = vpop.f32.mrb[0].mxu0
      %v2338 = vadd.f32 0.0, %v2337
      %v2339 = vpop.f32.mrb[0].mxu0
      %v2340 = vpop.f32.mrb[0].mxu0
      %v2341 = vadd.f32 0.0, %v2340
      %v2342 = vpop.f32.mrb[0].mxu0
      %2343 = vmatprep.mubr.bf16.mxu0 0
      %2344 = vmatmul.mubr.bf16.gmra.mrb[0].mxu0 %v2174
      %v2345 = vpop.f32.mrb[0].mxu0
      %v2346 = vadd.f32 0.0, %v2345
      %v2347 = vpop.f32.mrb[0].mxu0
      %v2348 = vpop.f32.mrb[0].mxu0
      %v2349 = vadd.f32 0.0, %v2348
      %v2350 = vpop.f32.mrb[0].mxu0
      %2351 = vmatprep.mubr.bf16.mxu0 0
      %2352 = vmatmul.mubr.bf16.gmra.mrb[0].mxu0 %v2175
      %v2353 = vpop.f32.mrb[0].mxu0
      %v2354 = vadd.f32 0.0, %v2353
      %v2355 = vpop.f32.mrb[0].mxu0
      %v2356 = vpop.f32.mrb[0].mxu0
      %v2357 = vadd.f32 0.0, %v2356
      %v2358 = vpop.f32.mrb[0].mxu0
      %2359 = vmatprep.mubr.bf16.mxu0 0
      %2360 = vmatmul.mubr.bf16.gmra.mrb[0].mxu0 %v2176
      %v2361 = vpop.f32.mrb[0].mxu0
      %v2362 = vadd.f32 0.0, %v2361
      %v2363 = vpop.f32.mrb[0].mxu0
      %v2364 = vpop.f32.mrb[0].mxu0
      %v2365 = vadd.f32 0.0, %v2364
      %v2366 = vpop.f32.mrb[0].mxu0
      %2367 = vmatprep.mubr.bf16.mxu0 0
      %2368 = vmatmul.mubr.bf16.gmra.mrb[0].mxu0 %v2177
      %v2369 = vpop.f32.mrb[0].mxu0
      %v2370 = vadd.f32 0.0, %v2369
      %v2371 = vpop.f32.mrb[0].mxu0
      %v2372 = vpop.f32.mrb[0].mxu0
      %v2373 = vadd.f32 0.0, %v2372
      %v2374 = vpop.f32.mrb[0].mxu0
      %2375 = vmatprep.mubr.bf16.mxu0 0
      %2376 = vmatmul.mubr.bf16.gmra.mrb[0].mxu0 %v2178
      %v2377 = vpop.f32.mrb[0].mxu0
      %v2378 = vadd.f32 0.0, %v2377
      %v2379 = vpop.f32.mrb[0].mxu0
      %v2380 = vpop.f32.mrb[0].mxu0
      %v2381 = vadd.f32 0.0, %v2380
      %v2382 = vpop.f32.mrb[0].mxu0
      %2383 = vmatprep.mubr.bf16.mxu0 0
      %2384 = vmatmul.mubr.bf16.gmra.mrb[0].mxu0 %v2179
      %v2385 = vpop.f32.mrb[0].mxu0
      %v2386 = vadd.f32 0.0, %v2385
      %v2387 = vpop.f32.mrb[0].mxu0
      %v2388 = vpop.f32.mrb[0].mxu0
      %v2389 = vadd.f32 0.0, %v2388
      %v2390 = vpop.f32.mrb[0].mxu0
      %2391 = vmatprep.mubr.bf16.mxu0 0
      %2392 = vmatmul.mubr.bf16.gmra.mrb[0].mxu0 %v2180
      %v2393 = vpop.f32.mrb[0].mxu0
      %v2394 = vadd.f32 0.0, %v2393
      %v2395 = vpop.f32.mrb[0].mxu0
      %v2396 = vpop.f32.mrb[0].mxu0
      %v2397 = vadd.f32 0.0, %v2396
      %v2398 = vpop.f32.mrb[0].mxu0
      %2399 = vmatprep.mubr.bf16.mxu0 0
      %2400 = vmatmul.mubr.bf16.gmra.mrb[0].mxu0 %v2181
      %v2401 = vpop.f32.mrb[0].mxu0
      %v2402 = vadd.f32 0.0, %v2401
      %v2403 = vpop.f32.mrb[0].mxu0
      %v2404 = vpop.f32.mrb[0].mxu0
      %v2405 = vadd.f32 0.0, %v2404
      %v2406 = vpop.f32.mrb[0].mxu0
      %2407 = vmatprep.mubr.bf16.mxu0 0
      %2408 = vmatmul.mubr.bf16.gmra.mrb[0].mxu0 %v2182
      %v2409 = vpop.f32.mrb[0].mxu0
      %v2410 = vadd.f32 0.0, %v2409
      %v2411 = vpop.f32.mrb[0].mxu0
      %v2412 = vpop.f32.mrb[0].mxu0
      %v2413 = vadd.f32 0.0, %v2412
      %v2414 = vpop.f32.mrb[0].mxu0
      %2415 = vmatprep.mubr.bf16.mxu0 0
      %2416 = vmatmul.mubr.bf16.gmra.mrb[0].mxu0 %v2183
      %v2417 = vpop.f32.mrb[0].mxu0
      %v2418 = vadd.f32 0.0, %v2417
      %v2419 = vpop.f32.mrb[0].mxu0
      %v2420 = vpop.f32.mrb[0].mxu0
      %v2421 = vadd.f32 0.0, %v2420
      %v2422 = vpop.f32.mrb[0].mxu0
      %2423 = vmatprep.mubr.bf16.mxu0 0
      %2424 = vmatmul.mubr.bf16.gmra.mrb[0].mxu0 %v2184
      %v2425 = vpop.f32.mrb[0].mxu0
      %v2426 = vadd.f32 0.0, %v2425
      %v2427 = vpop.f32.mrb[0].mxu0
      %v2428 = vpop.f32.mrb[0].mxu0
      %v2429 = vadd.f32 0.0, %v2428
      %v2430 = vpop.f32.mrb[0].mxu0
      %2431 = vmatprep.mubr.bf16.mxu0 0
      %2432 = vmatmul.mubr.bf16.gmra.mrb[0].mxu0 %v2185
      %v2433 = vpop.f32.mrb[0].mxu0
      %v2434 = vadd.f32 0.0, %v2433
      %v2435 = vpop.f32.mrb[0].mxu0
      %v2436 = vpop.f32.mrb[0].mxu0
      %v2437 = vadd.f32 0.0, %v2436
      %v2438 = vpop.f32.mrb[0].mxu0
      %2439 = vmatprep.mubr.bf16.mxu0 0
      %2440 = vmatmul.mubr.bf16.gmra.mrb[0].mxu0 %v2186
      %v2441 = vpop.f32.mrb[0].mxu0
      %v2442 = vadd.f32 0.0, %v2441
      %v2443 = vpop.f32.mrb[0].mxu0
      %v2444 = vpop.f32.mrb[0].mxu0
      %v2445 = vadd.f32 0.0, %v2444
      %v2446 = vpop.f32.mrb[0].mxu0
      %2447 = vmatprep.mubr.bf16.mxu0 0
      %2448 = vmatmul.mubr.bf16.gmra.mrb[0].mxu0 %v2187
      %v2449 = vpop.f32.mrb[0].mxu0
      %v2450 = vadd.f32 0.0, %v2449
      %v2451 = vpop.f32.mrb[0].mxu0
      %v2452 = vpop.f32.mrb[0].mxu0
      %v2453 = vadd.f32 0.0, %v2452
      %v2454 = vpop.f32.mrb[0].mxu0
      %2455 = vmatprep.mubr.bf16.mxu0 0
      %2456 = vmatmul.mubr.bf16.gmra.mrb[0].mxu0 %v2188
      %v2457 = vpop.f32.mrb[0].mxu0
      %v2458 = vadd.f32 0.0, %v2457
      %v2459 = vpop.f32.mrb[0].mxu0
      %v2460 = vpop.f32.mrb[0].mxu0
      %v2461 = vadd.f32 0.0, %v2460
      %v2462 = vpop.f32.mrb[0].mxu0
      %2463 = vmatprep.mubr.bf16.mxu0 0
      %2464 = vmatmul.mubr.bf16.gmra.mrb[0].mxu0 %v2189
      %v2465 = vpop.f32.mrb[0].mxu0
      %v2466 = vadd.f32 0.0, %v2465
      %v2467 = vpop.f32.mrb[0].mxu0
      %v2468 = vpop.f32.mrb[0].mxu0
      %v2469 = vpop.f32.mrb[0].mxu0
      %2470 = vdwg.mxu0
      %v2471 = vadd.f32 %v2077, %v2290
      %v2472 = vadd.f32 %v2078, %v2293
      %v2473 = vadd.f32 %v2079, %v2298
      %v2474 = vadd.f32 %v2080, %v2301
      %v2475 = vadd.f32 %v2081, %v2306
      %v2476 = vadd.f32 %v2082, %v2309
      %v2477 = vadd.f32 %v2083, %v2314
      %v2478 = vadd.f32 %v2084, %v2317
      %v2479 = vadd.f32 %v2085, %v2322
      %v2480 = vadd.f32 %v2086, %v2325
      %v2481 = vadd.f32 %v2087, %v2330
      %v2482 = vadd.f32 %v2088, %v2333
      %v2483 = vadd.f32 %v2089, %v2338
      %v2484 = vadd.f32 %v2090, %v2341
      %v2485 = vadd.f32 %v2091, %v2346
      %v2486 = vadd.f32 %v2092, %v2349
      %v2487 = vadd.f32 %v2093, %v2354
      %v2488 = vadd.f32 %v2094, %v2357
      %v2489 = vadd.f32 %v2095, %v2362
      %v2490 = vadd.f32 %v2096, %v2365
      %v2491 = vadd.f32 %v2097, %v2370
      %v2492 = vadd.f32 %v2098, %v2373
      %v2493 = vadd.f32 %v2099, %v2378
      %v2494 = vadd.f32 %v2100, %v2381
      %v2495 = vadd.f32 %v2101, %v2386
      %v2496 = vadd.f32 %v2102, %v2389
      %v2497 = vadd.f32 %v2103, %v2394
      %v2498 = vadd.f32 %v2104, %v2397
      %v2499 = vadd.f32 %v2105, %v2402
      %v2500 = vadd.f32 %v2106, %v2405
      %v2501 = vadd.f32 %v2107, %v2410
      %v2502 = vadd.f32 %v2108, %v2413
      %v2503 = vadd.f32 %v2109, %v2418
      %v2504 = vadd.f32 %v2110, %v2421
      %v2505 = vadd.f32 %v2111, %v2426
      %v2506 = vadd.f32 %v2112, %v2429
      %v2507 = vadd.f32 %v2113, %v2434
      %v2508 = vadd.f32 %v2114, %v2437
      %v2509 = vadd.f32 %v2115, %v2442
      %v2510 = vadd.f32 %v2116, %v2445
      %v2511 = vadd.f32 %v2117, %v2450
      %v2512 = vadd.f32 %v2118, %v2453
      %v2513 = vadd.f32 %v2119, %v2458
      %v2514 = vadd.f32 %v2120, %v2461
      %v2515 = vadd.f32 %v2121, %v2466
      %v2516 = vld [vmem:[%s230 + $0x35] sm:$0xff]
      %v2517 = vld [vmem:[%s230 + $0x3d] sm:$0xff]
      %v2518 = vld [vmem:[%s230 + $0x45] sm:$0xff]
      %v2519 = vld [vmem:[%s230 + $0x4d] sm:$0xff]
      %v2520 = vld [vmem:[%s230 + $0x55] sm:$0xff]
      %v2521 = vld [vmem:[%s230 + $0x5d] sm:$0xff]
      %v2522 = vld [vmem:[%s230 + $0x65] sm:$0xff]
      %v2523 = vld [vmem:[%s230 + $0x6d] sm:$0xff]
      %v2524 = vld [vmem:[%s230 + $0x75] sm:$0xff]
      %v2525 = vld [vmem:[%s230 + $0x7d] sm:$0xff]
      %v2526 = vld [vmem:[%s230 + $0x85] sm:$0xff]
      %v2527 = vld [vmem:[%s230 + $0x8d] sm:$0xff]
      %v2528 = vld [vmem:[%s230 + $0x95] sm:$0xff]
      %v2529 = vld [vmem:[%s230 + $0x9d] sm:$0xff]
      %v2530 = vld [vmem:[%s230 + $0xa5] sm:$0xff]
      %v2531 = vld [vmem:[%s230 + $0xad] sm:$0xff]
      %v2532 = vld [vmem:[%s230 + $0xb5] sm:$0xff]
      %v2533 = vld [vmem:[%s230 + $0xbd] sm:$0xff]
      %v2534 = vld [vmem:[%s230 + $0xc5] sm:$0xff]
      %v2535 = vld [vmem:[%s230 + $0xcd] sm:$0xff]
      %v2536 = vld [vmem:[%s230 + $0xd5] sm:$0xff]
      %v2537 = vld [vmem:[%s230 + $0xdd] sm:$0xff]
      %v2538 = vld [vmem:[%s230 + $0xe5] sm:$0xff]
      %v2539 = vld [vmem:[%s230 + $0xed] sm:$0xff]
      %v2540 = vld [vmem:[%s230 + $0xf5] sm:$0xff]
      %v2541 = vld [vmem:[%s230 + $0xfd] sm:$0xff]
      %v2542 = vld [vmem:[%s230 + $0x105] sm:$0xff]
      %v2543 = vld [vmem:[%s230 + $0x10d] sm:$0xff]
      %v2544 = vld [vmem:[%s230 + $0x115] sm:$0xff]
      %v2545 = vld [vmem:[%s230 + $0x11d] sm:$0xff]
      %v2546 = vld [vmem:[%s230 + $0x125] sm:$0xff]
      %v2547 = vld [vmem:[%s230 + $0x12d] sm:$0xff]
      %v2548 = vld [vmem:[%s230 + $0x135] sm:$0xff]
      %v2549 = vld [vmem:[%s230 + $0x13d] sm:$0xff]
      %v2550 = vld [vmem:[%s230 + $0x145] sm:$0xff]
      %v2551 = vld [vmem:[%s230 + $0x14d] sm:$0xff]
      %v2552 = vld [vmem:[%s230 + $0x155] sm:$0xff]
      %v2553 = vld [vmem:[%s230 + $0x15d] sm:$0xff]
      %v2554 = vld [vmem:[%s230 + $0x165] sm:$0xff]
      %v2555 = vld [vmem:[%s230 + $0x16d] sm:$0xff]
      %v2556 = vld [vmem:[%s230 + $0x175] sm:$0xff]
      %v2557 = vld [vmem:[%s230 + $0x17d] sm:$0xff]
      %v2558 = vld [vmem:[%s230 + $0x185] sm:$0xff]
      %v2559 = vld [vmem:[%s230 + $0x18d] sm:$0xff]
      %v2560 = vld [vmem:[%s230 + $0x195] sm:$0xff]
      %v2561 = vpack.c.bf16 %v2517, %v2516
      %v2562 = vpack.c.bf16 %v2519, %v2518
      %v2563 = vpack.c.bf16 %v2521, %v2520
      %v2564 = vpack.c.bf16 %v2523, %v2522
      %v2565 = vpack.c.bf16 %v2525, %v2524
      %v2566 = vpack.c.bf16 %v2527, %v2526
      %v2567 = vpack.c.bf16 %v2529, %v2528
      %v2568 = vpack.c.bf16 %v2531, %v2530
      %v2569 = vpack.c.bf16 %v2533, %v2532
      %v2570 = vpack.c.bf16 %v2535, %v2534
      %v2571 = vpack.c.bf16 %v2537, %v2536
      %v2572 = vpack.c.bf16 %v2539, %v2538
      %v2573 = vpack.c.bf16 %v2541, %v2540
      %v2574 = vpack.c.bf16 %v2543, %v2542
      %v2575 = vpack.c.bf16 %v2545, %v2544
      %v2576 = vpack.c.bf16 %v2547, %v2546
      %v2577 = vpack.c.bf16 %v2549, %v2548
      %v2578 = vpack.c.bf16 %v2551, %v2550
      %v2579 = vpack.c.bf16 %v2553, %v2552
      %v2580 = vpack.c.bf16 %v2555, %v2554
      %v2581 = vpack.c.bf16 %v2557, %v2556
      %v2582 = vpack.c.bf16 %v2559, %v2558
      %v2583 = vpack.c.bf16 %v2560, %v2560
      %s2584 = scalar_lea.vmem %s1, 384
      %v2585 = vld [vmem:[%s2584] sm:$0xf]
      %v2586 = vld [vmem:[%s2584 + $0x4] sm:$0xf]
      %v2587 = vld [vmem:[%s2584 + $0x8] sm:$0xf]
      %v2588 = vld [vmem:[%s2584 + $0xc] sm:$0xf]
      %v2589 = vld [vmem:[%s2584 + $0x10] sm:$0xf]
      %v2590 = vld [vmem:[%s2584 + $0x14] sm:$0xf]
      %v2591 = vld [vmem:[%s2584 + $0x18] sm:$0xf]
      %v2592 = vld [vmem:[%s2584 + $0x1c] sm:$0xf]
      %v2593 = vld [vmem:[%s2584 + $0x20] sm:$0xf]
      %v2594 = vld [vmem:[%s2584 + $0x24] sm:$0xf]
      %v2595 = vld [vmem:[%s2584 + $0x28] sm:$0xf]
      %v2596 = vld [vmem:[%s2584 + $0x2c] sm:$0xf]
      %v2597 = vld [vmem:[%s2584 + $0x30] sm:$0xf]
      %v2598 = vld [vmem:[%s2584 + $0x34] sm:$0xf]
      %v2599 = vld [vmem:[%s2584 + $0x38] sm:$0xf]
      %v2600 = vld [vmem:[%s2584 + $0x3c] sm:$0xf]
      %v2617 = vunpack.c.l.b16 %v2585
      %v2618 = vunpack.c.l.b16 %v2586
      %v2619 = vunpack.c.l.b16 %v2587
      %v2620 = vunpack.c.l.b16 %v2588
      %v2621 = vunpack.c.l.b16 %v2589
      %v2622 = vunpack.c.l.b16 %v2590
      %v2623 = vunpack.c.l.b16 %v2591
      %v2624 = vunpack.c.l.b16 %v2592
      %v2625 = vunpack.c.l.b16 %v2593
      %v2626 = vunpack.c.l.b16 %v2594
      %v2627 = vunpack.c.l.b16 %v2595
      %v2628 = vunpack.c.l.b16 %v2596
      %v2629 = vunpack.c.l.b16 %v2597
      %v2630 = vunpack.c.l.b16 %v2598
      %v2631 = vunpack.c.l.b16 %v2599
      %v2632 = vunpack.c.l.b16 %v2600
      %v2633 = vpack.c.b16 %v2618, %v2617
      %v2634 = vpack.c.b16 %v2620, %v2619
      %v2635 = vpack.c.b16 %v2622, %v2621
      %v2636 = vpack.c.b16 %v2624, %v2623
      %v2637 = vpack.c.b16 %v2626, %v2625
      %v2638 = vpack.c.b16 %v2628, %v2627
      %v2639 = vpack.c.b16 %v2630, %v2629
      %v2640 = vpack.c.b16 %v2632, %v2631
      %2649 = vmatprep.subr.bf16.mxu0 0
      %2650 = vmatpush1.bf16.msra.mxu0 %v2633
      %2651 = vmatprep.subr.bf16.mxu0 0
      %2652 = vmatpush1.bf16.msra.mxu0 %v2634
      %2653 = vmatprep.subr.bf16.mxu0 0
      %2654 = vmatpush1.bf16.msra.mxu0 %v2635
      %2655 = vmatprep.subr.bf16.mxu0 0
      %2656 = vmatpush1.bf16.msra.mxu0 %v2636
      %2657 = vmatprep.subr.bf16.mxu0 0
      %2658 = vmatpush1.bf16.msra.mxu0 %v2637
      %2659 = vmatprep.subr.bf16.mxu0 0
      %2660 = vmatpush1.bf16.msra.mxu0 %v2638
      %2661 = vmatprep.subr.bf16.mxu0 0
      %2662 = vmatpush1.bf16.msra.mxu0 %v2639
      %2663 = vmatprep.subr.bf16.mxu0 0
      %2664 = vmatpush1.bf16.msra.mxu0 %v2640
      %2665 = vmatprep.subr.bf16.mxu0 0
      %2666 = vmatpush1.bf16.msra.mxu0 0
      %2667 = vmatprep.subr.bf16.mxu0 0
      %2668 = vmatpush1.bf16.msra.mxu0 0
      %2669 = vmatprep.subr.bf16.mxu0 0
      %2670 = vmatpush1.bf16.msra.mxu0 0
      %2671 = vmatprep.subr.bf16.mxu0 0
      %2672 = vmatpush1.bf16.msra.mxu0 0
      %2673 = vmatprep.subr.bf16.mxu0 0
      %2674 = vmatpush1.bf16.msra.mxu0 0
      %2675 = vmatprep.subr.bf16.mxu0 0
      %2676 = vmatpush1.bf16.msra.mxu0 0
      %2677 = vmatprep.subr.bf16.mxu0 0
      %2678 = vmatpush1.bf16.msra.mxu0 0
      %2679 = vmatprep.subr.bf16.mxu0 0
      %2680 = vmatpush1.bf16.msra.mxu0 0
      %2681 = vmatprep.mubr.bf16.mxu0 0
      %2682 = vmatmul.mubr.bf16.gmra.mrb[0].mxu0 %v2561
      %v2683 = vpop.f32.mrb[0].mxu0
      %v2684 = vadd.f32 0.0, %v2683
      %v2685 = vpop.f32.mrb[0].mxu0
      %v2686 = vpop.f32.mrb[0].mxu0
      %v2687 = vadd.f32 0.0, %v2686
      %v2688 = vpop.f32.mrb[0].mxu0
      %2689 = vmatprep.mubr.bf16.mxu0 0
      %2690 = vmatmul.mubr.bf16.gmra.mrb[0].mxu0 %v2562
      %v2691 = vpop.f32.mrb[0].mxu0
      %v2692 = vadd.f32 0.0, %v2691
      %v2693 = vpop.f32.mrb[0].mxu0
      %v2694 = vpop.f32.mrb[0].mxu0
      %v2695 = vadd.f32 0.0, %v2694
      %v2696 = vpop.f32.mrb[0].mxu0
      %2697 = vmatprep.mubr.bf16.mxu0 0
      %2698 = vmatmul.mubr.bf16.gmra.mrb[0].mxu0 %v2563
      %v2699 = vpop.f32.mrb[0].mxu0
      %v2700 = vadd.f32 0.0, %v2699
      %v2701 = vpop.f32.mrb[0].mxu0
      %v2702 = vpop.f32.mrb[0].mxu0
      %v2703 = vadd.f32 0.0, %v2702
      %v2704 = vpop.f32.mrb[0].mxu0
      %2705 = vmatprep.mubr.bf16.mxu0 0
      %2706 = vmatmul.mubr.bf16.gmra.mrb[0].mxu0 %v2564
      %v2707 = vpop.f32.mrb[0].mxu0
      %v2708 = vadd.f32 0.0, %v2707
      %v2709 = vpop.f32.mrb[0].mxu0
      %v2710 = vpop.f32.mrb[0].mxu0
      %v2711 = vadd.f32 0.0, %v2710
      %v2712 = vpop.f32.mrb[0].mxu0
      %2713 = vmatprep.mubr.bf16.mxu0 0
      %2714 = vmatmul.mubr.bf16.gmra.mrb[0].mxu0 %v2565
      %v2715 = vpop.f32.mrb[0].mxu0
      %v2716 = vadd.f32 0.0, %v2715
      %v2717 = vpop.f32.mrb[0].mxu0
      %v2718 = vpop.f32.mrb[0].mxu0
      %v2719 = vadd.f32 0.0, %v2718
      %v2720 = vpop.f32.mrb[0].mxu0
      %2721 = vmatprep.mubr.bf16.mxu0 0
      %2722 = vmatmul.mubr.bf16.gmra.mrb[0].mxu0 %v2566
      %v2723 = vpop.f32.mrb[0].mxu0
      %v2724 = vadd.f32 0.0, %v2723
      %v2725 = vpop.f32.mrb[0].mxu0
      %v2726 = vpop.f32.mrb[0].mxu0
      %v2727 = vadd.f32 0.0, %v2726
      %v2728 = vpop.f32.mrb[0].mxu0
      %2729 = vmatprep.mubr.bf16.mxu0 0
      %2730 = vmatmul.mubr.bf16.gmra.mrb[0].mxu0 %v2567
      %v2731 = vpop.f32.mrb[0].mxu0
      %v2732 = vadd.f32 0.0, %v2731
      %v2733 = vpop.f32.mrb[0].mxu0
      %v2734 = vpop.f32.mrb[0].mxu0
      %v2735 = vadd.f32 0.0, %v2734
      %v2736 = vpop.f32.mrb[0].mxu0
      %2737 = vmatprep.mubr.bf16.mxu0 0
      %2738 = vmatmul.mubr.bf16.gmra.mrb[0].mxu0 %v2568
      %v2739 = vpop.f32.mrb[0].mxu0
      %v2740 = vadd.f32 0.0, %v2739
      %v2741 = vpop.f32.mrb[0].mxu0
      %v2742 = vpop.f32.mrb[0].mxu0
      %v2743 = vadd.f32 0.0, %v2742
      %v2744 = vpop.f32.mrb[0].mxu0
      %2745 = vmatprep.mubr.bf16.mxu0 0
      %2746 = vmatmul.mubr.bf16.gmra.mrb[0].mxu0 %v2569
      %v2747 = vpop.f32.mrb[0].mxu0
      %v2748 = vadd.f32 0.0, %v2747
      %v2749 = vpop.f32.mrb[0].mxu0
      %v2750 = vpop.f32.mrb[0].mxu0
      %v2751 = vadd.f32 0.0, %v2750
      %v2752 = vpop.f32.mrb[0].mxu0
      %2753 = vmatprep.mubr.bf16.mxu0 0
      %2754 = vmatmul.mubr.bf16.gmra.mrb[0].mxu0 %v2570
      %v2755 = vpop.f32.mrb[0].mxu0
      %v2756 = vadd.f32 0.0, %v2755
      %v2757 = vpop.f32.mrb[0].mxu0
      %v2758 = vpop.f32.mrb[0].mxu0
      %v2759 = vadd.f32 0.0, %v2758
      %v2760 = vpop.f32.mrb[0].mxu0
      %2761 = vmatprep.mubr.bf16.mxu0 0
      %2762 = vmatmul.mubr.bf16.gmra.mrb[0].mxu0 %v2571
      %v2763 = vpop.f32.mrb[0].mxu0
      %v2764 = vadd.f32 0.0, %v2763
      %v2765 = vpop.f32.mrb[0].mxu0
      %v2766 = vpop.f32.mrb[0].mxu0
      %v2767 = vadd.f32 0.0, %v2766
      %v2768 = vpop.f32.mrb[0].mxu0
      %2769 = vmatprep.mubr.bf16.mxu0 0
      %2770 = vmatmul.mubr.bf16.gmra.mrb[0].mxu0 %v2572
      %v2771 = vpop.f32.mrb[0].mxu0
      %v2772 = vadd.f32 0.0, %v2771
      %v2773 = vpop.f32.mrb[0].mxu0
      %v2774 = vpop.f32.mrb[0].mxu0
      %v2775 = vadd.f32 0.0, %v2774
      %v2776 = vpop.f32.mrb[0].mxu0
      %2777 = vmatprep.mubr.bf16.mxu0 0
      %2778 = vmatmul.mubr.bf16.gmra.mrb[0].mxu0 %v2573
      %v2779 = vpop.f32.mrb[0].mxu0
      %v2780 = vadd.f32 0.0, %v2779
      %v2781 = vpop.f32.mrb[0].mxu0
      %v2782 = vpop.f32.mrb[0].mxu0
      %v2783 = vadd.f32 0.0, %v2782
      %v2784 = vpop.f32.mrb[0].mxu0
      %2785 = vmatprep.mubr.bf16.mxu0 0
      %2786 = vmatmul.mubr.bf16.gmra.mrb[0].mxu0 %v2574
      %v2787 = vpop.f32.mrb[0].mxu0
      %v2788 = vadd.f32 0.0, %v2787
      %v2789 = vpop.f32.mrb[0].mxu0
      %v2790 = vpop.f32.mrb[0].mxu0
      %v2791 = vadd.f32 0.0, %v2790
      %v2792 = vpop.f32.mrb[0].mxu0
      %2793 = vmatprep.mubr.bf16.mxu0 0
      %2794 = vmatmul.mubr.bf16.gmra.mrb[0].mxu0 %v2575
      %v2795 = vpop.f32.mrb[0].mxu0
      %v2796 = vadd.f32 0.0, %v2795
      %v2797 = vpop.f32.mrb[0].mxu0
      %v2798 = vpop.f32.mrb[0].mxu0
      %v2799 = vadd.f32 0.0, %v2798
      %v2800 = vpop.f32.mrb[0].mxu0
      %2801 = vmatprep.mubr.bf16.mxu0 0
      %2802 = vmatmul.mubr.bf16.gmra.mrb[0].mxu0 %v2576
      %v2803 = vpop.f32.mrb[0].mxu0
      %v2804 = vadd.f32 0.0, %v2803
      %v2805 = vpop.f32.mrb[0].mxu0
      %v2806 = vpop.f32.mrb[0].mxu0
      %v2807 = vadd.f32 0.0, %v2806
      %v2808 = vpop.f32.mrb[0].mxu0
      %2809 = vmatprep.mubr.bf16.mxu0 0
      %2810 = vmatmul.mubr.bf16.gmra.mrb[0].mxu0 %v2577
      %v2811 = vpop.f32.mrb[0].mxu0
      %v2812 = vadd.f32 0.0, %v2811
      %v2813 = vpop.f32.mrb[0].mxu0
      %v2814 = vpop.f32.mrb[0].mxu0
      %v2815 = vadd.f32 0.0, %v2814
      %v2816 = vpop.f32.mrb[0].mxu0
      %2817 = vmatprep.mubr.bf16.mxu0 0
      %2818 = vmatmul.mubr.bf16.gmra.mrb[0].mxu0 %v2578
      %v2819 = vpop.f32.mrb[0].mxu0
      %v2820 = vadd.f32 0.0, %v2819
      %v2821 = vpop.f32.mrb[0].mxu0
      %v2822 = vpop.f32.mrb[0].mxu0
      %v2823 = vadd.f32 0.0, %v2822
      %v2824 = vpop.f32.mrb[0].mxu0
      %2825 = vmatprep.mubr.bf16.mxu0 0
      %2826 = vmatmul.mubr.bf16.gmra.mrb[0].mxu0 %v2579
      %v2827 = vpop.f32.mrb[0].mxu0
      %v2828 = vadd.f32 0.0, %v2827
      %v2829 = vpop.f32.mrb[0].mxu0
      %v2830 = vpop.f32.mrb[0].mxu0
      %v2831 = vadd.f32 0.0, %v2830
      %v2832 = vpop.f32.mrb[0].mxu0
      %2833 = vmatprep.mubr.bf16.mxu0 0
      %2834 = vmatmul.mubr.bf16.gmra.mrb[0].mxu0 %v2580
      %v2835 = vpop.f32.mrb[0].mxu0
      %v2836 = vadd.f32 0.0, %v2835
      %v2837 = vpop.f32.mrb[0].mxu0
      %v2838 = vpop.f32.mrb[0].mxu0
      %v2839 = vadd.f32 0.0, %v2838
      %v2840 = vpop.f32.mrb[0].mxu0
      %2841 = vmatprep.mubr.bf16.mxu0 0
      %2842 = vmatmul.mubr.bf16.gmra.mrb[0].mxu0 %v2581
      %v2843 = vpop.f32.mrb[0].mxu0
      %v2844 = vadd.f32 0.0, %v2843
      %v2845 = vpop.f32.mrb[0].mxu0
      %v2846 = vpop.f32.mrb[0].mxu0
      %v2847 = vadd.f32 0.0, %v2846
      %v2848 = vpop.f32.mrb[0].mxu0
      %2849 = vmatprep.mubr.bf16.mxu0 0
      %2850 = vmatmul.mubr.bf16.gmra.mrb[0].mxu0 %v2582
      %v2851 = vpop.f32.mrb[0].mxu0
      %v2852 = vadd.f32 0.0, %v2851
      %v2853 = vpop.f32.mrb[0].mxu0
      %v2854 = vpop.f32.mrb[0].mxu0
      %v2855 = vadd.f32 0.0, %v2854
      %v2856 = vpop.f32.mrb[0].mxu0
      %2857 = vmatprep.mubr.bf16.mxu0 0
      %2858 = vmatmul.mubr.bf16.gmra.mrb[0].mxu0 %v2583
      %v2859 = vpop.f32.mrb[0].mxu0
      %v2860 = vadd.f32 0.0, %v2859
      %v2861 = vpop.f32.mrb[0].mxu0
      %v2862 = vpop.f32.mrb[0].mxu0
      %v2863 = vpop.f32.mrb[0].mxu0
      %2864 = vdwg.mxu0
      %v2865 = vadd.f32 %v2471, %v2684
      %v2866 = vadd.f32 %v2472, %v2687
      %v2867 = vadd.f32 %v2473, %v2692
      %v2868 = vadd.f32 %v2474, %v2695
      %v2869 = vadd.f32 %v2475, %v2700
      %v2870 = vadd.f32 %v2476, %v2703
      %v2871 = vadd.f32 %v2477, %v2708
      %v2872 = vadd.f32 %v2478, %v2711
      %v2873 = vadd.f32 %v2479, %v2716
      %v2874 = vadd.f32 %v2480, %v2719
      %v2875 = vadd.f32 %v2481, %v2724
      %v2876 = vadd.f32 %v2482, %v2727
      %v2877 = vadd.f32 %v2483, %v2732
      %v2878 = vadd.f32 %v2484, %v2735
      %v2879 = vadd.f32 %v2485, %v2740
      %v2880 = vadd.f32 %v2486, %v2743
      %v2881 = vadd.f32 %v2487, %v2748
      %v2882 = vadd.f32 %v2488, %v2751
      %v2883 = vadd.f32 %v2489, %v2756
      %v2884 = vadd.f32 %v2490, %v2759
      %v2885 = vadd.f32 %v2491, %v2764
      %v2886 = vadd.f32 %v2492, %v2767
      %v2887 = vadd.f32 %v2493, %v2772
      %v2888 = vadd.f32 %v2494, %v2775
      %v2889 = vadd.f32 %v2495, %v2780
      %v2890 = vadd.f32 %v2496, %v2783
      %v2891 = vadd.f32 %v2497, %v2788
      %v2892 = vadd.f32 %v2498, %v2791
      %v2893 = vadd.f32 %v2499, %v2796
      %v2894 = vadd.f32 %v2500, %v2799
      %v2895 = vadd.f32 %v2501, %v2804
      %v2896 = vadd.f32 %v2502, %v2807
      %v2897 = vadd.f32 %v2503, %v2812
      %v2898 = vadd.f32 %v2504, %v2815
      %v2899 = vadd.f32 %v2505, %v2820
      %v2900 = vadd.f32 %v2506, %v2823
      %v2901 = vadd.f32 %v2507, %v2828
      %v2902 = vadd.f32 %v2508, %v2831
      %v2903 = vadd.f32 %v2509, %v2836
      %v2904 = vadd.f32 %v2510, %v2839
      %v2905 = vadd.f32 %v2511, %v2844
      %v2906 = vadd.f32 %v2512, %v2847
      %v2907 = vadd.f32 %v2513, %v2852
      %v2908 = vadd.f32 %v2514, %v2855
      %v2909 = vadd.f32 %v2515, %v2860
      %v2910 = vld [vmem:[%s230 + $0x36] sm:$0xff]
      %v2911 = vld [vmem:[%s230 + $0x3e] sm:$0xff]
      %v2912 = vld [vmem:[%s230 + $0x46] sm:$0xff]
      %v2913 = vld [vmem:[%s230 + $0x4e] sm:$0xff]
      %v2914 = vld [vmem:[%s230 + $0x56] sm:$0xff]
      %v2915 = vld [vmem:[%s230 + $0x5e] sm:$0xff]
      %v2916 = vld [vmem:[%s230 + $0x66] sm:$0xff]
      %v2917 = vld [vmem:[%s230 + $0x6e] sm:$0xff]
      %v2918 = vld [vmem:[%s230 + $0x76] sm:$0xff]
      %v2919 = vld [vmem:[%s230 + $0x7e] sm:$0xff]
      %v2920 = vld [vmem:[%s230 + $0x86] sm:$0xff]
      %v2921 = vld [vmem:[%s230 + $0x8e] sm:$0xff]
      %v2922 = vld [vmem:[%s230 + $0x96] sm:$0xff]
      %v2923 = vld [vmem:[%s230 + $0x9e] sm:$0xff]
      %v2924 = vld [vmem:[%s230 + $0xa6] sm:$0xff]
      %v2925 = vld [vmem:[%s230 + $0xae] sm:$0xff]
      %v2926 = vld [vmem:[%s230 + $0xb6] sm:$0xff]
      %v2927 = vld [vmem:[%s230 + $0xbe] sm:$0xff]
      %v2928 = vld [vmem:[%s230 + $0xc6] sm:$0xff]
      %v2929 = vld [vmem:[%s230 + $0xce] sm:$0xff]
      %v2930 = vld [vmem:[%s230 + $0xd6] sm:$0xff]
      %v2931 = vld [vmem:[%s230 + $0xde] sm:$0xff]
      %v2932 = vld [vmem:[%s230 + $0xe6] sm:$0xff]
      %v2933 = vld [vmem:[%s230 + $0xee] sm:$0xff]
      %v2934 = vld [vmem:[%s230 + $0xf6] sm:$0xff]
      %v2935 = vld [vmem:[%s230 + $0xfe] sm:$0xff]
      %v2936 = vld [vmem:[%s230 + $0x106] sm:$0xff]
      %v2937 = vld [vmem:[%s230 + $0x10e] sm:$0xff]
      %v2938 = vld [vmem:[%s230 + $0x116] sm:$0xff]
      %v2939 = vld [vmem:[%s230 + $0x11e] sm:$0xff]
      %v2940 = vld [vmem:[%s230 + $0x126] sm:$0xff]
      %v2941 = vld [vmem:[%s230 + $0x12e] sm:$0xff]
      %v2942 = vld [vmem:[%s230 + $0x136] sm:$0xff]
      %v2943 = vld [vmem:[%s230 + $0x13e] sm:$0xff]
      %v2944 = vld [vmem:[%s230 + $0x146] sm:$0xff]
      %v2945 = vld [vmem:[%s230 + $0x14e] sm:$0xff]
      %v2946 = vld [vmem:[%s230 + $0x156] sm:$0xff]
      %v2947 = vld [vmem:[%s230 + $0x15e] sm:$0xff]
      %v2948 = vld [vmem:[%s230 + $0x166] sm:$0xff]
      %v2949 = vld [vmem:[%s230 + $0x16e] sm:$0xff]
      %v2950 = vld [vmem:[%s230 + $0x176] sm:$0xff]
      %v2951 = vld [vmem:[%s230 + $0x17e] sm:$0xff]
      %v2952 = vld [vmem:[%s230 + $0x186] sm:$0xff]
      %v2953 = vld [vmem:[%s230 + $0x18e] sm:$0xff]
      %v2954 = vld [vmem:[%s230 + $0x196] sm:$0xff]
      %v2955 = vpack.c.bf16 %v2911, %v2910
      %v2956 = vpack.c.bf16 %v2913, %v2912
      %v2957 = vpack.c.bf16 %v2915, %v2914
      %v2958 = vpack.c.bf16 %v2917, %v2916
      %v2959 = vpack.c.bf16 %v2919, %v2918
      %v2960 = vpack.c.bf16 %v2921, %v2920
      %v2961 = vpack.c.bf16 %v2923, %v2922
      %v2962 = vpack.c.bf16 %v2925, %v2924
      %v2963 = vpack.c.bf16 %v2927, %v2926
      %v2964 = vpack.c.bf16 %v2929, %v2928
      %v2965 = vpack.c.bf16 %v2931, %v2930
      %v2966 = vpack.c.bf16 %v2933, %v2932
      %v2967 = vpack.c.bf16 %v2935, %v2934
      %v2968 = vpack.c.bf16 %v2937, %v2936
      %v2969 = vpack.c.bf16 %v2939, %v2938
      %v2970 = vpack.c.bf16 %v2941, %v2940
      %v2971 = vpack.c.bf16 %v2943, %v2942
      %v2972 = vpack.c.bf16 %v2945, %v2944
      %v2973 = vpack.c.bf16 %v2947, %v2946
      %v2974 = vpack.c.bf16 %v2949, %v2948
      %v2975 = vpack.c.bf16 %v2951, %v2950
      %v2976 = vpack.c.bf16 %v2953, %v2952
      %v2977 = vpack.c.bf16 %v2954, %v2954
      %s2978 = scalar_lea.vmem %s1, 448
      %v2979 = vld [vmem:[%s2978] sm:$0xf]
      %v2980 = vld [vmem:[%s2978 + $0x4] sm:$0xf]
      %v2981 = vld [vmem:[%s2978 + $0x8] sm:$0xf]
      %v2982 = vld [vmem:[%s2978 + $0xc] sm:$0xf]
      %v2983 = vld [vmem:[%s2978 + $0x10] sm:$0xf]
      %v2984 = vld [vmem:[%s2978 + $0x14] sm:$0xf]
      %v2985 = vld [vmem:[%s2978 + $0x18] sm:$0xf]
      %v2986 = vld [vmem:[%s2978 + $0x1c] sm:$0xf]
      %v2987 = vld [vmem:[%s2978 + $0x20] sm:$0xf]
      %v2988 = vld [vmem:[%s2978 + $0x24] sm:$0xf]
      %v2989 = vld [vmem:[%s2978 + $0x28] sm:$0xf]
      %v2990 = vld [vmem:[%s2978 + $0x2c] sm:$0xf]
      %v2991 = vld [vmem:[%s2978 + $0x30] sm:$0xf]
      %v2992 = vld [vmem:[%s2978 + $0x34] sm:$0xf]
      %v2993 = vld [vmem:[%s2978 + $0x38] sm:$0xf]
      %v2994 = vld [vmem:[%s2978 + $0x3c] sm:$0xf]
      %v3011 = vunpack.c.l.b16 %v2979
      %v3012 = vunpack.c.l.b16 %v2980
      %v3013 = vunpack.c.l.b16 %v2981
      %v3014 = vunpack.c.l.b16 %v2982
      %v3015 = vunpack.c.l.b16 %v2983
      %v3016 = vunpack.c.l.b16 %v2984
      %v3017 = vunpack.c.l.b16 %v2985
      %v3018 = vunpack.c.l.b16 %v2986
      %v3019 = vunpack.c.l.b16 %v2987
      %v3020 = vunpack.c.l.b16 %v2988
      %v3021 = vunpack.c.l.b16 %v2989
      %v3022 = vunpack.c.l.b16 %v2990
      %v3023 = vunpack.c.l.b16 %v2991
      %v3024 = vunpack.c.l.b16 %v2992
      %v3025 = vunpack.c.l.b16 %v2993
      %v3026 = vunpack.c.l.b16 %v2994
      %v3027 = vpack.c.b16 %v3012, %v3011
      %v3028 = vpack.c.b16 %v3014, %v3013
      %v3029 = vpack.c.b16 %v3016, %v3015
      %v3030 = vpack.c.b16 %v3018, %v3017
      %v3031 = vpack.c.b16 %v3020, %v3019
      %v3032 = vpack.c.b16 %v3022, %v3021
      %v3033 = vpack.c.b16 %v3024, %v3023
      %v3034 = vpack.c.b16 %v3026, %v3025
      %3043 = vmatprep.subr.bf16.mxu0 0
      %3044 = vmatpush1.bf16.msra.mxu0 %v3027
      %3045 = vmatprep.subr.bf16.mxu0 0
      %3046 = vmatpush1.bf16.msra.mxu0 %v3028
      %3047 = vmatprep.subr.bf16.mxu0 0
      %3048 = vmatpush1.bf16.msra.mxu0 %v3029
      %3049 = vmatprep.subr.bf16.mxu0 0
      %3050 = vmatpush1.bf16.msra.mxu0 %v3030
      %3051 = vmatprep.subr.bf16.mxu0 0
      %3052 = vmatpush1.bf16.msra.mxu0 %v3031
      %3053 = vmatprep.subr.bf16.mxu0 0
      %3054 = vmatpush1.bf16.msra.mxu0 %v3032
      %3055 = vmatprep.subr.bf16.mxu0 0
      %3056 = vmatpush1.bf16.msra.mxu0 %v3033
      %3057 = vmatprep.subr.bf16.mxu0 0
      %3058 = vmatpush1.bf16.msra.mxu0 %v3034
      %3059 = vmatprep.subr.bf16.mxu0 0
      %3060 = vmatpush1.bf16.msra.mxu0 0
      %3061 = vmatprep.subr.bf16.mxu0 0
      %3062 = vmatpush1.bf16.msra.mxu0 0
      %3063 = vmatprep.subr.bf16.mxu0 0
      %3064 = vmatpush1.bf16.msra.mxu0 0
      %3065 = vmatprep.subr.bf16.mxu0 0
      %3066 = vmatpush1.bf16.msra.mxu0 0
      %3067 = vmatprep.subr.bf16.mxu0 0
      %3068 = vmatpush1.bf16.msra.mxu0 0
      %3069 = vmatprep.subr.bf16.mxu0 0
      %3070 = vmatpush1.bf16.msra.mxu0 0
      %3071 = vmatprep.subr.bf16.mxu0 0
      %3072 = vmatpush1.bf16.msra.mxu0 0
      %3073 = vmatprep.subr.bf16.mxu0 0
      %3074 = vmatpush1.bf16.msra.mxu0 0
      %3075 = vmatprep.mubr.bf16.mxu0 0
      %3076 = vmatmul.mubr.bf16.gmra.mrb[0].mxu0 %v2955
      %v3077 = vpop.f32.mrb[0].mxu0
      %v3078 = vadd.f32 0.0, %v3077
      %v3079 = vpop.f32.mrb[0].mxu0
      %v3080 = vpop.f32.mrb[0].mxu0
      %v3081 = vadd.f32 0.0, %v3080
      %v3082 = vpop.f32.mrb[0].mxu0
      %3083 = vmatprep.mubr.bf16.mxu0 0
      %3084 = vmatmul.mubr.bf16.gmra.mrb[0].mxu0 %v2956
      %v3085 = vpop.f32.mrb[0].mxu0
      %v3086 = vadd.f32 0.0, %v3085
      %v3087 = vpop.f32.mrb[0].mxu0
      %v3088 = vpop.f32.mrb[0].mxu0
      %v3089 = vadd.f32 0.0, %v3088
      %v3090 = vpop.f32.mrb[0].mxu0
      %3091 = vmatprep.mubr.bf16.mxu0 0
      %3092 = vmatmul.mubr.bf16.gmra.mrb[0].mxu0 %v2957
      %v3093 = vpop.f32.mrb[0].mxu0
      %v3094 = vadd.f32 0.0, %v3093
      %v3095 = vpop.f32.mrb[0].mxu0
      %v3096 = vpop.f32.mrb[0].mxu0
      %v3097 = vadd.f32 0.0, %v3096
      %v3098 = vpop.f32.mrb[0].mxu0
      %3099 = vmatprep.mubr.bf16.mxu0 0
      %3100 = vmatmul.mubr.bf16.gmra.mrb[0].mxu0 %v2958
      %v3101 = vpop.f32.mrb[0].mxu0
      %v3102 = vadd.f32 0.0, %v3101
      %v3103 = vpop.f32.mrb[0].mxu0
      %v3104 = vpop.f32.mrb[0].mxu0
      %v3105 = vadd.f32 0.0, %v3104
      %v3106 = vpop.f32.mrb[0].mxu0
      %3107 = vmatprep.mubr.bf16.mxu0 0
      %3108 = vmatmul.mubr.bf16.gmra.mrb[0].mxu0 %v2959
      %v3109 = vpop.f32.mrb[0].mxu0
      %v3110 = vadd.f32 0.0, %v3109
      %v3111 = vpop.f32.mrb[0].mxu0
      %v3112 = vpop.f32.mrb[0].mxu0
      %v3113 = vadd.f32 0.0, %v3112
      %v3114 = vpop.f32.mrb[0].mxu0
      %3115 = vmatprep.mubr.bf16.mxu0 0
      %3116 = vmatmul.mubr.bf16.gmra.mrb[0].mxu0 %v2960
      %v3117 = vpop.f32.mrb[0].mxu0
      %v3118 = vadd.f32 0.0, %v3117
      %v3119 = vpop.f32.mrb[0].mxu0
      %v3120 = vpop.f32.mrb[0].mxu0
      %v3121 = vadd.f32 0.0, %v3120
      %v3122 = vpop.f32.mrb[0].mxu0
      %3123 = vmatprep.mubr.bf16.mxu0 0
      %3124 = vmatmul.mubr.bf16.gmra.mrb[0].mxu0 %v2961
      %v3125 = vpop.f32.mrb[0].mxu0
      %v3126 = vadd.f32 0.0, %v3125
      %v3127 = vpop.f32.mrb[0].mxu0
      %v3128 = vpop.f32.mrb[0].mxu0
      %v3129 = vadd.f32 0.0, %v3128
      %v3130 = vpop.f32.mrb[0].mxu0
      %3131 = vmatprep.mubr.bf16.mxu0 0
      %3132 = vmatmul.mubr.bf16.gmra.mrb[0].mxu0 %v2962
      %v3133 = vpop.f32.mrb[0].mxu0
      %v3134 = vadd.f32 0.0, %v3133
      %v3135 = vpop.f32.mrb[0].mxu0
      %v3136 = vpop.f32.mrb[0].mxu0
      %v3137 = vadd.f32 0.0, %v3136
      %v3138 = vpop.f32.mrb[0].mxu0
      %3139 = vmatprep.mubr.bf16.mxu0 0
      %3140 = vmatmul.mubr.bf16.gmra.mrb[0].mxu0 %v2963
      %v3141 = vpop.f32.mrb[0].mxu0
      %v3142 = vadd.f32 0.0, %v3141
      %v3143 = vpop.f32.mrb[0].mxu0
      %v3144 = vpop.f32.mrb[0].mxu0
      %v3145 = vadd.f32 0.0, %v3144
      %v3146 = vpop.f32.mrb[0].mxu0
      %3147 = vmatprep.mubr.bf16.mxu0 0
      %3148 = vmatmul.mubr.bf16.gmra.mrb[0].mxu0 %v2964
      %v3149 = vpop.f32.mrb[0].mxu0
      %v3150 = vadd.f32 0.0, %v3149
      %v3151 = vpop.f32.mrb[0].mxu0
      %v3152 = vpop.f32.mrb[0].mxu0
      %v3153 = vadd.f32 0.0, %v3152
      %v3154 = vpop.f32.mrb[0].mxu0
      %3155 = vmatprep.mubr.bf16.mxu0 0
      %3156 = vmatmul.mubr.bf16.gmra.mrb[0].mxu0 %v2965
      %v3157 = vpop.f32.mrb[0].mxu0
      %v3158 = vadd.f32 0.0, %v3157
      %v3159 = vpop.f32.mrb[0].mxu0
      %v3160 = vpop.f32.mrb[0].mxu0
      %v3161 = vadd.f32 0.0, %v3160
      %v3162 = vpop.f32.mrb[0].mxu0
      %3163 = vmatprep.mubr.bf16.mxu0 0
      %3164 = vmatmul.mubr.bf16.gmra.mrb[0].mxu0 %v2966
      %v3165 = vpop.f32.mrb[0].mxu0
      %v3166 = vadd.f32 0.0, %v3165
      %v3167 = vpop.f32.mrb[0].mxu0
      %v3168 = vpop.f32.mrb[0].mxu0
      %v3169 = vadd.f32 0.0, %v3168
      %v3170 = vpop.f32.mrb[0].mxu0
      %3171 = vmatprep.mubr.bf16.mxu0 0
      %3172 = vmatmul.mubr.bf16.gmra.mrb[0].mxu0 %v2967
      %v3173 = vpop.f32.mrb[0].mxu0
      %v3174 = vadd.f32 0.0, %v3173
      %v3175 = vpop.f32.mrb[0].mxu0
      %v3176 = vpop.f32.mrb[0].mxu0
      %v3177 = vadd.f32 0.0, %v3176
      %v3178 = vpop.f32.mrb[0].mxu0
      %3179 = vmatprep.mubr.bf16.mxu0 0
      %3180 = vmatmul.mubr.bf16.gmra.mrb[0].mxu0 %v2968
      %v3181 = vpop.f32.mrb[0].mxu0
      %v3182 = vadd.f32 0.0, %v3181
      %v3183 = vpop.f32.mrb[0].mxu0
      %v3184 = vpop.f32.mrb[0].mxu0
      %v3185 = vadd.f32 0.0, %v3184
      %v3186 = vpop.f32.mrb[0].mxu0
      %3187 = vmatprep.mubr.bf16.mxu0 0
      %3188 = vmatmul.mubr.bf16.gmra.mrb[0].mxu0 %v2969
      %v3189 = vpop.f32.mrb[0].mxu0
      %v3190 = vadd.f32 0.0, %v3189
      %v3191 = vpop.f32.mrb[0].mxu0
      %v3192 = vpop.f32.mrb[0].mxu0
      %v3193 = vadd.f32 0.0, %v3192
      %v3194 = vpop.f32.mrb[0].mxu0
      %3195 = vmatprep.mubr.bf16.mxu0 0
      %3196 = vmatmul.mubr.bf16.gmra.mrb[0].mxu0 %v2970
      %v3197 = vpop.f32.mrb[0].mxu0
      %v3198 = vadd.f32 0.0, %v3197
      %v3199 = vpop.f32.mrb[0].mxu0
      %v3200 = vpop.f32.mrb[0].mxu0
      %v3201 = vadd.f32 0.0, %v3200
      %v3202 = vpop.f32.mrb[0].mxu0
      %3203 = vmatprep.mubr.bf16.mxu0 0
      %3204 = vmatmul.mubr.bf16.gmra.mrb[0].mxu0 %v2971
      %v3205 = vpop.f32.mrb[0].mxu0
      %v3206 = vadd.f32 0.0, %v3205
      %v3207 = vpop.f32.mrb[0].mxu0
      %v3208 = vpop.f32.mrb[0].mxu0
      %v3209 = vadd.f32 0.0, %v3208
      %v3210 = vpop.f32.mrb[0].mxu0
      %3211 = vmatprep.mubr.bf16.mxu0 0
      %3212 = vmatmul.mubr.bf16.gmra.mrb[0].mxu0 %v2972
      %v3213 = vpop.f32.mrb[0].mxu0
      %v3214 = vadd.f32 0.0, %v3213
      %v3215 = vpop.f32.mrb[0].mxu0
      %v3216 = vpop.f32.mrb[0].mxu0
      %v3217 = vadd.f32 0.0, %v3216
      %v3218 = vpop.f32.mrb[0].mxu0
      %3219 = vmatprep.mubr.bf16.mxu0 0
      %3220 = vmatmul.mubr.bf16.gmra.mrb[0].mxu0 %v2973
      %v3221 = vpop.f32.mrb[0].mxu0
      %v3222 = vadd.f32 0.0, %v3221
      %v3223 = vpop.f32.mrb[0].mxu0
      %v3224 = vpop.f32.mrb[0].mxu0
      %v3225 = vadd.f32 0.0, %v3224
      %v3226 = vpop.f32.mrb[0].mxu0
      %3227 = vmatprep.mubr.bf16.mxu0 0
      %3228 = vmatmul.mubr.bf16.gmra.mrb[0].mxu0 %v2974
      %v3229 = vpop.f32.mrb[0].mxu0
      %v3230 = vadd.f32 0.0, %v3229
      %v3231 = vpop.f32.mrb[0].mxu0
      %v3232 = vpop.f32.mrb[0].mxu0
      %v3233 = vadd.f32 0.0, %v3232
      %v3234 = vpop.f32.mrb[0].mxu0
      %3235 = vmatprep.mubr.bf16.mxu0 0
      %3236 = vmatmul.mubr.bf16.gmra.mrb[0].mxu0 %v2975
      %v3237 = vpop.f32.mrb[0].mxu0
      %v3238 = vadd.f32 0.0, %v3237
      %v3239 = vpop.f32.mrb[0].mxu0
      %v3240 = vpop.f32.mrb[0].mxu0
      %v3241 = vadd.f32 0.0, %v3240
      %v3242 = vpop.f32.mrb[0].mxu0
      %3243 = vmatprep.mubr.bf16.mxu0 0
      %3244 = vmatmul.mubr.bf16.gmra.mrb[0].mxu0 %v2976
      %v3245 = vpop.f32.mrb[0].mxu0
      %v3246 = vadd.f32 0.0, %v3245
      %v3247 = vpop.f32.mrb[0].mxu0
      %v3248 = vpop.f32.mrb[0].mxu0
      %v3249 = vadd.f32 0.0, %v3248
      %v3250 = vpop.f32.mrb[0].mxu0
      %3251 = vmatprep.mubr.bf16.mxu0 0
      %3252 = vmatmul.mubr.bf16.gmra.mrb[0].mxu0 %v2977
      %v3253 = vpop.f32.mrb[0].mxu0
      %v3254 = vadd.f32 0.0, %v3253
      %v3255 = vpop.f32.mrb[0].mxu0
      %v3256 = vpop.f32.mrb[0].mxu0
      %v3257 = vpop.f32.mrb[0].mxu0
      %3258 = vdwg.mxu0
      %v3259 = vadd.f32 %v2865, %v3078
      %v3260 = vadd.f32 %v2866, %v3081
      %v3261 = vadd.f32 %v2867, %v3086
      %v3262 = vadd.f32 %v2868, %v3089
      %v3263 = vadd.f32 %v2869, %v3094
      %v3264 = vadd.f32 %v2870, %v3097
      %v3265 = vadd.f32 %v2871, %v3102
      %v3266 = vadd.f32 %v2872, %v3105
      %v3267 = vadd.f32 %v2873, %v3110
      %v3268 = vadd.f32 %v2874, %v3113
      %v3269 = vadd.f32 %v2875, %v3118
      %v3270 = vadd.f32 %v2876, %v3121
      %v3271 = vadd.f32 %v2877, %v3126
      %v3272 = vadd.f32 %v2878, %v3129
      %v3273 = vadd.f32 %v2879, %v3134
      %v3274 = vadd.f32 %v2880, %v3137
      %v3275 = vadd.f32 %v2881, %v3142
      %v3276 = vadd.f32 %v2882, %v3145
      %v3277 = vadd.f32 %v2883, %v3150
      %v3278 = vadd.f32 %v2884, %v3153
      %v3279 = vadd.f32 %v2885, %v3158
      %v3280 = vadd.f32 %v2886, %v3161
      %v3281 = vadd.f32 %v2887, %v3166
      %v3282 = vadd.f32 %v2888, %v3169
      %v3283 = vadd.f32 %v2889, %v3174
      %v3284 = vadd.f32 %v2890, %v3177
      %v3285 = vadd.f32 %v2891, %v3182
      %v3286 = vadd.f32 %v2892, %v3185
      %v3287 = vadd.f32 %v2893, %v3190
      %v3288 = vadd.f32 %v2894, %v3193
      %v3289 = vadd.f32 %v2895, %v3198
      %v3290 = vadd.f32 %v2896, %v3201
      %v3291 = vadd.f32 %v2897, %v3206
      %v3292 = vadd.f32 %v2898, %v3209
      %v3293 = vadd.f32 %v2899, %v3214
      %v3294 = vadd.f32 %v2900, %v3217
      %v3295 = vadd.f32 %v2901, %v3222
      %v3296 = vadd.f32 %v2902, %v3225
      %v3297 = vadd.f32 %v2903, %v3230
      %v3298 = vadd.f32 %v2904, %v3233
      %v3299 = vadd.f32 %v2905, %v3238
      %v3300 = vadd.f32 %v2906, %v3241
      %v3301 = vadd.f32 %v2907, %v3246
      %v3302 = vadd.f32 %v2908, %v3249
      %v3303 = vadd.f32 %v2909, %v3254
      %v3304 = vld [vmem:[%s230 + $0x37] sm:$0xff]
      %v3305 = vld [vmem:[%s230 + $0x3f] sm:$0xff]
      %v3306 = vld [vmem:[%s230 + $0x47] sm:$0xff]
      %v3307 = vld [vmem:[%s230 + $0x4f] sm:$0xff]
      %v3308 = vld [vmem:[%s230 + $0x57] sm:$0xff]
      %v3309 = vld [vmem:[%s230 + $0x5f] sm:$0xff]
      %v3310 = vld [vmem:[%s230 + $0x67] sm:$0xff]
      %v3311 = vld [vmem:[%s230 + $0x6f] sm:$0xff]
      %v3312 = vld [vmem:[%s230 + $0x77] sm:$0xff]
      %v3313 = vld [vmem:[%s230 + $0x7f] sm:$0xff]
      %v3314 = vld [vmem:[%s230 + $0x87] sm:$0xff]
      %v3315 = vld [vmem:[%s230 + $0x8f] sm:$0xff]
      %v3316 = vld [vmem:[%s230 + $0x97] sm:$0xff]
      %v3317 = vld [vmem:[%s230 + $0x9f] sm:$0xff]
      %v3318 = vld [vmem:[%s230 + $0xa7] sm:$0xff]
      %v3319 = vld [vmem:[%s230 + $0xaf] sm:$0xff]
      %v3320 = vld [vmem:[%s230 + $0xb7] sm:$0xff]
      %v3321 = vld [vmem:[%s230 + $0xbf] sm:$0xff]
      %v3322 = vld [vmem:[%s230 + $0xc7] sm:$0xff]
      %v3323 = vld [vmem:[%s230 + $0xcf] sm:$0xff]
      %v3324 = vld [vmem:[%s230 + $0xd7] sm:$0xff]
      %v3325 = vld [vmem:[%s230 + $0xdf] sm:$0xff]
      %v3326 = vld [vmem:[%s230 + $0xe7] sm:$0xff]
      %v3327 = vld [vmem:[%s230 + $0xef] sm:$0xff]
      %v3328 = vld [vmem:[%s230 + $0xf7] sm:$0xff]
      %v3329 = vld [vmem:[%s230 + $0xff] sm:$0xff]
      %v3330 = vld [vmem:[%s230 + $0x107] sm:$0xff]
      %v3331 = vld [vmem:[%s230 + $0x10f] sm:$0xff]
      %v3332 = vld [vmem:[%s230 + $0x117] sm:$0xff]
      %v3333 = vld [vmem:[%s230 + $0x11f] sm:$0xff]
      %v3334 = vld [vmem:[%s230 + $0x127] sm:$0xff]
      %v3335 = vld [vmem:[%s230 + $0x12f] sm:$0xff]
      %v3336 = vld [vmem:[%s230 + $0x137] sm:$0xff]
      %v3337 = vld [vmem:[%s230 + $0x13f] sm:$0xff]
      %v3338 = vld [vmem:[%s230 + $0x147] sm:$0xff]
      %v3339 = vld [vmem:[%s230 + $0x14f] sm:$0xff]
      %v3340 = vld [vmem:[%s230 + $0x157] sm:$0xff]
      %v3341 = vld [vmem:[%s230 + $0x15f] sm:$0xff]
      %v3342 = vld [vmem:[%s230 + $0x167] sm:$0xff]
      %v3343 = vld [vmem:[%s230 + $0x16f] sm:$0xff]
      %v3344 = vld [vmem:[%s230 + $0x177] sm:$0xff]
      %v3345 = vld [vmem:[%s230 + $0x17f] sm:$0xff]
      %v3346 = vld [vmem:[%s230 + $0x187] sm:$0xff]
      %v3347 = vld [vmem:[%s230 + $0x18f] sm:$0xff]
      %v3348 = vld [vmem:[%s230 + $0x197] sm:$0xff]
      %v3349 = vpack.c.bf16 %v3305, %v3304
      %v3350 = vpack.c.bf16 %v3307, %v3306
      %v3351 = vpack.c.bf16 %v3309, %v3308
      %v3352 = vpack.c.bf16 %v3311, %v3310
      %v3353 = vpack.c.bf16 %v3313, %v3312
      %v3354 = vpack.c.bf16 %v3315, %v3314
      %v3355 = vpack.c.bf16 %v3317, %v3316
      %v3356 = vpack.c.bf16 %v3319, %v3318
      %v3357 = vpack.c.bf16 %v3321, %v3320
      %v3358 = vpack.c.bf16 %v3323, %v3322
      %v3359 = vpack.c.bf16 %v3325, %v3324
      %v3360 = vpack.c.bf16 %v3327, %v3326
      %v3361 = vpack.c.bf16 %v3329, %v3328
      %v3362 = vpack.c.bf16 %v3331, %v3330
      %v3363 = vpack.c.bf16 %v3333, %v3332
      %v3364 = vpack.c.bf16 %v3335, %v3334
      %v3365 = vpack.c.bf16 %v3337, %v3336
      %v3366 = vpack.c.bf16 %v3339, %v3338
      %v3367 = vpack.c.bf16 %v3341, %v3340
      %v3368 = vpack.c.bf16 %v3343, %v3342
      %v3369 = vpack.c.bf16 %v3345, %v3344
      %v3370 = vpack.c.bf16 %v3347, %v3346
      %v3371 = vpack.c.bf16 %v3348, %v3348
      %s3372 = scalar_lea.vmem %s1, 512
      %v3373 = vld [vmem:[%s3372] sm:$0xf]
      %v3374 = vld [vmem:[%s3372 + $0x4] sm:$0xf]
      %v3375 = vld [vmem:[%s3372 + $0x8] sm:$0xf]
      %v3376 = vld [vmem:[%s3372 + $0xc] sm:$0xf]
      %v3377 = vld [vmem:[%s3372 + $0x10] sm:$0xf]
      %v3378 = vld [vmem:[%s3372 + $0x14] sm:$0xf]
      %v3379 = vld [vmem:[%s3372 + $0x18] sm:$0xf]
      %v3380 = vld [vmem:[%s3372 + $0x1c] sm:$0xf]
      %v3381 = vld [vmem:[%s3372 + $0x20] sm:$0xf]
      %v3382 = vld [vmem:[%s3372 + $0x24] sm:$0xf]
      %v3383 = vld [vmem:[%s3372 + $0x28] sm:$0xf]
      %v3384 = vld [vmem:[%s3372 + $0x2c] sm:$0xf]
      %v3385 = vld [vmem:[%s3372 + $0x30] sm:$0xf]
      %v3386 = vld [vmem:[%s3372 + $0x34] sm:$0xf]
      %v3387 = vld [vmem:[%s3372 + $0x38] sm:$0xf]
      %v3388 = vld [vmem:[%s3372 + $0x3c] sm:$0xf]
      %v3405 = vunpack.c.l.b16 %v3373
      %v3406 = vunpack.c.l.b16 %v3374
      %v3407 = vunpack.c.l.b16 %v3375
      %v3408 = vunpack.c.l.b16 %v3376
      %v3409 = vunpack.c.l.b16 %v3377
      %v3410 = vunpack.c.l.b16 %v3378
      %v3411 = vunpack.c.l.b16 %v3379
      %v3412 = vunpack.c.l.b16 %v3380
      %v3413 = vunpack.c.l.b16 %v3381
      %v3414 = vunpack.c.l.b16 %v3382
      %v3415 = vunpack.c.l.b16 %v3383
      %v3416 = vunpack.c.l.b16 %v3384
      %v3417 = vunpack.c.l.b16 %v3385
      %v3418 = vunpack.c.l.b16 %v3386
      %v3419 = vunpack.c.l.b16 %v3387
      %v3420 = vunpack.c.l.b16 %v3388
      %v3421 = vpack.c.b16 %v3406, %v3405
      %v3422 = vpack.c.b16 %v3408, %v3407
      %v3423 = vpack.c.b16 %v3410, %v3409
      %v3424 = vpack.c.b16 %v3412, %v3411
      %v3425 = vpack.c.b16 %v3414, %v3413
      %v3426 = vpack.c.b16 %v3416, %v3415
      %v3427 = vpack.c.b16 %v3418, %v3417
      %v3428 = vpack.c.b16 %v3420, %v3419
      %3437 = vmatprep.subr.bf16.mxu0 0
      %3438 = vmatpush1.bf16.msra.mxu0 %v3421
      %3439 = vmatprep.subr.bf16.mxu0 0
      %3440 = vmatpush1.bf16.msra.mxu0 %v3422
      %3441 = vmatprep.subr.bf16.mxu0 0
      %3442 = vmatpush1.bf16.msra.mxu0 %v3423
      %3443 = vmatprep.subr.bf16.mxu0 0
      %3444 = vmatpush1.bf16.msra.mxu0 %v3424
      %3445 = vmatprep.subr.bf16.mxu0 0
      %3446 = vmatpush1.bf16.msra.mxu0 %v3425
      %3447 = vmatprep.subr.bf16.mxu0 0
      %3448 = vmatpush1.bf16.msra.mxu0 %v3426
      %3449 = vmatprep.subr.bf16.mxu0 0
      %3450 = vmatpush1.bf16.msra.mxu0 %v3427
      %3451 = vmatprep.subr.bf16.mxu0 0
      %3452 = vmatpush1.bf16.msra.mxu0 %v3428
      %3453 = vmatprep.subr.bf16.mxu0 0
      %3454 = vmatpush1.bf16.msra.mxu0 0
      %3455 = vmatprep.subr.bf16.mxu0 0
      %3456 = vmatpush1.bf16.msra.mxu0 0
      %3457 = vmatprep.subr.bf16.mxu0 0
      %3458 = vmatpush1.bf16.msra.mxu0 0
      %3459 = vmatprep.subr.bf16.mxu0 0
      %3460 = vmatpush1.bf16.msra.mxu0 0
      %3461 = vmatprep.subr.bf16.mxu0 0
      %3462 = vmatpush1.bf16.msra.mxu0 0
      %3463 = vmatprep.subr.bf16.mxu0 0
      %3464 = vmatpush1.bf16.msra.mxu0 0
      %3465 = vmatprep.subr.bf16.mxu0 0
      %3466 = vmatpush1.bf16.msra.mxu0 0
      %3467 = vmatprep.subr.bf16.mxu0 0
      %3468 = vmatpush1.bf16.msra.mxu0 0
      %3469 = vmatprep.mubr.bf16.mxu0 0
      %3470 = vmatmul.mubr.bf16.gmra.mrb[0].mxu0 %v3349
      %v3471 = vpop.f32.mrb[0].mxu0
      %v3472 = vadd.f32 0.0, %v3471
      %v3473 = vpop.f32.mrb[0].mxu0
      %v3474 = vpop.f32.mrb[0].mxu0
      %v3475 = vadd.f32 0.0, %v3474
      %v3476 = vpop.f32.mrb[0].mxu0
      %3477 = vmatprep.mubr.bf16.mxu0 0
      %3478 = vmatmul.mubr.bf16.gmra.mrb[0].mxu0 %v3350
      %v3479 = vpop.f32.mrb[0].mxu0
      %v3480 = vadd.f32 0.0, %v3479
      %v3481 = vpop.f32.mrb[0].mxu0
      %v3482 = vpop.f32.mrb[0].mxu0
      %v3483 = vadd.f32 0.0, %v3482
      %v3484 = vpop.f32.mrb[0].mxu0
      %3485 = vmatprep.mubr.bf16.mxu0 0
      %3486 = vmatmul.mubr.bf16.gmra.mrb[0].mxu0 %v3351
      %v3487 = vpop.f32.mrb[0].mxu0
      %v3488 = vadd.f32 0.0, %v3487
      %v3489 = vpop.f32.mrb[0].mxu0
      %v3490 = vpop.f32.mrb[0].mxu0
      %v3491 = vadd.f32 0.0, %v3490
      %v3492 = vpop.f32.mrb[0].mxu0
      %3493 = vmatprep.mubr.bf16.mxu0 0
      %3494 = vmatmul.mubr.bf16.gmra.mrb[0].mxu0 %v3352
      %v3495 = vpop.f32.mrb[0].mxu0
      %v3496 = vadd.f32 0.0, %v3495
      %v3497 = vpop.f32.mrb[0].mxu0
      %v3498 = vpop.f32.mrb[0].mxu0
      %v3499 = vadd.f32 0.0, %v3498
      %v3500 = vpop.f32.mrb[0].mxu0
      %3501 = vmatprep.mubr.bf16.mxu0 0
      %3502 = vmatmul.mubr.bf16.gmra.mrb[0].mxu0 %v3353
      %v3503 = vpop.f32.mrb[0].mxu0
      %v3504 = vadd.f32 0.0, %v3503
      %v3505 = vpop.f32.mrb[0].mxu0
      %v3506 = vpop.f32.mrb[0].mxu0
      %v3507 = vadd.f32 0.0, %v3506
      %v3508 = vpop.f32.mrb[0].mxu0
      %3509 = vmatprep.mubr.bf16.mxu0 0
      %3510 = vmatmul.mubr.bf16.gmra.mrb[0].mxu0 %v3354
      %v3511 = vpop.f32.mrb[0].mxu0
      %v3512 = vadd.f32 0.0, %v3511
      %v3513 = vpop.f32.mrb[0].mxu0
      %v3514 = vpop.f32.mrb[0].mxu0
      %v3515 = vadd.f32 0.0, %v3514
      %v3516 = vpop.f32.mrb[0].mxu0
      %3517 = vmatprep.mubr.bf16.mxu0 0
      %3518 = vmatmul.mubr.bf16.gmra.mrb[0].mxu0 %v3355
      %v3519 = vpop.f32.mrb[0].mxu0
      %v3520 = vadd.f32 0.0, %v3519
      %v3521 = vpop.f32.mrb[0].mxu0
      %v3522 = vpop.f32.mrb[0].mxu0
      %v3523 = vadd.f32 0.0, %v3522
      %v3524 = vpop.f32.mrb[0].mxu0
      %3525 = vmatprep.mubr.bf16.mxu0 0
      %3526 = vmatmul.mubr.bf16.gmra.mrb[0].mxu0 %v3356
      %v3527 = vpop.f32.mrb[0].mxu0
      %v3528 = vadd.f32 0.0, %v3527
      %v3529 = vpop.f32.mrb[0].mxu0
      %v3530 = vpop.f32.mrb[0].mxu0
      %v3531 = vadd.f32 0.0, %v3530
      %v3532 = vpop.f32.mrb[0].mxu0
      %3533 = vmatprep.mubr.bf16.mxu0 0
      %3534 = vmatmul.mubr.bf16.gmra.mrb[0].mxu0 %v3357
      %v3535 = vpop.f32.mrb[0].mxu0
      %v3536 = vadd.f32 0.0, %v3535
      %v3537 = vpop.f32.mrb[0].mxu0
      %v3538 = vpop.f32.mrb[0].mxu0
      %v3539 = vadd.f32 0.0, %v3538
      %v3540 = vpop.f32.mrb[0].mxu0
      %3541 = vmatprep.mubr.bf16.mxu0 0
      %3542 = vmatmul.mubr.bf16.gmra.mrb[0].mxu0 %v3358
      %v3543 = vpop.f32.mrb[0].mxu0
      %v3544 = vadd.f32 0.0, %v3543
      %v3545 = vpop.f32.mrb[0].mxu0
      %v3546 = vpop.f32.mrb[0].mxu0
      %v3547 = vadd.f32 0.0, %v3546
      %v3548 = vpop.f32.mrb[0].mxu0
      %3549 = vmatprep.mubr.bf16.mxu0 0
      %3550 = vmatmul.mubr.bf16.gmra.mrb[0].mxu0 %v3359
      %v3551 = vpop.f32.mrb[0].mxu0
      %v3552 = vadd.f32 0.0, %v3551
      %v3553 = vpop.f32.mrb[0].mxu0
      %v3554 = vpop.f32.mrb[0].mxu0
      %v3555 = vadd.f32 0.0, %v3554
      %v3556 = vpop.f32.mrb[0].mxu0
      %3557 = vmatprep.mubr.bf16.mxu0 0
      %3558 = vmatmul.mubr.bf16.gmra.mrb[0].mxu0 %v3360
      %v3559 = vpop.f32.mrb[0].mxu0
      %v3560 = vadd.f32 0.0, %v3559
      %v3561 = vpop.f32.mrb[0].mxu0
      %v3562 = vpop.f32.mrb[0].mxu0
      %v3563 = vadd.f32 0.0, %v3562
      %v3564 = vpop.f32.mrb[0].mxu0
      %3565 = vmatprep.mubr.bf16.mxu0 0
      %3566 = vmatmul.mubr.bf16.gmra.mrb[0].mxu0 %v3361
      %v3567 = vpop.f32.mrb[0].mxu0
      %v3568 = vadd.f32 0.0, %v3567
      %v3569 = vpop.f32.mrb[0].mxu0
      %v3570 = vpop.f32.mrb[0].mxu0
      %v3571 = vadd.f32 0.0, %v3570
      %v3572 = vpop.f32.mrb[0].mxu0
      %3573 = vmatprep.mubr.bf16.mxu0 0
      %3574 = vmatmul.mubr.bf16.gmra.mrb[0].mxu0 %v3362
      %v3575 = vpop.f32.mrb[0].mxu0
      %v3576 = vadd.f32 0.0, %v3575
      %v3577 = vpop.f32.mrb[0].mxu0
      %v3578 = vpop.f32.mrb[0].mxu0
      %v3579 = vadd.f32 0.0, %v3578
      %v3580 = vpop.f32.mrb[0].mxu0
      %3581 = vmatprep.mubr.bf16.mxu0 0
      %3582 = vmatmul.mubr.bf16.gmra.mrb[0].mxu0 %v3363
      %v3583 = vpop.f32.mrb[0].mxu0
      %v3584 = vadd.f32 0.0, %v3583
      %v3585 = vpop.f32.mrb[0].mxu0
      %v3586 = vpop.f32.mrb[0].mxu0
      %v3587 = vadd.f32 0.0, %v3586
      %v3588 = vpop.f32.mrb[0].mxu0
      %3589 = vmatprep.mubr.bf16.mxu0 0
      %3590 = vmatmul.mubr.bf16.gmra.mrb[0].mxu0 %v3364
      %v3591 = vpop.f32.mrb[0].mxu0
      %v3592 = vadd.f32 0.0, %v3591
      %v3593 = vpop.f32.mrb[0].mxu0
      %v3594 = vpop.f32.mrb[0].mxu0
      %v3595 = vadd.f32 0.0, %v3594
      %v3596 = vpop.f32.mrb[0].mxu0
      %3597 = vmatprep.mubr.bf16.mxu0 0
      %3598 = vmatmul.mubr.bf16.gmra.mrb[0].mxu0 %v3365
      %v3599 = vpop.f32.mrb[0].mxu0
      %v3600 = vadd.f32 0.0, %v3599
      %v3601 = vpop.f32.mrb[0].mxu0
      %v3602 = vpop.f32.mrb[0].mxu0
      %v3603 = vadd.f32 0.0, %v3602
      %v3604 = vpop.f32.mrb[0].mxu0
      %3605 = vmatprep.mubr.bf16.mxu0 0
      %3606 = vmatmul.mubr.bf16.gmra.mrb[0].mxu0 %v3366
      %v3607 = vpop.f32.mrb[0].mxu0
      %v3608 = vadd.f32 0.0, %v3607
      %v3609 = vpop.f32.mrb[0].mxu0
      %v3610 = vpop.f32.mrb[0].mxu0
      %v3611 = vadd.f32 0.0, %v3610
      %v3612 = vpop.f32.mrb[0].mxu0
      %3613 = vmatprep.mubr.bf16.mxu0 0
      %3614 = vmatmul.mubr.bf16.gmra.mrb[0].mxu0 %v3367
      %v3615 = vpop.f32.mrb[0].mxu0
      %v3616 = vadd.f32 0.0, %v3615
      %v3617 = vpop.f32.mrb[0].mxu0
      %v3618 = vpop.f32.mrb[0].mxu0
      %v3619 = vadd.f32 0.0, %v3618
      %v3620 = vpop.f32.mrb[0].mxu0
      %3621 = vmatprep.mubr.bf16.mxu0 0
      %3622 = vmatmul.mubr.bf16.gmra.mrb[0].mxu0 %v3368
      %v3623 = vpop.f32.mrb[0].mxu0
      %v3624 = vadd.f32 0.0, %v3623
      %v3625 = vpop.f32.mrb[0].mxu0
      %v3626 = vpop.f32.mrb[0].mxu0
      %v3627 = vadd.f32 0.0, %v3626
      %v3628 = vpop.f32.mrb[0].mxu0
      %3629 = vmatprep.mubr.bf16.mxu0 0
      %3630 = vmatmul.mubr.bf16.gmra.mrb[0].mxu0 %v3369
      %v3631 = vpop.f32.mrb[0].mxu0
      %v3632 = vadd.f32 0.0, %v3631
      %v3633 = vpop.f32.mrb[0].mxu0
      %v3634 = vpop.f32.mrb[0].mxu0
      %v3635 = vadd.f32 0.0, %v3634
      %v3636 = vpop.f32.mrb[0].mxu0
      %3637 = vmatprep.mubr.bf16.mxu0 0
      %3638 = vmatmul.mubr.bf16.gmra.mrb[0].mxu0 %v3370
      %v3639 = vpop.f32.mrb[0].mxu0
      %v3640 = vadd.f32 0.0, %v3639
      %v3641 = vpop.f32.mrb[0].mxu0
      %v3642 = vpop.f32.mrb[0].mxu0
      %v3643 = vadd.f32 0.0, %v3642
      %v3644 = vpop.f32.mrb[0].mxu0
      %3645 = vmatprep.mubr.bf16.mxu0 0
      %3646 = vmatmul.mubr.bf16.gmra.mrb[0].mxu0 %v3371
      %v3647 = vpop.f32.mrb[0].mxu0
      %v3648 = vadd.f32 0.0, %v3647
      %v3649 = vpop.f32.mrb[0].mxu0
      %v3650 = vpop.f32.mrb[0].mxu0
      %v3651 = vpop.f32.mrb[0].mxu0
      %3652 = vdwg.mxu0
      %v3653 = vadd.f32 %v3259, %v3472
      %v3654 = vadd.f32 %v3260, %v3475
      %v3655 = vadd.f32 %v3261, %v3480
      %v3656 = vadd.f32 %v3262, %v3483
      %v3657 = vadd.f32 %v3263, %v3488
      %v3658 = vadd.f32 %v3264, %v3491
      %v3659 = vadd.f32 %v3265, %v3496
      %v3660 = vadd.f32 %v3266, %v3499
      %v3661 = vadd.f32 %v3267, %v3504
      %v3662 = vadd.f32 %v3268, %v3507
      %v3663 = vadd.f32 %v3269, %v3512
      %v3664 = vadd.f32 %v3270, %v3515
      %v3665 = vadd.f32 %v3271, %v3520
      %v3666 = vadd.f32 %v3272, %v3523
      %v3667 = vadd.f32 %v3273, %v3528
      %v3668 = vadd.f32 %v3274, %v3531
      %v3669 = vadd.f32 %v3275, %v3536
      %v3670 = vadd.f32 %v3276, %v3539
      %v3671 = vadd.f32 %v3277, %v3544
      %v3672 = vadd.f32 %v3278, %v3547
      %v3673 = vadd.f32 %v3279, %v3552
      %v3674 = vadd.f32 %v3280, %v3555
      %v3675 = vadd.f32 %v3281, %v3560
      %v3676 = vadd.f32 %v3282, %v3563
      %v3677 = vadd.f32 %v3283, %v3568
      %v3678 = vadd.f32 %v3284, %v3571
      %v3679 = vadd.f32 %v3285, %v3576
      %v3680 = vadd.f32 %v3286, %v3579
      %v3681 = vadd.f32 %v3287, %v3584
      %v3682 = vadd.f32 %v3288, %v3587
      %v3683 = vadd.f32 %v3289, %v3592
      %v3684 = vadd.f32 %v3290, %v3595
      %v3685 = vadd.f32 %v3291, %v3600
      %v3686 = vadd.f32 %v3292, %v3603
      %v3687 = vadd.f32 %v3293, %v3608
      %v3688 = vadd.f32 %v3294, %v3611
      %v3689 = vadd.f32 %v3295, %v3616
      %v3690 = vadd.f32 %v3296, %v3619
      %v3691 = vadd.f32 %v3297, %v3624
      %v3692 = vadd.f32 %v3298, %v3627
      %v3693 = vadd.f32 %v3299, %v3632
      %v3694 = vadd.f32 %v3300, %v3635
      %v3695 = vadd.f32 %v3301, %v3640
      %v3696 = vadd.f32 %v3302, %v3643
      %v3697 = vadd.f32 %v3303, %v3648
      %v3698 = vld [vmem:[%s2] sm:$0xff]
      %v3699 = vld [vmem:[%s2 + $0x8] sm:$0xff]
      %v3700 = vld [vmem:[%s2 + $0x10] sm:$0xff]
      %v3701 = vld [vmem:[%s2 + $0x18] sm:$0xff]
      %v3702 = vld [vmem:[%s2 + $0x20] sm:$0xff]
      %v3703 = vld [vmem:[%s2 + $0x28] sm:$0xff]
      %v3704 = vld [vmem:[%s2 + $0x30] sm:$0xff]
      %v3705 = vld [vmem:[%s2 + $0x38] sm:$0xff]
      %v3706 = vld [vmem:[%s2 + $0x40] sm:$0xff]
      %v3707 = vld [vmem:[%s2 + $0x48] sm:$0xff]
      %v3708 = vld [vmem:[%s2 + $0x50] sm:$0xff]
      %v3709 = vld [vmem:[%s2 + $0x58] sm:$0xff]
      %v3710 = vld [vmem:[%s2 + $0x60] sm:$0xff]
      %v3711 = vld [vmem:[%s2 + $0x68] sm:$0xff]
      %v3712 = vld [vmem:[%s2 + $0x70] sm:$0xff]
      %v3713 = vld [vmem:[%s2 + $0x78] sm:$0xff]
      %v3714 = vld [vmem:[%s2 + $0x80] sm:$0xff]
      %v3715 = vld [vmem:[%s2 + $0x88] sm:$0xff]
      %v3716 = vld [vmem:[%s2 + $0x90] sm:$0xff]
      %v3717 = vld [vmem:[%s2 + $0x98] sm:$0xff]
      %v3718 = vld [vmem:[%s2 + $0xa0] sm:$0xff]
      %v3719 = vld [vmem:[%s2 + $0xa8] sm:$0xff]
      %v3720 = vld [vmem:[%s2 + $0xb0] sm:$0xff]
      %v3721 = vld [vmem:[%s2 + $0xb8] sm:$0xff]
      %v3722 = vld [vmem:[%s2 + $0xc0] sm:$0xff]
      %v3723 = vld [vmem:[%s2 + $0xc8] sm:$0xff]
      %v3724 = vld [vmem:[%s2 + $0xd0] sm:$0xff]
      %v3725 = vld [vmem:[%s2 + $0xd8] sm:$0xff]
      %v3726 = vld [vmem:[%s2 + $0xe0] sm:$0xff]
      %v3727 = vld [vmem:[%s2 + $0xe8] sm:$0xff]
      %v3728 = vld [vmem:[%s2 + $0xf0] sm:$0xff]
      %v3729 = vld [vmem:[%s2 + $0xf8] sm:$0xff]
      %v3730 = vld [vmem:[%s2 + $0x100] sm:$0xff]
      %v3731 = vld [vmem:[%s2 + $0x108] sm:$0xff]
      %v3732 = vld [vmem:[%s2 + $0x110] sm:$0xff]
      %v3733 = vld [vmem:[%s2 + $0x118] sm:$0xff]
      %v3734 = vld [vmem:[%s2 + $0x120] sm:$0xff]
      %v3735 = vld [vmem:[%s2 + $0x128] sm:$0xff]
      %v3736 = vld [vmem:[%s2 + $0x130] sm:$0xff]
      %v3737 = vld [vmem:[%s2 + $0x138] sm:$0xff]
      %v3738 = vld [vmem:[%s2 + $0x140] sm:$0xff]
      %v3739 = vld [vmem:[%s2 + $0x148] sm:$0xff]
      %v3740 = vld [vmem:[%s2 + $0x150] sm:$0xff]
      %v3741 = vld [vmem:[%s2 + $0x158] sm:$0xff]
      %v3742 = vld [vmem:[%s2 + $0x160] sm:$0xff]
      %v3743 = vmul.f32 %v3653, %v3698
      %v3744 = vmul.f32 %v3654, %v3699
      %v3745 = vmul.f32 %v3655, %v3700
      %v3746 = vmul.f32 %v3656, %v3701
      %v3747 = vmul.f32 %v3657, %v3702
      %v3748 = vmul.f32 %v3658, %v3703
      %v3749 = vmul.f32 %v3659, %v3704
      %v3750 = vmul.f32 %v3660, %v3705
      %v3751 = vmul.f32 %v3661, %v3706
      %v3752 = vmul.f32 %v3662, %v3707
      %v3753 = vmul.f32 %v3663, %v3708
      %v3754 = vmul.f32 %v3664, %v3709
      %v3755 = vmul.f32 %v3665, %v3710
      %v3756 = vmul.f32 %v3666, %v3711
      %v3757 = vmul.f32 %v3667, %v3712
      %v3758 = vmul.f32 %v3668, %v3713
      %v3759 = vmul.f32 %v3669, %v3714
      %v3760 = vmul.f32 %v3670, %v3715
      %v3761 = vmul.f32 %v3671, %v3716
      %v3762 = vmul.f32 %v3672, %v3717
      %v3763 = vmul.f32 %v3673, %v3718
      %v3764 = vmul.f32 %v3674, %v3719
      %v3765 = vmul.f32 %v3675, %v3720
      %v3766 = vmul.f32 %v3676, %v3721
      %v3767 = vmul.f32 %v3677, %v3722
      %v3768 = vmul.f32 %v3678, %v3723
      %v3769 = vmul.f32 %v3679, %v3724
      %v3770 = vmul.f32 %v3680, %v3725
      %v3771 = vmul.f32 %v3681, %v3726
      %v3772 = vmul.f32 %v3682, %v3727
      %v3773 = vmul.f32 %v3683, %v3728
      %v3774 = vmul.f32 %v3684, %v3729
      %v3775 = vmul.f32 %v3685, %v3730
      %v3776 = vmul.f32 %v3686, %v3731
      %v3777 = vmul.f32 %v3687, %v3732
      %v3778 = vmul.f32 %v3688, %v3733
      %v3779 = vmul.f32 %v3689, %v3734
      %v3780 = vmul.f32 %v3690, %v3735
      %v3781 = vmul.f32 %v3691, %v3736
      %v3782 = vmul.f32 %v3692, %v3737
      %v3783 = vmul.f32 %v3693, %v3738
      %v3784 = vmul.f32 %v3694, %v3739
      %v3785 = vmul.f32 %v3695, %v3740
      %v3786 = vmul.f32 %v3696, %v3741
      %v3787 = vmul.f32 %v3697, %v3742
      %v3788 = vadd.f32 %v3743, %v3744
      %v3789 = vadd.f32 %v3788, %v3745
      %v3790 = vadd.f32 %v3789, %v3746
      %v3791 = vadd.f32 %v3790, %v3747
      %v3792 = vadd.f32 %v3791, %v3748
      %v3793 = vadd.f32 %v3792, %v3749
      %v3794 = vadd.f32 %v3793, %v3750
      %v3795 = vadd.f32 %v3794, %v3751
      %v3796 = vadd.f32 %v3795, %v3752
      %v3797 = vadd.f32 %v3796, %v3753
      %v3798 = vadd.f32 %v3797, %v3754
      %v3799 = vadd.f32 %v3798, %v3755
      %v3800 = vadd.f32 %v3799, %v3756
      %v3801 = vadd.f32 %v3800, %v3757
      %v3802 = vadd.f32 %v3801, %v3758
      %v3803 = vadd.f32 %v3802, %v3759
      %v3804 = vadd.f32 %v3803, %v3760
      %v3805 = vadd.f32 %v3804, %v3761
      %v3806 = vadd.f32 %v3805, %v3762
      %v3807 = vadd.f32 %v3806, %v3763
      %v3808 = vadd.f32 %v3807, %v3764
      %v3809 = vadd.f32 %v3808, %v3765
      %v3810 = vadd.f32 %v3809, %v3766
      %v3811 = vadd.f32 %v3810, %v3767
      %v3812 = vadd.f32 %v3811, %v3768
      %v3813 = vadd.f32 %v3812, %v3769
      %v3814 = vadd.f32 %v3813, %v3770
      %v3815 = vadd.f32 %v3814, %v3771
      %v3816 = vadd.f32 %v3815, %v3772
      %v3817 = vadd.f32 %v3816, %v3773
      %v3818 = vadd.f32 %v3817, %v3774
      %v3819 = vadd.f32 %v3818, %v3775
      %v3820 = vadd.f32 %v3819, %v3776
      %v3821 = vadd.f32 %v3820, %v3777
      %v3822 = vadd.f32 %v3821, %v3778
      %v3823 = vadd.f32 %v3822, %v3779
      %v3824 = vadd.f32 %v3823, %v3780
      %v3825 = vadd.f32 %v3824, %v3781
      %v3826 = vadd.f32 %v3825, %v3782
      %v3827 = vadd.f32 %v3826, %v3783
      %v3828 = vadd.f32 %v3827, %v3784
      %v3829 = vadd.f32 %v3828, %v3785
      %v3830 = vadd.f32 %v3829, %v3786
      %v3831 = vadd.f32 %v3830, %v3787
      %v3832 = vrot.slane %v3831, 4
      %v3833 = vadd.f32 %v3831, %v3832
      %v3834 = vrot.slane %v3833, 2
      %v3835 = vadd.f32 %v3833, %v3834
      %v3836 = vrot.slane %v3835, 1
      %v3837 = vadd.f32 %v3835, %v3836
      %3838 = vst [vmem:[%s238] sm:$0x1] %v3837
      %v3839 = vmul.f32 %v3743, %v3743
      %v3840 = vmul.f32 %v3744, %v3744
      %v3841 = vmul.f32 %v3745, %v3745
      %v3842 = vmul.f32 %v3746, %v3746
      %v3843 = vmul.f32 %v3747, %v3747
      %v3844 = vmul.f32 %v3748, %v3748
      %v3845 = vmul.f32 %v3749, %v3749
      %v3846 = vmul.f32 %v3750, %v3750
      %v3847 = vmul.f32 %v3751, %v3751
      %v3848 = vmul.f32 %v3752, %v3752
      %v3849 = vmul.f32 %v3753, %v3753
      %v3850 = vmul.f32 %v3754, %v3754
      %v3851 = vmul.f32 %v3755, %v3755
      %v3852 = vmul.f32 %v3756, %v3756
      %v3853 = vmul.f32 %v3757, %v3757
      %v3854 = vmul.f32 %v3758, %v3758
      %v3855 = vmul.f32 %v3759, %v3759
      %v3856 = vmul.f32 %v3760, %v3760
      %v3857 = vmul.f32 %v3761, %v3761
      %v3858 = vmul.f32 %v3762, %v3762
      %v3859 = vmul.f32 %v3763, %v3763
      %v3860 = vmul.f32 %v3764, %v3764
      %v3861 = vmul.f32 %v3765, %v3765
      %v3862 = vmul.f32 %v3766, %v3766
      %v3863 = vmul.f32 %v3767, %v3767
      %v3864 = vmul.f32 %v3768, %v3768
      %v3865 = vmul.f32 %v3769, %v3769
      %v3866 = vmul.f32 %v3770, %v3770
      %v3867 = vmul.f32 %v3771, %v3771
      %v3868 = vmul.f32 %v3772, %v3772
      %v3869 = vmul.f32 %v3773, %v3773
      %v3870 = vmul.f32 %v3774, %v3774
      %v3871 = vmul.f32 %v3775, %v3775
      %v3872 = vmul.f32 %v3776, %v3776
      %v3873 = vmul.f32 %v3777, %v3777
      %v3874 = vmul.f32 %v3778, %v3778
      %v3875 = vmul.f32 %v3779, %v3779
      %v3876 = vmul.f32 %v3780, %v3780
      %v3877 = vmul.f32 %v3781, %v3781
      %v3878 = vmul.f32 %v3782, %v3782
      %v3879 = vmul.f32 %v3783, %v3783
      %v3880 = vmul.f32 %v3784, %v3784
      %v3881 = vmul.f32 %v3785, %v3785
      %v3882 = vmul.f32 %v3786, %v3786
      %v3883 = vmul.f32 %v3787, %v3787
      %v3884 = vadd.f32 %v3839, %v3840
      %v3885 = vadd.f32 %v3884, %v3841
      %v3886 = vadd.f32 %v3885, %v3842
      %v3887 = vadd.f32 %v3886, %v3843
      %v3888 = vadd.f32 %v3887, %v3844
      %v3889 = vadd.f32 %v3888, %v3845
      %v3890 = vadd.f32 %v3889, %v3846
      %v3891 = vadd.f32 %v3890, %v3847
      %v3892 = vadd.f32 %v3891, %v3848
      %v3893 = vadd.f32 %v3892, %v3849
      %v3894 = vadd.f32 %v3893, %v3850
      %v3895 = vadd.f32 %v3894, %v3851
      %v3896 = vadd.f32 %v3895, %v3852
      %v3897 = vadd.f32 %v3896, %v3853
      %v3898 = vadd.f32 %v3897, %v3854
      %v3899 = vadd.f32 %v3898, %v3855
      %v3900 = vadd.f32 %v3899, %v3856
      %v3901 = vadd.f32 %v3900, %v3857
      %v3902 = vadd.f32 %v3901, %v3858
      %v3903 = vadd.f32 %v3902, %v3859
      %v3904 = vadd.f32 %v3903, %v3860
      %v3905 = vadd.f32 %v3904, %v3861
      %v3906 = vadd.f32 %v3905, %v3862
      %v3907 = vadd.f32 %v3906, %v3863
      %v3908 = vadd.f32 %v3907, %v3864
      %v3909 = vadd.f32 %v3908, %v3865
      %v3910 = vadd.f32 %v3909, %v3866
      %v3911 = vadd.f32 %v3910, %v3867
      %v3912 = vadd.f32 %v3911, %v3868
      %v3913 = vadd.f32 %v3912, %v3869
      %v3914 = vadd.f32 %v3913, %v3870
      %v3915 = vadd.f32 %v3914, %v3871
      %v3916 = vadd.f32 %v3915, %v3872
      %v3917 = vadd.f32 %v3916, %v3873
      %v3918 = vadd.f32 %v3917, %v3874
      %v3919 = vadd.f32 %v3918, %v3875
      %v3920 = vadd.f32 %v3919, %v3876
      %v3921 = vadd.f32 %v3920, %v3877
      %v3922 = vadd.f32 %v3921, %v3878
      %v3923 = vadd.f32 %v3922, %v3879
      %v3924 = vadd.f32 %v3923, %v3880
      %v3925 = vadd.f32 %v3924, %v3881
      %v3926 = vadd.f32 %v3925, %v3882
      %v3927 = vadd.f32 %v3926, %v3883
      %v3928 = vrot.slane %v3927, 4
      %v3929 = vadd.f32 %v3927, %v3928
      %v3930 = vrot.slane %v3929, 2
      %v3931 = vadd.f32 %v3929, %v3930
      %v3932 = vrot.slane %v3931, 1
      %v3933 = vadd.f32 %v3931, %v3932
      %3934 = vst [vmem:[%s241] sm:$0x1] %v3933
      %3935 = vst [vmem:[%s235] sm:$0xff] %v3743
      %3936 = vst [vmem:[%s235 + $0x8] sm:$0xff] %v3744
      %3937 = vst [vmem:[%s235 + $0x10] sm:$0xff] %v3745
      %3938 = vst [vmem:[%s235 + $0x18] sm:$0xff] %v3746
      %3939 = vst [vmem:[%s235 + $0x20] sm:$0xff] %v3747
      %3940 = vst [vmem:[%s235 + $0x28] sm:$0xff] %v3748
      %3941 = vst [vmem:[%s235 + $0x30] sm:$0xff] %v3749
      %3942 = vst [vmem:[%s235 + $0x38] sm:$0xff] %v3750
      %3943 = vst [vmem:[%s235 + $0x40] sm:$0xff] %v3751
      %3944 = vst [vmem:[%s235 + $0x48] sm:$0xff] %v3752
      %3945 = vst [vmem:[%s235 + $0x50] sm:$0xff] %v3753
      %3946 = vst [vmem:[%s235 + $0x58] sm:$0xff] %v3754
      %3947 = vst [vmem:[%s235 + $0x60] sm:$0xff] %v3755
      %3948 = vst [vmem:[%s235 + $0x68] sm:$0xff] %v3756
      %3949 = vst [vmem:[%s235 + $0x70] sm:$0xff] %v3757
      %3950 = vst [vmem:[%s235 + $0x78] sm:$0xff] %v3758
      %3951 = vst [vmem:[%s235 + $0x80] sm:$0xff] %v3759
      %3952 = vst [vmem:[%s235 + $0x88] sm:$0xff] %v3760
      %3953 = vst [vmem:[%s235 + $0x90] sm:$0xff] %v3761
      %3954 = vst [vmem:[%s235 + $0x98] sm:$0xff] %v3762
      %3955 = vst [vmem:[%s235 + $0xa0] sm:$0xff] %v3763
      %3956 = vst [vmem:[%s235 + $0xa8] sm:$0xff] %v3764
      %3957 = vst [vmem:[%s235 + $0xb0] sm:$0xff] %v3765
      %3958 = vst [vmem:[%s235 + $0xb8] sm:$0xff] %v3766
      %3959 = vst [vmem:[%s235 + $0xc0] sm:$0xff] %v3767
      %3960 = vst [vmem:[%s235 + $0xc8] sm:$0xff] %v3768
      %3961 = vst [vmem:[%s235 + $0xd0] sm:$0xff] %v3769
      %3962 = vst [vmem:[%s235 + $0xd8] sm:$0xff] %v3770
      %3963 = vst [vmem:[%s235 + $0xe0] sm:$0xff] %v3771
      %3964 = vst [vmem:[%s235 + $0xe8] sm:$0xff] %v3772
      %3965 = vst [vmem:[%s235 + $0xf0] sm:$0xff] %v3773
      %3966 = vst [vmem:[%s235 + $0xf8] sm:$0xff] %v3774
      %3967 = vst [vmem:[%s235 + $0x100] sm:$0xff] %v3775
      %3968 = vst [vmem:[%s235 + $0x108] sm:$0xff] %v3776
      %3969 = vst [vmem:[%s235 + $0x110] sm:$0xff] %v3777
      %3970 = vst [vmem:[%s235 + $0x118] sm:$0xff] %v3778
      %3971 = vst [vmem:[%s235 + $0x120] sm:$0xff] %v3779
      %3972 = vst [vmem:[%s235 + $0x128] sm:$0xff] %v3780
      %3973 = vst [vmem:[%s235 + $0x130] sm:$0xff] %v3781
      %3974 = vst [vmem:[%s235 + $0x138] sm:$0xff] %v3782
      %3975 = vst [vmem:[%s235 + $0x140] sm:$0xff] %v3783
      %3976 = vst [vmem:[%s235 + $0x148] sm:$0xff] %v3784
      %3977 = vst [vmem:[%s235 + $0x150] sm:$0xff] %v3785
      %3978 = vst [vmem:[%s235 + $0x158] sm:$0xff] %v3786
      %3979 = vst [vmem:[%s235 + $0x160] sm:$0xff] %v3787
      %p3980 = scmp.lt.s32.totalorder %s17, 1
      %s3981 = scalar_select %p3980, %s17, 1
      %s3982 = smul.addr %s3981, 45
      %s3983 = smul.addr %s3982, 8
      %s3984 = scalar_lea.vmem %s3, %s3983
      %p3985 = scmp.lt.s32.totalorder %s17, 1
      %s3986 = scalar_select %p3985, %s17, 1
      %s3987 = scalar_lea.vmem %s4, %s3986
      %p3988 = scmp.lt.s32.totalorder %s17, 1
      %s3989 = scalar_select %p3988, %s17, 1
      %s3990 = scalar_lea.vmem %s5, %s3989
      // Predicated region
      $region33: #{basic_block_forward.3} parent=31 // pred_check
        %p3991 = pneg %p103
      $region34: #{basic_block_forward.3} parent=31 // pred_check_branch
        %3993 = sbr.rel (%p3991) target = $region36
      $region35: #{basic_block_forward.3} parent=31 // pred_region
        _
      $region36: #{basic_block_forward.3} parent=31 // pred_fallthru
        _
      // Predicated region
      $region37: #{basic_block_forward.3} parent=31 // pred_check
        %p3994 = pneg %p129
      $region38: #{basic_block_forward.3} parent=31 // pred_check_branch
        %3996 = sbr.rel (%p3994) target = $region40
      $region39: #{basic_block_forward.3} parent=31 // pred_region
        _
      $region40: #{basic_block_forward.3} parent=31 // pred_fallthru
        _
      // Predicated region
      $region41: #{basic_block_forward.3} parent=31 // pred_check
        %p3997 = pneg %p155
      $region42: #{basic_block_forward.3} parent=31 // pred_check_branch
        %3999 = sbr.rel (%p3997) target = $region44
      $region43: #{basic_block_forward.3} parent=31 // pred_region
        _
      $region44: #{basic_block_forward.3} parent=31 // pred_fallthru
        _
    $region32: #{basic_block_forward.3} parent=5 // pred_fallthru
      _
    %p4000 = scmp.le.s32.totalorder 2, %s12
    // Predicated region
    $region45: #{basic_block_forward.3} parent=5 // pred_check
      %p4001 = pneg %p4000
    $region46: #{basic_block_forward.3} parent=5 // pred_check_branch
      %4003 = sbr.rel (%p4001) target = $region48
    $region47: #{basic_block_forward.3} parent=5 // pred_region
      %s4004 = ssub.s32 %s12, 2
      // Predicated region
      $region49: #{basic_block_forward.3} parent=47 // pred_check
        %p4005 = pneg %p109
      $region50: #{basic_block_forward.3} parent=47 // pred_check_branch
        %4007 = sbr.rel (%p4005) target = $region52
      $region51: #{basic_block_forward.3} parent=47 // pred_region
        %p4008 = scmp.lt.s32.totalorder %s18, 1
        %s4009 = scalar_select %p4008, %s18, 1
        %s4010 = smul.addr %s4009, 45
        %s4011 = smul.addr %s4010, 8
        %s4012 = scalar_lea.vmem %s3, %s4011
      $region52: #{basic_block_forward.3} parent=47 // pred_fallthru
        _
      // Predicated region
      $region53: #{basic_block_forward.3} parent=47 // pred_check
        %p4013 = pneg %p135
      $region54: #{basic_block_forward.3} parent=47 // pred_check_branch
        %4015 = sbr.rel (%p4013) target = $region56
      $region55: #{basic_block_forward.3} parent=47 // pred_region
        %p4016 = scmp.lt.s32.totalorder %s18, 1
        %s4017 = scalar_select %p4016, %s18, 1
        %s4018 = scalar_lea.vmem %s4, %s4017
      $region56: #{basic_block_forward.3} parent=47 // pred_fallthru
        _
      // Predicated region
      $region57: #{basic_block_forward.3} parent=47 // pred_check
        %p4019 = pneg %p161
      $region58: #{basic_block_forward.3} parent=47 // pred_check_branch
        %4021 = sbr.rel (%p4019) target = $region60
      $region59: #{basic_block_forward.3} parent=47 // pred_region
        %p4022 = scmp.lt.s32.totalorder %s18, 1
        %s4023 = scalar_select %p4022, %s18, 1
        %s4024 = scalar_lea.vmem %s5, %s4023
      $region60: #{basic_block_forward.3} parent=47 // pred_fallthru
        _
    $region48: #{basic_block_forward.3} parent=5 // pred_fallthru
      _
  $region6: #{basic_block_forward.3} parent=0 // loop_footer
    %s16 = sadd.s32 1, %s12
  $region7: #{basic_block_forward.3} parent=0 // loop_footer_branch
    %11 = sbr.rel target = $region3
  $region8: #{basic_block_forward.3} parent=0 // loop_exit
    _

// kernel: basic_block_forward.4
$region0: #{basic_block_forward.4}
  #allocation0 [shape = 'u32[]', space=smem, size = 0x4, offset = 0x4, fixed_abs, tag = 'smem constant byte address 0x4 - core index']
  #allocation1 [shape = 'u32[144,128]{1,0:T(1,128)}', space=vmem, size = 0x12000, scoped, tag = 'internal scratch']
  #allocation2 [shape = 'f32[360,128]{1,0:T(8,128)}', space=vmem, size = 0x2d000, scoped, tag = 'scratch operand']
  %s0 = inlined_call_operand.vmem [shape: f32[2,360,128], index: 0, kind: input, shape index: {}]
  %s1 = inlined_call_operand.vmem [shape: bf16[9,128,128], index: 1, kind: input, shape index: {}]
  %s2 = inlined_call_operand.vmem [shape: f32[1,128], index: 2, kind: input, shape index: {}]
  %s3 = inlined_call_operand.vmem [shape: f32[1,128], index: 3, kind: input, shape index: {}]
  %s4 = inlined_call_operand.vmem [shape: f32[360,128], index: 4, kind: input, shape index: {}]
  %s5 = inlined_call_operand.vmem [shape: f32[288,128], index: 5, kind: input, shape index: {}]
  %s6 = inlined_call_operand.vmem [shape: f32[2,288,128], index: 6, kind: output, shape index: {0}]
  %s7 = inlined_call_operand.vmem [shape: f32[2,1,128], index: 7, kind: output, shape index: {1}]
  %s8 = inlined_call_operand.vmem [shape: f32[2,1,128], index: 8, kind: output, shape index: {2}]
  %9 = xla_tuple %s6, %s7, %s8
  %s10 = sld [smem:[#allocation0]]
  $region73: #{basic_block_forward.4} parent=0
    _
  %s12 = ssub.s32 1, %s10
  %s13 = scalar_select 0, %s12, %s10
  loop: start=0, step=1, limit=4
  $region2: #{basic_block_forward.4} parent=0 // loop_pre_header
    _
  $region3: #{basic_block_forward.4} parent=0 // loop_header
    %s15 = sphi 0, %s19
    %p16 = scmp.ge.s32.totalorder %s15, 4
    %s25 = sphi 0, %s27
    %s28 = sphi 0, %s25
    %s29 = sphi 0, %s28
    %s45 = sphi 0, %s29
    %s49 = sphi 0, %s49
    %s51 = sphi 0, %s49
    %s52 = sphi 0, %s51
    %s66 = sphi 0, %s52
    %s70 = sphi 0, %s70
    %s72 = sphi 0, %s70
    %s73 = sphi 0, %s72
    %s87 = sphi 0, %s73
    %s91 = sphi 0, %s91
    %s93 = sphi 0, %s91
    %s94 = sphi 0, %s93
    %s108 = sphi 0, %s94
    %s112 = sphi 0, %s112
    %s114 = sphi 0, %s112
    %s115 = sphi 0, %s114
    %s129 = sphi 0, %s115
    %s133 = sphi 0, %s133
    %s135 = sphi 0, %s133
    %s136 = sphi 0, %s135
    %s150 = sphi 0, %s136
    %s156 = sphi 0, %s158
    %s159 = sphi 0, %s156
    %s160 = sphi 0, %s159
    %s176 = sphi 0, %s160
    %s182 = sphi 0, %s184
    %s185 = sphi 0, %s182
    %s186 = sphi 0, %s185
    %s202 = sphi 0, %s186
    %s208 = sphi 0, %s210
    %s211 = sphi 0, %s208
    %s212 = sphi 0, %s211
    %s228 = sphi 0, %s212
  $region4: #{basic_block_forward.4} parent=0 // loop_header_branch
    %18 = sbr.rel (%p16) target = $region8
  $region5: #{basic_block_forward.4} parent=0 // loop_body
    %s20 = ssub.s32 %s15, 1
    %s21 = ssub.s32 %s15, 2
    %s22 = sadd.s32 %s15, 1
    %s23 = ssub.s32 %s15, %s22
    %p24 = scmp.eq.s32.totalorder %s23, 0
    %s26 = sadd.s32 %s25, 1
    %s27 = scalar_select %p24, %s25, %s26
    %p30 = pneg %p24
    %p31 = scmp.eq.s32.totalorder %s15, 1
    %p32 = por %p30, %p31
    %p33 = scmp.ne.s32.totalorder %s25, %s28
    %p34 = scmp.eq.s32.totalorder %s15, 0
    %p35 = por %p33, %p34
    %p36 = scmp.ne.s32.totalorder %s25, %s28
    %p37 = scmp.eq.s32.totalorder %s20, 1
    %p38 = por %p36, %p37
    %p39 = scmp.ne.s32.totalorder %s28, %s29
    %p40 = scmp.eq.s32.totalorder %s20, 0
    %p41 = por %p39, %p40
    %p42 = scmp.ne.s32.totalorder %s28, %s29
    %p43 = scmp.eq.s32.totalorder %s21, 1
    %p44 = por %p42, %p43
    %p46 = scmp.ne.s32.totalorder %s29, %s45
    %p47 = scmp.eq.s32.totalorder %s21, 0
    %p48 = por %p46, %p47
    %s50 = sadd.s32 %s49, 1
    %p53 = scmp.eq.s32.totalorder %s15, 1
    %p54 = scmp.ne.s32.totalorder %s49, %s51
    %p55 = scmp.eq.s32.totalorder %s15, 0
    %p56 = por %p54, %p55
    %p57 = scmp.ne.s32.totalorder %s49, %s51
    %p58 = scmp.eq.s32.totalorder %s20, 1
    %p59 = por %p57, %p58
    %p60 = scmp.ne.s32.totalorder %s51, %s52
    %p61 = scmp.eq.s32.totalorder %s20, 0
    %p62 = por %p60, %p61
    %p63 = scmp.ne.s32.totalorder %s51, %s52
    %p64 = scmp.eq.s32.totalorder %s21, 1
    %p65 = por %p63, %p64
    %p67 = scmp.ne.s32.totalorder %s52, %s66
    %p68 = scmp.eq.s32.totalorder %s21, 0
    %p69 = por %p67, %p68
    %s71 = sadd.s32 %s70, 1
    %p74 = scmp.eq.s32.totalorder %s15, 1
    %p75 = scmp.ne.s32.totalorder %s70, %s72
    %p76 = scmp.eq.s32.totalorder %s15, 0
    %p77 = por %p75, %p76
    %p78 = scmp.ne.s32.totalorder %s70, %s72
    %p79 = scmp.eq.s32.totalorder %s20, 1
    %p80 = por %p78, %p79
    %p81 = scmp.ne.s32.totalorder %s72, %s73
    %p82 = scmp.eq.s32.totalorder %s20, 0
    %p83 = por %p81, %p82
    %p84 = scmp.ne.s32.totalorder %s72, %s73
    %p85 = scmp.eq.s32.totalorder %s21, 1
    %p86 = por %p84, %p85
    %p88 = scmp.ne.s32.totalorder %s73, %s87
    %p89 = scmp.eq.s32.totalorder %s21, 0
    %p90 = por %p88, %p89
    %s92 = sadd.s32 %s91, 1
    %p95 = scmp.eq.s32.totalorder %s15, 1
    %p96 = scmp.ne.s32.totalorder %s91, %s93
    %p97 = scmp.eq.s32.totalorder %s15, 0
    %p98 = por %p96, %p97
    %p99 = scmp.ne.s32.totalorder %s91, %s93
    %p100 = scmp.eq.s32.totalorder %s20, 1
    %p101 = por %p99, %p100
    %p102 = scmp.ne.s32.totalorder %s93, %s94
    %p103 = scmp.eq.s32.totalorder %s20, 0
    %p104 = por %p102, %p103
    %p105 = scmp.ne.s32.totalorder %s93, %s94
    %p106 = scmp.eq.s32.totalorder %s21, 1
    %p107 = por %p105, %p106
    %p109 = scmp.ne.s32.totalorder %s94, %s108
    %p110 = scmp.eq.s32.totalorder %s21, 0
    %p111 = por %p109, %p110
    %s113 = sadd.s32 %s112, 1
    %p116 = scmp.eq.s32.totalorder %s15, 1
    %p117 = scmp.ne.s32.totalorder %s112, %s114
    %p118 = scmp.eq.s32.totalorder %s15, 0
    %p119 = por %p117, %p118
    %p120 = scmp.ne.s32.totalorder %s112, %s114
    %p121 = scmp.eq.s32.totalorder %s20, 1
    %p122 = por %p120, %p121
    %p123 = scmp.ne.s32.totalorder %s114, %s115
    %p124 = scmp.eq.s32.totalorder %s20, 0
    %p125 = por %p123, %p124
    %p126 = scmp.ne.s32.totalorder %s114, %s115
    %p127 = scmp.eq.s32.totalorder %s21, 1
    %p128 = por %p126, %p127
    %p130 = scmp.ne.s32.totalorder %s115, %s129
    %p131 = scmp.eq.s32.totalorder %s21, 0
    %p132 = por %p130, %p131
    %s134 = sadd.s32 %s133, 1
    %p137 = scmp.eq.s32.totalorder %s15, 1
    %p138 = scmp.ne.s32.totalorder %s133, %s135
    %p139 = scmp.eq.s32.totalorder %s15, 0
    %p140 = por %p138, %p139
    %p141 = scmp.ne.s32.totalorder %s133, %s135
    %p142 = scmp.eq.s32.totalorder %s20, 1
    %p143 = por %p141, %p142
    %p144 = scmp.ne.s32.totalorder %s135, %s136
    %p145 = scmp.eq.s32.totalorder %s20, 0
    %p146 = por %p144, %p145
    %p147 = scmp.ne.s32.totalorder %s135, %s136
    %p148 = scmp.eq.s32.totalorder %s21, 1
    %p149 = por %p147, %p148
    %p151 = scmp.ne.s32.totalorder %s136, %s150
    %p152 = scmp.eq.s32.totalorder %s21, 0
    %p153 = por %p151, %p152
    %s154 = ssub.s32 %s15, %s22
    %p155 = scmp.eq.s32.totalorder %s154, 0
    %s157 = sadd.s32 %s156, 1
    %s158 = scalar_select %p155, %s156, %s157
    %p161 = pneg %p155
    %p162 = scmp.eq.s32.totalorder %s15, 1
    %p163 = por %p161, %p162
    %p164 = scmp.ne.s32.totalorder %s156, %s159
    %p165 = scmp.eq.s32.totalorder %s15, 0
    %p166 = por %p164, %p165
    %p167 = scmp.ne.s32.totalorder %s156, %s159
    %p168 = scmp.eq.s32.totalorder %s20, 1
    %p169 = por %p167, %p168
    %p170 = scmp.ne.s32.totalorder %s159, %s160
    %p171 = scmp.eq.s32.totalorder %s20, 0
    %p172 = por %p170, %p171
    %p173 = scmp.ne.s32.totalorder %s159, %s160
    %p174 = scmp.eq.s32.totalorder %s21, 1
    %p175 = por %p173, %p174
    %p177 = scmp.ne.s32.totalorder %s160, %s176
    %p178 = scmp.eq.s32.totalorder %s21, 0
    %p179 = por %p177, %p178
    %s180 = ssub.s32 %s15, %s22
    %p181 = scmp.eq.s32.totalorder %s180, 0
    %s183 = sadd.s32 %s182, 1
    %s184 = scalar_select %p181, %s182, %s183
    %p187 = pneg %p181
    %p188 = scmp.eq.s32.totalorder %s15, 1
    %p189 = por %p187, %p188
    %p190 = scmp.ne.s32.totalorder %s182, %s185
    %p191 = scmp.eq.s32.totalorder %s15, 0
    %p192 = por %p190, %p191
    %p193 = scmp.ne.s32.totalorder %s182, %s185
    %p194 = scmp.eq.s32.totalorder %s20, 1
    %p195 = por %p193, %p194
    %p196 = scmp.ne.s32.totalorder %s185, %s186
    %p197 = scmp.eq.s32.totalorder %s20, 0
    %p198 = por %p196, %p197
    %p199 = scmp.ne.s32.totalorder %s185, %s186
    %p200 = scmp.eq.s32.totalorder %s21, 1
    %p201 = por %p199, %p200
    %p203 = scmp.ne.s32.totalorder %s186, %s202
    %p204 = scmp.eq.s32.totalorder %s21, 0
    %p205 = por %p203, %p204
    %s206 = ssub.s32 %s15, %s22
    %p207 = scmp.eq.s32.totalorder %s206, 0
    %s209 = sadd.s32 %s208, 1
    %s210 = scalar_select %p207, %s208, %s209
    %p213 = pneg %p207
    %p214 = scmp.eq.s32.totalorder %s15, 1
    %p215 = por %p213, %p214
    %p216 = scmp.ne.s32.totalorder %s208, %s211
    %p217 = scmp.eq.s32.totalorder %s15, 0
    %p218 = por %p216, %p217
    %p219 = scmp.ne.s32.totalorder %s208, %s211
    %p220 = scmp.eq.s32.totalorder %s20, 1
    %p221 = por %p219, %p220
    %p222 = scmp.ne.s32.totalorder %s211, %s212
    %p223 = scmp.eq.s32.totalorder %s20, 0
    %p224 = por %p222, %p223
    %p225 = scmp.ne.s32.totalorder %s211, %s212
    %p226 = scmp.eq.s32.totalorder %s21, 1
    %p227 = por %p225, %p226
    %p229 = scmp.ne.s32.totalorder %s212, %s228
    %p230 = scmp.eq.s32.totalorder %s21, 0
    %p231 = por %p229, %p230
    %p232 = scmp.le.s32.totalorder 1, %s15
    %p233 = scmp.lt.s32.totalorder %s15, 3
    %p234 = pnand %p232, %p233
    %p235 = pneg %p234
    // Predicated region
    $region9: #{basic_block_forward.4} parent=5 // pred_check
      _
    $region10: #{basic_block_forward.4} parent=5 // pred_check_branch
      %237 = sbr.rel (%p234) target = $region12
    $region11: #{basic_block_forward.4} parent=5 // pred_region
      %s238 = ssub.s32 %s15, 1
      // Predicated region
      $region13: #{basic_block_forward.4} parent=11 // pred_check
        %p239 = pneg %p62
      $region14: #{basic_block_forward.4} parent=11 // pred_check_branch
        %241 = sbr.rel (%p239) target = $region16
      $region15: #{basic_block_forward.4} parent=11 // pred_region
        _
      $region16: #{basic_block_forward.4} parent=11 // pred_fallthru
        _
      // Predicated region
      $region17: #{basic_block_forward.4} parent=11 // pred_check
        %p242 = pneg %p83
      $region18: #{basic_block_forward.4} parent=11 // pred_check_branch
        %244 = sbr.rel (%p242) target = $region20
      $region19: #{basic_block_forward.4} parent=11 // pred_region
        _
      $region20: #{basic_block_forward.4} parent=11 // pred_fallthru
        _
      // Predicated region
      $region21: #{basic_block_forward.4} parent=11 // pred_check
        %p245 = pneg %p104
      $region22: #{basic_block_forward.4} parent=11 // pred_check_branch
        %247 = sbr.rel (%p245) target = $region24
      $region23: #{basic_block_forward.4} parent=11 // pred_region
        _
      $region24: #{basic_block_forward.4} parent=11 // pred_fallthru
        _
      // Predicated region
      $region25: #{basic_block_forward.4} parent=11 // pred_check
        %p248 = pneg %p125
      $region26: #{basic_block_forward.4} parent=11 // pred_check_branch
        %250 = sbr.rel (%p248) target = $region28
      $region27: #{basic_block_forward.4} parent=11 // pred_region
        _
      $region28: #{basic_block_forward.4} parent=11 // pred_fallthru
        _
      // Predicated region
      $region29: #{basic_block_forward.4} parent=11 // pred_check
        %p251 = pneg %p146
      $region30: #{basic_block_forward.4} parent=11 // pred_check_branch
        %253 = sbr.rel (%p251) target = $region32
      $region31: #{basic_block_forward.4} parent=11 // pred_region
        _
      $region32: #{basic_block_forward.4} parent=11 // pred_fallthru
        _
    $region12: #{basic_block_forward.4} parent=5 // pred_fallthru
      _
    %p254 = scmp.lt.s32.totalorder %s15, 2
    // Predicated region
    $region33: #{basic_block_forward.4} parent=5 // pred_check
      %p255 = pneg %p254
    $region34: #{basic_block_forward.4} parent=5 // pred_check_branch
      %257 = sbr.rel (%p255) target = $region36
    $region35: #{basic_block_forward.4} parent=5 // pred_region
      // Predicated region
      $region37: #{basic_block_forward.4} parent=35 // pred_check
        %p258 = pneg %p35
      $region38: #{basic_block_forward.4} parent=35 // pred_check_branch
        %260 = sbr.rel (%p258) target = $region40
      $region39: #{basic_block_forward.4} parent=35 // pred_region
        %p261 = scmp.lt.s32.totalorder %s15, 1
        %s262 = scalar_select %p261, %s15, 1
        %s263 = smul.addr %s262, 45
        %s264 = smul.addr %s263, 8
        %s265 = scalar_lea.vmem %s0, %s264
      $region40: #{basic_block_forward.4} parent=35 // pred_fallthru
        _
    $region36: #{basic_block_forward.4} parent=5 // pred_fallthru
      _
    %p266 = scmp.le.s32.totalorder 1, %s15
    %p267 = scmp.lt.s32.totalorder %s15, 3
    %p268 = pnand %p266, %p267
    %p269 = pneg %p268
    // Predicated region
    $region41: #{basic_block_forward.4} parent=5 // pred_check
      _
    $region42: #{basic_block_forward.4} parent=5 // pred_check_branch
      %271 = sbr.rel (%p268) target = $region44
    $region43: #{basic_block_forward.4} parent=5 // pred_region
      %s272 = ssub.s32 %s15, 1
      %p273 = scmp.lt.s32.totalorder %s20, 1
      %s274 = scalar_select %p273, %s20, 1
      %s275 = smul.addr %s274, 45
      %s276 = smul.addr %s275, 8
      %s277 = scalar_lea.vmem %s0, %s276
      %p278 = pneg %p41
      %p279 = pneg %p38
      %p280 = pneg %p62
      %p281 = pneg %p59
      %p282 = pneg %p83
      %p283 = pneg %p80
      %p284 = pneg %p104
      %p285 = pneg %p101
      %p286 = pneg %p125
      %p287 = pneg %p122
      %p288 = pneg %p146
      %p289 = pneg %p143
      %p290 = pneg %p172
      %p291 = pneg %p169
      %p292 = scmp.lt.s32.totalorder %s20, 1
      %s293 = scalar_select %p292, %s20, 1
      %s294 = smul.addr %s293, 36
      %s295 = smul.addr %s294, 8
      %s296 = scalar_lea.vmem %s6, %s295
      %p297 = pneg %p198
      %p298 = pneg %p195
      %p299 = scmp.lt.s32.totalorder %s20, 1
      %s300 = scalar_select %p299, %s20, 1
      %s301 = scalar_lea.vmem %s7, %s300
      %p302 = pneg %p224
      %p303 = pneg %p221
      %p304 = scmp.lt.s32.totalorder %s20, 1
      %s305 = scalar_select %p304, %s20, 1
      %s306 = scalar_lea.vmem %s8, %s305
      %p307 = scmp.lt.s32.totalorder %s20, 1
      %s308 = scalar_select %p307, %s20, 1
      %s309 = smul.addr %s308, 45
      %s310 = smul.addr %s309, 8
      %s311 = scalar_lea.vmem %s0, %s310
      %p312 = scmp.lt.s32.totalorder %s20, 1
      %s313 = scalar_select %p312, %s20, 1
      %s314 = smul.addr %s313, 36
      %s315 = smul.addr %s314, 8
      %s316 = scalar_lea.vmem %s6, %s315
      %p317 = scmp.lt.s32.totalorder %s20, 1
      %s318 = scalar_select %p317, %s20, 1
      %s319 = scalar_lea.vmem %s7, %s318
      %p320 = scmp.lt.s32.totalorder %s20, 1
      %s321 = scalar_select %p320, %s20, 1
      %s322 = scalar_lea.vmem %s8, %s321
      %v324 = vld [vmem:[%s311] sm:$0xff]
      %v325 = vld [vmem:[%s311 + $0x8] sm:$0xff]
      %v326 = vld [vmem:[%s311 + $0x10] sm:$0xff]
      %v327 = vld [vmem:[%s311 + $0x18] sm:$0xff]
      %v328 = vld [vmem:[%s311 + $0x20] sm:$0xff]
      %v329 = vld [vmem:[%s311 + $0x28] sm:$0xff]
      %v330 = vld [vmem:[%s311 + $0x30] sm:$0xff]
      %v331 = vld [vmem:[%s311 + $0x38] sm:$0xff]
      %v332 = vld [vmem:[%s311 + $0x40] sm:$0xff]
      %v333 = vld [vmem:[%s311 + $0x48] sm:$0xff]
      %v334 = vld [vmem:[%s311 + $0x50] sm:$0xff]
      %v335 = vld [vmem:[%s311 + $0x58] sm:$0xff]
      %v336 = vld [vmem:[%s311 + $0x60] sm:$0xff]
      %v337 = vld [vmem:[%s311 + $0x68] sm:$0xff]
      %v338 = vld [vmem:[%s311 + $0x70] sm:$0xff]
      %v339 = vld [vmem:[%s311 + $0x78] sm:$0xff]
      %v340 = vld [vmem:[%s311 + $0x80] sm:$0xff]
      %v341 = vld [vmem:[%s311 + $0x88] sm:$0xff]
      %v342 = vld [vmem:[%s311 + $0x90] sm:$0xff]
      %v343 = vld [vmem:[%s311 + $0x98] sm:$0xff]
      %v344 = vld [vmem:[%s311 + $0xa0] sm:$0xff]
      %v345 = vld [vmem:[%s311 + $0xa8] sm:$0xff]
      %v346 = vld [vmem:[%s311 + $0xb0] sm:$0xff]
      %v347 = vld [vmem:[%s311 + $0xb8] sm:$0xff]
      %v348 = vld [vmem:[%s311 + $0xc0] sm:$0xff]
      %v349 = vld [vmem:[%s311 + $0xc8] sm:$0xff]
      %v350 = vld [vmem:[%s311 + $0xd0] sm:$0xff]
      %v351 = vld [vmem:[%s311 + $0xd8] sm:$0xff]
      %v352 = vld [vmem:[%s311 + $0xe0] sm:$0xff]
      %v353 = vld [vmem:[%s311 + $0xe8] sm:$0xff]
      %v354 = vld [vmem:[%s311 + $0xf0] sm:$0xff]
      %v355 = vld [vmem:[%s311 + $0xf8] sm:$0xff]
      %v356 = vld [vmem:[%s311 + $0x100] sm:$0xff]
      %v357 = vld [vmem:[%s311 + $0x108] sm:$0xff]
      %v358 = vld [vmem:[%s311 + $0x110] sm:$0xff]
      %v359 = vld [vmem:[%s311 + $0x118] sm:$0xff]
      %v360 = vld [vmem:[%s311 + $0x120] sm:$0xff]
      %v361 = vld [vmem:[%s311 + $0x128] sm:$0xff]
      %v362 = vld [vmem:[%s311 + $0x130] sm:$0xff]
      %v363 = vld [vmem:[%s311 + $0x138] sm:$0xff]
      %v364 = vld [vmem:[%s311 + $0x140] sm:$0xff]
      %v365 = vld [vmem:[%s311 + $0x148] sm:$0xff]
      %v366 = vld [vmem:[%s311 + $0x150] sm:$0xff]
      %v367 = vld [vmem:[%s311 + $0x158] sm:$0xff]
      %v368 = vld [vmem:[%s311 + $0x160] sm:$0xff]
      %v369 = vld [vmem:[%s2] sm:$0x1]
      %v371 = vlaneseq
      %v372 = vshrl.u32 %v371, 7
      %v373 = vsub.s32 0, %v372
      %v374 = vrot.slane %v369, %v373
      %v376 = vmul.f32 %v324, %v374
      %v377 = vmul.f32 %v325, %v374
      %v378 = vmul.f32 %v326, %v374
      %v379 = vmul.f32 %v327, %v374
      %v380 = vmul.f32 %v328, %v374
      %v381 = vmul.f32 %v329, %v374
      %v382 = vmul.f32 %v330, %v374
      %v383 = vmul.f32 %v331, %v374
      %v384 = vmul.f32 %v332, %v374
      %v385 = vmul.f32 %v333, %v374
      %v386 = vmul.f32 %v334, %v374
      %v387 = vmul.f32 %v335, %v374
      %v388 = vmul.f32 %v336, %v374
      %v389 = vmul.f32 %v337, %v374
      %v390 = vmul.f32 %v338, %v374
      %v391 = vmul.f32 %v339, %v374
      %v392 = vmul.f32 %v340, %v374
      %v393 = vmul.f32 %v341, %v374
      %v394 = vmul.f32 %v342, %v374
      %v395 = vmul.f32 %v343, %v374
      %v396 = vmul.f32 %v344, %v374
      %v397 = vmul.f32 %v345, %v374
      %v398 = vmul.f32 %v346, %v374
      %v399 = vmul.f32 %v347, %v374
      %v400 = vmul.f32 %v348, %v374
      %v401 = vmul.f32 %v349, %v374
      %v402 = vmul.f32 %v350, %v374
      %v403 = vmul.f32 %v351, %v374
      %v404 = vmul.f32 %v352, %v374
      %v405 = vmul.f32 %v353, %v374
      %v406 = vmul.f32 %v354, %v374
      %v407 = vmul.f32 %v355, %v374
      %v408 = vmul.f32 %v356, %v374
      %v409 = vmul.f32 %v357, %v374
      %v410 = vmul.f32 %v358, %v374
      %v411 = vmul.f32 %v359, %v374
      %v412 = vmul.f32 %v360, %v374
      %v413 = vmul.f32 %v361, %v374
      %v414 = vmul.f32 %v362, %v374
      %v415 = vmul.f32 %v363, %v374
      %v416 = vmul.f32 %v364, %v374
      %v417 = vmul.f32 %v365, %v374
      %v418 = vmul.f32 %v366, %v374
      %v419 = vmul.f32 %v367, %v374
      %v420 = vmul.f32 %v368, %v374
      %v421 = vld [vmem:[%s3] sm:$0x1]
      %v423 = vlaneseq
      %v424 = vshrl.u32 %v423, 7
      %v425 = vsub.s32 0, %v424
      %v426 = vrot.slane %v421, %v425
      %v428 = vadd.f32 %v376, %v426
      %v429 = vadd.f32 %v377, %v426
      %v430 = vadd.f32 %v378, %v426
      %v431 = vadd.f32 %v379, %v426
      %v432 = vadd.f32 %v380, %v426
      %v433 = vadd.f32 %v381, %v426
      %v434 = vadd.f32 %v382, %v426
      %v435 = vadd.f32 %v383, %v426
      %v436 = vadd.f32 %v384, %v426
      %v437 = vadd.f32 %v385, %v426
      %v438 = vadd.f32 %v386, %v426
      %v439 = vadd.f32 %v387, %v426
      %v440 = vadd.f32 %v388, %v426
      %v441 = vadd.f32 %v389, %v426
      %v442 = vadd.f32 %v390, %v426
      %v443 = vadd.f32 %v391, %v426
      %v444 = vadd.f32 %v392, %v426
      %v445 = vadd.f32 %v393, %v426
      %v446 = vadd.f32 %v394, %v426
      %v447 = vadd.f32 %v395, %v426
      %v448 = vadd.f32 %v396, %v426
      %v449 = vadd.f32 %v397, %v426
      %v450 = vadd.f32 %v398, %v426
      %v451 = vadd.f32 %v399, %v426
      %v452 = vadd.f32 %v400, %v426
      %v453 = vadd.f32 %v401, %v426
      %v454 = vadd.f32 %v402, %v426
      %v455 = vadd.f32 %v403, %v426
      %v456 = vadd.f32 %v404, %v426
      %v457 = vadd.f32 %v405, %v426
      %v458 = vadd.f32 %v406, %v426
      %v459 = vadd.f32 %v407, %v426
      %v460 = vadd.f32 %v408, %v426
      %v461 = vadd.f32 %v409, %v426
      %v462 = vadd.f32 %v410, %v426
      %v463 = vadd.f32 %v411, %v426
      %v464 = vadd.f32 %v412, %v426
      %v465 = vadd.f32 %v413, %v426
      %v466 = vadd.f32 %v414, %v426
      %v467 = vadd.f32 %v415, %v426
      %v468 = vadd.f32 %v416, %v426
      %v469 = vadd.f32 %v417, %v426
      %v470 = vadd.f32 %v418, %v426
      %v471 = vadd.f32 %v419, %v426
      %v472 = vadd.f32 %v420, %v426
      %v473 = vmax.f32 %v428, 0.0
      %v474 = vmax.f32 %v429, 0.0
      %v475 = vmax.f32 %v430, 0.0
      %v476 = vmax.f32 %v431, 0.0
      %v477 = vmax.f32 %v432, 0.0
      %v478 = vmax.f32 %v433, 0.0
      %v479 = vmax.f32 %v434, 0.0
      %v480 = vmax.f32 %v435, 0.0
      %v481 = vmax.f32 %v436, 0.0
      %v482 = vmax.f32 %v437, 0.0
      %v483 = vmax.f32 %v438, 0.0
      %v484 = vmax.f32 %v439, 0.0
      %v485 = vmax.f32 %v440, 0.0
      %v486 = vmax.f32 %v441, 0.0
      %v487 = vmax.f32 %v442, 0.0
      %v488 = vmax.f32 %v443, 0.0
      %v489 = vmax.f32 %v444, 0.0
      %v490 = vmax.f32 %v445, 0.0
      %v491 = vmax.f32 %v446, 0.0
      %v492 = vmax.f32 %v447, 0.0
      %v493 = vmax.f32 %v448, 0.0
      %v494 = vmax.f32 %v449, 0.0
      %v495 = vmax.f32 %v450, 0.0
      %v496 = vmax.f32 %v451, 0.0
      %v497 = vmax.f32 %v452, 0.0
      %v498 = vmax.f32 %v453, 0.0
      %v499 = vmax.f32 %v454, 0.0
      %v500 = vmax.f32 %v455, 0.0
      %v501 = vmax.f32 %v456, 0.0
      %v502 = vmax.f32 %v457, 0.0
      %v503 = vmax.f32 %v458, 0.0
      %v504 = vmax.f32 %v459, 0.0
      %v505 = vmax.f32 %v460, 0.0
      %v506 = vmax.f32 %v461, 0.0
      %v507 = vmax.f32 %v462, 0.0
      %v508 = vmax.f32 %v463, 0.0
      %v509 = vmax.f32 %v464, 0.0
      %v510 = vmax.f32 %v465, 0.0
      %v511 = vmax.f32 %v466, 0.0
      %v512 = vmax.f32 %v467, 0.0
      %v513 = vmax.f32 %v468, 0.0
      %v514 = vmax.f32 %v469, 0.0
      %v515 = vmax.f32 %v470, 0.0
      %v516 = vmax.f32 %v471, 0.0
      %v517 = vmax.f32 %v472, 0.0
      %v518 = vld [vmem:[%s4] sm:$0xff]
      %v519 = vld [vmem:[%s4 + $0x8] sm:$0xff]
      %v520 = vld [vmem:[%s4 + $0x10] sm:$0xff]
      %v521 = vld [vmem:[%s4 + $0x18] sm:$0xff]
      %v522 = vld [vmem:[%s4 + $0x20] sm:$0xff]
      %v523 = vld [vmem:[%s4 + $0x28] sm:$0xff]
      %v524 = vld [vmem:[%s4 + $0x30] sm:$0xff]
      %v525 = vld [vmem:[%s4 + $0x38] sm:$0xff]
      %v526 = vld [vmem:[%s4 + $0x40] sm:$0xff]
      %v527 = vld [vmem:[%s4 + $0x48] sm:$0xff]
      %v528 = vld [vmem:[%s4 + $0x50] sm:$0xff]
      %v529 = vld [vmem:[%s4 + $0x58] sm:$0xff]
      %v530 = vld [vmem:[%s4 + $0x60] sm:$0xff]
      %v531 = vld [vmem:[%s4 + $0x68] sm:$0xff]
      %v532 = vld [vmem:[%s4 + $0x70] sm:$0xff]
      %v533 = vld [vmem:[%s4 + $0x78] sm:$0xff]
      %v534 = vld [vmem:[%s4 + $0x80] sm:$0xff]
      %v535 = vld [vmem:[%s4 + $0x88] sm:$0xff]
      %v536 = vld [vmem:[%s4 + $0x90] sm:$0xff]
      %v537 = vld [vmem:[%s4 + $0x98] sm:$0xff]
      %v538 = vld [vmem:[%s4 + $0xa0] sm:$0xff]
      %v539 = vld [vmem:[%s4 + $0xa8] sm:$0xff]
      %v540 = vld [vmem:[%s4 + $0xb0] sm:$0xff]
      %v541 = vld [vmem:[%s4 + $0xb8] sm:$0xff]
      %v542 = vld [vmem:[%s4 + $0xc0] sm:$0xff]
      %v543 = vld [vmem:[%s4 + $0xc8] sm:$0xff]
      %v544 = vld [vmem:[%s4 + $0xd0] sm:$0xff]
      %v545 = vld [vmem:[%s4 + $0xd8] sm:$0xff]
      %v546 = vld [vmem:[%s4 + $0xe0] sm:$0xff]
      %v547 = vld [vmem:[%s4 + $0xe8] sm:$0xff]
      %v548 = vld [vmem:[%s4 + $0xf0] sm:$0xff]
      %v549 = vld [vmem:[%s4 + $0xf8] sm:$0xff]
      %v550 = vld [vmem:[%s4 + $0x100] sm:$0xff]
      %v551 = vld [vmem:[%s4 + $0x108] sm:$0xff]
      %v552 = vld [vmem:[%s4 + $0x110] sm:$0xff]
      %v553 = vld [vmem:[%s4 + $0x118] sm:$0xff]
      %v554 = vld [vmem:[%s4 + $0x120] sm:$0xff]
      %v555 = vld [vmem:[%s4 + $0x128] sm:$0xff]
      %v556 = vld [vmem:[%s4 + $0x130] sm:$0xff]
      %v557 = vld [vmem:[%s4 + $0x138] sm:$0xff]
      %v558 = vld [vmem:[%s4 + $0x140] sm:$0xff]
      %v559 = vld [vmem:[%s4 + $0x148] sm:$0xff]
      %v560 = vld [vmem:[%s4 + $0x150] sm:$0xff]
      %v561 = vld [vmem:[%s4 + $0x158] sm:$0xff]
      %v562 = vld [vmem:[%s4 + $0x160] sm:$0xff]
      %v563 = vmul.f32 %v473, %v518
      %v564 = vmul.f32 %v474, %v519
      %v565 = vmul.f32 %v475, %v520
      %v566 = vmul.f32 %v476, %v521
      %v567 = vmul.f32 %v477, %v522
      %v568 = vmul.f32 %v478, %v523
      %v569 = vmul.f32 %v479, %v524
      %v570 = vmul.f32 %v480, %v525
      %v571 = vmul.f32 %v481, %v526
      %v572 = vmul.f32 %v482, %v527
      %v573 = vmul.f32 %v483, %v528
      %v574 = vmul.f32 %v484, %v529
      %v575 = vmul.f32 %v485, %v530
      %v576 = vmul.f32 %v486, %v531
      %v577 = vmul.f32 %v487, %v532
      %v578 = vmul.f32 %v488, %v533
      %v579 = vmul.f32 %v489, %v534
      %v580 = vmul.f32 %v490, %v535
      %v581 = vmul.f32 %v491, %v536
      %v582 = vmul.f32 %v492, %v537
      %v583 = vmul.f32 %v493, %v538
      %v584 = vmul.f32 %v494, %v539
      %v585 = vmul.f32 %v495, %v540
      %v586 = vmul.f32 %v496, %v541
      %v587 = vmul.f32 %v497, %v542
      %v588 = vmul.f32 %v498, %v543
      %v589 = vmul.f32 %v499, %v544
      %v590 = vmul.f32 %v500, %v545
      %v591 = vmul.f32 %v501, %v546
      %v592 = vmul.f32 %v502, %v547
      %v593 = vmul.f32 %v503, %v548
      %v594 = vmul.f32 %v504, %v549
      %v595 = vmul.f32 %v505, %v550
      %v596 = vmul.f32 %v506, %v551
      %v597 = vmul.f32 %v507, %v552
      %v598 = vmul.f32 %v508, %v553
      %v599 = vmul.f32 %v509, %v554
      %v600 = vmul.f32 %v510, %v555
      %v601 = vmul.f32 %v511, %v556
      %v602 = vmul.f32 %v512, %v557
      %v603 = vmul.f32 %v513, %v558
      %v604 = vmul.f32 %v514, %v559
      %v605 = vmul.f32 %v515, %v560
      %v606 = vmul.f32 %v516, %v561
      %v607 = vmul.f32 %v517, %v562
      %608 = vst [vmem:[#allocation2] sm:$0xff] %v563
      %609 = vst [vmem:[#allocation2 + $0x8] sm:$0xff] %v564
      %610 = vst [vmem:[#allocation2 + $0x10] sm:$0xff] %v565
      %611 = vst [vmem:[#allocation2 + $0x18] sm:$0xff] %v566
      %612 = vst [vmem:[#allocation2 + $0x20] sm:$0xff] %v567
      %613 = vst [vmem:[#allocation2 + $0x28] sm:$0xff] %v568
      %614 = vst [vmem:[#allocation2 + $0x30] sm:$0xff] %v569
      %615 = vst [vmem:[#allocation2 + $0x38] sm:$0xff] %v570
      %616 = vst [vmem:[#allocation2 + $0x40] sm:$0xff] %v571
      %617 = vst [vmem:[#allocation2 + $0x48] sm:$0xff] %v572
      %618 = vst [vmem:[#allocation2 + $0x50] sm:$0xff] %v573
      %619 = vst [vmem:[#allocation2 + $0x58] sm:$0xff] %v574
      %620 = vst [vmem:[#allocation2 + $0x60] sm:$0xff] %v575
      %621 = vst [vmem:[#allocation2 + $0x68] sm:$0xff] %v576
      %622 = vst [vmem:[#allocation2 + $0x70] sm:$0xff] %v577
      %623 = vst [vmem:[#allocation2 + $0x78] sm:$0xff] %v578
      %624 = vst [vmem:[#allocation2 + $0x80] sm:$0xff] %v579
      %625 = vst [vmem:[#allocation2 + $0x88] sm:$0xff] %v580
      %626 = vst [vmem:[#allocation2 + $0x90] sm:$0xff] %v581
      %627 = vst [vmem:[#allocation2 + $0x98] sm:$0xff] %v582
      %628 = vst [vmem:[#allocation2 + $0xa0] sm:$0xff] %v583
      %629 = vst [vmem:[#allocation2 + $0xa8] sm:$0xff] %v584
      %630 = vst [vmem:[#allocation2 + $0xb0] sm:$0xff] %v585
      %631 = vst [vmem:[#allocation2 + $0xb8] sm:$0xff] %v586
      %632 = vst [vmem:[#allocation2 + $0xc0] sm:$0xff] %v587
      %633 = vst [vmem:[#allocation2 + $0xc8] sm:$0xff] %v588
      %634 = vst [vmem:[#allocation2 + $0xd0] sm:$0xff] %v589
      %635 = vst [vmem:[#allocation2 + $0xd8] sm:$0xff] %v590
      %636 = vst [vmem:[#allocation2 + $0xe0] sm:$0xff] %v591
      %637 = vst [vmem:[#allocation2 + $0xe8] sm:$0xff] %v592
      %638 = vst [vmem:[#allocation2 + $0xf0] sm:$0xff] %v593
      %639 = vst [vmem:[#allocation2 + $0xf8] sm:$0xff] %v594
      %640 = vst [vmem:[#allocation2 + $0x100] sm:$0xff] %v595
      %641 = vst [vmem:[#allocation2 + $0x108] sm:$0xff] %v596
      %642 = vst [vmem:[#allocation2 + $0x110] sm:$0xff] %v597
      %643 = vst [vmem:[#allocation2 + $0x118] sm:$0xff] %v598
      %644 = vst [vmem:[#allocation2 + $0x120] sm:$0xff] %v599
      %645 = vst [vmem:[#allocation2 + $0x128] sm:$0xff] %v600
      %646 = vst [vmem:[#allocation2 + $0x130] sm:$0xff] %v601
      %647 = vst [vmem:[#allocation2 + $0x138] sm:$0xff] %v602
      %648 = vst [vmem:[#allocation2 + $0x140] sm:$0xff] %v603
      %649 = vst [vmem:[#allocation2 + $0x148] sm:$0xff] %v604
      %650 = vst [vmem:[#allocation2 + $0x150] sm:$0xff] %v605
      %651 = vst [vmem:[#allocation2 + $0x158] sm:$0xff] %v606
      %652 = vst [vmem:[#allocation2 + $0x160] sm:$0xff] %v607
      %v653 = vld [vmem:[#allocation2 + $0x11] sm:$0xff]
      %v654 = vld [vmem:[#allocation2 + $0x19] sm:$0xff]
      %v655 = vld [vmem:[#allocation2 + $0x21] sm:$0xff]
      %v656 = vld [vmem:[#allocation2 + $0x29] sm:$0xff]
      %v657 = vld [vmem:[#allocation2 + $0x31] sm:$0xff]
      %v658 = vld [vmem:[#allocation2 + $0x39] sm:$0xff]
      %v659 = vld [vmem:[#allocation2 + $0x41] sm:$0xff]
      %v660 = vld [vmem:[#allocation2 + $0x49] sm:$0xff]
      %v661 = vld [vmem:[#allocation2 + $0x51] sm:$0xff]
      %v662 = vld [vmem:[#allocation2 + $0x59] sm:$0xff]
      %v663 = vld [vmem:[#allocation2 + $0x61] sm:$0xff]
      %v664 = vld [vmem:[#allocation2 + $0x69] sm:$0xff]
      %v665 = vld [vmem:[#allocation2 + $0x71] sm:$0xff]
      %v666 = vld [vmem:[#allocation2 + $0x79] sm:$0xff]
      %v667 = vld [vmem:[#allocation2 + $0x81] sm:$0xff]
      %v668 = vld [vmem:[#allocation2 + $0x89] sm:$0xff]
      %v669 = vld [vmem:[#allocation2 + $0x91] sm:$0xff]
      %v670 = vld [vmem:[#allocation2 + $0x99] sm:$0xff]
      %v671 = vld [vmem:[#allocation2 + $0xa1] sm:$0xff]
      %v672 = vld [vmem:[#allocation2 + $0xa9] sm:$0xff]
      %v673 = vld [vmem:[#allocation2 + $0xb1] sm:$0xff]
      %v674 = vld [vmem:[#allocation2 + $0xb9] sm:$0xff]
      %v675 = vld [vmem:[#allocation2 + $0xc1] sm:$0xff]
      %v676 = vld [vmem:[#allocation2 + $0xc9] sm:$0xff]
      %v677 = vld [vmem:[#allocation2 + $0xd1] sm:$0xff]
      %v678 = vld [vmem:[#allocation2 + $0xd9] sm:$0xff]
      %v679 = vld [vmem:[#allocation2 + $0xe1] sm:$0xff]
      %v680 = vld [vmem:[#allocation2 + $0xe9] sm:$0xff]
      %v681 = vld [vmem:[#allocation2 + $0xf1] sm:$0xff]
      %v682 = vld [vmem:[#allocation2 + $0xf9] sm:$0xff]
      %v683 = vld [vmem:[#allocation2 + $0x101] sm:$0xff]
      %v684 = vld [vmem:[#allocation2 + $0x109] sm:$0xff]
      %v685 = vld [vmem:[#allocation2 + $0x111] sm:$0xff]
      %v686 = vld [vmem:[#allocation2 + $0x119] sm:$0xff]
      %v687 = vld [vmem:[#allocation2 + $0x121] sm:$0xff]
      %v688 = vld [vmem:[#allocation2 + $0x129] sm:$0xff]
      %v689 = vpack.c.bf16 %v654, %v653
      %v690 = vpack.c.bf16 %v656, %v655
      %v691 = vpack.c.bf16 %v658, %v657
      %v692 = vpack.c.bf16 %v660, %v659
      %v693 = vpack.c.bf16 %v662, %v661
      %v694 = vpack.c.bf16 %v664, %v663
      %v695 = vpack.c.bf16 %v666, %v665
      %v696 = vpack.c.bf16 %v668, %v667
      %v697 = vpack.c.bf16 %v670, %v669
      %v698 = vpack.c.bf16 %v672, %v671
      %v699 = vpack.c.bf16 %v674, %v673
      %v700 = vpack.c.bf16 %v676, %v675
      %v701 = vpack.c.bf16 %v678, %v677
      %v702 = vpack.c.bf16 %v680, %v679
      %v703 = vpack.c.bf16 %v682, %v681
      %v704 = vpack.c.bf16 %v684, %v683
      %v705 = vpack.c.bf16 %v686, %v685
      %v706 = vpack.c.bf16 %v688, %v687
      %v707 = vld [vmem:[%s1] sm:$0xf]
      %v708 = vld [vmem:[%s1 + $0x4] sm:$0xf]
      %v709 = vld [vmem:[%s1 + $0x8] sm:$0xf]
      %v710 = vld [vmem:[%s1 + $0xc] sm:$0xf]
      %v711 = vld [vmem:[%s1 + $0x10] sm:$0xf]
      %v712 = vld [vmem:[%s1 + $0x14] sm:$0xf]
      %v713 = vld [vmem:[%s1 + $0x18] sm:$0xf]
      %v714 = vld [vmem:[%s1 + $0x1c] sm:$0xf]
      %v715 = vld [vmem:[%s1 + $0x20] sm:$0xf]
      %v716 = vld [vmem:[%s1 + $0x24] sm:$0xf]
      %v717 = vld [vmem:[%s1 + $0x28] sm:$0xf]
      %v718 = vld [vmem:[%s1 + $0x2c] sm:$0xf]
      %v719 = vld [vmem:[%s1 + $0x30] sm:$0xf]
      %v720 = vld [vmem:[%s1 + $0x34] sm:$0xf]
      %v721 = vld [vmem:[%s1 + $0x38] sm:$0xf]
      %v722 = vld [vmem:[%s1 + $0x3c] sm:$0xf]
      %v723 = vld [vmem:[#allocation2 + $0x12] sm:$0xff]
      %v724 = vld [vmem:[#allocation2 + $0x1a] sm:$0xff]
      %v725 = vld [vmem:[#allocation2 + $0x22] sm:$0xff]
      %v726 = vld [vmem:[#allocation2 + $0x2a] sm:$0xff]
      %v727 = vld [vmem:[#allocation2 + $0x32] sm:$0xff]
      %v728 = vld [vmem:[#allocation2 + $0x3a] sm:$0xff]
      %v729 = vld [vmem:[#allocation2 + $0x42] sm:$0xff]
      %v730 = vld [vmem:[#allocation2 + $0x4a] sm:$0xff]
      %v731 = vld [vmem:[#allocation2 + $0x52] sm:$0xff]
      %v732 = vld [vmem:[#allocation2 + $0x5a] sm:$0xff]
      %v733 = vld [vmem:[#allocation2 + $0x62] sm:$0xff]
      %v734 = vld [vmem:[#allocation2 + $0x6a] sm:$0xff]
      %v735 = vld [vmem:[#allocation2 + $0x72] sm:$0xff]
      %v736 = vld [vmem:[#allocation2 + $0x7a] sm:$0xff]
      %v737 = vld [vmem:[#allocation2 + $0x82] sm:$0xff]
      %v738 = vld [vmem:[#allocation2 + $0x8a] sm:$0xff]
      %v739 = vld [vmem:[#allocation2 + $0x92] sm:$0xff]
      %v740 = vld [vmem:[#allocation2 + $0x9a] sm:$0xff]
      %v741 = vld [vmem:[#allocation2 + $0xa2] sm:$0xff]
      %v742 = vld [vmem:[#allocation2 + $0xaa] sm:$0xff]
      %v743 = vld [vmem:[#allocation2 + $0xb2] sm:$0xff]
      %v744 = vld [vmem:[#allocation2 + $0xba] sm:$0xff]
      %v745 = vld [vmem:[#allocation2 + $0xc2] sm:$0xff]
      %v746 = vld [vmem:[#allocation2 + $0xca] sm:$0xff]
      %v747 = vld [vmem:[#allocation2 + $0xd2] sm:$0xff]
      %v748 = vld [vmem:[#allocation2 + $0xda] sm:$0xff]
      %v749 = vld [vmem:[#allocation2 + $0xe2] sm:$0xff]
      %v750 = vld [vmem:[#allocation2 + $0xea] sm:$0xff]
      %v751 = vld [vmem:[#allocation2 + $0xf2] sm:$0xff]
      %v752 = vld [vmem:[#allocation2 + $0xfa] sm:$0xff]
      %v753 = vld [vmem:[#allocation2 + $0x102] sm:$0xff]
      %v754 = vld [vmem:[#allocation2 + $0x10a] sm:$0xff]
      %v755 = vld [vmem:[#allocation2 + $0x112] sm:$0xff]
      %v756 = vld [vmem:[#allocation2 + $0x11a] sm:$0xff]
      %v757 = vld [vmem:[#allocation2 + $0x122] sm:$0xff]
      %v758 = vld [vmem:[#allocation2 + $0x12a] sm:$0xff]
      %v759 = vpack.c.bf16 %v724, %v723
      %v760 = vpack.c.bf16 %v726, %v725
      %v761 = vpack.c.bf16 %v728, %v727
      %v762 = vpack.c.bf16 %v730, %v729
      %v763 = vpack.c.bf16 %v732, %v731
      %v764 = vpack.c.bf16 %v734, %v733
      %v765 = vpack.c.bf16 %v736, %v735
      %v766 = vpack.c.bf16 %v738, %v737
      %v767 = vpack.c.bf16 %v740, %v739
      %v768 = vpack.c.bf16 %v742, %v741
      %v769 = vpack.c.bf16 %v744, %v743
      %v770 = vpack.c.bf16 %v746, %v745
      %v771 = vpack.c.bf16 %v748, %v747
      %v772 = vpack.c.bf16 %v750, %v749
      %v773 = vpack.c.bf16 %v752, %v751
      %v774 = vpack.c.bf16 %v754, %v753
      %v775 = vpack.c.bf16 %v756, %v755
      %v776 = vpack.c.bf16 %v758, %v757
      %s777 = scalar_lea.vmem %s1, 64
      %v778 = vld [vmem:[%s777] sm:$0xf]
      %v779 = vld [vmem:[%s777 + $0x4] sm:$0xf]
      %v780 = vld [vmem:[%s777 + $0x8] sm:$0xf]
      %v781 = vld [vmem:[%s777 + $0xc] sm:$0xf]
      %v782 = vld [vmem:[%s777 + $0x10] sm:$0xf]
      %v783 = vld [vmem:[%s777 + $0x14] sm:$0xf]
      %v784 = vld [vmem:[%s777 + $0x18] sm:$0xf]
      %v785 = vld [vmem:[%s777 + $0x1c] sm:$0xf]
      %v786 = vld [vmem:[%s777 + $0x20] sm:$0xf]
      %v787 = vld [vmem:[%s777 + $0x24] sm:$0xf]
      %v788 = vld [vmem:[%s777 + $0x28] sm:$0xf]
      %v789 = vld [vmem:[%s777 + $0x2c] sm:$0xf]
      %v790 = vld [vmem:[%s777 + $0x30] sm:$0xf]
      %v791 = vld [vmem:[%s777 + $0x34] sm:$0xf]
      %v792 = vld [vmem:[%s777 + $0x38] sm:$0xf]
      %v793 = vld [vmem:[%s777 + $0x3c] sm:$0xf]
      %v810 = vunpack.c.l.b16 %v778
      %v811 = vunpack.c.l.b16 %v779
      %v812 = vunpack.c.l.b16 %v780
      %v813 = vunpack.c.l.b16 %v781
      %v814 = vunpack.c.l.b16 %v782
      %v815 = vunpack.c.l.b16 %v783
      %v816 = vunpack.c.l.b16 %v784
      %v817 = vunpack.c.l.b16 %v785
      %v818 = vunpack.c.l.b16 %v786
      %v819 = vunpack.c.l.b16 %v787
      %v820 = vunpack.c.l.b16 %v788
      %v821 = vunpack.c.l.b16 %v789
      %v822 = vunpack.c.l.b16 %v790
      %v823 = vunpack.c.l.b16 %v791
      %v824 = vunpack.c.l.b16 %v792
      %v825 = vunpack.c.l.b16 %v793
      %v826 = vpack.c.b16 %v811, %v810
      %v827 = vpack.c.b16 %v813, %v812
      %v828 = vpack.c.b16 %v815, %v814
      %v829 = vpack.c.b16 %v817, %v816
      %v830 = vpack.c.b16 %v819, %v818
      %v831 = vpack.c.b16 %v821, %v820
      %v832 = vpack.c.b16 %v823, %v822
      %v833 = vpack.c.b16 %v825, %v824
      %842 = vmatprep.subr.bf16.mxu0 0
      %843 = vmatpush1.bf16.msra.mxu0 %v826
      %844 = vmatprep.subr.bf16.mxu0 0
      %845 = vmatpush1.bf16.msra.mxu0 %v827
      %846 = vmatprep.subr.bf16.mxu0 0
      %847 = vmatpush1.bf16.msra.mxu0 %v828
      %848 = vmatprep.subr.bf16.mxu0 0
      %849 = vmatpush1.bf16.msra.mxu0 %v829
      %850 = vmatprep.subr.bf16.mxu0 0
      %851 = vmatpush1.bf16.msra.mxu0 %v830
      %852 = vmatprep.subr.bf16.mxu0 0
      %853 = vmatpush1.bf16.msra.mxu0 %v831
      %854 = vmatprep.subr.bf16.mxu0 0
      %855 = vmatpush1.bf16.msra.mxu0 %v832
      %856 = vmatprep.subr.bf16.mxu0 0
      %857 = vmatpush1.bf16.msra.mxu0 %v833
      %858 = vmatprep.subr.bf16.mxu0 0
      %859 = vmatpush1.bf16.msra.mxu0 0
      %860 = vmatprep.subr.bf16.mxu0 0
      %861 = vmatpush1.bf16.msra.mxu0 0
      %862 = vmatprep.subr.bf16.mxu0 0
      %863 = vmatpush1.bf16.msra.mxu0 0
      %864 = vmatprep.subr.bf16.mxu0 0
      %865 = vmatpush1.bf16.msra.mxu0 0
      %866 = vmatprep.subr.bf16.mxu0 0
      %867 = vmatpush1.bf16.msra.mxu0 0
      %868 = vmatprep.subr.bf16.mxu0 0
      %869 = vmatpush1.bf16.msra.mxu0 0
      %870 = vmatprep.subr.bf16.mxu0 0
      %871 = vmatpush1.bf16.msra.mxu0 0
      %872 = vmatprep.subr.bf16.mxu0 0
      %873 = vmatpush1.bf16.msra.mxu0 0
      %874 = vmatprep.mubr.bf16.mxu0 0
      %875 = vmatmul.mubr.bf16.gmra.mrb[0].mxu0 %v759
      %v876 = vpop.f32.mrb[0].mxu0
      %v877 = vadd.f32 0.0, %v876
      %v878 = vpop.f32.mrb[0].mxu0
      %v879 = vpop.f32.mrb[0].mxu0
      %v880 = vadd.f32 0.0, %v879
      %v881 = vpop.f32.mrb[0].mxu0
      %882 = vmatprep.mubr.bf16.mxu0 0
      %883 = vmatmul.mubr.bf16.gmra.mrb[0].mxu0 %v760
      %v884 = vpop.f32.mrb[0].mxu0
      %v885 = vadd.f32 0.0, %v884
      %v886 = vpop.f32.mrb[0].mxu0
      %v887 = vpop.f32.mrb[0].mxu0
      %v888 = vadd.f32 0.0, %v887
      %v889 = vpop.f32.mrb[0].mxu0
      %890 = vmatprep.mubr.bf16.mxu0 0
      %891 = vmatmul.mubr.bf16.gmra.mrb[0].mxu0 %v761
      %v892 = vpop.f32.mrb[0].mxu0
      %v893 = vadd.f32 0.0, %v892
      %v894 = vpop.f32.mrb[0].mxu0
      %v895 = vpop.f32.mrb[0].mxu0
      %v896 = vadd.f32 0.0, %v895
      %v897 = vpop.f32.mrb[0].mxu0
      %898 = vmatprep.mubr.bf16.mxu0 0
      %899 = vmatmul.mubr.bf16.gmra.mrb[0].mxu0 %v762
      %v900 = vpop.f32.mrb[0].mxu0
      %v901 = vadd.f32 0.0, %v900
      %v902 = vpop.f32.mrb[0].mxu0
      %v903 = vpop.f32.mrb[0].mxu0
      %v904 = vadd.f32 0.0, %v903
      %v905 = vpop.f32.mrb[0].mxu0
      %906 = vmatprep.mubr.bf16.mxu0 0
      %907 = vmatmul.mubr.bf16.gmra.mrb[0].mxu0 %v763
      %v908 = vpop.f32.mrb[0].mxu0
      %v909 = vadd.f32 0.0, %v908
      %v910 = vpop.f32.mrb[0].mxu0
      %v911 = vpop.f32.mrb[0].mxu0
      %v912 = vadd.f32 0.0, %v911
      %v913 = vpop.f32.mrb[0].mxu0
      %914 = vmatprep.mubr.bf16.mxu0 0
      %915 = vmatmul.mubr.bf16.gmra.mrb[0].mxu0 %v764
      %v916 = vpop.f32.mrb[0].mxu0
      %v917 = vadd.f32 0.0, %v916
      %v918 = vpop.f32.mrb[0].mxu0
      %v919 = vpop.f32.mrb[0].mxu0
      %v920 = vadd.f32 0.0, %v919
      %v921 = vpop.f32.mrb[0].mxu0
      %922 = vmatprep.mubr.bf16.mxu0 0
      %923 = vmatmul.mubr.bf16.gmra.mrb[0].mxu0 %v765
      %v924 = vpop.f32.mrb[0].mxu0
      %v925 = vadd.f32 0.0, %v924
      %v926 = vpop.f32.mrb[0].mxu0
      %v927 = vpop.f32.mrb[0].mxu0
      %v928 = vadd.f32 0.0, %v927
      %v929 = vpop.f32.mrb[0].mxu0
      %930 = vmatprep.mubr.bf16.mxu0 0
      %931 = vmatmul.mubr.bf16.gmra.mrb[0].mxu0 %v766
      %v932 = vpop.f32.mrb[0].mxu0
      %v933 = vadd.f32 0.0, %v932
      %v934 = vpop.f32.mrb[0].mxu0
      %v935 = vpop.f32.mrb[0].mxu0
      %v936 = vadd.f32 0.0, %v935
      %v937 = vpop.f32.mrb[0].mxu0
      %938 = vmatprep.mubr.bf16.mxu0 0
      %939 = vmatmul.mubr.bf16.gmra.mrb[0].mxu0 %v767
      %v940 = vpop.f32.mrb[0].mxu0
      %v941 = vadd.f32 0.0, %v940
      %v942 = vpop.f32.mrb[0].mxu0
      %v943 = vpop.f32.mrb[0].mxu0
      %v944 = vadd.f32 0.0, %v943
      %v945 = vpop.f32.mrb[0].mxu0
      %946 = vmatprep.mubr.bf16.mxu0 0
      %947 = vmatmul.mubr.bf16.gmra.mrb[0].mxu0 %v768
      %v948 = vpop.f32.mrb[0].mxu0
      %v949 = vadd.f32 0.0, %v948
      %v950 = vpop.f32.mrb[0].mxu0
      %v951 = vpop.f32.mrb[0].mxu0
      %v952 = vadd.f32 0.0, %v951
      %v953 = vpop.f32.mrb[0].mxu0
      %954 = vmatprep.mubr.bf16.mxu0 0
      %955 = vmatmul.mubr.bf16.gmra.mrb[0].mxu0 %v769
      %v956 = vpop.f32.mrb[0].mxu0
      %v957 = vadd.f32 0.0, %v956
      %v958 = vpop.f32.mrb[0].mxu0
      %v959 = vpop.f32.mrb[0].mxu0
      %v960 = vadd.f32 0.0, %v959
      %v961 = vpop.f32.mrb[0].mxu0
      %962 = vmatprep.mubr.bf16.mxu0 0
      %963 = vmatmul.mubr.bf16.gmra.mrb[0].mxu0 %v770
      %v964 = vpop.f32.mrb[0].mxu0
      %v965 = vadd.f32 0.0, %v964
      %v966 = vpop.f32.mrb[0].mxu0
      %v967 = vpop.f32.mrb[0].mxu0
      %v968 = vadd.f32 0.0, %v967
      %v969 = vpop.f32.mrb[0].mxu0
      %970 = vmatprep.mubr.bf16.mxu0 0
      %971 = vmatmul.mubr.bf16.gmra.mrb[0].mxu0 %v771
      %v972 = vpop.f32.mrb[0].mxu0
      %v973 = vadd.f32 0.0, %v972
      %v974 = vpop.f32.mrb[0].mxu0
      %v975 = vpop.f32.mrb[0].mxu0
      %v976 = vadd.f32 0.0, %v975
      %v977 = vpop.f32.mrb[0].mxu0
      %978 = vmatprep.mubr.bf16.mxu0 0
      %979 = vmatmul.mubr.bf16.gmra.mrb[0].mxu0 %v772
      %v980 = vpop.f32.mrb[0].mxu0
      %v981 = vadd.f32 0.0, %v980
      %v982 = vpop.f32.mrb[0].mxu0
      %v983 = vpop.f32.mrb[0].mxu0
      %v984 = vadd.f32 0.0, %v983
      %v985 = vpop.f32.mrb[0].mxu0
      %986 = vmatprep.mubr.bf16.mxu0 0
      %987 = vmatmul.mubr.bf16.gmra.mrb[0].mxu0 %v773
      %v988 = vpop.f32.mrb[0].mxu0
      %v989 = vadd.f32 0.0, %v988
      %v990 = vpop.f32.mrb[0].mxu0
      %v991 = vpop.f32.mrb[0].mxu0
      %v992 = vadd.f32 0.0, %v991
      %v993 = vpop.f32.mrb[0].mxu0
      %994 = vmatprep.mubr.bf16.mxu0 0
      %995 = vmatmul.mubr.bf16.gmra.mrb[0].mxu0 %v774
      %v996 = vpop.f32.mrb[0].mxu0
      %v997 = vadd.f32 0.0, %v996
      %v998 = vpop.f32.mrb[0].mxu0
      %v999 = vpop.f32.mrb[0].mxu0
      %v1000 = vadd.f32 0.0, %v999
      %v1001 = vpop.f32.mrb[0].mxu0
      %1002 = vmatprep.mubr.bf16.mxu0 0
      %1003 = vmatmul.mubr.bf16.gmra.mrb[0].mxu0 %v775
      %v1004 = vpop.f32.mrb[0].mxu0
      %v1005 = vadd.f32 0.0, %v1004
      %v1006 = vpop.f32.mrb[0].mxu0
      %v1007 = vpop.f32.mrb[0].mxu0
      %v1008 = vadd.f32 0.0, %v1007
      %v1009 = vpop.f32.mrb[0].mxu0
      %1010 = vmatprep.mubr.bf16.mxu0 0
      %1011 = vmatmul.mubr.bf16.gmra.mrb[0].mxu0 %v776
      %v1012 = vpop.f32.mrb[0].mxu0
      %v1013 = vadd.f32 0.0, %v1012
      %v1014 = vpop.f32.mrb[0].mxu0
      %v1015 = vpop.f32.mrb[0].mxu0
      %v1016 = vadd.f32 0.0, %v1015
      %v1017 = vpop.f32.mrb[0].mxu0
      %1018 = vdwg.mxu0
      %v1035 = vunpack.c.l.b16 %v707
      %v1036 = vunpack.c.l.b16 %v708
      %v1037 = vunpack.c.l.b16 %v709
      %v1038 = vunpack.c.l.b16 %v710
      %v1039 = vunpack.c.l.b16 %v711
      %v1040 = vunpack.c.l.b16 %v712
      %v1041 = vunpack.c.l.b16 %v713
      %v1042 = vunpack.c.l.b16 %v714
      %v1043 = vunpack.c.l.b16 %v715
      %v1044 = vunpack.c.l.b16 %v716
      %v1045 = vunpack.c.l.b16 %v717
      %v1046 = vunpack.c.l.b16 %v718
      %v1047 = vunpack.c.l.b16 %v719
      %v1048 = vunpack.c.l.b16 %v720
      %v1049 = vunpack.c.l.b16 %v721
      %v1050 = vunpack.c.l.b16 %v722
      %v1051 = vpack.c.b16 %v1036, %v1035
      %v1052 = vpack.c.b16 %v1038, %v1037
      %v1053 = vpack.c.b16 %v1040, %v1039
      %v1054 = vpack.c.b16 %v1042, %v1041
      %v1055 = vpack.c.b16 %v1044, %v1043
      %v1056 = vpack.c.b16 %v1046, %v1045
      %v1057 = vpack.c.b16 %v1048, %v1047
      %v1058 = vpack.c.b16 %v1050, %v1049
      %1067 = vmatprep.subr.bf16.mxu0 0
      %1068 = vmatpush1.bf16.msra.mxu0 %v1051
      %1069 = vmatprep.subr.bf16.mxu0 0
      %1070 = vmatpush1.bf16.msra.mxu0 %v1052
      %1071 = vmatprep.subr.bf16.mxu0 0
      %1072 = vmatpush1.bf16.msra.mxu0 %v1053
      %1073 = vmatprep.subr.bf16.mxu0 0
      %1074 = vmatpush1.bf16.msra.mxu0 %v1054
      %1075 = vmatprep.subr.bf16.mxu0 0
      %1076 = vmatpush1.bf16.msra.mxu0 %v1055
      %1077 = vmatprep.subr.bf16.mxu0 0
      %1078 = vmatpush1.bf16.msra.mxu0 %v1056
      %1079 = vmatprep.subr.bf16.mxu0 0
      %1080 = vmatpush1.bf16.msra.mxu0 %v1057
      %1081 = vmatprep.subr.bf16.mxu0 0
      %1082 = vmatpush1.bf16.msra.mxu0 %v1058
      %1083 = vmatprep.subr.bf16.mxu0 0
      %1084 = vmatpush1.bf16.msra.mxu0 0
      %1085 = vmatprep.subr.bf16.mxu0 0
      %1086 = vmatpush1.bf16.msra.mxu0 0
      %1087 = vmatprep.subr.bf16.mxu0 0
      %1088 = vmatpush1.bf16.msra.mxu0 0
      %1089 = vmatprep.subr.bf16.mxu0 0
      %1090 = vmatpush1.bf16.msra.mxu0 0
      %1091 = vmatprep.subr.bf16.mxu0 0
      %1092 = vmatpush1.bf16.msra.mxu0 0
      %1093 = vmatprep.subr.bf16.mxu0 0
      %1094 = vmatpush1.bf16.msra.mxu0 0
      %1095 = vmatprep.subr.bf16.mxu0 0
      %1096 = vmatpush1.bf16.msra.mxu0 0
      %1097 = vmatprep.subr.bf16.mxu0 0
      %1098 = vmatpush1.bf16.msra.mxu0 0
      %1099 = vmatprep.mubr.bf16.mxu0 0
      %1100 = vmatmul.mubr.bf16.gmra.mrb[0].mxu0 %v689
      %v1101 = vpop.f32.mrb[0].mxu0
      %v1102 = vadd.f32 %v877, %v1101
      %v1103 = vpop.f32.mrb[0].mxu0
      %v1104 = vpop.f32.mrb[0].mxu0
      %v1105 = vadd.f32 %v880, %v1104
      %v1106 = vpop.f32.mrb[0].mxu0
      %1107 = vmatprep.mubr.bf16.mxu0 0
      %1108 = vmatmul.mubr.bf16.gmra.mrb[0].mxu0 %v690
      %v1109 = vpop.f32.mrb[0].mxu0
      %v1110 = vadd.f32 %v885, %v1109
      %v1111 = vpop.f32.mrb[0].mxu0
      %v1112 = vpop.f32.mrb[0].mxu0
      %v1113 = vadd.f32 %v888, %v1112
      %v1114 = vpop.f32.mrb[0].mxu0
      %1115 = vmatprep.mubr.bf16.mxu0 0
      %1116 = vmatmul.mubr.bf16.gmra.mrb[0].mxu0 %v691
      %v1117 = vpop.f32.mrb[0].mxu0
      %v1118 = vadd.f32 %v893, %v1117
      %v1119 = vpop.f32.mrb[0].mxu0
      %v1120 = vpop.f32.mrb[0].mxu0
      %v1121 = vadd.f32 %v896, %v1120
      %v1122 = vpop.f32.mrb[0].mxu0
      %1123 = vmatprep.mubr.bf16.mxu0 0
      %1124 = vmatmul.mubr.bf16.gmra.mrb[0].mxu0 %v692
      %v1125 = vpop.f32.mrb[0].mxu0
      %v1126 = vadd.f32 %v901, %v1125
      %v1127 = vpop.f32.mrb[0].mxu0
      %v1128 = vpop.f32.mrb[0].mxu0
      %v1129 = vadd.f32 %v904, %v1128
      %v1130 = vpop.f32.mrb[0].mxu0
      %1131 = vmatprep.mubr.bf16.mxu0 0
      %1132 = vmatmul.mubr.bf16.gmra.mrb[0].mxu0 %v693
      %v1133 = vpop.f32.mrb[0].mxu0
      %v1134 = vadd.f32 %v909, %v1133
      %v1135 = vpop.f32.mrb[0].mxu0
      %v1136 = vpop.f32.mrb[0].mxu0
      %v1137 = vadd.f32 %v912, %v1136
      %v1138 = vpop.f32.mrb[0].mxu0
      %1139 = vmatprep.mubr.bf16.mxu0 0
      %1140 = vmatmul.mubr.bf16.gmra.mrb[0].mxu0 %v694
      %v1141 = vpop.f32.mrb[0].mxu0
      %v1142 = vadd.f32 %v917, %v1141
      %v1143 = vpop.f32.mrb[0].mxu0
      %v1144 = vpop.f32.mrb[0].mxu0
      %v1145 = vadd.f32 %v920, %v1144
      %v1146 = vpop.f32.mrb[0].mxu0
      %1147 = vmatprep.mubr.bf16.mxu0 0
      %1148 = vmatmul.mubr.bf16.gmra.mrb[0].mxu0 %v695
      %v1149 = vpop.f32.mrb[0].mxu0
      %v1150 = vadd.f32 %v925, %v1149
      %v1151 = vpop.f32.mrb[0].mxu0
      %v1152 = vpop.f32.mrb[0].mxu0
      %v1153 = vadd.f32 %v928, %v1152
      %v1154 = vpop.f32.mrb[0].mxu0
      %1155 = vmatprep.mubr.bf16.mxu0 0
      %1156 = vmatmul.mubr.bf16.gmra.mrb[0].mxu0 %v696
      %v1157 = vpop.f32.mrb[0].mxu0
      %v1158 = vadd.f32 %v933, %v1157
      %v1159 = vpop.f32.mrb[0].mxu0
      %v1160 = vpop.f32.mrb[0].mxu0
      %v1161 = vadd.f32 %v936, %v1160
      %v1162 = vpop.f32.mrb[0].mxu0
      %1163 = vmatprep.mubr.bf16.mxu0 0
      %1164 = vmatmul.mubr.bf16.gmra.mrb[0].mxu0 %v697
      %v1165 = vpop.f32.mrb[0].mxu0
      %v1166 = vadd.f32 %v941, %v1165
      %v1167 = vpop.f32.mrb[0].mxu0
      %v1168 = vpop.f32.mrb[0].mxu0
      %v1169 = vadd.f32 %v944, %v1168
      %v1170 = vpop.f32.mrb[0].mxu0
      %1171 = vmatprep.mubr.bf16.mxu0 0
      %1172 = vmatmul.mubr.bf16.gmra.mrb[0].mxu0 %v698
      %v1173 = vpop.f32.mrb[0].mxu0
      %v1174 = vadd.f32 %v949, %v1173
      %v1175 = vpop.f32.mrb[0].mxu0
      %v1176 = vpop.f32.mrb[0].mxu0
      %v1177 = vadd.f32 %v952, %v1176
      %v1178 = vpop.f32.mrb[0].mxu0
      %1179 = vmatprep.mubr.bf16.mxu0 0
      %1180 = vmatmul.mubr.bf16.gmra.mrb[0].mxu0 %v699
      %v1181 = vpop.f32.mrb[0].mxu0
      %v1182 = vadd.f32 %v957, %v1181
      %v1183 = vpop.f32.mrb[0].mxu0
      %v1184 = vpop.f32.mrb[0].mxu0
      %v1185 = vadd.f32 %v960, %v1184
      %v1186 = vpop.f32.mrb[0].mxu0
      %1187 = vmatprep.mubr.bf16.mxu0 0
      %1188 = vmatmul.mubr.bf16.gmra.mrb[0].mxu0 %v700
      %v1189 = vpop.f32.mrb[0].mxu0
      %v1190 = vadd.f32 %v965, %v1189
      %v1191 = vpop.f32.mrb[0].mxu0
      %v1192 = vpop.f32.mrb[0].mxu0
      %v1193 = vadd.f32 %v968, %v1192
      %v1194 = vpop.f32.mrb[0].mxu0
      %1195 = vmatprep.mubr.bf16.mxu0 0
      %1196 = vmatmul.mubr.bf16.gmra.mrb[0].mxu0 %v701
      %v1197 = vpop.f32.mrb[0].mxu0
      %v1198 = vadd.f32 %v973, %v1197
      %v1199 = vpop.f32.mrb[0].mxu0
      %v1200 = vpop.f32.mrb[0].mxu0
      %v1201 = vadd.f32 %v976, %v1200
      %v1202 = vpop.f32.mrb[0].mxu0
      %1203 = vmatprep.mubr.bf16.mxu0 0
      %1204 = vmatmul.mubr.bf16.gmra.mrb[0].mxu0 %v702
      %v1205 = vpop.f32.mrb[0].mxu0
      %v1206 = vadd.f32 %v981, %v1205
      %v1207 = vpop.f32.mrb[0].mxu0
      %v1208 = vpop.f32.mrb[0].mxu0
      %v1209 = vadd.f32 %v984, %v1208
      %v1210 = vpop.f32.mrb[0].mxu0
      %1211 = vmatprep.mubr.bf16.mxu0 0
      %1212 = vmatmul.mubr.bf16.gmra.mrb[0].mxu0 %v703
      %v1213 = vpop.f32.mrb[0].mxu0
      %v1214 = vadd.f32 %v989, %v1213
      %v1215 = vpop.f32.mrb[0].mxu0
      %v1216 = vpop.f32.mrb[0].mxu0
      %v1217 = vadd.f32 %v992, %v1216
      %v1218 = vpop.f32.mrb[0].mxu0
      %1219 = vmatprep.mubr.bf16.mxu0 0
      %1220 = vmatmul.mubr.bf16.gmra.mrb[0].mxu0 %v704
      %v1221 = vpop.f32.mrb[0].mxu0
      %v1222 = vadd.f32 %v997, %v1221
      %v1223 = vpop.f32.mrb[0].mxu0
      %v1224 = vpop.f32.mrb[0].mxu0
      %v1225 = vadd.f32 %v1000, %v1224
      %v1226 = vpop.f32.mrb[0].mxu0
      %1227 = vmatprep.mubr.bf16.mxu0 0
      %1228 = vmatmul.mubr.bf16.gmra.mrb[0].mxu0 %v705
      %v1229 = vpop.f32.mrb[0].mxu0
      %v1230 = vadd.f32 %v1005, %v1229
      %v1231 = vpop.f32.mrb[0].mxu0
      %v1232 = vpop.f32.mrb[0].mxu0
      %v1233 = vadd.f32 %v1008, %v1232
      %v1234 = vpop.f32.mrb[0].mxu0
      %1235 = vmatprep.mubr.bf16.mxu0 0
      %1236 = vmatmul.mubr.bf16.gmra.mrb[0].mxu0 %v706
      %v1237 = vpop.f32.mrb[0].mxu0
      %v1238 = vadd.f32 %v1013, %v1237
      %v1239 = vpop.f32.mrb[0].mxu0
      %v1240 = vpop.f32.mrb[0].mxu0
      %v1241 = vadd.f32 %v1016, %v1240
      %v1242 = vpop.f32.mrb[0].mxu0
      %1243 = vdwg.mxu0
      %v1244 = vld [vmem:[#allocation2 + $0x13] sm:$0xff]
      %v1245 = vld [vmem:[#allocation2 + $0x1b] sm:$0xff]
      %v1246 = vld [vmem:[#allocation2 + $0x23] sm:$0xff]
      %v1247 = vld [vmem:[#allocation2 + $0x2b] sm:$0xff]
      %v1248 = vld [vmem:[#allocation2 + $0x33] sm:$0xff]
      %v1249 = vld [vmem:[#allocation2 + $0x3b] sm:$0xff]
      %v1250 = vld [vmem:[#allocation2 + $0x43] sm:$0xff]
      %v1251 = vld [vmem:[#allocation2 + $0x4b] sm:$0xff]
      %v1252 = vld [vmem:[#allocation2 + $0x53] sm:$0xff]
      %v1253 = vld [vmem:[#allocation2 + $0x5b] sm:$0xff]
      %v1254 = vld [vmem:[#allocation2 + $0x63] sm:$0xff]
      %v1255 = vld [vmem:[#allocation2 + $0x6b] sm:$0xff]
      %v1256 = vld [vmem:[#allocation2 + $0x73] sm:$0xff]
      %v1257 = vld [vmem:[#allocation2 + $0x7b] sm:$0xff]
      %v1258 = vld [vmem:[#allocation2 + $0x83] sm:$0xff]
      %v1259 = vld [vmem:[#allocation2 + $0x8b] sm:$0xff]
      %v1260 = vld [vmem:[#allocation2 + $0x93] sm:$0xff]
      %v1261 = vld [vmem:[#allocation2 + $0x9b] sm:$0xff]
      %v1262 = vld [vmem:[#allocation2 + $0xa3] sm:$0xff]
      %v1263 = vld [vmem:[#allocation2 + $0xab] sm:$0xff]
      %v1264 = vld [vmem:[#allocation2 + $0xb3] sm:$0xff]
      %v1265 = vld [vmem:[#allocation2 + $0xbb] sm:$0xff]
      %v1266 = vld [vmem:[#allocation2 + $0xc3] sm:$0xff]
      %v1267 = vld [vmem:[#allocation2 + $0xcb] sm:$0xff]
      %v1268 = vld [vmem:[#allocation2 + $0xd3] sm:$0xff]
      %v1269 = vld [vmem:[#allocation2 + $0xdb] sm:$0xff]
      %v1270 = vld [vmem:[#allocation2 + $0xe3] sm:$0xff]
      %v1271 = vld [vmem:[#allocation2 + $0xeb] sm:$0xff]
      %v1272 = vld [vmem:[#allocation2 + $0xf3] sm:$0xff]
      %v1273 = vld [vmem:[#allocation2 + $0xfb] sm:$0xff]
      %v1274 = vld [vmem:[#allocation2 + $0x103] sm:$0xff]
      %v1275 = vld [vmem:[#allocation2 + $0x10b] sm:$0xff]
      %v1276 = vld [vmem:[#allocation2 + $0x113] sm:$0xff]
      %v1277 = vld [vmem:[#allocation2 + $0x11b] sm:$0xff]
      %v1278 = vld [vmem:[#allocation2 + $0x123] sm:$0xff]
      %v1279 = vld [vmem:[#allocation2 + $0x12b] sm:$0xff]
      %v1280 = vpack.c.bf16 %v1245, %v1244
      %v1281 = vpack.c.bf16 %v1247, %v1246
      %v1282 = vpack.c.bf16 %v1249, %v1248
      %v1283 = vpack.c.bf16 %v1251, %v1250
      %v1284 = vpack.c.bf16 %v1253, %v1252
      %v1285 = vpack.c.bf16 %v1255, %v1254
      %v1286 = vpack.c.bf16 %v1257, %v1256
      %v1287 = vpack.c.bf16 %v1259, %v1258
      %v1288 = vpack.c.bf16 %v1261, %v1260
      %v1289 = vpack.c.bf16 %v1263, %v1262
      %v1290 = vpack.c.bf16 %v1265, %v1264
      %v1291 = vpack.c.bf16 %v1267, %v1266
      %v1292 = vpack.c.bf16 %v1269, %v1268
      %v1293 = vpack.c.bf16 %v1271, %v1270
      %v1294 = vpack.c.bf16 %v1273, %v1272
      %v1295 = vpack.c.bf16 %v1275, %v1274
      %v1296 = vpack.c.bf16 %v1277, %v1276
      %v1297 = vpack.c.bf16 %v1279, %v1278
      %s1298 = scalar_lea.vmem %s1, 128
      %v1299 = vld [vmem:[%s1298] sm:$0xf]
      %v1300 = vld [vmem:[%s1298 + $0x4] sm:$0xf]
      %v1301 = vld [vmem:[%s1298 + $0x8] sm:$0xf]
      %v1302 = vld [vmem:[%s1298 + $0xc] sm:$0xf]
      %v1303 = vld [vmem:[%s1298 + $0x10] sm:$0xf]
      %v1304 = vld [vmem:[%s1298 + $0x14] sm:$0xf]
      %v1305 = vld [vmem:[%s1298 + $0x18] sm:$0xf]
      %v1306 = vld [vmem:[%s1298 + $0x1c] sm:$0xf]
      %v1307 = vld [vmem:[%s1298 + $0x20] sm:$0xf]
      %v1308 = vld [vmem:[%s1298 + $0x24] sm:$0xf]
      %v1309 = vld [vmem:[%s1298 + $0x28] sm:$0xf]
      %v1310 = vld [vmem:[%s1298 + $0x2c] sm:$0xf]
      %v1311 = vld [vmem:[%s1298 + $0x30] sm:$0xf]
      %v1312 = vld [vmem:[%s1298 + $0x34] sm:$0xf]
      %v1313 = vld [vmem:[%s1298 + $0x38] sm:$0xf]
      %v1314 = vld [vmem:[%s1298 + $0x3c] sm:$0xf]
      %v1331 = vunpack.c.l.b16 %v1299
      %v1332 = vunpack.c.l.b16 %v1300
      %v1333 = vunpack.c.l.b16 %v1301
      %v1334 = vunpack.c.l.b16 %v1302
      %v1335 = vunpack.c.l.b16 %v1303
      %v1336 = vunpack.c.l.b16 %v1304
      %v1337 = vunpack.c.l.b16 %v1305
      %v1338 = vunpack.c.l.b16 %v1306
      %v1339 = vunpack.c.l.b16 %v1307
      %v1340 = vunpack.c.l.b16 %v1308
      %v1341 = vunpack.c.l.b16 %v1309
      %v1342 = vunpack.c.l.b16 %v1310
      %v1343 = vunpack.c.l.b16 %v1311
      %v1344 = vunpack.c.l.b16 %v1312
      %v1345 = vunpack.c.l.b16 %v1313
      %v1346 = vunpack.c.l.b16 %v1314
      %v1347 = vpack.c.b16 %v1332, %v1331
      %v1348 = vpack.c.b16 %v1334, %v1333
      %v1349 = vpack.c.b16 %v1336, %v1335
      %v1350 = vpack.c.b16 %v1338, %v1337
      %v1351 = vpack.c.b16 %v1340, %v1339
      %v1352 = vpack.c.b16 %v1342, %v1341
      %v1353 = vpack.c.b16 %v1344, %v1343
      %v1354 = vpack.c.b16 %v1346, %v1345
      %1363 = vmatprep.subr.bf16.mxu0 0
      %1364 = vmatpush1.bf16.msra.mxu0 %v1347
      %1365 = vmatprep.subr.bf16.mxu0 0
      %1366 = vmatpush1.bf16.msra.mxu0 %v1348
      %1367 = vmatprep.subr.bf16.mxu0 0
      %1368 = vmatpush1.bf16.msra.mxu0 %v1349
      %1369 = vmatprep.subr.bf16.mxu0 0
      %1370 = vmatpush1.bf16.msra.mxu0 %v1350
      %1371 = vmatprep.subr.bf16.mxu0 0
      %1372 = vmatpush1.bf16.msra.mxu0 %v1351
      %1373 = vmatprep.subr.bf16.mxu0 0
      %1374 = vmatpush1.bf16.msra.mxu0 %v1352
      %1375 = vmatprep.subr.bf16.mxu0 0
      %1376 = vmatpush1.bf16.msra.mxu0 %v1353
      %1377 = vmatprep.subr.bf16.mxu0 0
      %1378 = vmatpush1.bf16.msra.mxu0 %v1354
      %1379 = vmatprep.subr.bf16.mxu0 0
      %1380 = vmatpush1.bf16.msra.mxu0 0
      %1381 = vmatprep.subr.bf16.mxu0 0
      %1382 = vmatpush1.bf16.msra.mxu0 0
      %1383 = vmatprep.subr.bf16.mxu0 0
      %1384 = vmatpush1.bf16.msra.mxu0 0
      %1385 = vmatprep.subr.bf16.mxu0 0
      %1386 = vmatpush1.bf16.msra.mxu0 0
      %1387 = vmatprep.subr.bf16.mxu0 0
      %1388 = vmatpush1.bf16.msra.mxu0 0
      %1389 = vmatprep.subr.bf16.mxu0 0
      %1390 = vmatpush1.bf16.msra.mxu0 0
      %1391 = vmatprep.subr.bf16.mxu0 0
      %1392 = vmatpush1.bf16.msra.mxu0 0
      %1393 = vmatprep.subr.bf16.mxu0 0
      %1394 = vmatpush1.bf16.msra.mxu0 0
      %1395 = vmatprep.mubr.bf16.mxu0 0
      %1396 = vmatmul.mubr.bf16.gmra.mrb[0].mxu0 %v1280
      %v1397 = vpop.f32.mrb[0].mxu0
      %v1398 = vadd.f32 0.0, %v1397
      %v1399 = vpop.f32.mrb[0].mxu0
      %v1400 = vpop.f32.mrb[0].mxu0
      %v1401 = vadd.f32 0.0, %v1400
      %v1402 = vpop.f32.mrb[0].mxu0
      %1403 = vmatprep.mubr.bf16.mxu0 0
      %1404 = vmatmul.mubr.bf16.gmra.mrb[0].mxu0 %v1281
      %v1405 = vpop.f32.mrb[0].mxu0
      %v1406 = vadd.f32 0.0, %v1405
      %v1407 = vpop.f32.mrb[0].mxu0
      %v1408 = vpop.f32.mrb[0].mxu0
      %v1409 = vadd.f32 0.0, %v1408
      %v1410 = vpop.f32.mrb[0].mxu0
      %1411 = vmatprep.mubr.bf16.mxu0 0
      %1412 = vmatmul.mubr.bf16.gmra.mrb[0].mxu0 %v1282
      %v1413 = vpop.f32.mrb[0].mxu0
      %v1414 = vadd.f32 0.0, %v1413
      %v1415 = vpop.f32.mrb[0].mxu0
      %v1416 = vpop.f32.mrb[0].mxu0
      %v1417 = vadd.f32 0.0, %v1416
      %v1418 = vpop.f32.mrb[0].mxu0
      %1419 = vmatprep.mubr.bf16.mxu0 0
      %1420 = vmatmul.mubr.bf16.gmra.mrb[0].mxu0 %v1283
      %v1421 = vpop.f32.mrb[0].mxu0
      %v1422 = vadd.f32 0.0, %v1421
      %v1423 = vpop.f32.mrb[0].mxu0
      %v1424 = vpop.f32.mrb[0].mxu0
      %v1425 = vadd.f32 0.0, %v1424
      %v1426 = vpop.f32.mrb[0].mxu0
      %1427 = vmatprep.mubr.bf16.mxu0 0
      %1428 = vmatmul.mubr.bf16.gmra.mrb[0].mxu0 %v1284
      %v1429 = vpop.f32.mrb[0].mxu0
      %v1430 = vadd.f32 0.0, %v1429
      %v1431 = vpop.f32.mrb[0].mxu0
      %v1432 = vpop.f32.mrb[0].mxu0
      %v1433 = vadd.f32 0.0, %v1432
      %v1434 = vpop.f32.mrb[0].mxu0
      %1435 = vmatprep.mubr.bf16.mxu0 0
      %1436 = vmatmul.mubr.bf16.gmra.mrb[0].mxu0 %v1285
      %v1437 = vpop.f32.mrb[0].mxu0
      %v1438 = vadd.f32 0.0, %v1437
      %v1439 = vpop.f32.mrb[0].mxu0
      %v1440 = vpop.f32.mrb[0].mxu0
      %v1441 = vadd.f32 0.0, %v1440
      %v1442 = vpop.f32.mrb[0].mxu0
      %1443 = vmatprep.mubr.bf16.mxu0 0
      %1444 = vmatmul.mubr.bf16.gmra.mrb[0].mxu0 %v1286
      %v1445 = vpop.f32.mrb[0].mxu0
      %v1446 = vadd.f32 0.0, %v1445
      %v1447 = vpop.f32.mrb[0].mxu0
      %v1448 = vpop.f32.mrb[0].mxu0
      %v1449 = vadd.f32 0.0, %v1448
      %v1450 = vpop.f32.mrb[0].mxu0
      %1451 = vmatprep.mubr.bf16.mxu0 0
      %1452 = vmatmul.mubr.bf16.gmra.mrb[0].mxu0 %v1287
      %v1453 = vpop.f32.mrb[0].mxu0
      %v1454 = vadd.f32 0.0, %v1453
      %v1455 = vpop.f32.mrb[0].mxu0
      %v1456 = vpop.f32.mrb[0].mxu0
      %v1457 = vadd.f32 0.0, %v1456
      %v1458 = vpop.f32.mrb[0].mxu0
      %1459 = vmatprep.mubr.bf16.mxu0 0
      %1460 = vmatmul.mubr.bf16.gmra.mrb[0].mxu0 %v1288
      %v1461 = vpop.f32.mrb[0].mxu0
      %v1462 = vadd.f32 0.0, %v1461
      %v1463 = vpop.f32.mrb[0].mxu0
      %v1464 = vpop.f32.mrb[0].mxu0
      %v1465 = vadd.f32 0.0, %v1464
      %v1466 = vpop.f32.mrb[0].mxu0
      %1467 = vmatprep.mubr.bf16.mxu0 0
      %1468 = vmatmul.mubr.bf16.gmra.mrb[0].mxu0 %v1289
      %v1469 = vpop.f32.mrb[0].mxu0
      %v1470 = vadd.f32 0.0, %v1469
      %v1471 = vpop.f32.mrb[0].mxu0
      %v1472 = vpop.f32.mrb[0].mxu0
      %v1473 = vadd.f32 0.0, %v1472
      %v1474 = vpop.f32.mrb[0].mxu0
      %1475 = vmatprep.mubr.bf16.mxu0 0
      %1476 = vmatmul.mubr.bf16.gmra.mrb[0].mxu0 %v1290
      %v1477 = vpop.f32.mrb[0].mxu0
      %v1478 = vadd.f32 0.0, %v1477
      %v1479 = vpop.f32.mrb[0].mxu0
      %v1480 = vpop.f32.mrb[0].mxu0
      %v1481 = vadd.f32 0.0, %v1480
      %v1482 = vpop.f32.mrb[0].mxu0
      %1483 = vmatprep.mubr.bf16.mxu0 0
      %1484 = vmatmul.mubr.bf16.gmra.mrb[0].mxu0 %v1291
      %v1485 = vpop.f32.mrb[0].mxu0
      %v1486 = vadd.f32 0.0, %v1485
      %v1487 = vpop.f32.mrb[0].mxu0
      %v1488 = vpop.f32.mrb[0].mxu0
      %v1489 = vadd.f32 0.0, %v1488
      %v1490 = vpop.f32.mrb[0].mxu0
      %1491 = vmatprep.mubr.bf16.mxu0 0
      %1492 = vmatmul.mubr.bf16.gmra.mrb[0].mxu0 %v1292
      %v1493 = vpop.f32.mrb[0].mxu0
      %v1494 = vadd.f32 0.0, %v1493
      %v1495 = vpop.f32.mrb[0].mxu0
      %v1496 = vpop.f32.mrb[0].mxu0
      %v1497 = vadd.f32 0.0, %v1496
      %v1498 = vpop.f32.mrb[0].mxu0
      %1499 = vmatprep.mubr.bf16.mxu0 0
      %1500 = vmatmul.mubr.bf16.gmra.mrb[0].mxu0 %v1293
      %v1501 = vpop.f32.mrb[0].mxu0
      %v1502 = vadd.f32 0.0, %v1501
      %v1503 = vpop.f32.mrb[0].mxu0
      %v1504 = vpop.f32.mrb[0].mxu0
      %v1505 = vadd.f32 0.0, %v1504
      %v1506 = vpop.f32.mrb[0].mxu0
      %1507 = vmatprep.mubr.bf16.mxu0 0
      %1508 = vmatmul.mubr.bf16.gmra.mrb[0].mxu0 %v1294
      %v1509 = vpop.f32.mrb[0].mxu0
      %v1510 = vadd.f32 0.0, %v1509
      %v1511 = vpop.f32.mrb[0].mxu0
      %v1512 = vpop.f32.mrb[0].mxu0
      %v1513 = vadd.f32 0.0, %v1512
      %v1514 = vpop.f32.mrb[0].mxu0
      %1515 = vmatprep.mubr.bf16.mxu0 0
      %1516 = vmatmul.mubr.bf16.gmra.mrb[0].mxu0 %v1295
      %v1517 = vpop.f32.mrb[0].mxu0
      %v1518 = vadd.f32 0.0, %v1517
      %v1519 = vpop.f32.mrb[0].mxu0
      %v1520 = vpop.f32.mrb[0].mxu0
      %v1521 = vadd.f32 0.0, %v1520
      %v1522 = vpop.f32.mrb[0].mxu0
      %1523 = vmatprep.mubr.bf16.mxu0 0
      %1524 = vmatmul.mubr.bf16.gmra.mrb[0].mxu0 %v1296
      %v1525 = vpop.f32.mrb[0].mxu0
      %v1526 = vadd.f32 0.0, %v1525
      %v1527 = vpop.f32.mrb[0].mxu0
      %v1528 = vpop.f32.mrb[0].mxu0
      %v1529 = vadd.f32 0.0, %v1528
      %v1530 = vpop.f32.mrb[0].mxu0
      %1531 = vmatprep.mubr.bf16.mxu0 0
      %1532 = vmatmul.mubr.bf16.gmra.mrb[0].mxu0 %v1297
      %v1533 = vpop.f32.mrb[0].mxu0
      %v1534 = vadd.f32 0.0, %v1533
      %v1535 = vpop.f32.mrb[0].mxu0
      %v1536 = vpop.f32.mrb[0].mxu0
      %v1537 = vadd.f32 0.0, %v1536
      %v1538 = vpop.f32.mrb[0].mxu0
      %1539 = vdwg.mxu0
      %v1540 = vadd.f32 %v1102, %v1398
      %v1541 = vadd.f32 %v1105, %v1401
      %v1542 = vadd.f32 %v1110, %v1406
      %v1543 = vadd.f32 %v1113, %v1409
      %v1544 = vadd.f32 %v1118, %v1414
      %v1545 = vadd.f32 %v1121, %v1417
      %v1546 = vadd.f32 %v1126, %v1422
      %v1547 = vadd.f32 %v1129, %v1425
      %v1548 = vadd.f32 %v1134, %v1430
      %v1549 = vadd.f32 %v1137, %v1433
      %v1550 = vadd.f32 %v1142, %v1438
      %v1551 = vadd.f32 %v1145, %v1441
      %v1552 = vadd.f32 %v1150, %v1446
      %v1553 = vadd.f32 %v1153, %v1449
      %v1554 = vadd.f32 %v1158, %v1454
      %v1555 = vadd.f32 %v1161, %v1457
      %v1556 = vadd.f32 %v1166, %v1462
      %v1557 = vadd.f32 %v1169, %v1465
      %v1558 = vadd.f32 %v1174, %v1470
      %v1559 = vadd.f32 %v1177, %v1473
      %v1560 = vadd.f32 %v1182, %v1478
      %v1561 = vadd.f32 %v1185, %v1481
      %v1562 = vadd.f32 %v1190, %v1486
      %v1563 = vadd.f32 %v1193, %v1489
      %v1564 = vadd.f32 %v1198, %v1494
      %v1565 = vadd.f32 %v1201, %v1497
      %v1566 = vadd.f32 %v1206, %v1502
      %v1567 = vadd.f32 %v1209, %v1505
      %v1568 = vadd.f32 %v1214, %v1510
      %v1569 = vadd.f32 %v1217, %v1513
      %v1570 = vadd.f32 %v1222, %v1518
      %v1571 = vadd.f32 %v1225, %v1521
      %v1572 = vadd.f32 %v1230, %v1526
      %v1573 = vadd.f32 %v1233, %v1529
      %v1574 = vadd.f32 %v1238, %v1534
      %v1575 = vadd.f32 %v1241, %v1537
      %v1576 = vld [vmem:[#allocation2 + $0x23] sm:$0xff]
      %v1577 = vld [vmem:[#allocation2 + $0x2b] sm:$0xff]
      %v1578 = vld [vmem:[#allocation2 + $0x33] sm:$0xff]
      %v1579 = vld [vmem:[#allocation2 + $0x3b] sm:$0xff]
      %v1580 = vld [vmem:[#allocation2 + $0x43] sm:$0xff]
      %v1581 = vld [vmem:[#allocation2 + $0x4b] sm:$0xff]
      %v1582 = vld [vmem:[#allocation2 + $0x53] sm:$0xff]
      %v1583 = vld [vmem:[#allocation2 + $0x5b] sm:$0xff]
      %v1584 = vld [vmem:[#allocation2 + $0x63] sm:$0xff]
      %v1585 = vld [vmem:[#allocation2 + $0x6b] sm:$0xff]
      %v1586 = vld [vmem:[#allocation2 + $0x73] sm:$0xff]
      %v1587 = vld [vmem:[#allocation2 + $0x7b] sm:$0xff]
      %v1588 = vld [vmem:[#allocation2 + $0x83] sm:$0xff]
      %v1589 = vld [vmem:[#allocation2 + $0x8b] sm:$0xff]
      %v1590 = vld [vmem:[#allocation2 + $0x93] sm:$0xff]
      %v1591 = vld [vmem:[#allocation2 + $0x9b] sm:$0xff]
      %v1592 = vld [vmem:[#allocation2 + $0xa3] sm:$0xff]
      %v1593 = vld [vmem:[#allocation2 + $0xab] sm:$0xff]
      %v1594 = vld [vmem:[#allocation2 + $0xb3] sm:$0xff]
      %v1595 = vld [vmem:[#allocation2 + $0xbb] sm:$0xff]
      %v1596 = vld [vmem:[#allocation2 + $0xc3] sm:$0xff]
      %v1597 = vld [vmem:[#allocation2 + $0xcb] sm:$0xff]
      %v1598 = vld [vmem:[#allocation2 + $0xd3] sm:$0xff]
      %v1599 = vld [vmem:[#allocation2 + $0xdb] sm:$0xff]
      %v1600 = vld [vmem:[#allocation2 + $0xe3] sm:$0xff]
      %v1601 = vld [vmem:[#allocation2 + $0xeb] sm:$0xff]
      %v1602 = vld [vmem:[#allocation2 + $0xf3] sm:$0xff]
      %v1603 = vld [vmem:[#allocation2 + $0xfb] sm:$0xff]
      %v1604 = vld [vmem:[#allocation2 + $0x103] sm:$0xff]
      %v1605 = vld [vmem:[#allocation2 + $0x10b] sm:$0xff]
      %v1606 = vld [vmem:[#allocation2 + $0x113] sm:$0xff]
      %v1607 = vld [vmem:[#allocation2 + $0x11b] sm:$0xff]
      %v1608 = vld [vmem:[#allocation2 + $0x123] sm:$0xff]
      %v1609 = vld [vmem:[#allocation2 + $0x12b] sm:$0xff]
      %v1610 = vld [vmem:[#allocation2 + $0x133] sm:$0xff]
      %v1611 = vld [vmem:[#allocation2 + $0x13b] sm:$0xff]
      %v1612 = vpack.c.bf16 %v1577, %v1576
      %v1613 = vpack.c.bf16 %v1579, %v1578
      %v1614 = vpack.c.bf16 %v1581, %v1580
      %v1615 = vpack.c.bf16 %v1583, %v1582
      %v1616 = vpack.c.bf16 %v1585, %v1584
      %v1617 = vpack.c.bf16 %v1587, %v1586
      %v1618 = vpack.c.bf16 %v1589, %v1588
      %v1619 = vpack.c.bf16 %v1591, %v1590
      %v1620 = vpack.c.bf16 %v1593, %v1592
      %v1621 = vpack.c.bf16 %v1595, %v1594
      %v1622 = vpack.c.bf16 %v1597, %v1596
      %v1623 = vpack.c.bf16 %v1599, %v1598
      %v1624 = vpack.c.bf16 %v1601, %v1600
      %v1625 = vpack.c.bf16 %v1603, %v1602
      %v1626 = vpack.c.bf16 %v1605, %v1604
      %v1627 = vpack.c.bf16 %v1607, %v1606
      %v1628 = vpack.c.bf16 %v1609, %v1608
      %v1629 = vpack.c.bf16 %v1611, %v1610
      %s1630 = scalar_lea.vmem %s1, 192
      %v1631 = vld [vmem:[%s1630] sm:$0xf]
      %v1632 = vld [vmem:[%s1630 + $0x4] sm:$0xf]
      %v1633 = vld [vmem:[%s1630 + $0x8] sm:$0xf]
      %v1634 = vld [vmem:[%s1630 + $0xc] sm:$0xf]
      %v1635 = vld [vmem:[%s1630 + $0x10] sm:$0xf]
      %v1636 = vld [vmem:[%s1630 + $0x14] sm:$0xf]
      %v1637 = vld [vmem:[%s1630 + $0x18] sm:$0xf]
      %v1638 = vld [vmem:[%s1630 + $0x1c] sm:$0xf]
      %v1639 = vld [vmem:[%s1630 + $0x20] sm:$0xf]
      %v1640 = vld [vmem:[%s1630 + $0x24] sm:$0xf]
      %v1641 = vld [vmem:[%s1630 + $0x28] sm:$0xf]
      %v1642 = vld [vmem:[%s1630 + $0x2c] sm:$0xf]
      %v1643 = vld [vmem:[%s1630 + $0x30] sm:$0xf]
      %v1644 = vld [vmem:[%s1630 + $0x34] sm:$0xf]
      %v1645 = vld [vmem:[%s1630 + $0x38] sm:$0xf]
      %v1646 = vld [vmem:[%s1630 + $0x3c] sm:$0xf]
      %v1663 = vunpack.c.l.b16 %v1631
      %v1664 = vunpack.c.l.b16 %v1632
      %v1665 = vunpack.c.l.b16 %v1633
      %v1666 = vunpack.c.l.b16 %v1634
      %v1667 = vunpack.c.l.b16 %v1635
      %v1668 = vunpack.c.l.b16 %v1636
      %v1669 = vunpack.c.l.b16 %v1637
      %v1670 = vunpack.c.l.b16 %v1638
      %v1671 = vunpack.c.l.b16 %v1639
      %v1672 = vunpack.c.l.b16 %v1640
      %v1673 = vunpack.c.l.b16 %v1641
      %v1674 = vunpack.c.l.b16 %v1642
      %v1675 = vunpack.c.l.b16 %v1643
      %v1676 = vunpack.c.l.b16 %v1644
      %v1677 = vunpack.c.l.b16 %v1645
      %v1678 = vunpack.c.l.b16 %v1646
      %v1679 = vpack.c.b16 %v1664, %v1663
      %v1680 = vpack.c.b16 %v1666, %v1665
      %v1681 = vpack.c.b16 %v1668, %v1667
      %v1682 = vpack.c.b16 %v1670, %v1669
      %v1683 = vpack.c.b16 %v1672, %v1671
      %v1684 = vpack.c.b16 %v1674, %v1673
      %v1685 = vpack.c.b16 %v1676, %v1675
      %v1686 = vpack.c.b16 %v1678, %v1677
      %1695 = vmatprep.subr.bf16.mxu0 0
      %1696 = vmatpush1.bf16.msra.mxu0 %v1679
      %1697 = vmatprep.subr.bf16.mxu0 0
      %1698 = vmatpush1.bf16.msra.mxu0 %v1680
      %1699 = vmatprep.subr.bf16.mxu0 0
      %1700 = vmatpush1.bf16.msra.mxu0 %v1681
      %1701 = vmatprep.subr.bf16.mxu0 0
      %1702 = vmatpush1.bf16.msra.mxu0 %v1682
      %1703 = vmatprep.subr.bf16.mxu0 0
      %1704 = vmatpush1.bf16.msra.mxu0 %v1683
      %1705 = vmatprep.subr.bf16.mxu0 0
      %1706 = vmatpush1.bf16.msra.mxu0 %v1684
      %1707 = vmatprep.subr.bf16.mxu0 0
      %1708 = vmatpush1.bf16.msra.mxu0 %v1685
      %1709 = vmatprep.subr.bf16.mxu0 0
      %1710 = vmatpush1.bf16.msra.mxu0 %v1686
      %1711 = vmatprep.subr.bf16.mxu0 0
      %1712 = vmatpush1.bf16.msra.mxu0 0
      %1713 = vmatprep.subr.bf16.mxu0 0
      %1714 = vmatpush1.bf16.msra.mxu0 0
      %1715 = vmatprep.subr.bf16.mxu0 0
      %1716 = vmatpush1.bf16.msra.mxu0 0
      %1717 = vmatprep.subr.bf16.mxu0 0
      %1718 = vmatpush1.bf16.msra.mxu0 0
      %1719 = vmatprep.subr.bf16.mxu0 0
      %1720 = vmatpush1.bf16.msra.mxu0 0
      %1721 = vmatprep.subr.bf16.mxu0 0
      %1722 = vmatpush1.bf16.msra.mxu0 0
      %1723 = vmatprep.subr.bf16.mxu0 0
      %1724 = vmatpush1.bf16.msra.mxu0 0
      %1725 = vmatprep.subr.bf16.mxu0 0
      %1726 = vmatpush1.bf16.msra.mxu0 0
      %1727 = vmatprep.mubr.bf16.mxu0 0
      %1728 = vmatmul.mubr.bf16.gmra.mrb[0].mxu0 %v1612
      %v1729 = vpop.f32.mrb[0].mxu0
      %v1730 = vadd.f32 0.0, %v1729
      %v1731 = vpop.f32.mrb[0].mxu0
      %v1732 = vpop.f32.mrb[0].mxu0
      %v1733 = vadd.f32 0.0, %v1732
      %v1734 = vpop.f32.mrb[0].mxu0
      %1735 = vmatprep.mubr.bf16.mxu0 0
      %1736 = vmatmul.mubr.bf16.gmra.mrb[0].mxu0 %v1613
      %v1737 = vpop.f32.mrb[0].mxu0
      %v1738 = vadd.f32 0.0, %v1737
      %v1739 = vpop.f32.mrb[0].mxu0
      %v1740 = vpop.f32.mrb[0].mxu0
      %v1741 = vadd.f32 0.0, %v1740
      %v1742 = vpop.f32.mrb[0].mxu0
      %1743 = vmatprep.mubr.bf16.mxu0 0
      %1744 = vmatmul.mubr.bf16.gmra.mrb[0].mxu0 %v1614
      %v1745 = vpop.f32.mrb[0].mxu0
      %v1746 = vadd.f32 0.0, %v1745
      %v1747 = vpop.f32.mrb[0].mxu0
      %v1748 = vpop.f32.mrb[0].mxu0
      %v1749 = vadd.f32 0.0, %v1748
      %v1750 = vpop.f32.mrb[0].mxu0
      %1751 = vmatprep.mubr.bf16.mxu0 0
      %1752 = vmatmul.mubr.bf16.gmra.mrb[0].mxu0 %v1615
      %v1753 = vpop.f32.mrb[0].mxu0
      %v1754 = vadd.f32 0.0, %v1753
      %v1755 = vpop.f32.mrb[0].mxu0
      %v1756 = vpop.f32.mrb[0].mxu0
      %v1757 = vadd.f32 0.0, %v1756
      %v1758 = vpop.f32.mrb[0].mxu0
      %1759 = vmatprep.mubr.bf16.mxu0 0
      %1760 = vmatmul.mubr.bf16.gmra.mrb[0].mxu0 %v1616
      %v1761 = vpop.f32.mrb[0].mxu0
      %v1762 = vadd.f32 0.0, %v1761
      %v1763 = vpop.f32.mrb[0].mxu0
      %v1764 = vpop.f32.mrb[0].mxu0
      %v1765 = vadd.f32 0.0, %v1764
      %v1766 = vpop.f32.mrb[0].mxu0
      %1767 = vmatprep.mubr.bf16.mxu0 0
      %1768 = vmatmul.mubr.bf16.gmra.mrb[0].mxu0 %v1617
      %v1769 = vpop.f32.mrb[0].mxu0
      %v1770 = vadd.f32 0.0, %v1769
      %v1771 = vpop.f32.mrb[0].mxu0
      %v1772 = vpop.f32.mrb[0].mxu0
      %v1773 = vadd.f32 0.0, %v1772
      %v1774 = vpop.f32.mrb[0].mxu0
      %1775 = vmatprep.mubr.bf16.mxu0 0
      %1776 = vmatmul.mubr.bf16.gmra.mrb[0].mxu0 %v1618
      %v1777 = vpop.f32.mrb[0].mxu0
      %v1778 = vadd.f32 0.0, %v1777
      %v1779 = vpop.f32.mrb[0].mxu0
      %v1780 = vpop.f32.mrb[0].mxu0
      %v1781 = vadd.f32 0.0, %v1780
      %v1782 = vpop.f32.mrb[0].mxu0
      %1783 = vmatprep.mubr.bf16.mxu0 0
      %1784 = vmatmul.mubr.bf16.gmra.mrb[0].mxu0 %v1619
      %v1785 = vpop.f32.mrb[0].mxu0
      %v1786 = vadd.f32 0.0, %v1785
      %v1787 = vpop.f32.mrb[0].mxu0
      %v1788 = vpop.f32.mrb[0].mxu0
      %v1789 = vadd.f32 0.0, %v1788
      %v1790 = vpop.f32.mrb[0].mxu0
      %1791 = vmatprep.mubr.bf16.mxu0 0
      %1792 = vmatmul.mubr.bf16.gmra.mrb[0].mxu0 %v1620
      %v1793 = vpop.f32.mrb[0].mxu0
      %v1794 = vadd.f32 0.0, %v1793
      %v1795 = vpop.f32.mrb[0].mxu0
      %v1796 = vpop.f32.mrb[0].mxu0
      %v1797 = vadd.f32 0.0, %v1796
      %v1798 = vpop.f32.mrb[0].mxu0
      %1799 = vmatprep.mubr.bf16.mxu0 0
      %1800 = vmatmul.mubr.bf16.gmra.mrb[0].mxu0 %v1621
      %v1801 = vpop.f32.mrb[0].mxu0
      %v1802 = vadd.f32 0.0, %v1801
      %v1803 = vpop.f32.mrb[0].mxu0
      %v1804 = vpop.f32.mrb[0].mxu0
      %v1805 = vadd.f32 0.0, %v1804
      %v1806 = vpop.f32.mrb[0].mxu0
      %1807 = vmatprep.mubr.bf16.mxu0 0
      %1808 = vmatmul.mubr.bf16.gmra.mrb[0].mxu0 %v1622
      %v1809 = vpop.f32.mrb[0].mxu0
      %v1810 = vadd.f32 0.0, %v1809
      %v1811 = vpop.f32.mrb[0].mxu0
      %v1812 = vpop.f32.mrb[0].mxu0
      %v1813 = vadd.f32 0.0, %v1812
      %v1814 = vpop.f32.mrb[0].mxu0
      %1815 = vmatprep.mubr.bf16.mxu0 0
      %1816 = vmatmul.mubr.bf16.gmra.mrb[0].mxu0 %v1623
      %v1817 = vpop.f32.mrb[0].mxu0
      %v1818 = vadd.f32 0.0, %v1817
      %v1819 = vpop.f32.mrb[0].mxu0
      %v1820 = vpop.f32.mrb[0].mxu0
      %v1821 = vadd.f32 0.0, %v1820
      %v1822 = vpop.f32.mrb[0].mxu0
      %1823 = vmatprep.mubr.bf16.mxu0 0
      %1824 = vmatmul.mubr.bf16.gmra.mrb[0].mxu0 %v1624
      %v1825 = vpop.f32.mrb[0].mxu0
      %v1826 = vadd.f32 0.0, %v1825
      %v1827 = vpop.f32.mrb[0].mxu0
      %v1828 = vpop.f32.mrb[0].mxu0
      %v1829 = vadd.f32 0.0, %v1828
      %v1830 = vpop.f32.mrb[0].mxu0
      %1831 = vmatprep.mubr.bf16.mxu0 0
      %1832 = vmatmul.mubr.bf16.gmra.mrb[0].mxu0 %v1625
      %v1833 = vpop.f32.mrb[0].mxu0
      %v1834 = vadd.f32 0.0, %v1833
      %v1835 = vpop.f32.mrb[0].mxu0
      %v1836 = vpop.f32.mrb[0].mxu0
      %v1837 = vadd.f32 0.0, %v1836
      %v1838 = vpop.f32.mrb[0].mxu0
      %1839 = vmatprep.mubr.bf16.mxu0 0
      %1840 = vmatmul.mubr.bf16.gmra.mrb[0].mxu0 %v1626
      %v1841 = vpop.f32.mrb[0].mxu0
      %v1842 = vadd.f32 0.0, %v1841
      %v1843 = vpop.f32.mrb[0].mxu0
      %v1844 = vpop.f32.mrb[0].mxu0
      %v1845 = vadd.f32 0.0, %v1844
      %v1846 = vpop.f32.mrb[0].mxu0
      %1847 = vmatprep.mubr.bf16.mxu0 0
      %1848 = vmatmul.mubr.bf16.gmra.mrb[0].mxu0 %v1627
      %v1849 = vpop.f32.mrb[0].mxu0
      %v1850 = vadd.f32 0.0, %v1849
      %v1851 = vpop.f32.mrb[0].mxu0
      %v1852 = vpop.f32.mrb[0].mxu0
      %v1853 = vadd.f32 0.0, %v1852
      %v1854 = vpop.f32.mrb[0].mxu0
      %1855 = vmatprep.mubr.bf16.mxu0 0
      %1856 = vmatmul.mubr.bf16.gmra.mrb[0].mxu0 %v1628
      %v1857 = vpop.f32.mrb[0].mxu0
      %v1858 = vadd.f32 0.0, %v1857
      %v1859 = vpop.f32.mrb[0].mxu0
      %v1860 = vpop.f32.mrb[0].mxu0
      %v1861 = vadd.f32 0.0, %v1860
      %v1862 = vpop.f32.mrb[0].mxu0
      %1863 = vmatprep.mubr.bf16.mxu0 0
      %1864 = vmatmul.mubr.bf16.gmra.mrb[0].mxu0 %v1629
      %v1865 = vpop.f32.mrb[0].mxu0
      %v1866 = vadd.f32 0.0, %v1865
      %v1867 = vpop.f32.mrb[0].mxu0
      %v1868 = vpop.f32.mrb[0].mxu0
      %v1869 = vadd.f32 0.0, %v1868
      %v1870 = vpop.f32.mrb[0].mxu0
      %1871 = vdwg.mxu0
      %v1872 = vadd.f32 %v1540, %v1730
      %v1873 = vadd.f32 %v1541, %v1733
      %v1874 = vadd.f32 %v1542, %v1738
      %v1875 = vadd.f32 %v1543, %v1741
      %v1876 = vadd.f32 %v1544, %v1746
      %v1877 = vadd.f32 %v1545, %v1749
      %v1878 = vadd.f32 %v1546, %v1754
      %v1879 = vadd.f32 %v1547, %v1757
      %v1880 = vadd.f32 %v1548, %v1762
      %v1881 = vadd.f32 %v1549, %v1765
      %v1882 = vadd.f32 %v1550, %v1770
      %v1883 = vadd.f32 %v1551, %v1773
      %v1884 = vadd.f32 %v1552, %v1778
      %v1885 = vadd.f32 %v1553, %v1781
      %v1886 = vadd.f32 %v1554, %v1786
      %v1887 = vadd.f32 %v1555, %v1789
      %v1888 = vadd.f32 %v1556, %v1794
      %v1889 = vadd.f32 %v1557, %v1797
      %v1890 = vadd.f32 %v1558, %v1802
      %v1891 = vadd.f32 %v1559, %v1805
      %v1892 = vadd.f32 %v1560, %v1810
      %v1893 = vadd.f32 %v1561, %v1813
      %v1894 = vadd.f32 %v1562, %v1818
      %v1895 = vadd.f32 %v1563, %v1821
      %v1896 = vadd.f32 %v1564, %v1826
      %v1897 = vadd.f32 %v1565, %v1829
      %v1898 = vadd.f32 %v1566, %v1834
      %v1899 = vadd.f32 %v1567, %v1837
      %v1900 = vadd.f32 %v1568, %v1842
      %v1901 = vadd.f32 %v1569, %v1845
      %v1902 = vadd.f32 %v1570, %v1850
      %v1903 = vadd.f32 %v1571, %v1853
      %v1904 = vadd.f32 %v1572, %v1858
      %v1905 = vadd.f32 %v1573, %v1861
      %v1906 = vadd.f32 %v1574, %v1866
      %v1907 = vadd.f32 %v1575, %v1869
      %v1908 = vld [vmem:[#allocation2 + $0x24] sm:$0xff]
      %v1909 = vld [vmem:[#allocation2 + $0x2c] sm:$0xff]
      %v1910 = vld [vmem:[#allocation2 + $0x34] sm:$0xff]
      %v1911 = vld [vmem:[#allocation2 + $0x3c] sm:$0xff]
      %v1912 = vld [vmem:[#allocation2 + $0x44] sm:$0xff]
      %v1913 = vld [vmem:[#allocation2 + $0x4c] sm:$0xff]
      %v1914 = vld [vmem:[#allocation2 + $0x54] sm:$0xff]
      %v1915 = vld [vmem:[#allocation2 + $0x5c] sm:$0xff]
      %v1916 = vld [vmem:[#allocation2 + $0x64] sm:$0xff]
      %v1917 = vld [vmem:[#allocation2 + $0x6c] sm:$0xff]
      %v1918 = vld [vmem:[#allocation2 + $0x74] sm:$0xff]
      %v1919 = vld [vmem:[#allocation2 + $0x7c] sm:$0xff]
      %v1920 = vld [vmem:[#allocation2 + $0x84] sm:$0xff]
      %v1921 = vld [vmem:[#allocation2 + $0x8c] sm:$0xff]
      %v1922 = vld [vmem:[#allocation2 + $0x94] sm:$0xff]
      %v1923 = vld [vmem:[#allocation2 + $0x9c] sm:$0xff]
      %v1924 = vld [vmem:[#allocation2 + $0xa4] sm:$0xff]
      %v1925 = vld [vmem:[#allocation2 + $0xac] sm:$0xff]
      %v1926 = vld [vmem:[#allocation2 + $0xb4] sm:$0xff]
      %v1927 = vld [vmem:[#allocation2 + $0xbc] sm:$0xff]
      %v1928 = vld [vmem:[#allocation2 + $0xc4] sm:$0xff]
      %v1929 = vld [vmem:[#allocation2 + $0xcc] sm:$0xff]
      %v1930 = vld [vmem:[#allocation2 + $0xd4] sm:$0xff]
      %v1931 = vld [vmem:[#allocation2 + $0xdc] sm:$0xff]
      %v1932 = vld [vmem:[#allocation2 + $0xe4] sm:$0xff]
      %v1933 = vld [vmem:[#allocation2 + $0xec] sm:$0xff]
      %v1934 = vld [vmem:[#allocation2 + $0xf4] sm:$0xff]
      %v1935 = vld [vmem:[#allocation2 + $0xfc] sm:$0xff]
      %v1936 = vld [vmem:[#allocation2 + $0x104] sm:$0xff]
      %v1937 = vld [vmem:[#allocation2 + $0x10c] sm:$0xff]
      %v1938 = vld [vmem:[#allocation2 + $0x114] sm:$0xff]
      %v1939 = vld [vmem:[#allocation2 + $0x11c] sm:$0xff]
      %v1940 = vld [vmem:[#allocation2 + $0x124] sm:$0xff]
      %v1941 = vld [vmem:[#allocation2 + $0x12c] sm:$0xff]
      %v1942 = vld [vmem:[#allocation2 + $0x134] sm:$0xff]
      %v1943 = vld [vmem:[#allocation2 + $0x13c] sm:$0xff]
      %v1944 = vpack.c.bf16 %v1909, %v1908
      %v1945 = vpack.c.bf16 %v1911, %v1910
      %v1946 = vpack.c.bf16 %v1913, %v1912
      %v1947 = vpack.c.bf16 %v1915, %v1914
      %v1948 = vpack.c.bf16 %v1917, %v1916
      %v1949 = vpack.c.bf16 %v1919, %v1918
      %v1950 = vpack.c.bf16 %v1921, %v1920
      %v1951 = vpack.c.bf16 %v1923, %v1922
      %v1952 = vpack.c.bf16 %v1925, %v1924
      %v1953 = vpack.c.bf16 %v1927, %v1926
      %v1954 = vpack.c.bf16 %v1929, %v1928
      %v1955 = vpack.c.bf16 %v1931, %v1930
      %v1956 = vpack.c.bf16 %v1933, %v1932
      %v1957 = vpack.c.bf16 %v1935, %v1934
      %v1958 = vpack.c.bf16 %v1937, %v1936
      %v1959 = vpack.c.bf16 %v1939, %v1938
      %v1960 = vpack.c.bf16 %v1941, %v1940
      %v1961 = vpack.c.bf16 %v1943, %v1942
      %s1962 = scalar_lea.vmem %s1, 256
      %v1963 = vld [vmem:[%s1962] sm:$0xf]
      %v1964 = vld [vmem:[%s1962 + $0x4] sm:$0xf]
      %v1965 = vld [vmem:[%s1962 + $0x8] sm:$0xf]
      %v1966 = vld [vmem:[%s1962 + $0xc] sm:$0xf]
      %v1967 = vld [vmem:[%s1962 + $0x10] sm:$0xf]
      %v1968 = vld [vmem:[%s1962 + $0x14] sm:$0xf]
      %v1969 = vld [vmem:[%s1962 + $0x18] sm:$0xf]
      %v1970 = vld [vmem:[%s1962 + $0x1c] sm:$0xf]
      %v1971 = vld [vmem:[%s1962 + $0x20] sm:$0xf]
      %v1972 = vld [vmem:[%s1962 + $0x24] sm:$0xf]
      %v1973 = vld [vmem:[%s1962 + $0x28] sm:$0xf]
      %v1974 = vld [vmem:[%s1962 + $0x2c] sm:$0xf]
      %v1975 = vld [vmem:[%s1962 + $0x30] sm:$0xf]
      %v1976 = vld [vmem:[%s1962 + $0x34] sm:$0xf]
      %v1977 = vld [vmem:[%s1962 + $0x38] sm:$0xf]
      %v1978 = vld [vmem:[%s1962 + $0x3c] sm:$0xf]
      %v1995 = vunpack.c.l.b16 %v1963
      %v1996 = vunpack.c.l.b16 %v1964
      %v1997 = vunpack.c.l.b16 %v1965
      %v1998 = vunpack.c.l.b16 %v1966
      %v1999 = vunpack.c.l.b16 %v1967
      %v2000 = vunpack.c.l.b16 %v1968
      %v2001 = vunpack.c.l.b16 %v1969
      %v2002 = vunpack.c.l.b16 %v1970
      %v2003 = vunpack.c.l.b16 %v1971
      %v2004 = vunpack.c.l.b16 %v1972
      %v2005 = vunpack.c.l.b16 %v1973
      %v2006 = vunpack.c.l.b16 %v1974
      %v2007 = vunpack.c.l.b16 %v1975
      %v2008 = vunpack.c.l.b16 %v1976
      %v2009 = vunpack.c.l.b16 %v1977
      %v2010 = vunpack.c.l.b16 %v1978
      %v2011 = vpack.c.b16 %v1996, %v1995
      %v2012 = vpack.c.b16 %v1998, %v1997
      %v2013 = vpack.c.b16 %v2000, %v1999
      %v2014 = vpack.c.b16 %v2002, %v2001
      %v2015 = vpack.c.b16 %v2004, %v2003
      %v2016 = vpack.c.b16 %v2006, %v2005
      %v2017 = vpack.c.b16 %v2008, %v2007
      %v2018 = vpack.c.b16 %v2010, %v2009
      %2027 = vmatprep.subr.bf16.mxu0 0
      %2028 = vmatpush1.bf16.msra.mxu0 %v2011
      %2029 = vmatprep.subr.bf16.mxu0 0
      %2030 = vmatpush1.bf16.msra.mxu0 %v2012
      %2031 = vmatprep.subr.bf16.mxu0 0
      %2032 = vmatpush1.bf16.msra.mxu0 %v2013
      %2033 = vmatprep.subr.bf16.mxu0 0
      %2034 = vmatpush1.bf16.msra.mxu0 %v2014
      %2035 = vmatprep.subr.bf16.mxu0 0
      %2036 = vmatpush1.bf16.msra.mxu0 %v2015
      %2037 = vmatprep.subr.bf16.mxu0 0
      %2038 = vmatpush1.bf16.msra.mxu0 %v2016
      %2039 = vmatprep.subr.bf16.mxu0 0
      %2040 = vmatpush1.bf16.msra.mxu0 %v2017
      %2041 = vmatprep.subr.bf16.mxu0 0
      %2042 = vmatpush1.bf16.msra.mxu0 %v2018
      %2043 = vmatprep.subr.bf16.mxu0 0
      %2044 = vmatpush1.bf16.msra.mxu0 0
      %2045 = vmatprep.subr.bf16.mxu0 0
      %2046 = vmatpush1.bf16.msra.mxu0 0
      %2047 = vmatprep.subr.bf16.mxu0 0
      %2048 = vmatpush1.bf16.msra.mxu0 0
      %2049 = vmatprep.subr.bf16.mxu0 0
      %2050 = vmatpush1.bf16.msra.mxu0 0
      %2051 = vmatprep.subr.bf16.mxu0 0
      %2052 = vmatpush1.bf16.msra.mxu0 0
      %2053 = vmatprep.subr.bf16.mxu0 0
      %2054 = vmatpush1.bf16.msra.mxu0 0
      %2055 = vmatprep.subr.bf16.mxu0 0
      %2056 = vmatpush1.bf16.msra.mxu0 0
      %2057 = vmatprep.subr.bf16.mxu0 0
      %2058 = vmatpush1.bf16.msra.mxu0 0
      %2059 = vmatprep.mubr.bf16.mxu0 0
      %2060 = vmatmul.mubr.bf16.gmra.mrb[0].mxu0 %v1944
      %v2061 = vpop.f32.mrb[0].mxu0
      %v2062 = vadd.f32 0.0, %v2061
      %v2063 = vpop.f32.mrb[0].mxu0
      %v2064 = vpop.f32.mrb[0].mxu0
      %v2065 = vadd.f32 0.0, %v2064
      %v2066 = vpop.f32.mrb[0].mxu0
      %2067 = vmatprep.mubr.bf16.mxu0 0
      %2068 = vmatmul.mubr.bf16.gmra.mrb[0].mxu0 %v1945
      %v2069 = vpop.f32.mrb[0].mxu0
      %v2070 = vadd.f32 0.0, %v2069
      %v2071 = vpop.f32.mrb[0].mxu0
      %v2072 = vpop.f32.mrb[0].mxu0
      %v2073 = vadd.f32 0.0, %v2072
      %v2074 = vpop.f32.mrb[0].mxu0
      %2075 = vmatprep.mubr.bf16.mxu0 0
      %2076 = vmatmul.mubr.bf16.gmra.mrb[0].mxu0 %v1946
      %v2077 = vpop.f32.mrb[0].mxu0
      %v2078 = vadd.f32 0.0, %v2077
      %v2079 = vpop.f32.mrb[0].mxu0
      %v2080 = vpop.f32.mrb[0].mxu0
      %v2081 = vadd.f32 0.0, %v2080
      %v2082 = vpop.f32.mrb[0].mxu0
      %2083 = vmatprep.mubr.bf16.mxu0 0
      %2084 = vmatmul.mubr.bf16.gmra.mrb[0].mxu0 %v1947
      %v2085 = vpop.f32.mrb[0].mxu0
      %v2086 = vadd.f32 0.0, %v2085
      %v2087 = vpop.f32.mrb[0].mxu0
      %v2088 = vpop.f32.mrb[0].mxu0
      %v2089 = vadd.f32 0.0, %v2088
      %v2090 = vpop.f32.mrb[0].mxu0
      %2091 = vmatprep.mubr.bf16.mxu0 0
      %2092 = vmatmul.mubr.bf16.gmra.mrb[0].mxu0 %v1948
      %v2093 = vpop.f32.mrb[0].mxu0
      %v2094 = vadd.f32 0.0, %v2093
      %v2095 = vpop.f32.mrb[0].mxu0
      %v2096 = vpop.f32.mrb[0].mxu0
      %v2097 = vadd.f32 0.0, %v2096
      %v2098 = vpop.f32.mrb[0].mxu0
      %2099 = vmatprep.mubr.bf16.mxu0 0
      %2100 = vmatmul.mubr.bf16.gmra.mrb[0].mxu0 %v1949
      %v2101 = vpop.f32.mrb[0].mxu0
      %v2102 = vadd.f32 0.0, %v2101
      %v2103 = vpop.f32.mrb[0].mxu0
      %v2104 = vpop.f32.mrb[0].mxu0
      %v2105 = vadd.f32 0.0, %v2104
      %v2106 = vpop.f32.mrb[0].mxu0
      %2107 = vmatprep.mubr.bf16.mxu0 0
      %2108 = vmatmul.mubr.bf16.gmra.mrb[0].mxu0 %v1950
      %v2109 = vpop.f32.mrb[0].mxu0
      %v2110 = vadd.f32 0.0, %v2109
      %v2111 = vpop.f32.mrb[0].mxu0
      %v2112 = vpop.f32.mrb[0].mxu0
      %v2113 = vadd.f32 0.0, %v2112
      %v2114 = vpop.f32.mrb[0].mxu0
      %2115 = vmatprep.mubr.bf16.mxu0 0
      %2116 = vmatmul.mubr.bf16.gmra.mrb[0].mxu0 %v1951
      %v2117 = vpop.f32.mrb[0].mxu0
      %v2118 = vadd.f32 0.0, %v2117
      %v2119 = vpop.f32.mrb[0].mxu0
      %v2120 = vpop.f32.mrb[0].mxu0
      %v2121 = vadd.f32 0.0, %v2120
      %v2122 = vpop.f32.mrb[0].mxu0
      %2123 = vmatprep.mubr.bf16.mxu0 0
      %2124 = vmatmul.mubr.bf16.gmra.mrb[0].mxu0 %v1952
      %v2125 = vpop.f32.mrb[0].mxu0
      %v2126 = vadd.f32 0.0, %v2125
      %v2127 = vpop.f32.mrb[0].mxu0
      %v2128 = vpop.f32.mrb[0].mxu0
      %v2129 = vadd.f32 0.0, %v2128
      %v2130 = vpop.f32.mrb[0].mxu0
      %2131 = vmatprep.mubr.bf16.mxu0 0
      %2132 = vmatmul.mubr.bf16.gmra.mrb[0].mxu0 %v1953
      %v2133 = vpop.f32.mrb[0].mxu0
      %v2134 = vadd.f32 0.0, %v2133
      %v2135 = vpop.f32.mrb[0].mxu0
      %v2136 = vpop.f32.mrb[0].mxu0
      %v2137 = vadd.f32 0.0, %v2136
      %v2138 = vpop.f32.mrb[0].mxu0
      %2139 = vmatprep.mubr.bf16.mxu0 0
      %2140 = vmatmul.mubr.bf16.gmra.mrb[0].mxu0 %v1954
      %v2141 = vpop.f32.mrb[0].mxu0
      %v2142 = vadd.f32 0.0, %v2141
      %v2143 = vpop.f32.mrb[0].mxu0
      %v2144 = vpop.f32.mrb[0].mxu0
      %v2145 = vadd.f32 0.0, %v2144
      %v2146 = vpop.f32.mrb[0].mxu0
      %2147 = vmatprep.mubr.bf16.mxu0 0
      %2148 = vmatmul.mubr.bf16.gmra.mrb[0].mxu0 %v1955
      %v2149 = vpop.f32.mrb[0].mxu0
      %v2150 = vadd.f32 0.0, %v2149
      %v2151 = vpop.f32.mrb[0].mxu0
      %v2152 = vpop.f32.mrb[0].mxu0
      %v2153 = vadd.f32 0.0, %v2152
      %v2154 = vpop.f32.mrb[0].mxu0
      %2155 = vmatprep.mubr.bf16.mxu0 0
      %2156 = vmatmul.mubr.bf16.gmra.mrb[0].mxu0 %v1956
      %v2157 = vpop.f32.mrb[0].mxu0
      %v2158 = vadd.f32 0.0, %v2157
      %v2159 = vpop.f32.mrb[0].mxu0
      %v2160 = vpop.f32.mrb[0].mxu0
      %v2161 = vadd.f32 0.0, %v2160
      %v2162 = vpop.f32.mrb[0].mxu0
      %2163 = vmatprep.mubr.bf16.mxu0 0
      %2164 = vmatmul.mubr.bf16.gmra.mrb[0].mxu0 %v1957
      %v2165 = vpop.f32.mrb[0].mxu0
      %v2166 = vadd.f32 0.0, %v2165
      %v2167 = vpop.f32.mrb[0].mxu0
      %v2168 = vpop.f32.mrb[0].mxu0
      %v2169 = vadd.f32 0.0, %v2168
      %v2170 = vpop.f32.mrb[0].mxu0
      %2171 = vmatprep.mubr.bf16.mxu0 0
      %2172 = vmatmul.mubr.bf16.gmra.mrb[0].mxu0 %v1958
      %v2173 = vpop.f32.mrb[0].mxu0
      %v2174 = vadd.f32 0.0, %v2173
      %v2175 = vpop.f32.mrb[0].mxu0
      %v2176 = vpop.f32.mrb[0].mxu0
      %v2177 = vadd.f32 0.0, %v2176
      %v2178 = vpop.f32.mrb[0].mxu0
      %2179 = vmatprep.mubr.bf16.mxu0 0
      %2180 = vmatmul.mubr.bf16.gmra.mrb[0].mxu0 %v1959
      %v2181 = vpop.f32.mrb[0].mxu0
      %v2182 = vadd.f32 0.0, %v2181
      %v2183 = vpop.f32.mrb[0].mxu0
      %v2184 = vpop.f32.mrb[0].mxu0
      %v2185 = vadd.f32 0.0, %v2184
      %v2186 = vpop.f32.mrb[0].mxu0
      %2187 = vmatprep.mubr.bf16.mxu0 0
      %2188 = vmatmul.mubr.bf16.gmra.mrb[0].mxu0 %v1960
      %v2189 = vpop.f32.mrb[0].mxu0
      %v2190 = vadd.f32 0.0, %v2189
      %v2191 = vpop.f32.mrb[0].mxu0
      %v2192 = vpop.f32.mrb[0].mxu0
      %v2193 = vadd.f32 0.0, %v2192
      %v2194 = vpop.f32.mrb[0].mxu0
      %2195 = vmatprep.mubr.bf16.mxu0 0
      %2196 = vmatmul.mubr.bf16.gmra.mrb[0].mxu0 %v1961
      %v2197 = vpop.f32.mrb[0].mxu0
      %v2198 = vadd.f32 0.0, %v2197
      %v2199 = vpop.f32.mrb[0].mxu0
      %v2200 = vpop.f32.mrb[0].mxu0
      %v2201 = vadd.f32 0.0, %v2200
      %v2202 = vpop.f32.mrb[0].mxu0
      %2203 = vdwg.mxu0
      %v2204 = vadd.f32 %v1872, %v2062
      %v2205 = vadd.f32 %v1873, %v2065
      %v2206 = vadd.f32 %v1874, %v2070
      %v2207 = vadd.f32 %v1875, %v2073
      %v2208 = vadd.f32 %v1876, %v2078
      %v2209 = vadd.f32 %v1877, %v2081
      %v2210 = vadd.f32 %v1878, %v2086
      %v2211 = vadd.f32 %v1879, %v2089
      %v2212 = vadd.f32 %v1880, %v2094
      %v2213 = vadd.f32 %v1881, %v2097
      %v2214 = vadd.f32 %v1882, %v2102
      %v2215 = vadd.f32 %v1883, %v2105
      %v2216 = vadd.f32 %v1884, %v2110
      %v2217 = vadd.f32 %v1885, %v2113
      %v2218 = vadd.f32 %v1886, %v2118
      %v2219 = vadd.f32 %v1887, %v2121
      %v2220 = vadd.f32 %v1888, %v2126
      %v2221 = vadd.f32 %v1889, %v2129
      %v2222 = vadd.f32 %v1890, %v2134
      %v2223 = vadd.f32 %v1891, %v2137
      %v2224 = vadd.f32 %v1892, %v2142
      %v2225 = vadd.f32 %v1893, %v2145
      %v2226 = vadd.f32 %v1894, %v2150
      %v2227 = vadd.f32 %v1895, %v2153
      %v2228 = vadd.f32 %v1896, %v2158
      %v2229 = vadd.f32 %v1897, %v2161
      %v2230 = vadd.f32 %v1898, %v2166
      %v2231 = vadd.f32 %v1899, %v2169
      %v2232 = vadd.f32 %v1900, %v2174
      %v2233 = vadd.f32 %v1901, %v2177
      %v2234 = vadd.f32 %v1902, %v2182
      %v2235 = vadd.f32 %v1903, %v2185
      %v2236 = vadd.f32 %v1904, %v2190
      %v2237 = vadd.f32 %v1905, %v2193
      %v2238 = vadd.f32 %v1906, %v2198
      %v2239 = vadd.f32 %v1907, %v2201
      %v2240 = vld [vmem:[#allocation2 + $0x25] sm:$0xff]
      %v2241 = vld [vmem:[#allocation2 + $0x2d] sm:$0xff]
      %v2242 = vld [vmem:[#allocation2 + $0x35] sm:$0xff]
      %v2243 = vld [vmem:[#allocation2 + $0x3d] sm:$0xff]
      %v2244 = vld [vmem:[#allocation2 + $0x45] sm:$0xff]
      %v2245 = vld [vmem:[#allocation2 + $0x4d] sm:$0xff]
      %v2246 = vld [vmem:[#allocation2 + $0x55] sm:$0xff]
      %v2247 = vld [vmem:[#allocation2 + $0x5d] sm:$0xff]
      %v2248 = vld [vmem:[#allocation2 + $0x65] sm:$0xff]
      %v2249 = vld [vmem:[#allocation2 + $0x6d] sm:$0xff]
      %v2250 = vld [vmem:[#allocation2 + $0x75] sm:$0xff]
      %v2251 = vld [vmem:[#allocation2 + $0x7d] sm:$0xff]
      %v2252 = vld [vmem:[#allocation2 + $0x85] sm:$0xff]
      %v2253 = vld [vmem:[#allocation2 + $0x8d] sm:$0xff]
      %v2254 = vld [vmem:[#allocation2 + $0x95] sm:$0xff]
      %v2255 = vld [vmem:[#allocation2 + $0x9d] sm:$0xff]
      %v2256 = vld [vmem:[#allocation2 + $0xa5] sm:$0xff]
      %v2257 = vld [vmem:[#allocation2 + $0xad] sm:$0xff]
      %v2258 = vld [vmem:[#allocation2 + $0xb5] sm:$0xff]
      %v2259 = vld [vmem:[#allocation2 + $0xbd] sm:$0xff]
      %v2260 = vld [vmem:[#allocation2 + $0xc5] sm:$0xff]
      %v2261 = vld [vmem:[#allocation2 + $0xcd] sm:$0xff]
      %v2262 = vld [vmem:[#allocation2 + $0xd5] sm:$0xff]
      %v2263 = vld [vmem:[#allocation2 + $0xdd] sm:$0xff]
      %v2264 = vld [vmem:[#allocation2 + $0xe5] sm:$0xff]
      %v2265 = vld [vmem:[#allocation2 + $0xed] sm:$0xff]
      %v2266 = vld [vmem:[#allocation2 + $0xf5] sm:$0xff]
      %v2267 = vld [vmem:[#allocation2 + $0xfd] sm:$0xff]
      %v2268 = vld [vmem:[#allocation2 + $0x105] sm:$0xff]
      %v2269 = vld [vmem:[#allocation2 + $0x10d] sm:$0xff]
      %v2270 = vld [vmem:[#allocation2 + $0x115] sm:$0xff]
      %v2271 = vld [vmem:[#allocation2 + $0x11d] sm:$0xff]
      %v2272 = vld [vmem:[#allocation2 + $0x125] sm:$0xff]
      %v2273 = vld [vmem:[#allocation2 + $0x12d] sm:$0xff]
      %v2274 = vld [vmem:[#allocation2 + $0x135] sm:$0xff]
      %v2275 = vld [vmem:[#allocation2 + $0x13d] sm:$0xff]
      %v2276 = vpack.c.bf16 %v2241, %v2240
      %v2277 = vpack.c.bf16 %v2243, %v2242
      %v2278 = vpack.c.bf16 %v2245, %v2244
      %v2279 = vpack.c.bf16 %v2247, %v2246
      %v2280 = vpack.c.bf16 %v2249, %v2248
      %v2281 = vpack.c.bf16 %v2251, %v2250
      %v2282 = vpack.c.bf16 %v2253, %v2252
      %v2283 = vpack.c.bf16 %v2255, %v2254
      %v2284 = vpack.c.bf16 %v2257, %v2256
      %v2285 = vpack.c.bf16 %v2259, %v2258
      %v2286 = vpack.c.bf16 %v2261, %v2260
      %v2287 = vpack.c.bf16 %v2263, %v2262
      %v2288 = vpack.c.bf16 %v2265, %v2264
      %v2289 = vpack.c.bf16 %v2267, %v2266
      %v2290 = vpack.c.bf16 %v2269, %v2268
      %v2291 = vpack.c.bf16 %v2271, %v2270
      %v2292 = vpack.c.bf16 %v2273, %v2272
      %v2293 = vpack.c.bf16 %v2275, %v2274
      %s2294 = scalar_lea.vmem %s1, 320
      %v2295 = vld [vmem:[%s2294] sm:$0xf]
      %v2296 = vld [vmem:[%s2294 + $0x4] sm:$0xf]
      %v2297 = vld [vmem:[%s2294 + $0x8] sm:$0xf]
      %v2298 = vld [vmem:[%s2294 + $0xc] sm:$0xf]
      %v2299 = vld [vmem:[%s2294 + $0x10] sm:$0xf]
      %v2300 = vld [vmem:[%s2294 + $0x14] sm:$0xf]
      %v2301 = vld [vmem:[%s2294 + $0x18] sm:$0xf]
      %v2302 = vld [vmem:[%s2294 + $0x1c] sm:$0xf]
      %v2303 = vld [vmem:[%s2294 + $0x20] sm:$0xf]
      %v2304 = vld [vmem:[%s2294 + $0x24] sm:$0xf]
      %v2305 = vld [vmem:[%s2294 + $0x28] sm:$0xf]
      %v2306 = vld [vmem:[%s2294 + $0x2c] sm:$0xf]
      %v2307 = vld [vmem:[%s2294 + $0x30] sm:$0xf]
      %v2308 = vld [vmem:[%s2294 + $0x34] sm:$0xf]
      %v2309 = vld [vmem:[%s2294 + $0x38] sm:$0xf]
      %v2310 = vld [vmem:[%s2294 + $0x3c] sm:$0xf]
      %v2327 = vunpack.c.l.b16 %v2295
      %v2328 = vunpack.c.l.b16 %v2296
      %v2329 = vunpack.c.l.b16 %v2297
      %v2330 = vunpack.c.l.b16 %v2298
      %v2331 = vunpack.c.l.b16 %v2299
      %v2332 = vunpack.c.l.b16 %v2300
      %v2333 = vunpack.c.l.b16 %v2301
      %v2334 = vunpack.c.l.b16 %v2302
      %v2335 = vunpack.c.l.b16 %v2303
      %v2336 = vunpack.c.l.b16 %v2304
      %v2337 = vunpack.c.l.b16 %v2305
      %v2338 = vunpack.c.l.b16 %v2306
      %v2339 = vunpack.c.l.b16 %v2307
      %v2340 = vunpack.c.l.b16 %v2308
      %v2341 = vunpack.c.l.b16 %v2309
      %v2342 = vunpack.c.l.b16 %v2310
      %v2343 = vpack.c.b16 %v2328, %v2327
      %v2344 = vpack.c.b16 %v2330, %v2329
      %v2345 = vpack.c.b16 %v2332, %v2331
      %v2346 = vpack.c.b16 %v2334, %v2333
      %v2347 = vpack.c.b16 %v2336, %v2335
      %v2348 = vpack.c.b16 %v2338, %v2337
      %v2349 = vpack.c.b16 %v2340, %v2339
      %v2350 = vpack.c.b16 %v2342, %v2341
      %2359 = vmatprep.subr.bf16.mxu0 0
      %2360 = vmatpush1.bf16.msra.mxu0 %v2343
      %2361 = vmatprep.subr.bf16.mxu0 0
      %2362 = vmatpush1.bf16.msra.mxu0 %v2344
      %2363 = vmatprep.subr.bf16.mxu0 0
      %2364 = vmatpush1.bf16.msra.mxu0 %v2345
      %2365 = vmatprep.subr.bf16.mxu0 0
      %2366 = vmatpush1.bf16.msra.mxu0 %v2346
      %2367 = vmatprep.subr.bf16.mxu0 0
      %2368 = vmatpush1.bf16.msra.mxu0 %v2347
      %2369 = vmatprep.subr.bf16.mxu0 0
      %2370 = vmatpush1.bf16.msra.mxu0 %v2348
      %2371 = vmatprep.subr.bf16.mxu0 0
      %2372 = vmatpush1.bf16.msra.mxu0 %v2349
      %2373 = vmatprep.subr.bf16.mxu0 0
      %2374 = vmatpush1.bf16.msra.mxu0 %v2350
      %2375 = vmatprep.subr.bf16.mxu0 0
      %2376 = vmatpush1.bf16.msra.mxu0 0
      %2377 = vmatprep.subr.bf16.mxu0 0
      %2378 = vmatpush1.bf16.msra.mxu0 0
      %2379 = vmatprep.subr.bf16.mxu0 0
      %2380 = vmatpush1.bf16.msra.mxu0 0
      %2381 = vmatprep.subr.bf16.mxu0 0
      %2382 = vmatpush1.bf16.msra.mxu0 0
      %2383 = vmatprep.subr.bf16.mxu0 0
      %2384 = vmatpush1.bf16.msra.mxu0 0
      %2385 = vmatprep.subr.bf16.mxu0 0
      %2386 = vmatpush1.bf16.msra.mxu0 0
      %2387 = vmatprep.subr.bf16.mxu0 0
      %2388 = vmatpush1.bf16.msra.mxu0 0
      %2389 = vmatprep.subr.bf16.mxu0 0
      %2390 = vmatpush1.bf16.msra.mxu0 0
      %2391 = vmatprep.mubr.bf16.mxu0 0
      %2392 = vmatmul.mubr.bf16.gmra.mrb[0].mxu0 %v2276
      %v2393 = vpop.f32.mrb[0].mxu0
      %v2394 = vadd.f32 0.0, %v2393
      %v2395 = vpop.f32.mrb[0].mxu0
      %v2396 = vpop.f32.mrb[0].mxu0
      %v2397 = vadd.f32 0.0, %v2396
      %v2398 = vpop.f32.mrb[0].mxu0
      %2399 = vmatprep.mubr.bf16.mxu0 0
      %2400 = vmatmul.mubr.bf16.gmra.mrb[0].mxu0 %v2277
      %v2401 = vpop.f32.mrb[0].mxu0
      %v2402 = vadd.f32 0.0, %v2401
      %v2403 = vpop.f32.mrb[0].mxu0
      %v2404 = vpop.f32.mrb[0].mxu0
      %v2405 = vadd.f32 0.0, %v2404
      %v2406 = vpop.f32.mrb[0].mxu0
      %2407 = vmatprep.mubr.bf16.mxu0 0
      %2408 = vmatmul.mubr.bf16.gmra.mrb[0].mxu0 %v2278
      %v2409 = vpop.f32.mrb[0].mxu0
      %v2410 = vadd.f32 0.0, %v2409
      %v2411 = vpop.f32.mrb[0].mxu0
      %v2412 = vpop.f32.mrb[0].mxu0
      %v2413 = vadd.f32 0.0, %v2412
      %v2414 = vpop.f32.mrb[0].mxu0
      %2415 = vmatprep.mubr.bf16.mxu0 0
      %2416 = vmatmul.mubr.bf16.gmra.mrb[0].mxu0 %v2279
      %v2417 = vpop.f32.mrb[0].mxu0
      %v2418 = vadd.f32 0.0, %v2417
      %v2419 = vpop.f32.mrb[0].mxu0
      %v2420 = vpop.f32.mrb[0].mxu0
      %v2421 = vadd.f32 0.0, %v2420
      %v2422 = vpop.f32.mrb[0].mxu0
      %2423 = vmatprep.mubr.bf16.mxu0 0
      %2424 = vmatmul.mubr.bf16.gmra.mrb[0].mxu0 %v2280
      %v2425 = vpop.f32.mrb[0].mxu0
      %v2426 = vadd.f32 0.0, %v2425
      %v2427 = vpop.f32.mrb[0].mxu0
      %v2428 = vpop.f32.mrb[0].mxu0
      %v2429 = vadd.f32 0.0, %v2428
      %v2430 = vpop.f32.mrb[0].mxu0
      %2431 = vmatprep.mubr.bf16.mxu0 0
      %2432 = vmatmul.mubr.bf16.gmra.mrb[0].mxu0 %v2281
      %v2433 = vpop.f32.mrb[0].mxu0
      %v2434 = vadd.f32 0.0, %v2433
      %v2435 = vpop.f32.mrb[0].mxu0
      %v2436 = vpop.f32.mrb[0].mxu0
      %v2437 = vadd.f32 0.0, %v2436
      %v2438 = vpop.f32.mrb[0].mxu0
      %2439 = vmatprep.mubr.bf16.mxu0 0
      %2440 = vmatmul.mubr.bf16.gmra.mrb[0].mxu0 %v2282
      %v2441 = vpop.f32.mrb[0].mxu0
      %v2442 = vadd.f32 0.0, %v2441
      %v2443 = vpop.f32.mrb[0].mxu0
      %v2444 = vpop.f32.mrb[0].mxu0
      %v2445 = vadd.f32 0.0, %v2444
      %v2446 = vpop.f32.mrb[0].mxu0
      %2447 = vmatprep.mubr.bf16.mxu0 0
      %2448 = vmatmul.mubr.bf16.gmra.mrb[0].mxu0 %v2283
      %v2449 = vpop.f32.mrb[0].mxu0
      %v2450 = vadd.f32 0.0, %v2449
      %v2451 = vpop.f32.mrb[0].mxu0
      %v2452 = vpop.f32.mrb[0].mxu0
      %v2453 = vadd.f32 0.0, %v2452
      %v2454 = vpop.f32.mrb[0].mxu0
      %2455 = vmatprep.mubr.bf16.mxu0 0
      %2456 = vmatmul.mubr.bf16.gmra.mrb[0].mxu0 %v2284
      %v2457 = vpop.f32.mrb[0].mxu0
      %v2458 = vadd.f32 0.0, %v2457
      %v2459 = vpop.f32.mrb[0].mxu0
      %v2460 = vpop.f32.mrb[0].mxu0
      %v2461 = vadd.f32 0.0, %v2460
      %v2462 = vpop.f32.mrb[0].mxu0
      %2463 = vmatprep.mubr.bf16.mxu0 0
      %2464 = vmatmul.mubr.bf16.gmra.mrb[0].mxu0 %v2285
      %v2465 = vpop.f32.mrb[0].mxu0
      %v2466 = vadd.f32 0.0, %v2465
      %v2467 = vpop.f32.mrb[0].mxu0
      %v2468 = vpop.f32.mrb[0].mxu0
      %v2469 = vadd.f32 0.0, %v2468
      %v2470 = vpop.f32.mrb[0].mxu0
      %2471 = vmatprep.mubr.bf16.mxu0 0
      %2472 = vmatmul.mubr.bf16.gmra.mrb[0].mxu0 %v2286
      %v2473 = vpop.f32.mrb[0].mxu0
      %v2474 = vadd.f32 0.0, %v2473
      %v2475 = vpop.f32.mrb[0].mxu0
      %v2476 = vpop.f32.mrb[0].mxu0
      %v2477 = vadd.f32 0.0, %v2476
      %v2478 = vpop.f32.mrb[0].mxu0
      %2479 = vmatprep.mubr.bf16.mxu0 0
      %2480 = vmatmul.mubr.bf16.gmra.mrb[0].mxu0 %v2287
      %v2481 = vpop.f32.mrb[0].mxu0
      %v2482 = vadd.f32 0.0, %v2481
      %v2483 = vpop.f32.mrb[0].mxu0
      %v2484 = vpop.f32.mrb[0].mxu0
      %v2485 = vadd.f32 0.0, %v2484
      %v2486 = vpop.f32.mrb[0].mxu0
      %2487 = vmatprep.mubr.bf16.mxu0 0
      %2488 = vmatmul.mubr.bf16.gmra.mrb[0].mxu0 %v2288
      %v2489 = vpop.f32.mrb[0].mxu0
      %v2490 = vadd.f32 0.0, %v2489
      %v2491 = vpop.f32.mrb[0].mxu0
      %v2492 = vpop.f32.mrb[0].mxu0
      %v2493 = vadd.f32 0.0, %v2492
      %v2494 = vpop.f32.mrb[0].mxu0
      %2495 = vmatprep.mubr.bf16.mxu0 0
      %2496 = vmatmul.mubr.bf16.gmra.mrb[0].mxu0 %v2289
      %v2497 = vpop.f32.mrb[0].mxu0
      %v2498 = vadd.f32 0.0, %v2497
      %v2499 = vpop.f32.mrb[0].mxu0
      %v2500 = vpop.f32.mrb[0].mxu0
      %v2501 = vadd.f32 0.0, %v2500
      %v2502 = vpop.f32.mrb[0].mxu0
      %2503 = vmatprep.mubr.bf16.mxu0 0
      %2504 = vmatmul.mubr.bf16.gmra.mrb[0].mxu0 %v2290
      %v2505 = vpop.f32.mrb[0].mxu0
      %v2506 = vadd.f32 0.0, %v2505
      %v2507 = vpop.f32.mrb[0].mxu0
      %v2508 = vpop.f32.mrb[0].mxu0
      %v2509 = vadd.f32 0.0, %v2508
      %v2510 = vpop.f32.mrb[0].mxu0
      %2511 = vmatprep.mubr.bf16.mxu0 0
      %2512 = vmatmul.mubr.bf16.gmra.mrb[0].mxu0 %v2291
      %v2513 = vpop.f32.mrb[0].mxu0
      %v2514 = vadd.f32 0.0, %v2513
      %v2515 = vpop.f32.mrb[0].mxu0
      %v2516 = vpop.f32.mrb[0].mxu0
      %v2517 = vadd.f32 0.0, %v2516
      %v2518 = vpop.f32.mrb[0].mxu0
      %2519 = vmatprep.mubr.bf16.mxu0 0
      %2520 = vmatmul.mubr.bf16.gmra.mrb[0].mxu0 %v2292
      %v2521 = vpop.f32.mrb[0].mxu0
      %v2522 = vadd.f32 0.0, %v2521
      %v2523 = vpop.f32.mrb[0].mxu0
      %v2524 = vpop.f32.mrb[0].mxu0
      %v2525 = vadd.f32 0.0, %v2524
      %v2526 = vpop.f32.mrb[0].mxu0
      %2527 = vmatprep.mubr.bf16.mxu0 0
      %2528 = vmatmul.mubr.bf16.gmra.mrb[0].mxu0 %v2293
      %v2529 = vpop.f32.mrb[0].mxu0
      %v2530 = vadd.f32 0.0, %v2529
      %v2531 = vpop.f32.mrb[0].mxu0
      %v2532 = vpop.f32.mrb[0].mxu0
      %v2533 = vadd.f32 0.0, %v2532
      %v2534 = vpop.f32.mrb[0].mxu0
      %2535 = vdwg.mxu0
      %v2536 = vadd.f32 %v2204, %v2394
      %v2537 = vadd.f32 %v2205, %v2397
      %v2538 = vadd.f32 %v2206, %v2402
      %v2539 = vadd.f32 %v2207, %v2405
      %v2540 = vadd.f32 %v2208, %v2410
      %v2541 = vadd.f32 %v2209, %v2413
      %v2542 = vadd.f32 %v2210, %v2418
      %v2543 = vadd.f32 %v2211, %v2421
      %v2544 = vadd.f32 %v2212, %v2426
      %v2545 = vadd.f32 %v2213, %v2429
      %v2546 = vadd.f32 %v2214, %v2434
      %v2547 = vadd.f32 %v2215, %v2437
      %v2548 = vadd.f32 %v2216, %v2442
      %v2549 = vadd.f32 %v2217, %v2445
      %v2550 = vadd.f32 %v2218, %v2450
      %v2551 = vadd.f32 %v2219, %v2453
      %v2552 = vadd.f32 %v2220, %v2458
      %v2553 = vadd.f32 %v2221, %v2461
      %v2554 = vadd.f32 %v2222, %v2466
      %v2555 = vadd.f32 %v2223, %v2469
      %v2556 = vadd.f32 %v2224, %v2474
      %v2557 = vadd.f32 %v2225, %v2477
      %v2558 = vadd.f32 %v2226, %v2482
      %v2559 = vadd.f32 %v2227, %v2485
      %v2560 = vadd.f32 %v2228, %v2490
      %v2561 = vadd.f32 %v2229, %v2493
      %v2562 = vadd.f32 %v2230, %v2498
      %v2563 = vadd.f32 %v2231, %v2501
      %v2564 = vadd.f32 %v2232, %v2506
      %v2565 = vadd.f32 %v2233, %v2509
      %v2566 = vadd.f32 %v2234, %v2514
      %v2567 = vadd.f32 %v2235, %v2517
      %v2568 = vadd.f32 %v2236, %v2522
      %v2569 = vadd.f32 %v2237, %v2525
      %v2570 = vadd.f32 %v2238, %v2530
      %v2571 = vadd.f32 %v2239, %v2533
      %v2572 = vld [vmem:[#allocation2 + $0x35] sm:$0xff]
      %v2573 = vld [vmem:[#allocation2 + $0x3d] sm:$0xff]
      %v2574 = vld [vmem:[#allocation2 + $0x45] sm:$0xff]
      %v2575 = vld [vmem:[#allocation2 + $0x4d] sm:$0xff]
      %v2576 = vld [vmem:[#allocation2 + $0x55] sm:$0xff]
      %v2577 = vld [vmem:[#allocation2 + $0x5d] sm:$0xff]
      %v2578 = vld [vmem:[#allocation2 + $0x65] sm:$0xff]
      %v2579 = vld [vmem:[#allocation2 + $0x6d] sm:$0xff]
      %v2580 = vld [vmem:[#allocation2 + $0x75] sm:$0xff]
      %v2581 = vld [vmem:[#allocation2 + $0x7d] sm:$0xff]
      %v2582 = vld [vmem:[#allocation2 + $0x85] sm:$0xff]
      %v2583 = vld [vmem:[#allocation2 + $0x8d] sm:$0xff]
      %v2584 = vld [vmem:[#allocation2 + $0x95] sm:$0xff]
      %v2585 = vld [vmem:[#allocation2 + $0x9d] sm:$0xff]
      %v2586 = vld [vmem:[#allocation2 + $0xa5] sm:$0xff]
      %v2587 = vld [vmem:[#allocation2 + $0xad] sm:$0xff]
      %v2588 = vld [vmem:[#allocation2 + $0xb5] sm:$0xff]
      %v2589 = vld [vmem:[#allocation2 + $0xbd] sm:$0xff]
      %v2590 = vld [vmem:[#allocation2 + $0xc5] sm:$0xff]
      %v2591 = vld [vmem:[#allocation2 + $0xcd] sm:$0xff]
      %v2592 = vld [vmem:[#allocation2 + $0xd5] sm:$0xff]
      %v2593 = vld [vmem:[#allocation2 + $0xdd] sm:$0xff]
      %v2594 = vld [vmem:[#allocation2 + $0xe5] sm:$0xff]
      %v2595 = vld [vmem:[#allocation2 + $0xed] sm:$0xff]
      %v2596 = vld [vmem:[#allocation2 + $0xf5] sm:$0xff]
      %v2597 = vld [vmem:[#allocation2 + $0xfd] sm:$0xff]
      %v2598 = vld [vmem:[#allocation2 + $0x105] sm:$0xff]
      %v2599 = vld [vmem:[#allocation2 + $0x10d] sm:$0xff]
      %v2600 = vld [vmem:[#allocation2 + $0x115] sm:$0xff]
      %v2601 = vld [vmem:[#allocation2 + $0x11d] sm:$0xff]
      %v2602 = vld [vmem:[#allocation2 + $0x125] sm:$0xff]
      %v2603 = vld [vmem:[#allocation2 + $0x12d] sm:$0xff]
      %v2604 = vld [vmem:[#allocation2 + $0x135] sm:$0xff]
      %v2605 = vld [vmem:[#allocation2 + $0x13d] sm:$0xff]
      %v2606 = vld [vmem:[#allocation2 + $0x145] sm:$0xff]
      %v2607 = vld [vmem:[#allocation2 + $0x14d] sm:$0xff]
      %v2608 = vpack.c.bf16 %v2573, %v2572
      %v2609 = vpack.c.bf16 %v2575, %v2574
      %v2610 = vpack.c.bf16 %v2577, %v2576
      %v2611 = vpack.c.bf16 %v2579, %v2578
      %v2612 = vpack.c.bf16 %v2581, %v2580
      %v2613 = vpack.c.bf16 %v2583, %v2582
      %v2614 = vpack.c.bf16 %v2585, %v2584
      %v2615 = vpack.c.bf16 %v2587, %v2586
      %v2616 = vpack.c.bf16 %v2589, %v2588
      %v2617 = vpack.c.bf16 %v2591, %v2590
      %v2618 = vpack.c.bf16 %v2593, %v2592
      %v2619 = vpack.c.bf16 %v2595, %v2594
      %v2620 = vpack.c.bf16 %v2597, %v2596
      %v2621 = vpack.c.bf16 %v2599, %v2598
      %v2622 = vpack.c.bf16 %v2601, %v2600
      %v2623 = vpack.c.bf16 %v2603, %v2602
      %v2624 = vpack.c.bf16 %v2605, %v2604
      %v2625 = vpack.c.bf16 %v2607, %v2606
      %s2626 = scalar_lea.vmem %s1, 384
      %v2627 = vld [vmem:[%s2626] sm:$0xf]
      %v2628 = vld [vmem:[%s2626 + $0x4] sm:$0xf]
      %v2629 = vld [vmem:[%s2626 + $0x8] sm:$0xf]
      %v2630 = vld [vmem:[%s2626 + $0xc] sm:$0xf]
      %v2631 = vld [vmem:[%s2626 + $0x10] sm:$0xf]
      %v2632 = vld [vmem:[%s2626 + $0x14] sm:$0xf]
      %v2633 = vld [vmem:[%s2626 + $0x18] sm:$0xf]
      %v2634 = vld [vmem:[%s2626 + $0x1c] sm:$0xf]
      %v2635 = vld [vmem:[%s2626 + $0x20] sm:$0xf]
      %v2636 = vld [vmem:[%s2626 + $0x24] sm:$0xf]
      %v2637 = vld [vmem:[%s2626 + $0x28] sm:$0xf]
      %v2638 = vld [vmem:[%s2626 + $0x2c] sm:$0xf]
      %v2639 = vld [vmem:[%s2626 + $0x30] sm:$0xf]
      %v2640 = vld [vmem:[%s2626 + $0x34] sm:$0xf]
      %v2641 = vld [vmem:[%s2626 + $0x38] sm:$0xf]
      %v2642 = vld [vmem:[%s2626 + $0x3c] sm:$0xf]
      %v2659 = vunpack.c.l.b16 %v2627
      %v2660 = vunpack.c.l.b16 %v2628
      %v2661 = vunpack.c.l.b16 %v2629
      %v2662 = vunpack.c.l.b16 %v2630
      %v2663 = vunpack.c.l.b16 %v2631
      %v2664 = vunpack.c.l.b16 %v2632
      %v2665 = vunpack.c.l.b16 %v2633
      %v2666 = vunpack.c.l.b16 %v2634
      %v2667 = vunpack.c.l.b16 %v2635
      %v2668 = vunpack.c.l.b16 %v2636
      %v2669 = vunpack.c.l.b16 %v2637
      %v2670 = vunpack.c.l.b16 %v2638
      %v2671 = vunpack.c.l.b16 %v2639
      %v2672 = vunpack.c.l.b16 %v2640
      %v2673 = vunpack.c.l.b16 %v2641
      %v2674 = vunpack.c.l.b16 %v2642
      %v2675 = vpack.c.b16 %v2660, %v2659
      %v2676 = vpack.c.b16 %v2662, %v2661
      %v2677 = vpack.c.b16 %v2664, %v2663
      %v2678 = vpack.c.b16 %v2666, %v2665
      %v2679 = vpack.c.b16 %v2668, %v2667
      %v2680 = vpack.c.b16 %v2670, %v2669
      %v2681 = vpack.c.b16 %v2672, %v2671
      %v2682 = vpack.c.b16 %v2674, %v2673
      %2691 = vmatprep.subr.bf16.mxu0 0
      %2692 = vmatpush1.bf16.msra.mxu0 %v2675
      %2693 = vmatprep.subr.bf16.mxu0 0
      %2694 = vmatpush1.bf16.msra.mxu0 %v2676
      %2695 = vmatprep.subr.bf16.mxu0 0
      %2696 = vmatpush1.bf16.msra.mxu0 %v2677
      %2697 = vmatprep.subr.bf16.mxu0 0
      %2698 = vmatpush1.bf16.msra.mxu0 %v2678
      %2699 = vmatprep.subr.bf16.mxu0 0
      %2700 = vmatpush1.bf16.msra.mxu0 %v2679
      %2701 = vmatprep.subr.bf16.mxu0 0
      %2702 = vmatpush1.bf16.msra.mxu0 %v2680
      %2703 = vmatprep.subr.bf16.mxu0 0
      %2704 = vmatpush1.bf16.msra.mxu0 %v2681
      %2705 = vmatprep.subr.bf16.mxu0 0
      %2706 = vmatpush1.bf16.msra.mxu0 %v2682
      %2707 = vmatprep.subr.bf16.mxu0 0
      %2708 = vmatpush1.bf16.msra.mxu0 0
      %2709 = vmatprep.subr.bf16.mxu0 0
      %2710 = vmatpush1.bf16.msra.mxu0 0
      %2711 = vmatprep.subr.bf16.mxu0 0
      %2712 = vmatpush1.bf16.msra.mxu0 0
      %2713 = vmatprep.subr.bf16.mxu0 0
      %2714 = vmatpush1.bf16.msra.mxu0 0
      %2715 = vmatprep.subr.bf16.mxu0 0
      %2716 = vmatpush1.bf16.msra.mxu0 0
      %2717 = vmatprep.subr.bf16.mxu0 0
      %2718 = vmatpush1.bf16.msra.mxu0 0
      %2719 = vmatprep.subr.bf16.mxu0 0
      %2720 = vmatpush1.bf16.msra.mxu0 0
      %2721 = vmatprep.subr.bf16.mxu0 0
      %2722 = vmatpush1.bf16.msra.mxu0 0
      %2723 = vmatprep.mubr.bf16.mxu0 0
      %2724 = vmatmul.mubr.bf16.gmra.mrb[0].mxu0 %v2608
      %v2725 = vpop.f32.mrb[0].mxu0
      %v2726 = vadd.f32 0.0, %v2725
      %v2727 = vpop.f32.mrb[0].mxu0
      %v2728 = vpop.f32.mrb[0].mxu0
      %v2729 = vadd.f32 0.0, %v2728
      %v2730 = vpop.f32.mrb[0].mxu0
      %2731 = vmatprep.mubr.bf16.mxu0 0
      %2732 = vmatmul.mubr.bf16.gmra.mrb[0].mxu0 %v2609
      %v2733 = vpop.f32.mrb[0].mxu0
      %v2734 = vadd.f32 0.0, %v2733
      %v2735 = vpop.f32.mrb[0].mxu0
      %v2736 = vpop.f32.mrb[0].mxu0
      %v2737 = vadd.f32 0.0, %v2736
      %v2738 = vpop.f32.mrb[0].mxu0
      %2739 = vmatprep.mubr.bf16.mxu0 0
      %2740 = vmatmul.mubr.bf16.gmra.mrb[0].mxu0 %v2610
      %v2741 = vpop.f32.mrb[0].mxu0
      %v2742 = vadd.f32 0.0, %v2741
      %v2743 = vpop.f32.mrb[0].mxu0
      %v2744 = vpop.f32.mrb[0].mxu0
      %v2745 = vadd.f32 0.0, %v2744
      %v2746 = vpop.f32.mrb[0].mxu0
      %2747 = vmatprep.mubr.bf16.mxu0 0
      %2748 = vmatmul.mubr.bf16.gmra.mrb[0].mxu0 %v2611
      %v2749 = vpop.f32.mrb[0].mxu0
      %v2750 = vadd.f32 0.0, %v2749
      %v2751 = vpop.f32.mrb[0].mxu0
      %v2752 = vpop.f32.mrb[0].mxu0
      %v2753 = vadd.f32 0.0, %v2752
      %v2754 = vpop.f32.mrb[0].mxu0
      %2755 = vmatprep.mubr.bf16.mxu0 0
      %2756 = vmatmul.mubr.bf16.gmra.mrb[0].mxu0 %v2612
      %v2757 = vpop.f32.mrb[0].mxu0
      %v2758 = vadd.f32 0.0, %v2757
      %v2759 = vpop.f32.mrb[0].mxu0
      %v2760 = vpop.f32.mrb[0].mxu0
      %v2761 = vadd.f32 0.0, %v2760
      %v2762 = vpop.f32.mrb[0].mxu0
      %2763 = vmatprep.mubr.bf16.mxu0 0
      %2764 = vmatmul.mubr.bf16.gmra.mrb[0].mxu0 %v2613
      %v2765 = vpop.f32.mrb[0].mxu0
      %v2766 = vadd.f32 0.0, %v2765
      %v2767 = vpop.f32.mrb[0].mxu0
      %v2768 = vpop.f32.mrb[0].mxu0
      %v2769 = vadd.f32 0.0, %v2768
      %v2770 = vpop.f32.mrb[0].mxu0
      %2771 = vmatprep.mubr.bf16.mxu0 0
      %2772 = vmatmul.mubr.bf16.gmra.mrb[0].mxu0 %v2614
      %v2773 = vpop.f32.mrb[0].mxu0
      %v2774 = vadd.f32 0.0, %v2773
      %v2775 = vpop.f32.mrb[0].mxu0
      %v2776 = vpop.f32.mrb[0].mxu0
      %v2777 = vadd.f32 0.0, %v2776
      %v2778 = vpop.f32.mrb[0].mxu0
      %2779 = vmatprep.mubr.bf16.mxu0 0
      %2780 = vmatmul.mubr.bf16.gmra.mrb[0].mxu0 %v2615
      %v2781 = vpop.f32.mrb[0].mxu0
      %v2782 = vadd.f32 0.0, %v2781
      %v2783 = vpop.f32.mrb[0].mxu0
      %v2784 = vpop.f32.mrb[0].mxu0
      %v2785 = vadd.f32 0.0, %v2784
      %v2786 = vpop.f32.mrb[0].mxu0
      %2787 = vmatprep.mubr.bf16.mxu0 0
      %2788 = vmatmul.mubr.bf16.gmra.mrb[0].mxu0 %v2616
      %v2789 = vpop.f32.mrb[0].mxu0
      %v2790 = vadd.f32 0.0, %v2789
      %v2791 = vpop.f32.mrb[0].mxu0
      %v2792 = vpop.f32.mrb[0].mxu0
      %v2793 = vadd.f32 0.0, %v2792
      %v2794 = vpop.f32.mrb[0].mxu0
      %2795 = vmatprep.mubr.bf16.mxu0 0
      %2796 = vmatmul.mubr.bf16.gmra.mrb[0].mxu0 %v2617
      %v2797 = vpop.f32.mrb[0].mxu0
      %v2798 = vadd.f32 0.0, %v2797
      %v2799 = vpop.f32.mrb[0].mxu0
      %v2800 = vpop.f32.mrb[0].mxu0
      %v2801 = vadd.f32 0.0, %v2800
      %v2802 = vpop.f32.mrb[0].mxu0
      %2803 = vmatprep.mubr.bf16.mxu0 0
      %2804 = vmatmul.mubr.bf16.gmra.mrb[0].mxu0 %v2618
      %v2805 = vpop.f32.mrb[0].mxu0
      %v2806 = vadd.f32 0.0, %v2805
      %v2807 = vpop.f32.mrb[0].mxu0
      %v2808 = vpop.f32.mrb[0].mxu0
      %v2809 = vadd.f32 0.0, %v2808
      %v2810 = vpop.f32.mrb[0].mxu0
      %2811 = vmatprep.mubr.bf16.mxu0 0
      %2812 = vmatmul.mubr.bf16.gmra.mrb[0].mxu0 %v2619
      %v2813 = vpop.f32.mrb[0].mxu0
      %v2814 = vadd.f32 0.0, %v2813
      %v2815 = vpop.f32.mrb[0].mxu0
      %v2816 = vpop.f32.mrb[0].mxu0
      %v2817 = vadd.f32 0.0, %v2816
      %v2818 = vpop.f32.mrb[0].mxu0
      %2819 = vmatprep.mubr.bf16.mxu0 0
      %2820 = vmatmul.mubr.bf16.gmra.mrb[0].mxu0 %v2620
      %v2821 = vpop.f32.mrb[0].mxu0
      %v2822 = vadd.f32 0.0, %v2821
      %v2823 = vpop.f32.mrb[0].mxu0
      %v2824 = vpop.f32.mrb[0].mxu0
      %v2825 = vadd.f32 0.0, %v2824
      %v2826 = vpop.f32.mrb[0].mxu0
      %2827 = vmatprep.mubr.bf16.mxu0 0
      %2828 = vmatmul.mubr.bf16.gmra.mrb[0].mxu0 %v2621
      %v2829 = vpop.f32.mrb[0].mxu0
      %v2830 = vadd.f32 0.0, %v2829
      %v2831 = vpop.f32.mrb[0].mxu0
      %v2832 = vpop.f32.mrb[0].mxu0
      %v2833 = vadd.f32 0.0, %v2832
      %v2834 = vpop.f32.mrb[0].mxu0
      %2835 = vmatprep.mubr.bf16.mxu0 0
      %2836 = vmatmul.mubr.bf16.gmra.mrb[0].mxu0 %v2622
      %v2837 = vpop.f32.mrb[0].mxu0
      %v2838 = vadd.f32 0.0, %v2837
      %v2839 = vpop.f32.mrb[0].mxu0
      %v2840 = vpop.f32.mrb[0].mxu0
      %v2841 = vadd.f32 0.0, %v2840
      %v2842 = vpop.f32.mrb[0].mxu0
      %2843 = vmatprep.mubr.bf16.mxu0 0
      %2844 = vmatmul.mubr.bf16.gmra.mrb[0].mxu0 %v2623
      %v2845 = vpop.f32.mrb[0].mxu0
      %v2846 = vadd.f32 0.0, %v2845
      %v2847 = vpop.f32.mrb[0].mxu0
      %v2848 = vpop.f32.mrb[0].mxu0
      %v2849 = vadd.f32 0.0, %v2848
      %v2850 = vpop.f32.mrb[0].mxu0
      %2851 = vmatprep.mubr.bf16.mxu0 0
      %2852 = vmatmul.mubr.bf16.gmra.mrb[0].mxu0 %v2624
      %v2853 = vpop.f32.mrb[0].mxu0
      %v2854 = vadd.f32 0.0, %v2853
      %v2855 = vpop.f32.mrb[0].mxu0
      %v2856 = vpop.f32.mrb[0].mxu0
      %v2857 = vadd.f32 0.0, %v2856
      %v2858 = vpop.f32.mrb[0].mxu0
      %2859 = vmatprep.mubr.bf16.mxu0 0
      %2860 = vmatmul.mubr.bf16.gmra.mrb[0].mxu0 %v2625
      %v2861 = vpop.f32.mrb[0].mxu0
      %v2862 = vadd.f32 0.0, %v2861
      %v2863 = vpop.f32.mrb[0].mxu0
      %v2864 = vpop.f32.mrb[0].mxu0
      %v2865 = vadd.f32 0.0, %v2864
      %v2866 = vpop.f32.mrb[0].mxu0
      %2867 = vdwg.mxu0
      %v2868 = vadd.f32 %v2536, %v2726
      %v2869 = vadd.f32 %v2537, %v2729
      %v2870 = vadd.f32 %v2538, %v2734
      %v2871 = vadd.f32 %v2539, %v2737
      %v2872 = vadd.f32 %v2540, %v2742
      %v2873 = vadd.f32 %v2541, %v2745
      %v2874 = vadd.f32 %v2542, %v2750
      %v2875 = vadd.f32 %v2543, %v2753
      %v2876 = vadd.f32 %v2544, %v2758
      %v2877 = vadd.f32 %v2545, %v2761
      %v2878 = vadd.f32 %v2546, %v2766
      %v2879 = vadd.f32 %v2547, %v2769
      %v2880 = vadd.f32 %v2548, %v2774
      %v2881 = vadd.f32 %v2549, %v2777
      %v2882 = vadd.f32 %v2550, %v2782
      %v2883 = vadd.f32 %v2551, %v2785
      %v2884 = vadd.f32 %v2552, %v2790
      %v2885 = vadd.f32 %v2553, %v2793
      %v2886 = vadd.f32 %v2554, %v2798
      %v2887 = vadd.f32 %v2555, %v2801
      %v2888 = vadd.f32 %v2556, %v2806
      %v2889 = vadd.f32 %v2557, %v2809
      %v2890 = vadd.f32 %v2558, %v2814
      %v2891 = vadd.f32 %v2559, %v2817
      %v2892 = vadd.f32 %v2560, %v2822
      %v2893 = vadd.f32 %v2561, %v2825
      %v2894 = vadd.f32 %v2562, %v2830
      %v2895 = vadd.f32 %v2563, %v2833
      %v2896 = vadd.f32 %v2564, %v2838
      %v2897 = vadd.f32 %v2565, %v2841
      %v2898 = vadd.f32 %v2566, %v2846
      %v2899 = vadd.f32 %v2567, %v2849
      %v2900 = vadd.f32 %v2568, %v2854
      %v2901 = vadd.f32 %v2569, %v2857
      %v2902 = vadd.f32 %v2570, %v2862
      %v2903 = vadd.f32 %v2571, %v2865
      %v2904 = vld [vmem:[#allocation2 + $0x36] sm:$0xff]
      %v2905 = vld [vmem:[#allocation2 + $0x3e] sm:$0xff]
      %v2906 = vld [vmem:[#allocation2 + $0x46] sm:$0xff]
      %v2907 = vld [vmem:[#allocation2 + $0x4e] sm:$0xff]
      %v2908 = vld [vmem:[#allocation2 + $0x56] sm:$0xff]
      %v2909 = vld [vmem:[#allocation2 + $0x5e] sm:$0xff]
      %v2910 = vld [vmem:[#allocation2 + $0x66] sm:$0xff]
      %v2911 = vld [vmem:[#allocation2 + $0x6e] sm:$0xff]
      %v2912 = vld [vmem:[#allocation2 + $0x76] sm:$0xff]
      %v2913 = vld [vmem:[#allocation2 + $0x7e] sm:$0xff]
      %v2914 = vld [vmem:[#allocation2 + $0x86] sm:$0xff]
      %v2915 = vld [vmem:[#allocation2 + $0x8e] sm:$0xff]
      %v2916 = vld [vmem:[#allocation2 + $0x96] sm:$0xff]
      %v2917 = vld [vmem:[#allocation2 + $0x9e] sm:$0xff]
      %v2918 = vld [vmem:[#allocation2 + $0xa6] sm:$0xff]
      %v2919 = vld [vmem:[#allocation2 + $0xae] sm:$0xff]
      %v2920 = vld [vmem:[#allocation2 + $0xb6] sm:$0xff]
      %v2921 = vld [vmem:[#allocation2 + $0xbe] sm:$0xff]
      %v2922 = vld [vmem:[#allocation2 + $0xc6] sm:$0xff]
      %v2923 = vld [vmem:[#allocation2 + $0xce] sm:$0xff]
      %v2924 = vld [vmem:[#allocation2 + $0xd6] sm:$0xff]
      %v2925 = vld [vmem:[#allocation2 + $0xde] sm:$0xff]
      %v2926 = vld [vmem:[#allocation2 + $0xe6] sm:$0xff]
      %v2927 = vld [vmem:[#allocation2 + $0xee] sm:$0xff]
      %v2928 = vld [vmem:[#allocation2 + $0xf6] sm:$0xff]
      %v2929 = vld [vmem:[#allocation2 + $0xfe] sm:$0xff]
      %v2930 = vld [vmem:[#allocation2 + $0x106] sm:$0xff]
      %v2931 = vld [vmem:[#allocation2 + $0x10e] sm:$0xff]
      %v2932 = vld [vmem:[#allocation2 + $0x116] sm:$0xff]
      %v2933 = vld [vmem:[#allocation2 + $0x11e] sm:$0xff]
      %v2934 = vld [vmem:[#allocation2 + $0x126] sm:$0xff]
      %v2935 = vld [vmem:[#allocation2 + $0x12e] sm:$0xff]
      %v2936 = vld [vmem:[#allocation2 + $0x136] sm:$0xff]
      %v2937 = vld [vmem:[#allocation2 + $0x13e] sm:$0xff]
      %v2938 = vld [vmem:[#allocation2 + $0x146] sm:$0xff]
      %v2939 = vld [vmem:[#allocation2 + $0x14e] sm:$0xff]
      %v2940 = vpack.c.bf16 %v2905, %v2904
      %v2941 = vpack.c.bf16 %v2907, %v2906
      %v2942 = vpack.c.bf16 %v2909, %v2908
      %v2943 = vpack.c.bf16 %v2911, %v2910
      %v2944 = vpack.c.bf16 %v2913, %v2912
      %v2945 = vpack.c.bf16 %v2915, %v2914
      %v2946 = vpack.c.bf16 %v2917, %v2916
      %v2947 = vpack.c.bf16 %v2919, %v2918
      %v2948 = vpack.c.bf16 %v2921, %v2920
      %v2949 = vpack.c.bf16 %v2923, %v2922
      %v2950 = vpack.c.bf16 %v2925, %v2924
      %v2951 = vpack.c.bf16 %v2927, %v2926
      %v2952 = vpack.c.bf16 %v2929, %v2928
      %v2953 = vpack.c.bf16 %v2931, %v2930
      %v2954 = vpack.c.bf16 %v2933, %v2932
      %v2955 = vpack.c.bf16 %v2935, %v2934
      %v2956 = vpack.c.bf16 %v2937, %v2936
      %v2957 = vpack.c.bf16 %v2939, %v2938
      %s2958 = scalar_lea.vmem %s1, 448
      %v2959 = vld [vmem:[%s2958] sm:$0xf]
      %v2960 = vld [vmem:[%s2958 + $0x4] sm:$0xf]
      %v2961 = vld [vmem:[%s2958 + $0x8] sm:$0xf]
      %v2962 = vld [vmem:[%s2958 + $0xc] sm:$0xf]
      %v2963 = vld [vmem:[%s2958 + $0x10] sm:$0xf]
      %v2964 = vld [vmem:[%s2958 + $0x14] sm:$0xf]
      %v2965 = vld [vmem:[%s2958 + $0x18] sm:$0xf]
      %v2966 = vld [vmem:[%s2958 + $0x1c] sm:$0xf]
      %v2967 = vld [vmem:[%s2958 + $0x20] sm:$0xf]
      %v2968 = vld [vmem:[%s2958 + $0x24] sm:$0xf]
      %v2969 = vld [vmem:[%s2958 + $0x28] sm:$0xf]
      %v2970 = vld [vmem:[%s2958 + $0x2c] sm:$0xf]
      %v2971 = vld [vmem:[%s2958 + $0x30] sm:$0xf]
      %v2972 = vld [vmem:[%s2958 + $0x34] sm:$0xf]
      %v2973 = vld [vmem:[%s2958 + $0x38] sm:$0xf]
      %v2974 = vld [vmem:[%s2958 + $0x3c] sm:$0xf]
      %v2991 = vunpack.c.l.b16 %v2959
      %v2992 = vunpack.c.l.b16 %v2960
      %v2993 = vunpack.c.l.b16 %v2961
      %v2994 = vunpack.c.l.b16 %v2962
      %v2995 = vunpack.c.l.b16 %v2963
      %v2996 = vunpack.c.l.b16 %v2964
      %v2997 = vunpack.c.l.b16 %v2965
      %v2998 = vunpack.c.l.b16 %v2966
      %v2999 = vunpack.c.l.b16 %v2967
      %v3000 = vunpack.c.l.b16 %v2968
      %v3001 = vunpack.c.l.b16 %v2969
      %v3002 = vunpack.c.l.b16 %v2970
      %v3003 = vunpack.c.l.b16 %v2971
      %v3004 = vunpack.c.l.b16 %v2972
      %v3005 = vunpack.c.l.b16 %v2973
      %v3006 = vunpack.c.l.b16 %v2974
      %v3007 = vpack.c.b16 %v2992, %v2991
      %v3008 = vpack.c.b16 %v2994, %v2993
      %v3009 = vpack.c.b16 %v2996, %v2995
      %v3010 = vpack.c.b16 %v2998, %v2997
      %v3011 = vpack.c.b16 %v3000, %v2999
      %v3012 = vpack.c.b16 %v3002, %v3001
      %v3013 = vpack.c.b16 %v3004, %v3003
      %v3014 = vpack.c.b16 %v3006, %v3005
      %3023 = vmatprep.subr.bf16.mxu0 0
      %3024 = vmatpush1.bf16.msra.mxu0 %v3007
      %3025 = vmatprep.subr.bf16.mxu0 0
      %3026 = vmatpush1.bf16.msra.mxu0 %v3008
      %3027 = vmatprep.subr.bf16.mxu0 0
      %3028 = vmatpush1.bf16.msra.mxu0 %v3009
      %3029 = vmatprep.subr.bf16.mxu0 0
      %3030 = vmatpush1.bf16.msra.mxu0 %v3010
      %3031 = vmatprep.subr.bf16.mxu0 0
      %3032 = vmatpush1.bf16.msra.mxu0 %v3011
      %3033 = vmatprep.subr.bf16.mxu0 0
      %3034 = vmatpush1.bf16.msra.mxu0 %v3012
      %3035 = vmatprep.subr.bf16.mxu0 0
      %3036 = vmatpush1.bf16.msra.mxu0 %v3013
      %3037 = vmatprep.subr.bf16.mxu0 0
      %3038 = vmatpush1.bf16.msra.mxu0 %v3014
      %3039 = vmatprep.subr.bf16.mxu0 0
      %3040 = vmatpush1.bf16.msra.mxu0 0
      %3041 = vmatprep.subr.bf16.mxu0 0
      %3042 = vmatpush1.bf16.msra.mxu0 0
      %3043 = vmatprep.subr.bf16.mxu0 0
      %3044 = vmatpush1.bf16.msra.mxu0 0
      %3045 = vmatprep.subr.bf16.mxu0 0
      %3046 = vmatpush1.bf16.msra.mxu0 0
      %3047 = vmatprep.subr.bf16.mxu0 0
      %3048 = vmatpush1.bf16.msra.mxu0 0
      %3049 = vmatprep.subr.bf16.mxu0 0
      %3050 = vmatpush1.bf16.msra.mxu0 0
      %3051 = vmatprep.subr.bf16.mxu0 0
      %3052 = vmatpush1.bf16.msra.mxu0 0
      %3053 = vmatprep.subr.bf16.mxu0 0
      %3054 = vmatpush1.bf16.msra.mxu0 0
      %3055 = vmatprep.mubr.bf16.mxu0 0
      %3056 = vmatmul.mubr.bf16.gmra.mrb[0].mxu0 %v2940
      %v3057 = vpop.f32.mrb[0].mxu0
      %v3058 = vadd.f32 0.0, %v3057
      %v3059 = vpop.f32.mrb[0].mxu0
      %v3060 = vpop.f32.mrb[0].mxu0
      %v3061 = vadd.f32 0.0, %v3060
      %v3062 = vpop.f32.mrb[0].mxu0
      %3063 = vmatprep.mubr.bf16.mxu0 0
      %3064 = vmatmul.mubr.bf16.gmra.mrb[0].mxu0 %v2941
      %v3065 = vpop.f32.mrb[0].mxu0
      %v3066 = vadd.f32 0.0, %v3065
      %v3067 = vpop.f32.mrb[0].mxu0
      %v3068 = vpop.f32.mrb[0].mxu0
      %v3069 = vadd.f32 0.0, %v3068
      %v3070 = vpop.f32.mrb[0].mxu0
      %3071 = vmatprep.mubr.bf16.mxu0 0
      %3072 = vmatmul.mubr.bf16.gmra.mrb[0].mxu0 %v2942
      %v3073 = vpop.f32.mrb[0].mxu0
      %v3074 = vadd.f32 0.0, %v3073
      %v3075 = vpop.f32.mrb[0].mxu0
      %v3076 = vpop.f32.mrb[0].mxu0
      %v3077 = vadd.f32 0.0, %v3076
      %v3078 = vpop.f32.mrb[0].mxu0
      %3079 = vmatprep.mubr.bf16.mxu0 0
      %3080 = vmatmul.mubr.bf16.gmra.mrb[0].mxu0 %v2943
      %v3081 = vpop.f32.mrb[0].mxu0
      %v3082 = vadd.f32 0.0, %v3081
      %v3083 = vpop.f32.mrb[0].mxu0
      %v3084 = vpop.f32.mrb[0].mxu0
      %v3085 = vadd.f32 0.0, %v3084
      %v3086 = vpop.f32.mrb[0].mxu0
      %3087 = vmatprep.mubr.bf16.mxu0 0
      %3088 = vmatmul.mubr.bf16.gmra.mrb[0].mxu0 %v2944
      %v3089 = vpop.f32.mrb[0].mxu0
      %v3090 = vadd.f32 0.0, %v3089
      %v3091 = vpop.f32.mrb[0].mxu0
      %v3092 = vpop.f32.mrb[0].mxu0
      %v3093 = vadd.f32 0.0, %v3092
      %v3094 = vpop.f32.mrb[0].mxu0
      %3095 = vmatprep.mubr.bf16.mxu0 0
      %3096 = vmatmul.mubr.bf16.gmra.mrb[0].mxu0 %v2945
      %v3097 = vpop.f32.mrb[0].mxu0
      %v3098 = vadd.f32 0.0, %v3097
      %v3099 = vpop.f32.mrb[0].mxu0
      %v3100 = vpop.f32.mrb[0].mxu0
      %v3101 = vadd.f32 0.0, %v3100
      %v3102 = vpop.f32.mrb[0].mxu0
      %3103 = vmatprep.mubr.bf16.mxu0 0
      %3104 = vmatmul.mubr.bf16.gmra.mrb[0].mxu0 %v2946
      %v3105 = vpop.f32.mrb[0].mxu0
      %v3106 = vadd.f32 0.0, %v3105
      %v3107 = vpop.f32.mrb[0].mxu0
      %v3108 = vpop.f32.mrb[0].mxu0
      %v3109 = vadd.f32 0.0, %v3108
      %v3110 = vpop.f32.mrb[0].mxu0
      %3111 = vmatprep.mubr.bf16.mxu0 0
      %3112 = vmatmul.mubr.bf16.gmra.mrb[0].mxu0 %v2947
      %v3113 = vpop.f32.mrb[0].mxu0
      %v3114 = vadd.f32 0.0, %v3113
      %v3115 = vpop.f32.mrb[0].mxu0
      %v3116 = vpop.f32.mrb[0].mxu0
      %v3117 = vadd.f32 0.0, %v3116
      %v3118 = vpop.f32.mrb[0].mxu0
      %3119 = vmatprep.mubr.bf16.mxu0 0
      %3120 = vmatmul.mubr.bf16.gmra.mrb[0].mxu0 %v2948
      %v3121 = vpop.f32.mrb[0].mxu0
      %v3122 = vadd.f32 0.0, %v3121
      %v3123 = vpop.f32.mrb[0].mxu0
      %v3124 = vpop.f32.mrb[0].mxu0
      %v3125 = vadd.f32 0.0, %v3124
      %v3126 = vpop.f32.mrb[0].mxu0
      %3127 = vmatprep.mubr.bf16.mxu0 0
      %3128 = vmatmul.mubr.bf16.gmra.mrb[0].mxu0 %v2949
      %v3129 = vpop.f32.mrb[0].mxu0
      %v3130 = vadd.f32 0.0, %v3129
      %v3131 = vpop.f32.mrb[0].mxu0
      %v3132 = vpop.f32.mrb[0].mxu0
      %v3133 = vadd.f32 0.0, %v3132
      %v3134 = vpop.f32.mrb[0].mxu0
      %3135 = vmatprep.mubr.bf16.mxu0 0
      %3136 = vmatmul.mubr.bf16.gmra.mrb[0].mxu0 %v2950
      %v3137 = vpop.f32.mrb[0].mxu0
      %v3138 = vadd.f32 0.0, %v3137
      %v3139 = vpop.f32.mrb[0].mxu0
      %v3140 = vpop.f32.mrb[0].mxu0
      %v3141 = vadd.f32 0.0, %v3140
      %v3142 = vpop.f32.mrb[0].mxu0
      %3143 = vmatprep.mubr.bf16.mxu0 0
      %3144 = vmatmul.mubr.bf16.gmra.mrb[0].mxu0 %v2951
      %v3145 = vpop.f32.mrb[0].mxu0
      %v3146 = vadd.f32 0.0, %v3145
      %v3147 = vpop.f32.mrb[0].mxu0
      %v3148 = vpop.f32.mrb[0].mxu0
      %v3149 = vadd.f32 0.0, %v3148
      %v3150 = vpop.f32.mrb[0].mxu0
      %3151 = vmatprep.mubr.bf16.mxu0 0
      %3152 = vmatmul.mubr.bf16.gmra.mrb[0].mxu0 %v2952
      %v3153 = vpop.f32.mrb[0].mxu0
      %v3154 = vadd.f32 0.0, %v3153
      %v3155 = vpop.f32.mrb[0].mxu0
      %v3156 = vpop.f32.mrb[0].mxu0
      %v3157 = vadd.f32 0.0, %v3156
      %v3158 = vpop.f32.mrb[0].mxu0
      %3159 = vmatprep.mubr.bf16.mxu0 0
      %3160 = vmatmul.mubr.bf16.gmra.mrb[0].mxu0 %v2953
      %v3161 = vpop.f32.mrb[0].mxu0
      %v3162 = vadd.f32 0.0, %v3161
      %v3163 = vpop.f32.mrb[0].mxu0
      %v3164 = vpop.f32.mrb[0].mxu0
      %v3165 = vadd.f32 0.0, %v3164
      %v3166 = vpop.f32.mrb[0].mxu0
      %3167 = vmatprep.mubr.bf16.mxu0 0
      %3168 = vmatmul.mubr.bf16.gmra.mrb[0].mxu0 %v2954
      %v3169 = vpop.f32.mrb[0].mxu0
      %v3170 = vadd.f32 0.0, %v3169
      %v3171 = vpop.f32.mrb[0].mxu0
      %v3172 = vpop.f32.mrb[0].mxu0
      %v3173 = vadd.f32 0.0, %v3172
      %v3174 = vpop.f32.mrb[0].mxu0
      %3175 = vmatprep.mubr.bf16.mxu0 0
      %3176 = vmatmul.mubr.bf16.gmra.mrb[0].mxu0 %v2955
      %v3177 = vpop.f32.mrb[0].mxu0
      %v3178 = vadd.f32 0.0, %v3177
      %v3179 = vpop.f32.mrb[0].mxu0
      %v3180 = vpop.f32.mrb[0].mxu0
      %v3181 = vadd.f32 0.0, %v3180
      %v3182 = vpop.f32.mrb[0].mxu0
      %3183 = vmatprep.mubr.bf16.mxu0 0
      %3184 = vmatmul.mubr.bf16.gmra.mrb[0].mxu0 %v2956
      %v3185 = vpop.f32.mrb[0].mxu0
      %v3186 = vadd.f32 0.0, %v3185
      %v3187 = vpop.f32.mrb[0].mxu0
      %v3188 = vpop.f32.mrb[0].mxu0
      %v3189 = vadd.f32 0.0, %v3188
      %v3190 = vpop.f32.mrb[0].mxu0
      %3191 = vmatprep.mubr.bf16.mxu0 0
      %3192 = vmatmul.mubr.bf16.gmra.mrb[0].mxu0 %v2957
      %v3193 = vpop.f32.mrb[0].mxu0
      %v3194 = vadd.f32 0.0, %v3193
      %v3195 = vpop.f32.mrb[0].mxu0
      %v3196 = vpop.f32.mrb[0].mxu0
      %v3197 = vadd.f32 0.0, %v3196
      %v3198 = vpop.f32.mrb[0].mxu0
      %3199 = vdwg.mxu0
      %v3200 = vadd.f32 %v2868, %v3058
      %v3201 = vadd.f32 %v2869, %v3061
      %v3202 = vadd.f32 %v2870, %v3066
      %v3203 = vadd.f32 %v2871, %v3069
      %v3204 = vadd.f32 %v2872, %v3074
      %v3205 = vadd.f32 %v2873, %v3077
      %v3206 = vadd.f32 %v2874, %v3082
      %v3207 = vadd.f32 %v2875, %v3085
      %v3208 = vadd.f32 %v2876, %v3090
      %v3209 = vadd.f32 %v2877, %v3093
      %v3210 = vadd.f32 %v2878, %v3098
      %v3211 = vadd.f32 %v2879, %v3101
      %v3212 = vadd.f32 %v2880, %v3106
      %v3213 = vadd.f32 %v2881, %v3109
      %v3214 = vadd.f32 %v2882, %v3114
      %v3215 = vadd.f32 %v2883, %v3117
      %v3216 = vadd.f32 %v2884, %v3122
      %v3217 = vadd.f32 %v2885, %v3125
      %v3218 = vadd.f32 %v2886, %v3130
      %v3219 = vadd.f32 %v2887, %v3133
      %v3220 = vadd.f32 %v2888, %v3138
      %v3221 = vadd.f32 %v2889, %v3141
      %v3222 = vadd.f32 %v2890, %v3146
      %v3223 = vadd.f32 %v2891, %v3149
      %v3224 = vadd.f32 %v2892, %v3154
      %v3225 = vadd.f32 %v2893, %v3157
      %v3226 = vadd.f32 %v2894, %v3162
      %v3227 = vadd.f32 %v2895, %v3165
      %v3228 = vadd.f32 %v2896, %v3170
      %v3229 = vadd.f32 %v2897, %v3173
      %v3230 = vadd.f32 %v2898, %v3178
      %v3231 = vadd.f32 %v2899, %v3181
      %v3232 = vadd.f32 %v2900, %v3186
      %v3233 = vadd.f32 %v2901, %v3189
      %v3234 = vadd.f32 %v2902, %v3194
      %v3235 = vadd.f32 %v2903, %v3197
      %v3236 = vld [vmem:[#allocation2 + $0x37] sm:$0xff]
      %v3237 = vld [vmem:[#allocation2 + $0x3f] sm:$0xff]
      %v3238 = vld [vmem:[#allocation2 + $0x47] sm:$0xff]
      %v3239 = vld [vmem:[#allocation2 + $0x4f] sm:$0xff]
      %v3240 = vld [vmem:[#allocation2 + $0x57] sm:$0xff]
      %v3241 = vld [vmem:[#allocation2 + $0x5f] sm:$0xff]
      %v3242 = vld [vmem:[#allocation2 + $0x67] sm:$0xff]
      %v3243 = vld [vmem:[#allocation2 + $0x6f] sm:$0xff]
      %v3244 = vld [vmem:[#allocation2 + $0x77] sm:$0xff]
      %v3245 = vld [vmem:[#allocation2 + $0x7f] sm:$0xff]
      %v3246 = vld [vmem:[#allocation2 + $0x87] sm:$0xff]
      %v3247 = vld [vmem:[#allocation2 + $0x8f] sm:$0xff]
      %v3248 = vld [vmem:[#allocation2 + $0x97] sm:$0xff]
      %v3249 = vld [vmem:[#allocation2 + $0x9f] sm:$0xff]
      %v3250 = vld [vmem:[#allocation2 + $0xa7] sm:$0xff]
      %v3251 = vld [vmem:[#allocation2 + $0xaf] sm:$0xff]
      %v3252 = vld [vmem:[#allocation2 + $0xb7] sm:$0xff]
      %v3253 = vld [vmem:[#allocation2 + $0xbf] sm:$0xff]
      %v3254 = vld [vmem:[#allocation2 + $0xc7] sm:$0xff]
      %v3255 = vld [vmem:[#allocation2 + $0xcf] sm:$0xff]
      %v3256 = vld [vmem:[#allocation2 + $0xd7] sm:$0xff]
      %v3257 = vld [vmem:[#allocation2 + $0xdf] sm:$0xff]
      %v3258 = vld [vmem:[#allocation2 + $0xe7] sm:$0xff]
      %v3259 = vld [vmem:[#allocation2 + $0xef] sm:$0xff]
      %v3260 = vld [vmem:[#allocation2 + $0xf7] sm:$0xff]
      %v3261 = vld [vmem:[#allocation2 + $0xff] sm:$0xff]
      %v3262 = vld [vmem:[#allocation2 + $0x107] sm:$0xff]
      %v3263 = vld [vmem:[#allocation2 + $0x10f] sm:$0xff]
      %v3264 = vld [vmem:[#allocation2 + $0x117] sm:$0xff]
      %v3265 = vld [vmem:[#allocation2 + $0x11f] sm:$0xff]
      %v3266 = vld [vmem:[#allocation2 + $0x127] sm:$0xff]
      %v3267 = vld [vmem:[#allocation2 + $0x12f] sm:$0xff]
      %v3268 = vld [vmem:[#allocation2 + $0x137] sm:$0xff]
      %v3269 = vld [vmem:[#allocation2 + $0x13f] sm:$0xff]
      %v3270 = vld [vmem:[#allocation2 + $0x147] sm:$0xff]
      %v3271 = vld [vmem:[#allocation2 + $0x14f] sm:$0xff]
      %v3272 = vpack.c.bf16 %v3237, %v3236
      %v3273 = vpack.c.bf16 %v3239, %v3238
      %v3274 = vpack.c.bf16 %v3241, %v3240
      %v3275 = vpack.c.bf16 %v3243, %v3242
      %v3276 = vpack.c.bf16 %v3245, %v3244
      %v3277 = vpack.c.bf16 %v3247, %v3246
      %v3278 = vpack.c.bf16 %v3249, %v3248
      %v3279 = vpack.c.bf16 %v3251, %v3250
      %v3280 = vpack.c.bf16 %v3253, %v3252
      %v3281 = vpack.c.bf16 %v3255, %v3254
      %v3282 = vpack.c.bf16 %v3257, %v3256
      %v3283 = vpack.c.bf16 %v3259, %v3258
      %v3284 = vpack.c.bf16 %v3261, %v3260
      %v3285 = vpack.c.bf16 %v3263, %v3262
      %v3286 = vpack.c.bf16 %v3265, %v3264
      %v3287 = vpack.c.bf16 %v3267, %v3266
      %v3288 = vpack.c.bf16 %v3269, %v3268
      %v3289 = vpack.c.bf16 %v3271, %v3270
      %s3290 = scalar_lea.vmem %s1, 512
      %v3291 = vld [vmem:[%s3290] sm:$0xf]
      %v3292 = vld [vmem:[%s3290 + $0x4] sm:$0xf]
      %v3293 = vld [vmem:[%s3290 + $0x8] sm:$0xf]
      %v3294 = vld [vmem:[%s3290 + $0xc] sm:$0xf]
      %v3295 = vld [vmem:[%s3290 + $0x10] sm:$0xf]
      %v3296 = vld [vmem:[%s3290 + $0x14] sm:$0xf]
      %v3297 = vld [vmem:[%s3290 + $0x18] sm:$0xf]
      %v3298 = vld [vmem:[%s3290 + $0x1c] sm:$0xf]
      %v3299 = vld [vmem:[%s3290 + $0x20] sm:$0xf]
      %v3300 = vld [vmem:[%s3290 + $0x24] sm:$0xf]
      %v3301 = vld [vmem:[%s3290 + $0x28] sm:$0xf]
      %v3302 = vld [vmem:[%s3290 + $0x2c] sm:$0xf]
      %v3303 = vld [vmem:[%s3290 + $0x30] sm:$0xf]
      %v3304 = vld [vmem:[%s3290 + $0x34] sm:$0xf]
      %v3305 = vld [vmem:[%s3290 + $0x38] sm:$0xf]
      %v3306 = vld [vmem:[%s3290 + $0x3c] sm:$0xf]
      %v3323 = vunpack.c.l.b16 %v3291
      %v3324 = vunpack.c.l.b16 %v3292
      %v3325 = vunpack.c.l.b16 %v3293
      %v3326 = vunpack.c.l.b16 %v3294
      %v3327 = vunpack.c.l.b16 %v3295
      %v3328 = vunpack.c.l.b16 %v3296
      %v3329 = vunpack.c.l.b16 %v3297
      %v3330 = vunpack.c.l.b16 %v3298
      %v3331 = vunpack.c.l.b16 %v3299
      %v3332 = vunpack.c.l.b16 %v3300
      %v3333 = vunpack.c.l.b16 %v3301
      %v3334 = vunpack.c.l.b16 %v3302
      %v3335 = vunpack.c.l.b16 %v3303
      %v3336 = vunpack.c.l.b16 %v3304
      %v3337 = vunpack.c.l.b16 %v3305
      %v3338 = vunpack.c.l.b16 %v3306
      %v3339 = vpack.c.b16 %v3324, %v3323
      %v3340 = vpack.c.b16 %v3326, %v3325
      %v3341 = vpack.c.b16 %v3328, %v3327
      %v3342 = vpack.c.b16 %v3330, %v3329
      %v3343 = vpack.c.b16 %v3332, %v3331
      %v3344 = vpack.c.b16 %v3334, %v3333
      %v3345 = vpack.c.b16 %v3336, %v3335
      %v3346 = vpack.c.b16 %v3338, %v3337
      %3355 = vmatprep.subr.bf16.mxu0 0
      %3356 = vmatpush1.bf16.msra.mxu0 %v3339
      %3357 = vmatprep.subr.bf16.mxu0 0
      %3358 = vmatpush1.bf16.msra.mxu0 %v3340
      %3359 = vmatprep.subr.bf16.mxu0 0
      %3360 = vmatpush1.bf16.msra.mxu0 %v3341
      %3361 = vmatprep.subr.bf16.mxu0 0
      %3362 = vmatpush1.bf16.msra.mxu0 %v3342
      %3363 = vmatprep.subr.bf16.mxu0 0
      %3364 = vmatpush1.bf16.msra.mxu0 %v3343
      %3365 = vmatprep.subr.bf16.mxu0 0
      %3366 = vmatpush1.bf16.msra.mxu0 %v3344
      %3367 = vmatprep.subr.bf16.mxu0 0
      %3368 = vmatpush1.bf16.msra.mxu0 %v3345
      %3369 = vmatprep.subr.bf16.mxu0 0
      %3370 = vmatpush1.bf16.msra.mxu0 %v3346
      %3371 = vmatprep.subr.bf16.mxu0 0
      %3372 = vmatpush1.bf16.msra.mxu0 0
      %3373 = vmatprep.subr.bf16.mxu0 0
      %3374 = vmatpush1.bf16.msra.mxu0 0
      %3375 = vmatprep.subr.bf16.mxu0 0
      %3376 = vmatpush1.bf16.msra.mxu0 0
      %3377 = vmatprep.subr.bf16.mxu0 0
      %3378 = vmatpush1.bf16.msra.mxu0 0
      %3379 = vmatprep.subr.bf16.mxu0 0
      %3380 = vmatpush1.bf16.msra.mxu0 0
      %3381 = vmatprep.subr.bf16.mxu0 0
      %3382 = vmatpush1.bf16.msra.mxu0 0
      %3383 = vmatprep.subr.bf16.mxu0 0
      %3384 = vmatpush1.bf16.msra.mxu0 0
      %3385 = vmatprep.subr.bf16.mxu0 0
      %3386 = vmatpush1.bf16.msra.mxu0 0
      %3387 = vmatprep.mubr.bf16.mxu0 0
      %3388 = vmatmul.mubr.bf16.gmra.mrb[0].mxu0 %v3272
      %v3389 = vpop.f32.mrb[0].mxu0
      %v3390 = vadd.f32 0.0, %v3389
      %v3391 = vpop.f32.mrb[0].mxu0
      %v3392 = vpop.f32.mrb[0].mxu0
      %v3393 = vadd.f32 0.0, %v3392
      %v3394 = vpop.f32.mrb[0].mxu0
      %3395 = vmatprep.mubr.bf16.mxu0 0
      %3396 = vmatmul.mubr.bf16.gmra.mrb[0].mxu0 %v3273
      %v3397 = vpop.f32.mrb[0].mxu0
      %v3398 = vadd.f32 0.0, %v3397
      %v3399 = vpop.f32.mrb[0].mxu0
      %v3400 = vpop.f32.mrb[0].mxu0
      %v3401 = vadd.f32 0.0, %v3400
      %v3402 = vpop.f32.mrb[0].mxu0
      %3403 = vmatprep.mubr.bf16.mxu0 0
      %3404 = vmatmul.mubr.bf16.gmra.mrb[0].mxu0 %v3274
      %v3405 = vpop.f32.mrb[0].mxu0
      %v3406 = vadd.f32 0.0, %v3405
      %v3407 = vpop.f32.mrb[0].mxu0
      %v3408 = vpop.f32.mrb[0].mxu0
      %v3409 = vadd.f32 0.0, %v3408
      %v3410 = vpop.f32.mrb[0].mxu0
      %3411 = vmatprep.mubr.bf16.mxu0 0
      %3412 = vmatmul.mubr.bf16.gmra.mrb[0].mxu0 %v3275
      %v3413 = vpop.f32.mrb[0].mxu0
      %v3414 = vadd.f32 0.0, %v3413
      %v3415 = vpop.f32.mrb[0].mxu0
      %v3416 = vpop.f32.mrb[0].mxu0
      %v3417 = vadd.f32 0.0, %v3416
      %v3418 = vpop.f32.mrb[0].mxu0
      %3419 = vmatprep.mubr.bf16.mxu0 0
      %3420 = vmatmul.mubr.bf16.gmra.mrb[0].mxu0 %v3276
      %v3421 = vpop.f32.mrb[0].mxu0
      %v3422 = vadd.f32 0.0, %v3421
      %v3423 = vpop.f32.mrb[0].mxu0
      %v3424 = vpop.f32.mrb[0].mxu0
      %v3425 = vadd.f32 0.0, %v3424
      %v3426 = vpop.f32.mrb[0].mxu0
      %3427 = vmatprep.mubr.bf16.mxu0 0
      %3428 = vmatmul.mubr.bf16.gmra.mrb[0].mxu0 %v3277
      %v3429 = vpop.f32.mrb[0].mxu0
      %v3430 = vadd.f32 0.0, %v3429
      %v3431 = vpop.f32.mrb[0].mxu0
      %v3432 = vpop.f32.mrb[0].mxu0
      %v3433 = vadd.f32 0.0, %v3432
      %v3434 = vpop.f32.mrb[0].mxu0
      %3435 = vmatprep.mubr.bf16.mxu0 0
      %3436 = vmatmul.mubr.bf16.gmra.mrb[0].mxu0 %v3278
      %v3437 = vpop.f32.mrb[0].mxu0
      %v3438 = vadd.f32 0.0, %v3437
      %v3439 = vpop.f32.mrb[0].mxu0
      %v3440 = vpop.f32.mrb[0].mxu0
      %v3441 = vadd.f32 0.0, %v3440
      %v3442 = vpop.f32.mrb[0].mxu0
      %3443 = vmatprep.mubr.bf16.mxu0 0
      %3444 = vmatmul.mubr.bf16.gmra.mrb[0].mxu0 %v3279
      %v3445 = vpop.f32.mrb[0].mxu0
      %v3446 = vadd.f32 0.0, %v3445
      %v3447 = vpop.f32.mrb[0].mxu0
      %v3448 = vpop.f32.mrb[0].mxu0
      %v3449 = vadd.f32 0.0, %v3448
      %v3450 = vpop.f32.mrb[0].mxu0
      %3451 = vmatprep.mubr.bf16.mxu0 0
      %3452 = vmatmul.mubr.bf16.gmra.mrb[0].mxu0 %v3280
      %v3453 = vpop.f32.mrb[0].mxu0
      %v3454 = vadd.f32 0.0, %v3453
      %v3455 = vpop.f32.mrb[0].mxu0
      %v3456 = vpop.f32.mrb[0].mxu0
      %v3457 = vadd.f32 0.0, %v3456
      %v3458 = vpop.f32.mrb[0].mxu0
      %3459 = vmatprep.mubr.bf16.mxu0 0
      %3460 = vmatmul.mubr.bf16.gmra.mrb[0].mxu0 %v3281
      %v3461 = vpop.f32.mrb[0].mxu0
      %v3462 = vadd.f32 0.0, %v3461
      %v3463 = vpop.f32.mrb[0].mxu0
      %v3464 = vpop.f32.mrb[0].mxu0
      %v3465 = vadd.f32 0.0, %v3464
      %v3466 = vpop.f32.mrb[0].mxu0
      %3467 = vmatprep.mubr.bf16.mxu0 0
      %3468 = vmatmul.mubr.bf16.gmra.mrb[0].mxu0 %v3282
      %v3469 = vpop.f32.mrb[0].mxu0
      %v3470 = vadd.f32 0.0, %v3469
      %v3471 = vpop.f32.mrb[0].mxu0
      %v3472 = vpop.f32.mrb[0].mxu0
      %v3473 = vadd.f32 0.0, %v3472
      %v3474 = vpop.f32.mrb[0].mxu0
      %3475 = vmatprep.mubr.bf16.mxu0 0
      %3476 = vmatmul.mubr.bf16.gmra.mrb[0].mxu0 %v3283
      %v3477 = vpop.f32.mrb[0].mxu0
      %v3478 = vadd.f32 0.0, %v3477
      %v3479 = vpop.f32.mrb[0].mxu0
      %v3480 = vpop.f32.mrb[0].mxu0
      %v3481 = vadd.f32 0.0, %v3480
      %v3482 = vpop.f32.mrb[0].mxu0
      %3483 = vmatprep.mubr.bf16.mxu0 0
      %3484 = vmatmul.mubr.bf16.gmra.mrb[0].mxu0 %v3284
      %v3485 = vpop.f32.mrb[0].mxu0
      %v3486 = vadd.f32 0.0, %v3485
      %v3487 = vpop.f32.mrb[0].mxu0
      %v3488 = vpop.f32.mrb[0].mxu0
      %v3489 = vadd.f32 0.0, %v3488
      %v3490 = vpop.f32.mrb[0].mxu0
      %3491 = vmatprep.mubr.bf16.mxu0 0
      %3492 = vmatmul.mubr.bf16.gmra.mrb[0].mxu0 %v3285
      %v3493 = vpop.f32.mrb[0].mxu0
      %v3494 = vadd.f32 0.0, %v3493
      %v3495 = vpop.f32.mrb[0].mxu0
      %v3496 = vpop.f32.mrb[0].mxu0
      %v3497 = vadd.f32 0.0, %v3496
      %v3498 = vpop.f32.mrb[0].mxu0
      %3499 = vmatprep.mubr.bf16.mxu0 0
      %3500 = vmatmul.mubr.bf16.gmra.mrb[0].mxu0 %v3286
      %v3501 = vpop.f32.mrb[0].mxu0
      %v3502 = vadd.f32 0.0, %v3501
      %v3503 = vpop.f32.mrb[0].mxu0
      %v3504 = vpop.f32.mrb[0].mxu0
      %v3505 = vadd.f32 0.0, %v3504
      %v3506 = vpop.f32.mrb[0].mxu0
      %3507 = vmatprep.mubr.bf16.mxu0 0
      %3508 = vmatmul.mubr.bf16.gmra.mrb[0].mxu0 %v3287
      %v3509 = vpop.f32.mrb[0].mxu0
      %v3510 = vadd.f32 0.0, %v3509
      %v3511 = vpop.f32.mrb[0].mxu0
      %v3512 = vpop.f32.mrb[0].mxu0
      %v3513 = vadd.f32 0.0, %v3512
      %v3514 = vpop.f32.mrb[0].mxu0
      %3515 = vmatprep.mubr.bf16.mxu0 0
      %3516 = vmatmul.mubr.bf16.gmra.mrb[0].mxu0 %v3288
      %v3517 = vpop.f32.mrb[0].mxu0
      %v3518 = vadd.f32 0.0, %v3517
      %v3519 = vpop.f32.mrb[0].mxu0
      %v3520 = vpop.f32.mrb[0].mxu0
      %v3521 = vadd.f32 0.0, %v3520
      %v3522 = vpop.f32.mrb[0].mxu0
      %3523 = vmatprep.mubr.bf16.mxu0 0
      %3524 = vmatmul.mubr.bf16.gmra.mrb[0].mxu0 %v3289
      %v3525 = vpop.f32.mrb[0].mxu0
      %v3526 = vadd.f32 0.0, %v3525
      %v3527 = vpop.f32.mrb[0].mxu0
      %v3528 = vpop.f32.mrb[0].mxu0
      %v3529 = vadd.f32 0.0, %v3528
      %v3530 = vpop.f32.mrb[0].mxu0
      %3531 = vdwg.mxu0
      %v3532 = vadd.f32 %v3200, %v3390
      %v3533 = vadd.f32 %v3201, %v3393
      %v3534 = vadd.f32 %v3202, %v3398
      %v3535 = vadd.f32 %v3203, %v3401
      %v3536 = vadd.f32 %v3204, %v3406
      %v3537 = vadd.f32 %v3205, %v3409
      %v3538 = vadd.f32 %v3206, %v3414
      %v3539 = vadd.f32 %v3207, %v3417
      %v3540 = vadd.f32 %v3208, %v3422
      %v3541 = vadd.f32 %v3209, %v3425
      %v3542 = vadd.f32 %v3210, %v3430
      %v3543 = vadd.f32 %v3211, %v3433
      %v3544 = vadd.f32 %v3212, %v3438
      %v3545 = vadd.f32 %v3213, %v3441
      %v3546 = vadd.f32 %v3214, %v3446
      %v3547 = vadd.f32 %v3215, %v3449
      %v3548 = vadd.f32 %v3216, %v3454
      %v3549 = vadd.f32 %v3217, %v3457
      %v3550 = vadd.f32 %v3218, %v3462
      %v3551 = vadd.f32 %v3219, %v3465
      %v3552 = vadd.f32 %v3220, %v3470
      %v3553 = vadd.f32 %v3221, %v3473
      %v3554 = vadd.f32 %v3222, %v3478
      %v3555 = vadd.f32 %v3223, %v3481
      %v3556 = vadd.f32 %v3224, %v3486
      %v3557 = vadd.f32 %v3225, %v3489
      %v3558 = vadd.f32 %v3226, %v3494
      %v3559 = vadd.f32 %v3227, %v3497
      %v3560 = vadd.f32 %v3228, %v3502
      %v3561 = vadd.f32 %v3229, %v3505
      %v3562 = vadd.f32 %v3230, %v3510
      %v3563 = vadd.f32 %v3231, %v3513
      %v3564 = vadd.f32 %v3232, %v3518
      %v3565 = vadd.f32 %v3233, %v3521
      %v3566 = vadd.f32 %v3234, %v3526
      %v3567 = vadd.f32 %v3235, %v3529
      %v3568 = vld [vmem:[%s5] sm:$0xff]
      %v3569 = vld [vmem:[%s5 + $0x8] sm:$0xff]
      %v3570 = vld [vmem:[%s5 + $0x10] sm:$0xff]
      %v3571 = vld [vmem:[%s5 + $0x18] sm:$0xff]
      %v3572 = vld [vmem:[%s5 + $0x20] sm:$0xff]
      %v3573 = vld [vmem:[%s5 + $0x28] sm:$0xff]
      %v3574 = vld [vmem:[%s5 + $0x30] sm:$0xff]
      %v3575 = vld [vmem:[%s5 + $0x38] sm:$0xff]
      %v3576 = vld [vmem:[%s5 + $0x40] sm:$0xff]
      %v3577 = vld [vmem:[%s5 + $0x48] sm:$0xff]
      %v3578 = vld [vmem:[%s5 + $0x50] sm:$0xff]
      %v3579 = vld [vmem:[%s5 + $0x58] sm:$0xff]
      %v3580 = vld [vmem:[%s5 + $0x60] sm:$0xff]
      %v3581 = vld [vmem:[%s5 + $0x68] sm:$0xff]
      %v3582 = vld [vmem:[%s5 + $0x70] sm:$0xff]
      %v3583 = vld [vmem:[%s5 + $0x78] sm:$0xff]
      %v3584 = vld [vmem:[%s5 + $0x80] sm:$0xff]
      %v3585 = vld [vmem:[%s5 + $0x88] sm:$0xff]
      %v3586 = vld [vmem:[%s5 + $0x90] sm:$0xff]
      %v3587 = vld [vmem:[%s5 + $0x98] sm:$0xff]
      %v3588 = vld [vmem:[%s5 + $0xa0] sm:$0xff]
      %v3589 = vld [vmem:[%s5 + $0xa8] sm:$0xff]
      %v3590 = vld [vmem:[%s5 + $0xb0] sm:$0xff]
      %v3591 = vld [vmem:[%s5 + $0xb8] sm:$0xff]
      %v3592 = vld [vmem:[%s5 + $0xc0] sm:$0xff]
      %v3593 = vld [vmem:[%s5 + $0xc8] sm:$0xff]
      %v3594 = vld [vmem:[%s5 + $0xd0] sm:$0xff]
      %v3595 = vld [vmem:[%s5 + $0xd8] sm:$0xff]
      %v3596 = vld [vmem:[%s5 + $0xe0] sm:$0xff]
      %v3597 = vld [vmem:[%s5 + $0xe8] sm:$0xff]
      %v3598 = vld [vmem:[%s5 + $0xf0] sm:$0xff]
      %v3599 = vld [vmem:[%s5 + $0xf8] sm:$0xff]
      %v3600 = vld [vmem:[%s5 + $0x100] sm:$0xff]
      %v3601 = vld [vmem:[%s5 + $0x108] sm:$0xff]
      %v3602 = vld [vmem:[%s5 + $0x110] sm:$0xff]
      %v3603 = vld [vmem:[%s5 + $0x118] sm:$0xff]
      %v3604 = vmul.f32 %v3532, %v3568
      %v3605 = vmul.f32 %v3533, %v3569
      %v3606 = vmul.f32 %v3534, %v3570
      %v3607 = vmul.f32 %v3535, %v3571
      %v3608 = vmul.f32 %v3536, %v3572
      %v3609 = vmul.f32 %v3537, %v3573
      %v3610 = vmul.f32 %v3538, %v3574
      %v3611 = vmul.f32 %v3539, %v3575
      %v3612 = vmul.f32 %v3540, %v3576
      %v3613 = vmul.f32 %v3541, %v3577
      %v3614 = vmul.f32 %v3542, %v3578
      %v3615 = vmul.f32 %v3543, %v3579
      %v3616 = vmul.f32 %v3544, %v3580
      %v3617 = vmul.f32 %v3545, %v3581
      %v3618 = vmul.f32 %v3546, %v3582
      %v3619 = vmul.f32 %v3547, %v3583
      %v3620 = vmul.f32 %v3548, %v3584
      %v3621 = vmul.f32 %v3549, %v3585
      %v3622 = vmul.f32 %v3550, %v3586
      %v3623 = vmul.f32 %v3551, %v3587
      %v3624 = vmul.f32 %v3552, %v3588
      %v3625 = vmul.f32 %v3553, %v3589
      %v3626 = vmul.f32 %v3554, %v3590
      %v3627 = vmul.f32 %v3555, %v3591
      %v3628 = vmul.f32 %v3556, %v3592
      %v3629 = vmul.f32 %v3557, %v3593
      %v3630 = vmul.f32 %v3558, %v3594
      %v3631 = vmul.f32 %v3559, %v3595
      %v3632 = vmul.f32 %v3560, %v3596
      %v3633 = vmul.f32 %v3561, %v3597
      %v3634 = vmul.f32 %v3562, %v3598
      %v3635 = vmul.f32 %v3563, %v3599
      %v3636 = vmul.f32 %v3564, %v3600
      %v3637 = vmul.f32 %v3565, %v3601
      %v3638 = vmul.f32 %v3566, %v3602
      %v3639 = vmul.f32 %v3567, %v3603
      %v3640 = vadd.f32 %v3604, %v3605
      %v3641 = vadd.f32 %v3640, %v3606
      %v3642 = vadd.f32 %v3641, %v3607
      %v3643 = vadd.f32 %v3642, %v3608
      %v3644 = vadd.f32 %v3643, %v3609
      %v3645 = vadd.f32 %v3644, %v3610
      %v3646 = vadd.f32 %v3645, %v3611
      %v3647 = vadd.f32 %v3646, %v3612
      %v3648 = vadd.f32 %v3647, %v3613
      %v3649 = vadd.f32 %v3648, %v3614
      %v3650 = vadd.f32 %v3649, %v3615
      %v3651 = vadd.f32 %v3650, %v3616
      %v3652 = vadd.f32 %v3651, %v3617
      %v3653 = vadd.f32 %v3652, %v3618
      %v3654 = vadd.f32 %v3653, %v3619
      %v3655 = vadd.f32 %v3654, %v3620
      %v3656 = vadd.f32 %v3655, %v3621
      %v3657 = vadd.f32 %v3656, %v3622
      %v3658 = vadd.f32 %v3657, %v3623
      %v3659 = vadd.f32 %v3658, %v3624
      %v3660 = vadd.f32 %v3659, %v3625
      %v3661 = vadd.f32 %v3660, %v3626
      %v3662 = vadd.f32 %v3661, %v3627
      %v3663 = vadd.f32 %v3662, %v3628
      %v3664 = vadd.f32 %v3663, %v3629
      %v3665 = vadd.f32 %v3664, %v3630
      %v3666 = vadd.f32 %v3665, %v3631
      %v3667 = vadd.f32 %v3666, %v3632
      %v3668 = vadd.f32 %v3667, %v3633
      %v3669 = vadd.f32 %v3668, %v3634
      %v3670 = vadd.f32 %v3669, %v3635
      %v3671 = vadd.f32 %v3670, %v3636
      %v3672 = vadd.f32 %v3671, %v3637
      %v3673 = vadd.f32 %v3672, %v3638
      %v3674 = vadd.f32 %v3673, %v3639
      %v3675 = vrot.slane %v3674, 4
      %v3676 = vadd.f32 %v3674, %v3675
      %v3677 = vrot.slane %v3676, 2
      %v3678 = vadd.f32 %v3676, %v3677
      %v3679 = vrot.slane %v3678, 1
      %v3680 = vadd.f32 %v3678, %v3679
      %3681 = vst [vmem:[%s319] sm:$0x1] %v3680
      %v3682 = vmul.f32 %v3604, %v3604
      %v3683 = vmul.f32 %v3605, %v3605
      %v3684 = vmul.f32 %v3606, %v3606
      %v3685 = vmul.f32 %v3607, %v3607
      %v3686 = vmul.f32 %v3608, %v3608
      %v3687 = vmul.f32 %v3609, %v3609
      %v3688 = vmul.f32 %v3610, %v3610
      %v3689 = vmul.f32 %v3611, %v3611
      %v3690 = vmul.f32 %v3612, %v3612
      %v3691 = vmul.f32 %v3613, %v3613
      %v3692 = vmul.f32 %v3614, %v3614
      %v3693 = vmul.f32 %v3615, %v3615
      %v3694 = vmul.f32 %v3616, %v3616
      %v3695 = vmul.f32 %v3617, %v3617
      %v3696 = vmul.f32 %v3618, %v3618
      %v3697 = vmul.f32 %v3619, %v3619
      %v3698 = vmul.f32 %v3620, %v3620
      %v3699 = vmul.f32 %v3621, %v3621
      %v3700 = vmul.f32 %v3622, %v3622
      %v3701 = vmul.f32 %v3623, %v3623
      %v3702 = vmul.f32 %v3624, %v3624
      %v3703 = vmul.f32 %v3625, %v3625
      %v3704 = vmul.f32 %v3626, %v3626
      %v3705 = vmul.f32 %v3627, %v3627
      %v3706 = vmul.f32 %v3628, %v3628
      %v3707 = vmul.f32 %v3629, %v3629
      %v3708 = vmul.f32 %v3630, %v3630
      %v3709 = vmul.f32 %v3631, %v3631
      %v3710 = vmul.f32 %v3632, %v3632
      %v3711 = vmul.f32 %v3633, %v3633
      %v3712 = vmul.f32 %v3634, %v3634
      %v3713 = vmul.f32 %v3635, %v3635
      %v3714 = vmul.f32 %v3636, %v3636
      %v3715 = vmul.f32 %v3637, %v3637
      %v3716 = vmul.f32 %v3638, %v3638
      %v3717 = vmul.f32 %v3639, %v3639
      %v3718 = vadd.f32 %v3682, %v3683
      %v3719 = vadd.f32 %v3718, %v3684
      %v3720 = vadd.f32 %v3719, %v3685
      %v3721 = vadd.f32 %v3720, %v3686
      %v3722 = vadd.f32 %v3721, %v3687
      %v3723 = vadd.f32 %v3722, %v3688
      %v3724 = vadd.f32 %v3723, %v3689
      %v3725 = vadd.f32 %v3724, %v3690
      %v3726 = vadd.f32 %v3725, %v3691
      %v3727 = vadd.f32 %v3726, %v3692
      %v3728 = vadd.f32 %v3727, %v3693
      %v3729 = vadd.f32 %v3728, %v3694
      %v3730 = vadd.f32 %v3729, %v3695
      %v3731 = vadd.f32 %v3730, %v3696
      %v3732 = vadd.f32 %v3731, %v3697
      %v3733 = vadd.f32 %v3732, %v3698
      %v3734 = vadd.f32 %v3733, %v3699
      %v3735 = vadd.f32 %v3734, %v3700
      %v3736 = vadd.f32 %v3735, %v3701
      %v3737 = vadd.f32 %v3736, %v3702
      %v3738 = vadd.f32 %v3737, %v3703
      %v3739 = vadd.f32 %v3738, %v3704
      %v3740 = vadd.f32 %v3739, %v3705
      %v3741 = vadd.f32 %v3740, %v3706
      %v3742 = vadd.f32 %v3741, %v3707
      %v3743 = vadd.f32 %v3742, %v3708
      %v3744 = vadd.f32 %v3743, %v3709
      %v3745 = vadd.f32 %v3744, %v3710
      %v3746 = vadd.f32 %v3745, %v3711
      %v3747 = vadd.f32 %v3746, %v3712
      %v3748 = vadd.f32 %v3747, %v3713
      %v3749 = vadd.f32 %v3748, %v3714
      %v3750 = vadd.f32 %v3749, %v3715
      %v3751 = vadd.f32 %v3750, %v3716
      %v3752 = vadd.f32 %v3751, %v3717
      %v3753 = vrot.slane %v3752, 4
      %v3754 = vadd.f32 %v3752, %v3753
      %v3755 = vrot.slane %v3754, 2
      %v3756 = vadd.f32 %v3754, %v3755
      %v3757 = vrot.slane %v3756, 1
      %v3758 = vadd.f32 %v3756, %v3757
      %3759 = vst [vmem:[%s322] sm:$0x1] %v3758
      %3760 = vst [vmem:[%s316] sm:$0xff] %v3604
      %3761 = vst [vmem:[%s316 + $0x8] sm:$0xff] %v3605
      %3762 = vst [vmem:[%s316 + $0x10] sm:$0xff] %v3606
      %3763 = vst [vmem:[%s316 + $0x18] sm:$0xff] %v3607
      %3764 = vst [vmem:[%s316 + $0x20] sm:$0xff] %v3608
      %3765 = vst [vmem:[%s316 + $0x28] sm:$0xff] %v3609
      %3766 = vst [vmem:[%s316 + $0x30] sm:$0xff] %v3610
      %3767 = vst [vmem:[%s316 + $0x38] sm:$0xff] %v3611
      %3768 = vst [vmem:[%s316 + $0x40] sm:$0xff] %v3612
      %3769 = vst [vmem:[%s316 + $0x48] sm:$0xff] %v3613
      %3770 = vst [vmem:[%s316 + $0x50] sm:$0xff] %v3614
      %3771 = vst [vmem:[%s316 + $0x58] sm:$0xff] %v3615
      %3772 = vst [vmem:[%s316 + $0x60] sm:$0xff] %v3616
      %3773 = vst [vmem:[%s316 + $0x68] sm:$0xff] %v3617
      %3774 = vst [vmem:[%s316 + $0x70] sm:$0xff] %v3618
      %3775 = vst [vmem:[%s316 + $0x78] sm:$0xff] %v3619
      %3776 = vst [vmem:[%s316 + $0x80] sm:$0xff] %v3620
      %3777 = vst [vmem:[%s316 + $0x88] sm:$0xff] %v3621
      %3778 = vst [vmem:[%s316 + $0x90] sm:$0xff] %v3622
      %3779 = vst [vmem:[%s316 + $0x98] sm:$0xff] %v3623
      %3780 = vst [vmem:[%s316 + $0xa0] sm:$0xff] %v3624
      %3781 = vst [vmem:[%s316 + $0xa8] sm:$0xff] %v3625
      %3782 = vst [vmem:[%s316 + $0xb0] sm:$0xff] %v3626
      %3783 = vst [vmem:[%s316 + $0xb8] sm:$0xff] %v3627
      %3784 = vst [vmem:[%s316 + $0xc0] sm:$0xff] %v3628
      %3785 = vst [vmem:[%s316 + $0xc8] sm:$0xff] %v3629
      %3786 = vst [vmem:[%s316 + $0xd0] sm:$0xff] %v3630
      %3787 = vst [vmem:[%s316 + $0xd8] sm:$0xff] %v3631
      %3788 = vst [vmem:[%s316 + $0xe0] sm:$0xff] %v3632
      %3789 = vst [vmem:[%s316 + $0xe8] sm:$0xff] %v3633
      %3790 = vst [vmem:[%s316 + $0xf0] sm:$0xff] %v3634
      %3791 = vst [vmem:[%s316 + $0xf8] sm:$0xff] %v3635
      %3792 = vst [vmem:[%s316 + $0x100] sm:$0xff] %v3636
      %3793 = vst [vmem:[%s316 + $0x108] sm:$0xff] %v3637
      %3794 = vst [vmem:[%s316 + $0x110] sm:$0xff] %v3638
      %3795 = vst [vmem:[%s316 + $0x118] sm:$0xff] %v3639
      %p3796 = scmp.lt.s32.totalorder %s20, 1
      %s3797 = scalar_select %p3796, %s20, 1
      %s3798 = smul.addr %s3797, 36
      %s3799 = smul.addr %s3798, 8
      %s3800 = scalar_lea.vmem %s6, %s3799
      %p3801 = scmp.lt.s32.totalorder %s20, 1
      %s3802 = scalar_select %p3801, %s20, 1
      %s3803 = scalar_lea.vmem %s7, %s3802
      %p3804 = scmp.lt.s32.totalorder %s20, 1
      %s3805 = scalar_select %p3804, %s20, 1
      %s3806 = scalar_lea.vmem %s8, %s3805
      // Predicated region
      $region45: #{basic_block_forward.4} parent=43 // pred_check
        %p3807 = pneg %p169
      $region46: #{basic_block_forward.4} parent=43 // pred_check_branch
        %3809 = sbr.rel (%p3807) target = $region48
      $region47: #{basic_block_forward.4} parent=43 // pred_region
        _
      $region48: #{basic_block_forward.4} parent=43 // pred_fallthru
        _
      // Predicated region
      $region49: #{basic_block_forward.4} parent=43 // pred_check
        %p3810 = pneg %p195
      $region50: #{basic_block_forward.4} parent=43 // pred_check_branch
        %3812 = sbr.rel (%p3810) target = $region52
      $region51: #{basic_block_forward.4} parent=43 // pred_region
        _
      $region52: #{basic_block_forward.4} parent=43 // pred_fallthru
        _
      // Predicated region
      $region53: #{basic_block_forward.4} parent=43 // pred_check
        %p3813 = pneg %p221
      $region54: #{basic_block_forward.4} parent=43 // pred_check_branch
        %3815 = sbr.rel (%p3813) target = $region56
      $region55: #{basic_block_forward.4} parent=43 // pred_region
        _
      $region56: #{basic_block_forward.4} parent=43 // pred_fallthru
        _
    $region44: #{basic_block_forward.4} parent=5 // pred_fallthru
      _
    %p3816 = scmp.le.s32.totalorder 2, %s15
    // Predicated region
    $region57: #{basic_block_forward.4} parent=5 // pred_check
      %p3817 = pneg %p3816
    $region58: #{basic_block_forward.4} parent=5 // pred_check_branch
      %3819 = sbr.rel (%p3817) target = $region60
    $region59: #{basic_block_forward.4} parent=5 // pred_region
      %s3820 = ssub.s32 %s15, 2
      // Predicated region
      $region61: #{basic_block_forward.4} parent=59 // pred_check
        %p3821 = pneg %p175
      $region62: #{basic_block_forward.4} parent=59 // pred_check_branch
        %3823 = sbr.rel (%p3821) target = $region64
      $region63: #{basic_block_forward.4} parent=59 // pred_region
        %p3824 = scmp.lt.s32.totalorder %s21, 1
        %s3825 = scalar_select %p3824, %s21, 1
        %s3826 = smul.addr %s3825, 36
        %s3827 = smul.addr %s3826, 8
        %s3828 = scalar_lea.vmem %s6, %s3827
      $region64: #{basic_block_forward.4} parent=59 // pred_fallthru
        _
      // Predicated region
      $region65: #{basic_block_forward.4} parent=59 // pred_check
        %p3829 = pneg %p201
      $region66: #{basic_block_forward.4} parent=59 // pred_check_branch
        %3831 = sbr.rel (%p3829) target = $region68
      $region67: #{basic_block_forward.4} parent=59 // pred_region
        %p3832 = scmp.lt.s32.totalorder %s21, 1
        %s3833 = scalar_select %p3832, %s21, 1
        %s3834 = scalar_lea.vmem %s7, %s3833
      $region68: #{basic_block_forward.4} parent=59 // pred_fallthru
        _
      // Predicated region
      $region69: #{basic_block_forward.4} parent=59 // pred_check
        %p3835 = pneg %p227
      $region70: #{basic_block_forward.4} parent=59 // pred_check_branch
        %3837 = sbr.rel (%p3835) target = $region72
      $region71: #{basic_block_forward.4} parent=59 // pred_region
        %p3838 = scmp.lt.s32.totalorder %s21, 1
        %s3839 = scalar_select %p3838, %s21, 1
        %s3840 = scalar_lea.vmem %s8, %s3839
      $region72: #{basic_block_forward.4} parent=59 // pred_fallthru
        _
    $region60: #{basic_block_forward.4} parent=5 // pred_fallthru
      _
  $region6: #{basic_block_forward.4} parent=0 // loop_footer
    %s19 = sadd.s32 1, %s15
  $region7: #{basic_block_forward.4} parent=0 // loop_footer_branch
    %14 = sbr.rel target = $region3
  $region8: #{basic_block_forward.4} parent=0 // loop_exit
    _

</llo_original>
